<compile_context>
chip_gen: v6e
topology: v6e:2x2x1
jax: 0.10.0
libtpu: 0.0.40
codegen_flags: <defaults>
</compile_context>

<pallas_src>
import numpy as np
import jax
import jax.numpy as jnp
from jax import lax
from jax.experimental import pallas as pl
from jax.experimental.pallas import tpu as pltpu

BN_EPS = 1e-5
MXU_DTYPE = jnp.bfloat16          # matmul operand dtype (accumulation stays f32)


# ----------------------------------------------------------------------------
# Fused kernel: one batch element per grid step.
# ----------------------------------------------------------------------------
def _fused_kernel(x_ref,
                  w1_ref, sb1_ref, w2_ref, sb2_ref, w3_ref, sb3_ref, w4_ref, sb4_ref,
                  u_ref, wa_ref, wc_ref, misc_ref,
                  out_x_ref, out_c_ref,
                  acc1, acc2, acc3, acc4):

    def conv_bn_relu(x, w_ref, sb_ref, d, acc_ref, pool):
        # x: (L, Cin) bf16 value (already cast once).  w_ref: (3, Cin, Cout) bf16.
        # sb_ref: (2, Cout) f32 folded BN affine.
        L = x.shape[0]
        # dilated k=3 'same' conv: three full matmuls computed as values.
        #   y1[t] = x[t]   @ w1   (all rows)
        #   y0[i] = x[i]   @ w0   -> contributes to output row i + d
        #   y2[i] = x[i+d] @ w2   -> contributes to output row i
        y1 = jnp.dot(x, w_ref[1], preferred_element_type=jnp.float32)            # (L, Cout)
        y0 = jnp.dot(x[:L - d, :], w_ref[0], preferred_element_type=jnp.float32)  # (L-d, Cout)
        y2 = jnp.dot(x[d:, :], w_ref[2], preferred_element_type=jnp.float32)      # (L-d, Cout)

        # Assemble region-wise: every accumulator row is written exactly once
        # (no read-modify-write passes through VMEM).
        acc_ref[pl.ds(0, d), :] = y1[:d] + y2[:d]
        acc_ref[pl.ds(d, L - 2 * d), :] = y1[d:L - d] + y0[:L - 2 * d] + y2[d:]
        acc_ref[pl.ds(L - d, d), :] = y1[L - d:] + y0[L - 2 * d:]

        sb = sb_ref[...]                               # (2, Cout)
        scale, shift = sb[0:1, :], sb[1:2, :]
        if pool:
            # fused MaxPool1d(2,2): BN+ReLU on even / odd rows (strided ref reads),
            # then elementwise max.  Affine+ReLU must stay before the max (scale
            # can be negative).
            even = acc_ref[pl.ds(0, L // 2, 2), :]
            odd = acc_ref[pl.ds(1, L // 2, 2), :]
            y = jnp.maximum(jnp.maximum(even * scale + shift, 0.0),
                            jnp.maximum(odd * scale + shift, 0.0))
        else:
            y = jnp.maximum(acc_ref[...] * scale + shift, 0.0)
        # one cast per layer, reused by all three tap matmuls of the next layer.
        return y.astype(MXU_DTYPE)

    x0 = x_ref[0]                                            # (300, 513) bf16
    x1 = conv_bn_relu(x0, w1_ref, sb1_ref, 1, acc1, False)   # (300, 256)
    x2 = conv_bn_relu(x1, w2_ref, sb2_ref, 2, acc2, False)   # (300, 128)
    x3 = conv_bn_relu(x2, w3_ref, sb3_ref, 2, acc3, True)    # (150, 128)  (80 padded)
    x4 = conv_bn_relu(x3, w4_ref, sb4_ref, 2, acc4, True)    # (75, 64)

    # ---- head ---------------------------------------------------------------
    # dense Conv1d(64->64, k=75) folded through the attention 1x1 conv:
    #   wa . g = sum_{t,c} x4[t,c] * U[t,c] + wa . bd   (exact f32 elementwise)
    misc = misc_ref[...]                                     # (1, 2): [wa.bd, bc]
    c0, bc = misc[:, 0:1], misc[:, 1:2]
    s_g = jnp.sum(jnp.sum(x4 * u_ref[...], axis=1, keepdims=True),
                  axis=0, keepdims=True) + c0                # (1, 1)

    # attention logits, lane-dense (1, L):  c[t] = sum_c wa[c]*x4[t,c] + wa.g
    c_row = lax.dot_general(wa_ref[...], x4,
                            (((1,), (1,)), ((), ())),
                            preferred_element_type=jnp.float32) + s_g   # (1, 75)

    # softmax over L (normalize_attn=True) + attention-weighted pooling.
    m = jnp.max(c_row, axis=1, keepdims=True)
    e = jnp.exp(c_row - m)
    inv = pl.reciprocal(jnp.sum(e, axis=1, keepdims=True), approx=True)
    a_row = e * inv                                           # (1, 75)
    pooled = jnp.dot(a_row, x4, preferred_element_type=jnp.float32)     # (1, 64)

    # final classify as a VPU dot (no M=1,N=1 MXU round trip).
    logit = jnp.sum(pooled * wc_ref[...], axis=1, keepdims=True) + bc   # (1, 1)
    out_x_ref[0] = jax.nn.sigmoid(logit).astype(out_x_ref.dtype)        # (1, 1)
    out_c_ref[0] = c_row.astype(out_c_ref.dtype)                        # (1, 75)


def _fold_bn(gamma, beta, mean, var):
    inv = gamma / jnp.sqrt(var + BN_EPS)
    return jnp.stack([inv, beta - mean * inv], axis=0)       # (2, Cout)


@jax.jit
def attn_pooling_forward(x_ncl, p):
    """x_ncl: (N, 513, L0) f32, PyTorch NCL layout.  Returns ((N, 1), (N, 1, L0//4))."""
    N, cin, L0 = x_ncl.shape
    L4 = L0 // 4
    # the dense-conv fold (U = einsum('oct,o->tc', wd, wa)) is only exact when
    # the dense Conv1d output length is 1, i.e. L0 // 4 == kernel_size.
    if L0 % 4 != 0 or L4 != p['wd'].shape[2]:
        raise ValueError(f"AttnPooling requires L0 // 4 == {p['wd'].shape[2]}, got L0={L0}")

    # fused NCL -> NLC transpose + bf16 cast: halves input DMA bytes.
    x = jnp.transpose(x_ncl, (0, 2, 1)).astype(MXU_DTYPE)    # (N, L0, Cin) bf16

    wts = [jnp.transpose(p[f'w{i}'], (2, 1, 0)).astype(MXU_DTYPE) for i in range(1, 5)]
    sbs = [_fold_bn(*p[f'bn{i}']) for i in range(1, 5)]

    # zero-pad conv3's output channels (80 -> 128) and conv4's matching input
    # channels so layer 3/4 tiles are lane-dense (zero MXU / math cost).
    c3 = wts[2].shape[2]
    c3p = ((c3 + 127) // 128) * 128
    if c3p != c3:
        wts[2] = jnp.pad(wts[2], ((0, 0), (0, 0), (0, c3p - c3)))
        wts[3] = jnp.pad(wts[3], ((0, 0), (0, c3p - c3), (0, 0)))
        sbs[2] = jnp.pad(sbs[2], ((0, 0), (0, c3p - c3)))

    cins = [w.shape[1] for w in wts]
    couts = [w.shape[2] for w in wts]

    # fold dense conv through the attention 1x1 conv (exact f32, no matmul).
    wa_vec = p['wa'][0, :, 0]                                        # (64,)
    u = jnp.sum(p['wd'] * wa_vec[:, None, None], axis=0).T           # (75, 64) f32
    c0 = jnp.sum(p['bd'] * wa_vec)                                   # wa . bd
    wa_row = wa_vec.reshape(1, -1).astype(MXU_DTYPE)                 # (1, 64) bf16
    wc_row = p['wc'].astype(jnp.float32)                             # (1, 64)
    misc = jnp.stack([c0, p['bc'][0]]).reshape(1, 2)

    grid_spec = pltpu.PrefetchScalarGridSpec(
        num_scalar_prefetch=0,
        grid=(N,),
        in_specs=[
            pl.BlockSpec((1, L0, cin), lambda n: (n, 0, 0)),
            # weights / folded BN: constant index maps -> resident across the grid
            pl.BlockSpec((3, cins[0], couts[0]), lambda n: (0, 0, 0)),
            pl.BlockSpec((2, couts[0]), lambda n: (0, 0)),
            pl.BlockSpec((3, cins[1], couts[1]), lambda n: (0, 0, 0)),
            pl.BlockSpec((2, couts[1]), lambda n: (0, 0)),
            pl.BlockSpec((3, cins[2], couts[2]), lambda n: (0, 0, 0)),
            pl.BlockSpec((2, couts[2]), lambda n: (0, 0)),
            pl.BlockSpec((3, cins[3], couts[3]), lambda n: (0, 0, 0)),
            pl.BlockSpec((2, couts[3]), lambda n: (0, 0)),
            pl.BlockSpec((L4, couts[3]), lambda n: (0, 0)),          # U
            pl.BlockSpec((1, couts[3]), lambda n: (0, 0)),           # wa row
            pl.BlockSpec((1, couts[3]), lambda n: (0, 0)),           # wc row
            pl.BlockSpec((1, 2), lambda n: (0, 0)),                  # [wa.bd, bc]
        ],
        out_specs=(pl.BlockSpec((1, 1, 1), lambda n: (n, 0, 0)),
                   pl.BlockSpec((1, 1, L4), lambda n: (n, 0, 0))),
        scratch_shapes=[
            pltpu.VMEM((L0, couts[0]), jnp.float32),
            pltpu.VMEM((L0, couts[1]), jnp.float32),
            pltpu.VMEM((L0, couts[2]), jnp.float32),
            pltpu.VMEM((L0 // 2, couts[3]), jnp.float32),
        ])

    out_x, out_c = pl.pallas_call(
        _fused_kernel,
        out_shape=(jax.ShapeDtypeStruct((N, 1, 1), jnp.float32),
                   jax.ShapeDtypeStruct((N, 1, L4), jnp.float32)),
        grid_spec=grid_spec,
        compiler_params=pltpu.CompilerParams(dimension_semantics=("parallel",)),
    )(x, wts[0], sbs[0], wts[1], sbs[1], wts[2], sbs[2], wts[3], sbs[3],
      u, wa_row, wc_row, misc)

    return out_x[:, 0, :], out_c                             # (N, 1), (N, 1, 75)


# ----------------------------------------------------------------------------
# Pure-JAX reference (unfused, dense conv g computed explicitly).  Activations
# and MXU operands are rounded to bf16 to mirror the kernel's operand precision.
# ----------------------------------------------------------------------------
def reference_forward(x_ncl, p):
    q = lambda a: a.astype(jnp.bfloat16).astype(jnp.float32)
    x = q(jnp.transpose(x_ncl, (0, 2, 1)))

    def cb(x, w, gamma, beta, mean, var, d, pool):
        N, L, _ = x.shape
        xp = jnp.pad(x, ((0, 0), (d, d), (0, 0)))
        wt = q(jnp.transpose(w, (2, 1, 0)))
        y = sum(jnp.einsum('nlc,cd->nld', xp[:, k * d:k * d + L], wt[k])
                for k in range(3))
        scale = gamma / jnp.sqrt(var + BN_EPS)
        shift = beta - mean * scale
        y = jnp.maximum(y * scale + shift, 0.0)
        if pool:
            y = jnp.max(y.reshape(N, L // 2, 2, -1), axis=2)
        return q(y)

    x = cb(x, p['w1'], *p['bn1'], 1, False)
    x = cb(x, p['w2'], *p['bn2'], 2, False)
    x = cb(x, p['w3'], *p['bn3'], 2, True)
    x = cb(x, p['w4'], *p['bn4'], 2, True)

    N, L, C = x.shape
    wa_vec = p['wa'][0, :, 0]
    wd_flat = jnp.transpose(p['wd'], (2, 1, 0)).reshape(L * C, C)
    g = jnp.dot(x.reshape(N, L * C), wd_flat,
                precision=lax.Precision.HIGHEST) + p['bd']            # (N, C)
    wag = jnp.sum(g * wa_vec, axis=-1, keepdims=True)                 # (N, 1)
    c = jnp.einsum('nlc,c->nl', x, q(wa_vec)) + wag                   # (N, 75)
    a = jax.nn.softmax(c, axis=-1)
    pooled = jnp.einsum('nl,nlc->nc', a, x)
    out = jax.nn.sigmoid(pooled @ p['wc'].T + p['bc'])
    return out, c[:, None, :]


def xavier_uniform(key, shape, fan_in, fan_out):
    lim = float(np.sqrt(6.0 / (fan_in + fan_out)))
    return jax.random.uniform(key, shape, jnp.float32, -lim, lim)


if __name__ == "__main__":
    key = jax.random.PRNGKey(0)
    keys = jax.random.split(key, 10)

    # Length 300 -> 150 -> 75 after the two max-pools; the dense Conv1d with
    # kernel_size=75 then yields the length-1 global feature used by attention.
    N, L0, CIN = 2, 300, 513

    params = {}
    conv_dims = [(513, 256), (256, 128), (128, 80), (80, 64)]
    for i, (cin, cout) in enumerate(conv_dims, start=1):
        params[f'w{i}'] = xavier_uniform(keys[i - 1], (cout, cin, 3), cin * 3, cout * 3)
        # BatchNorm1d defaults, eval mode: gamma=1, beta=0, mean=0, var=1
        params[f'bn{i}'] = (jnp.ones((cout,), jnp.float32),
                            jnp.zeros((cout,), jnp.float32),
                            jnp.zeros((cout,), jnp.float32),
                            jnp.ones((cout,), jnp.float32))
    params['wd'] = xavier_uniform(keys[4], (64, 64, 75), 64 * 75, 64 * 75)
    params['bd'] = jax.random.uniform(keys[5], (64,), jnp.float32, -0.01, 0.01)
    params['wa'] = xavier_uniform(keys[6], (1, 64, 1), 64, 1)
    params['wc'] = xavier_uniform(keys[7], (1, 64), 64, 1)
    params['bc'] = jax.random.uniform(keys[8], (1,), jnp.float32, -0.01, 0.01)

    x = jax.random.normal(keys[9], (N, CIN, L0), jnp.float32)   # PyTorch NCL input

    out_x, out_c = attn_pooling_forward(x, params)
    out_x = jax.block_until_ready(out_x)
    out_c = jax.block_until_ready(out_c)

    ref_x, ref_c = reference_forward(x, params)
    assert out_x.shape == (N, 1) and out_c.shape == (N, 1, L0 // 4)
    np.testing.assert_allclose(np.asarray(out_x), np.asarray(ref_x), rtol=5e-3, atol=5e-3)
    np.testing.assert_allclose(np.asarray(out_c), np.asarray(ref_c), rtol=5e-3, atol=5e-3)

    print("KERNEL_OK")
</pallas_src>

<mosaic_0001>
module attributes {stable_mosaic.version = 11 : i64} {
  func.func @_fused_kernel(%arg0: i32, %arg1: memref<1x300x513xbf16, #tpu.memory_space<vmem>>, %arg2: memref<3x513x256xbf16, #tpu.memory_space<vmem>>, %arg3: memref<2x256xf32, #tpu.memory_space<vmem>>, %arg4: memref<3x256x128xbf16, #tpu.memory_space<vmem>>, %arg5: memref<2x128xf32, #tpu.memory_space<vmem>>, %arg6: memref<3x128x128xbf16, #tpu.memory_space<vmem>>, %arg7: memref<2x128xf32, #tpu.memory_space<vmem>>, %arg8: memref<3x128x64xbf16, #tpu.memory_space<vmem>>, %arg9: memref<2x64xf32, #tpu.memory_space<vmem>>, %arg10: memref<75x64xf32, #tpu.memory_space<vmem>>, %arg11: memref<1x64xbf16, #tpu.memory_space<vmem>>, %arg12: memref<1x64xf32, #tpu.memory_space<vmem>>, %arg13: memref<1x2xf32, #tpu.memory_space<vmem>>, %arg14: memref<1x1x1xf32, #tpu.memory_space<vmem>>, %arg15: memref<1x1x75xf32, #tpu.memory_space<vmem>>, %arg16: memref<300x256xf32, #tpu.memory_space<vmem>>, %arg17: memref<300x128xf32, #tpu.memory_space<vmem>>, %arg18: memref<300x128xf32, #tpu.memory_space<vmem>>, %arg19: memref<150x64xf32, #tpu.memory_space<vmem>>) attributes {dimension_semantics = [#tpu.dimension_semantics<parallel>], iteration_bounds = array<i64: 2>, scalar_prefetch = 0 : i64, scratch_operands = 4 : i64, tpu.core_type = #tpu.core_type<tc>, window_params = [{transform_indices = @transform_0, window_bounds = array<i64: 1, 300, 513>}, {pipeline_mode = #tpu.pipeline_mode<synchronous>, transform_indices = @transform_1, window_bounds = array<i64: 3, 513, 256>}, {pipeline_mode = #tpu.pipeline_mode<synchronous>, transform_indices = @transform_2, window_bounds = array<i64: 2, 256>}, {pipeline_mode = #tpu.pipeline_mode<synchronous>, transform_indices = @transform_3, window_bounds = array<i64: 3, 256, 128>}, {pipeline_mode = #tpu.pipeline_mode<synchronous>, transform_indices = @transform_4, window_bounds = array<i64: 2, 128>}, {pipeline_mode = #tpu.pipeline_mode<synchronous>, transform_indices = @transform_5, window_bounds = array<i64: 3, 128, 128>}, {pipeline_mode = #tpu.pipeline_mode<synchronous>, transform_indices = @transform_6, window_bounds = array<i64: 2, 128>}, {pipeline_mode = #tpu.pipeline_mode<synchronous>, transform_indices = @transform_7, window_bounds = array<i64: 3, 128, 64>}, {pipeline_mode = #tpu.pipeline_mode<synchronous>, transform_indices = @transform_8, window_bounds = array<i64: 2, 64>}, {pipeline_mode = #tpu.pipeline_mode<synchronous>, transform_indices = @transform_9, window_bounds = array<i64: 75, 64>}, {pipeline_mode = #tpu.pipeline_mode<synchronous>, transform_indices = @transform_10, window_bounds = array<i64: 1, 64>}, {pipeline_mode = #tpu.pipeline_mode<synchronous>, transform_indices = @transform_11, window_bounds = array<i64: 1, 64>}, {pipeline_mode = #tpu.pipeline_mode<synchronous>, transform_indices = @transform_12, window_bounds = array<i64: 1, 2>}, {transform_indices = @transform_13, window_bounds = array<i64: 1, 1, 1>}, {transform_indices = @transform_14, window_bounds = array<i64: 1, 1, 75>}]} {
    %c0 = arith.constant 0 : index
    %c0_0 = arith.constant 0 : index
    %c0_1 = arith.constant 0 : index
    %0 = vector.load %arg1[%c0, %c0_0, %c0_1] : memref<1x300x513xbf16, #tpu.memory_space<vmem>>, vector<1x300x513xbf16>
    %1 = vector.shape_cast %0 : vector<1x300x513xbf16> to vector<300x513xbf16>
    %c1 = arith.constant 1 : index
    %c0_2 = arith.constant 0 : index
    %c0_3 = arith.constant 0 : index
    %2 = vector.load %arg2[%c1, %c0_2, %c0_3] : memref<3x513x256xbf16, #tpu.memory_space<vmem>>, vector<1x513x256xbf16>
    %3 = vector.shape_cast %2 : vector<1x513x256xbf16> to vector<513x256xbf16>
    %cst = arith.constant dense<0.000000e+00> : vector<300x256xf32>
    %4 = tpu.matmul %1, %3, %cst {dimension_numbers = #tpu.dot_dimension_numbers<[1], [0], [0], [1], [0, 0, 1, 1], [], []>} : vector<300x513xbf16>, vector<513x256xbf16>, vector<300x256xf32> -> vector<300x256xf32>
    %5 = vector.extract_strided_slice %1 {offsets = [0, 0], sizes = [299, 513], strides = [1, 1]} : vector<300x513xbf16> to vector<299x513xbf16>
    %c0_4 = arith.constant 0 : index
    %c0_5 = arith.constant 0 : index
    %c0_6 = arith.constant 0 : index
    %6 = vector.load %arg2[%c0_4, %c0_5, %c0_6] : memref<3x513x256xbf16, #tpu.memory_space<vmem>>, vector<1x513x256xbf16>
    %7 = vector.shape_cast %6 : vector<1x513x256xbf16> to vector<513x256xbf16>
    %cst_7 = arith.constant dense<0.000000e+00> : vector<299x256xf32>
    %8 = tpu.matmul %5, %7, %cst_7 {dimension_numbers = #tpu.dot_dimension_numbers<[1], [0], [0], [1], [0, 0, 1, 1], [], []>} : vector<299x513xbf16>, vector<513x256xbf16>, vector<299x256xf32> -> vector<299x256xf32>
    %9 = vector.extract_strided_slice %1 {offsets = [1, 0], sizes = [299, 513], strides = [1, 1]} : vector<300x513xbf16> to vector<299x513xbf16>
    %c2 = arith.constant 2 : index
    %c0_8 = arith.constant 0 : index
    %c0_9 = arith.constant 0 : index
    %10 = vector.load %arg2[%c2, %c0_8, %c0_9] : memref<3x513x256xbf16, #tpu.memory_space<vmem>>, vector<1x513x256xbf16>
    %11 = vector.shape_cast %10 : vector<1x513x256xbf16> to vector<513x256xbf16>
    %cst_10 = arith.constant dense<0.000000e+00> : vector<299x256xf32>
    %12 = tpu.matmul %9, %11, %cst_10 {dimension_numbers = #tpu.dot_dimension_numbers<[1], [0], [0], [1], [0, 0, 1, 1], [], []>} : vector<299x513xbf16>, vector<513x256xbf16>, vector<299x256xf32> -> vector<299x256xf32>
    %13 = vector.extract_strided_slice %4 {offsets = [0, 0], sizes = [1, 256], strides = [1, 1]} : vector<300x256xf32> to vector<1x256xf32>
    %14 = vector.extract_strided_slice %12 {offsets = [0, 0], sizes = [1, 256], strides = [1, 1]} : vector<299x256xf32> to vector<1x256xf32>
    %15 = arith.addf %13, %14 : vector<1x256xf32>
    %c0_11 = arith.constant 0 : index
    %c0_12 = arith.constant 0 : index
    %16 = vector.load %arg16[%c0_11, %c0_12] : memref<300x256xf32, #tpu.memory_space<vmem>>, vector<1x256xf32>
    tpu.vector_store %arg16[%c0_11, %c0_12], %15 {strides = array<i32>} : memref<300x256xf32, #tpu.memory_space<vmem>>, vector<1x256xf32>,
    %17 = vector.extract_strided_slice %4 {offsets = [1, 0], sizes = [298, 256], strides = [1, 1]} : vector<300x256xf32> to vector<298x256xf32>
    %18 = vector.extract_strided_slice %8 {offsets = [0, 0], sizes = [298, 256], strides = [1, 1]} : vector<299x256xf32> to vector<298x256xf32>
    %19 = arith.addf %17, %18 : vector<298x256xf32>
    %20 = vector.extract_strided_slice %12 {offsets = [1, 0], sizes = [298, 256], strides = [1, 1]} : vector<299x256xf32> to vector<298x256xf32>
    %21 = arith.addf %19, %20 : vector<298x256xf32>
    %c1_13 = arith.constant 1 : index
    %c0_14 = arith.constant 0 : index
    %22 = vector.load %arg16[%c1_13, %c0_14] : memref<300x256xf32, #tpu.memory_space<vmem>>, vector<298x256xf32>
    tpu.vector_store %arg16[%c1_13, %c0_14], %21 {strides = array<i32>} : memref<300x256xf32, #tpu.memory_space<vmem>>, vector<298x256xf32>,
    %23 = vector.extract_strided_slice %4 {offsets = [299, 0], sizes = [1, 256], strides = [1, 1]} : vector<300x256xf32> to vector<1x256xf32>
    %24 = vector.extract_strided_slice %8 {offsets = [298, 0], sizes = [1, 256], strides = [1, 1]} : vector<299x256xf32> to vector<1x256xf32>
    %25 = arith.addf %23, %24 : vector<1x256xf32>
    %c299 = arith.constant 299 : index
    %c0_15 = arith.constant 0 : index
    %26 = vector.load %arg16[%c299, %c0_15] : memref<300x256xf32, #tpu.memory_space<vmem>>, vector<1x256xf32>
    tpu.vector_store %arg16[%c299, %c0_15], %25 {strides = array<i32>} : memref<300x256xf32, #tpu.memory_space<vmem>>, vector<1x256xf32>,
    %c0_16 = arith.constant 0 : index
    %c0_17 = arith.constant 0 : index
    %27 = vector.load %arg3[%c0_16, %c0_17] : memref<2x256xf32, #tpu.memory_space<vmem>>, vector<2x256xf32>
    %28 = vector.extract_strided_slice %27 {offsets = [0, 0], sizes = [1, 256], strides = [1, 1]} : vector<2x256xf32> to vector<1x256xf32>
    %29 = vector.extract_strided_slice %27 {offsets = [1, 0], sizes = [1, 256], strides = [1, 1]} : vector<2x256xf32> to vector<1x256xf32>
    %c0_18 = arith.constant 0 : index
    %c0_19 = arith.constant 0 : index
    %30 = vector.load %arg16[%c0_18, %c0_19] : memref<300x256xf32, #tpu.memory_space<vmem>>, vector<300x256xf32>
    %31 = vector.broadcast %28 : vector<1x256xf32> to vector<300x256xf32>
    %32 = arith.mulf %30, %31 : vector<300x256xf32>
    %33 = vector.broadcast %29 : vector<1x256xf32> to vector<300x256xf32>
    %34 = arith.addf %32, %33 : vector<300x256xf32>
    %cst_20 = arith.constant 0.000000e+00 : f32
    %35 = vector.broadcast %cst_20 : f32 to vector<300x256xf32>
    %36 = arith.maximumf %34, %35 : vector<300x256xf32>
    %37 = arith.truncf %36 : vector<300x256xf32> to vector<300x256xbf16>
    %c1_21 = arith.constant 1 : index
    %c0_22 = arith.constant 0 : index
    %c0_23 = arith.constant 0 : index
    %38 = vector.load %arg4[%c1_21, %c0_22, %c0_23] : memref<3x256x128xbf16, #tpu.memory_space<vmem>>, vector<1x256x128xbf16>
    %39 = vector.shape_cast %38 : vector<1x256x128xbf16> to vector<256x128xbf16>
    %cst_24 = arith.constant dense<0.000000e+00> : vector<300x128xf32>
    %40 = tpu.matmul %37, %39, %cst_24 {dimension_numbers = #tpu.dot_dimension_numbers<[1], [0], [0], [1], [0, 0, 1, 1], [], []>} : vector<300x256xbf16>, vector<256x128xbf16>, vector<300x128xf32> -> vector<300x128xf32>
    %41 = vector.extract_strided_slice %37 {offsets = [0, 0], sizes = [298, 256], strides = [1, 1]} : vector<300x256xbf16> to vector<298x256xbf16>
    %c0_25 = arith.constant 0 : index
    %c0_26 = arith.constant 0 : index
    %c0_27 = arith.constant 0 : index
    %42 = vector.load %arg4[%c0_25, %c0_26, %c0_27] : memref<3x256x128xbf16, #tpu.memory_space<vmem>>, vector<1x256x128xbf16>
    %43 = vector.shape_cast %42 : vector<1x256x128xbf16> to vector<256x128xbf16>
    %cst_28 = arith.constant dense<0.000000e+00> : vector<298x128xf32>
    %44 = tpu.matmul %41, %43, %cst_28 {dimension_numbers = #tpu.dot_dimension_numbers<[1], [0], [0], [1], [0, 0, 1, 1], [], []>} : vector<298x256xbf16>, vector<256x128xbf16>, vector<298x128xf32> -> vector<298x128xf32>
    %45 = vector.extract_strided_slice %37 {offsets = [2, 0], sizes = [298, 256], strides = [1, 1]} : vector<300x256xbf16> to vector<298x256xbf16>
    %c2_29 = arith.constant 2 : index
    %c0_30 = arith.constant 0 : index
    %c0_31 = arith.constant 0 : index
    %46 = vector.load %arg4[%c2_29, %c0_30, %c0_31] : memref<3x256x128xbf16, #tpu.memory_space<vmem>>, vector<1x256x128xbf16>
    %47 = vector.shape_cast %46 : vector<1x256x128xbf16> to vector<256x128xbf16>
    %cst_32 = arith.constant dense<0.000000e+00> : vector<298x128xf32>
    %48 = tpu.matmul %45, %47, %cst_32 {dimension_numbers = #tpu.dot_dimension_numbers<[1], [0], [0], [1], [0, 0, 1, 1], [], []>} : vector<298x256xbf16>, vector<256x128xbf16>, vector<298x128xf32> -> vector<298x128xf32>
    %49 = vector.extract_strided_slice %40 {offsets = [0, 0], sizes = [2, 128], strides = [1, 1]} : vector<300x128xf32> to vector<2x128xf32>
    %50 = vector.extract_strided_slice %48 {offsets = [0, 0], sizes = [2, 128], strides = [1, 1]} : vector<298x128xf32> to vector<2x128xf32>
    %51 = arith.addf %49, %50 : vector<2x128xf32>
    %c0_33 = arith.constant 0 : index
    %c0_34 = arith.constant 0 : index
    %52 = vector.load %arg17[%c0_33, %c0_34] : memref<300x128xf32, #tpu.memory_space<vmem>>, vector<2x128xf32>
    tpu.vector_store %arg17[%c0_33, %c0_34], %51 {strides = array<i32>} : memref<300x128xf32, #tpu.memory_space<vmem>>, vector<2x128xf32>,
    %53 = vector.extract_strided_slice %40 {offsets = [2, 0], sizes = [296, 128], strides = [1, 1]} : vector<300x128xf32> to vector<296x128xf32>
    %54 = vector.extract_strided_slice %44 {offsets = [0, 0], sizes = [296, 128], strides = [1, 1]} : vector<298x128xf32> to vector<296x128xf32>
    %55 = arith.addf %53, %54 : vector<296x128xf32>
    %56 = vector.extract_strided_slice %48 {offsets = [2, 0], sizes = [296, 128], strides = [1, 1]} : vector<298x128xf32> to vector<296x128xf32>
    %57 = arith.addf %55, %56 : vector<296x128xf32>
    %c2_35 = arith.constant 2 : index
    %c0_36 = arith.constant 0 : index
    %58 = vector.load %arg17[%c2_35, %c0_36] : memref<300x128xf32, #tpu.memory_space<vmem>>, vector<296x128xf32>
    tpu.vector_store %arg17[%c2_35, %c0_36], %57 {strides = array<i32>} : memref<300x128xf32, #tpu.memory_space<vmem>>, vector<296x128xf32>,
    %59 = vector.extract_strided_slice %40 {offsets = [298, 0], sizes = [2, 128], strides = [1, 1]} : vector<300x128xf32> to vector<2x128xf32>
    %60 = vector.extract_strided_slice %44 {offsets = [296, 0], sizes = [2, 128], strides = [1, 1]} : vector<298x128xf32> to vector<2x128xf32>
    %61 = arith.addf %59, %60 : vector<2x128xf32>
    %c298 = arith.constant 298 : index
    %c0_37 = arith.constant 0 : index
    %62 = vector.load %arg17[%c298, %c0_37] : memref<300x128xf32, #tpu.memory_space<vmem>>, vector<2x128xf32>
    tpu.vector_store %arg17[%c298, %c0_37], %61 {strides = array<i32>} : memref<300x128xf32, #tpu.memory_space<vmem>>, vector<2x128xf32>,
    %c0_38 = arith.constant 0 : index
    %c0_39 = arith.constant 0 : index
    %63 = vector.load %arg5[%c0_38, %c0_39] : memref<2x128xf32, #tpu.memory_space<vmem>>, vector<2x128xf32>
    %64 = vector.extract_strided_slice %63 {offsets = [0, 0], sizes = [1, 128], strides = [1, 1]} : vector<2x128xf32> to vector<1x128xf32>
    %65 = vector.extract_strided_slice %63 {offsets = [1, 0], sizes = [1, 128], strides = [1, 1]} : vector<2x128xf32> to vector<1x128xf32>
    %c0_40 = arith.constant 0 : index
    %c0_41 = arith.constant 0 : index
    %66 = vector.load %arg17[%c0_40, %c0_41] : memref<300x128xf32, #tpu.memory_space<vmem>>, vector<300x128xf32>
    %67 = vector.broadcast %64 : vector<1x128xf32> to vector<300x128xf32>
    %68 = arith.mulf %66, %67 : vector<300x128xf32>
    %69 = vector.broadcast %65 : vector<1x128xf32> to vector<300x128xf32>
    %70 = arith.addf %68, %69 : vector<300x128xf32>
    %cst_42 = arith.constant 0.000000e+00 : f32
    %71 = vector.broadcast %cst_42 : f32 to vector<300x128xf32>
    %72 = arith.maximumf %70, %71 : vector<300x128xf32>
    %73 = arith.truncf %72 : vector<300x128xf32> to vector<300x128xbf16>
    %c1_43 = arith.constant 1 : index
    %c0_44 = arith.constant 0 : index
    %c0_45 = arith.constant 0 : index
    %74 = vector.load %arg6[%c1_43, %c0_44, %c0_45] : memref<3x128x128xbf16, #tpu.memory_space<vmem>>, vector<1x128x128xbf16>
    %75 = vector.shape_cast %74 : vector<1x128x128xbf16> to vector<128x128xbf16>
    %cst_46 = arith.constant dense<0.000000e+00> : vector<300x128xf32>
    %76 = tpu.matmul %73, %75, %cst_46 {dimension_numbers = #tpu.dot_dimension_numbers<[1], [0], [0], [1], [0, 0, 1, 1], [], []>} : vector<300x128xbf16>, vector<128x128xbf16>, vector<300x128xf32> -> vector<300x128xf32>
    %77 = vector.extract_strided_slice %73 {offsets = [0, 0], sizes = [298, 128], strides = [1, 1]} : vector<300x128xbf16> to vector<298x128xbf16>
    %c0_47 = arith.constant 0 : index
    %c0_48 = arith.constant 0 : index
    %c0_49 = arith.constant 0 : index
    %78 = vector.load %arg6[%c0_47, %c0_48, %c0_49] : memref<3x128x128xbf16, #tpu.memory_space<vmem>>, vector<1x128x128xbf16>
    %79 = vector.shape_cast %78 : vector<1x128x128xbf16> to vector<128x128xbf16>
    %cst_50 = arith.constant dense<0.000000e+00> : vector<298x128xf32>
    %80 = tpu.matmul %77, %79, %cst_50 {dimension_numbers = #tpu.dot_dimension_numbers<[1], [0], [0], [1], [0, 0, 1, 1], [], []>} : vector<298x128xbf16>, vector<128x128xbf16>, vector<298x128xf32> -> vector<298x128xf32>
    %81 = vector.extract_strided_slice %73 {offsets = [2, 0], sizes = [298, 128], strides = [1, 1]} : vector<300x128xbf16> to vector<298x128xbf16>
    %c2_51 = arith.constant 2 : index
    %c0_52 = arith.constant 0 : index
    %c0_53 = arith.constant 0 : index
    %82 = vector.load %arg6[%c2_51, %c0_52, %c0_53] : memref<3x128x128xbf16, #tpu.memory_space<vmem>>, vector<1x128x128xbf16>
    %83 = vector.shape_cast %82 : vector<1x128x128xbf16> to vector<128x128xbf16>
    %cst_54 = arith.constant dense<0.000000e+00> : vector<298x128xf32>
    %84 = tpu.matmul %81, %83, %cst_54 {dimension_numbers = #tpu.dot_dimension_numbers<[1], [0], [0], [1], [0, 0, 1, 1], [], []>} : vector<298x128xbf16>, vector<128x128xbf16>, vector<298x128xf32> -> vector<298x128xf32>
    %85 = vector.extract_strided_slice %76 {offsets = [0, 0], sizes = [2, 128], strides = [1, 1]} : vector<300x128xf32> to vector<2x128xf32>
    %86 = vector.extract_strided_slice %84 {offsets = [0, 0], sizes = [2, 128], strides = [1, 1]} : vector<298x128xf32> to vector<2x128xf32>
    %87 = arith.addf %85, %86 : vector<2x128xf32>
    %c0_55 = arith.constant 0 : index
    %c0_56 = arith.constant 0 : index
    %88 = vector.load %arg18[%c0_55, %c0_56] : memref<300x128xf32, #tpu.memory_space<vmem>>, vector<2x128xf32>
    tpu.vector_store %arg18[%c0_55, %c0_56], %87 {strides = array<i32>} : memref<300x128xf32, #tpu.memory_space<vmem>>, vector<2x128xf32>,
    %89 = vector.extract_strided_slice %76 {offsets = [2, 0], sizes = [296, 128], strides = [1, 1]} : vector<300x128xf32> to vector<296x128xf32>
    %90 = vector.extract_strided_slice %80 {offsets = [0, 0], sizes = [296, 128], strides = [1, 1]} : vector<298x128xf32> to vector<296x128xf32>
    %91 = arith.addf %89, %90 : vector<296x128xf32>
    %92 = vector.extract_strided_slice %84 {offsets = [2, 0], sizes = [296, 128], strides = [1, 1]} : vector<298x128xf32> to vector<296x128xf32>
    %93 = arith.addf %91, %92 : vector<296x128xf32>
    %c2_57 = arith.constant 2 : index
    %c0_58 = arith.constant 0 : index
    %94 = vector.load %arg18[%c2_57, %c0_58] : memref<300x128xf32, #tpu.memory_space<vmem>>, vector<296x128xf32>
    tpu.vector_store %arg18[%c2_57, %c0_58], %93 {strides = array<i32>} : memref<300x128xf32, #tpu.memory_space<vmem>>, vector<296x128xf32>,
    %95 = vector.extract_strided_slice %76 {offsets = [298, 0], sizes = [2, 128], strides = [1, 1]} : vector<300x128xf32> to vector<2x128xf32>
    %96 = vector.extract_strided_slice %80 {offsets = [296, 0], sizes = [2, 128], strides = [1, 1]} : vector<298x128xf32> to vector<2x128xf32>
    %97 = arith.addf %95, %96 : vector<2x128xf32>
    %c298_59 = arith.constant 298 : index
    %c0_60 = arith.constant 0 : index
    %98 = vector.load %arg18[%c298_59, %c0_60] : memref<300x128xf32, #tpu.memory_space<vmem>>, vector<2x128xf32>
    tpu.vector_store %arg18[%c298_59, %c0_60], %97 {strides = array<i32>} : memref<300x128xf32, #tpu.memory_space<vmem>>, vector<2x128xf32>,
    %c0_61 = arith.constant 0 : index
    %c0_62 = arith.constant 0 : index
    %99 = vector.load %arg7[%c0_61, %c0_62] : memref<2x128xf32, #tpu.memory_space<vmem>>, vector<2x128xf32>
    %100 = vector.extract_strided_slice %99 {offsets = [0, 0], sizes = [1, 128], strides = [1, 1]} : vector<2x128xf32> to vector<1x128xf32>
    %101 = vector.extract_strided_slice %99 {offsets = [1, 0], sizes = [1, 128], strides = [1, 1]} : vector<2x128xf32> to vector<1x128xf32>
    %c0_63 = arith.constant 0 : index
    %c0_64 = arith.constant 0 : index
    %102 = tpu.strided_load %arg18[%c0_63, %c0_64] {strides = array<i32: 2, 1>} : memref<300x128xf32, #tpu.memory_space<vmem>>, vector<150x128xf32>
    %c1_65 = arith.constant 1 : index
    %c0_66 = arith.constant 0 : index
    %103 = tpu.strided_load %arg18[%c1_65, %c0_66] {strides = array<i32: 2, 1>} : memref<300x128xf32, #tpu.memory_space<vmem>>, vector<150x128xf32>
    %104 = vector.broadcast %100 : vector<1x128xf32> to vector<150x128xf32>
    %105 = arith.mulf %102, %104 : vector<150x128xf32>
    %106 = vector.broadcast %101 : vector<1x128xf32> to vector<150x128xf32>
    %107 = arith.addf %105, %106 : vector<150x128xf32>
    %cst_67 = arith.constant 0.000000e+00 : f32
    %108 = vector.broadcast %cst_67 : f32 to vector<150x128xf32>
    %109 = arith.maximumf %107, %108 : vector<150x128xf32>
    %110 = vector.broadcast %100 : vector<1x128xf32> to vector<150x128xf32>
    %111 = arith.mulf %103, %110 : vector<150x128xf32>
    %112 = vector.broadcast %101 : vector<1x128xf32> to vector<150x128xf32>
    %113 = arith.addf %111, %112 : vector<150x128xf32>
    %cst_68 = arith.constant 0.000000e+00 : f32
    %114 = vector.broadcast %cst_68 : f32 to vector<150x128xf32>
    %115 = arith.maximumf %113, %114 : vector<150x128xf32>
    %116 = arith.maximumf %109, %115 : vector<150x128xf32>
    %117 = arith.truncf %116 : vector<150x128xf32> to vector<150x128xbf16>
    %c1_69 = arith.constant 1 : index
    %c0_70 = arith.constant 0 : index
    %c0_71 = arith.constant 0 : index
    %118 = vector.load %arg8[%c1_69, %c0_70, %c0_71] : memref<3x128x64xbf16, #tpu.memory_space<vmem>>, vector<1x128x64xbf16>
    %119 = vector.shape_cast %118 : vector<1x128x64xbf16> to vector<128x64xbf16>
    %cst_72 = arith.constant dense<0.000000e+00> : vector<150x64xf32>
    %120 = tpu.matmul %117, %119, %cst_72 {dimension_numbers = #tpu.dot_dimension_numbers<[1], [0], [0], [1], [0, 0, 1, 1], [], []>} : vector<150x128xbf16>, vector<128x64xbf16>, vector<150x64xf32> -> vector<150x64xf32>
    %121 = vector.extract_strided_slice %117 {offsets = [0, 0], sizes = [148, 128], strides = [1, 1]} : vector<150x128xbf16> to vector<148x128xbf16>
    %c0_73 = arith.constant 0 : index
    %c0_74 = arith.constant 0 : index
    %c0_75 = arith.constant 0 : index
    %122 = vector.load %arg8[%c0_73, %c0_74, %c0_75] : memref<3x128x64xbf16, #tpu.memory_space<vmem>>, vector<1x128x64xbf16>
    %123 = vector.shape_cast %122 : vector<1x128x64xbf16> to vector<128x64xbf16>
    %cst_76 = arith.constant dense<0.000000e+00> : vector<148x64xf32>
    %124 = tpu.matmul %121, %123, %cst_76 {dimension_numbers = #tpu.dot_dimension_numbers<[1], [0], [0], [1], [0, 0, 1, 1], [], []>} : vector<148x128xbf16>, vector<128x64xbf16>, vector<148x64xf32> -> vector<148x64xf32>
    %125 = vector.extract_strided_slice %117 {offsets = [2, 0], sizes = [148, 128], strides = [1, 1]} : vector<150x128xbf16> to vector<148x128xbf16>
    %c2_77 = arith.constant 2 : index
    %c0_78 = arith.constant 0 : index
    %c0_79 = arith.constant 0 : index
    %126 = vector.load %arg8[%c2_77, %c0_78, %c0_79] : memref<3x128x64xbf16, #tpu.memory_space<vmem>>, vector<1x128x64xbf16>
    %127 = vector.shape_cast %126 : vector<1x128x64xbf16> to vector<128x64xbf16>
    %cst_80 = arith.constant dense<0.000000e+00> : vector<148x64xf32>
    %128 = tpu.matmul %125, %127, %cst_80 {dimension_numbers = #tpu.dot_dimension_numbers<[1], [0], [0], [1], [0, 0, 1, 1], [], []>} : vector<148x128xbf16>, vector<128x64xbf16>, vector<148x64xf32> -> vector<148x64xf32>
    %129 = vector.extract_strided_slice %120 {offsets = [0, 0], sizes = [2, 64], strides = [1, 1]} : vector<150x64xf32> to vector<2x64xf32>
    %130 = vector.extract_strided_slice %128 {offsets = [0, 0], sizes = [2, 64], strides = [1, 1]} : vector<148x64xf32> to vector<2x64xf32>
    %131 = arith.addf %129, %130 : vector<2x64xf32>
    %c0_81 = arith.constant 0 : index
    %c0_82 = arith.constant 0 : index
    %132 = vector.load %arg19[%c0_81, %c0_82] : memref<150x64xf32, #tpu.memory_space<vmem>>, vector<2x64xf32>
    tpu.vector_store %arg19[%c0_81, %c0_82], %131 {strides = array<i32>} : memref<150x64xf32, #tpu.memory_space<vmem>>, vector<2x64xf32>,
    %133 = vector.extract_strided_slice %120 {offsets = [2, 0], sizes = [146, 64], strides = [1, 1]} : vector<150x64xf32> to vector<146x64xf32>
    %134 = vector.extract_strided_slice %124 {offsets = [0, 0], sizes = [146, 64], strides = [1, 1]} : vector<148x64xf32> to vector<146x64xf32>
    %135 = arith.addf %133, %134 : vector<146x64xf32>
    %136 = vector.extract_strided_slice %128 {offsets = [2, 0], sizes = [146, 64], strides = [1, 1]} : vector<148x64xf32> to vector<146x64xf32>
    %137 = arith.addf %135, %136 : vector<146x64xf32>
    %c2_83 = arith.constant 2 : index
    %c0_84 = arith.constant 0 : index
    %138 = vector.load %arg19[%c2_83, %c0_84] : memref<150x64xf32, #tpu.memory_space<vmem>>, vector<146x64xf32>
    tpu.vector_store %arg19[%c2_83, %c0_84], %137 {strides = array<i32>} : memref<150x64xf32, #tpu.memory_space<vmem>>, vector<146x64xf32>,
    %139 = vector.extract_strided_slice %120 {offsets = [148, 0], sizes = [2, 64], strides = [1, 1]} : vector<150x64xf32> to vector<2x64xf32>
    %140 = vector.extract_strided_slice %124 {offsets = [146, 0], sizes = [2, 64], strides = [1, 1]} : vector<148x64xf32> to vector<2x64xf32>
    %141 = arith.addf %139, %140 : vector<2x64xf32>
    %c148 = arith.constant 148 : index
    %c0_85 = arith.constant 0 : index
    %142 = vector.load %arg19[%c148, %c0_85] : memref<150x64xf32, #tpu.memory_space<vmem>>, vector<2x64xf32>
    tpu.vector_store %arg19[%c148, %c0_85], %141 {strides = array<i32>} : memref<150x64xf32, #tpu.memory_space<vmem>>, vector<2x64xf32>,
    %c0_86 = arith.constant 0 : index
    %c0_87 = arith.constant 0 : index
    %143 = vector.load %arg9[%c0_86, %c0_87] : memref<2x64xf32, #tpu.memory_space<vmem>>, vector<2x64xf32>
    %144 = vector.extract_strided_slice %143 {offsets = [0, 0], sizes = [1, 64], strides = [1, 1]} : vector<2x64xf32> to vector<1x64xf32>
    %145 = vector.extract_strided_slice %143 {offsets = [1, 0], sizes = [1, 64], strides = [1, 1]} : vector<2x64xf32> to vector<1x64xf32>
    %c0_88 = arith.constant 0 : index
    %c0_89 = arith.constant 0 : index
    %146 = tpu.strided_load %arg19[%c0_88, %c0_89] {strides = array<i32: 2, 1>} : memref<150x64xf32, #tpu.memory_space<vmem>>, vector<75x64xf32>
    %c1_90 = arith.constant 1 : index
    %c0_91 = arith.constant 0 : index
    %147 = tpu.strided_load %arg19[%c1_90, %c0_91] {strides = array<i32: 2, 1>} : memref<150x64xf32, #tpu.memory_space<vmem>>, vector<75x64xf32>
    %148 = vector.broadcast %144 : vector<1x64xf32> to vector<75x64xf32>
    %149 = arith.mulf %146, %148 : vector<75x64xf32>
    %150 = vector.broadcast %145 : vector<1x64xf32> to vector<75x64xf32>
    %151 = arith.addf %149, %150 : vector<75x64xf32>
    %cst_92 = arith.constant 0.000000e+00 : f32
    %152 = vector.broadcast %cst_92 : f32 to vector<75x64xf32>
    %153 = arith.maximumf %151, %152 : vector<75x64xf32>
    %154 = vector.broadcast %144 : vector<1x64xf32> to vector<75x64xf32>
    %155 = arith.mulf %147, %154 : vector<75x64xf32>
    %156 = vector.broadcast %145 : vector<1x64xf32> to vector<75x64xf32>
    %157 = arith.addf %155, %156 : vector<75x64xf32>
    %cst_93 = arith.constant 0.000000e+00 : f32
    %158 = vector.broadcast %cst_93 : f32 to vector<75x64xf32>
    %159 = arith.maximumf %157, %158 : vector<75x64xf32>
    %160 = arith.maximumf %153, %159 : vector<75x64xf32>
    %161 = arith.truncf %160 : vector<75x64xf32> to vector<75x64xbf16>
    %c0_94 = arith.constant 0 : index
    %c0_95 = arith.constant 0 : index
    %162 = vector.load %arg13[%c0_94, %c0_95] : memref<1x2xf32, #tpu.memory_space<vmem>>, vector<1x2xf32>
    %163 = vector.extract_strided_slice %162 {offsets = [0, 0], sizes = [1, 1], strides = [1, 1]} : vector<1x2xf32> to vector<1x1xf32>
    %164 = vector.extract_strided_slice %162 {offsets = [0, 1], sizes = [1, 1], strides = [1, 1]} : vector<1x2xf32> to vector<1x1xf32>
    %c0_96 = arith.constant 0 : index
    %c0_97 = arith.constant 0 : index
    %165 = vector.load %arg10[%c0_96, %c0_97] : memref<75x64xf32, #tpu.memory_space<vmem>>, vector<75x64xf32>
    %166 = arith.extf %161 : vector<75x64xbf16> to vector<75x64xf32>
    %167 = arith.mulf %166, %165 : vector<75x64xf32>
    %cst_98 = arith.constant dense<0.000000e+00> : vector<75xf32>
    %168 = vector.multi_reduction <add>, %167, %cst_98 [1] : vector<75x64xf32> to vector<75xf32>
    %169 = vector.shape_cast %168 : vector<75xf32> to vector<75x1xf32>
    %cst_99 = arith.constant dense<0.000000e+00> : vector<1xf32>
    %170 = vector.multi_reduction <add>, %169, %cst_99 [0] : vector<75x1xf32> to vector<1xf32>
    %171 = vector.shape_cast %170 : vector<1xf32> to vector<1x1xf32>
    %172 = arith.addf %171, %163 : vector<1x1xf32>
    %c0_100 = arith.constant 0 : index
    %c0_101 = arith.constant 0 : index
    %173 = vector.load %arg11[%c0_100, %c0_101] : memref<1x64xbf16, #tpu.memory_space<vmem>>, vector<1x64xbf16>
    %cst_102 = arith.constant dense<0.000000e+00> : vector<1x75xf32>
    %174 = tpu.matmul %173, %161, %cst_102 {dimension_numbers = #tpu.dot_dimension_numbers<[1], [1], [0], [0], [0, 0, 1, 0], [], []>} : vector<1x64xbf16>, vector<75x64xbf16>, vector<1x75xf32> -> vector<1x75xf32>
    %175 = vector.broadcast %172 : vector<1x1xf32> to vector<1x75xf32>
    %176 = arith.addf %174, %175 : vector<1x75xf32>
    %cst_103 = arith.constant dense<0xFF800000> : vector<1xf32>
    %177 = vector.multi_reduction <maximumf>, %176, %cst_103 [1] : vector<1x75xf32> to vector<1xf32>
    %178 = vector.shape_cast %177 : vector<1xf32> to vector<1x1xf32>
    %179 = vector.broadcast %178 : vector<1x1xf32> to vector<1x75xf32>
    %180 = arith.subf %176, %179 : vector<1x75xf32>
    %181 = math.exp %180 : vector<1x75xf32>
    %cst_104 = arith.constant dense<0.000000e+00> : vector<1xf32>
    %182 = vector.multi_reduction <add>, %181, %cst_104 [1] : vector<1x75xf32> to vector<1xf32>
    %183 = vector.shape_cast %182 : vector<1xf32> to vector<1x1xf32>
    %184 = tpu.reciprocal %183 {approx = true} : vector<1x1xf32> -> vector<1x1xf32>
    %185 = vector.broadcast %184 : vector<1x1xf32> to vector<1x75xf32>
    %186 = arith.mulf %181, %185 : vector<1x75xf32>
    %cst_105 = arith.constant dense<0.000000e+00> : vector<1x64xf32>
    %187 = tpu.matmul %186, %161, %cst_105 {dimension_numbers = #tpu.dot_dimension_numbers<[1], [0], [0], [1], [0, 0, 1, 1], [], []>} : vector<1x75xf32>, vector<75x64xbf16>, vector<1x64xf32> -> vector<1x64xf32>
    %c0_106 = arith.constant 0 : index
    %c0_107 = arith.constant 0 : index
    %188 = vector.load %arg12[%c0_106, %c0_107] : memref<1x64xf32, #tpu.memory_space<vmem>>, vector<1x64xf32>
    %189 = arith.mulf %187, %188 : vector<1x64xf32>
    %cst_108 = arith.constant dense<0.000000e+00> : vector<1xf32>
    %190 = vector.multi_reduction <add>, %189, %cst_108 [1] : vector<1x64xf32> to vector<1xf32>
    %191 = vector.shape_cast %190 : vector<1xf32> to vector<1x1xf32>
    %192 = arith.addf %191, %164 : vector<1x1xf32>
    %193 = arith.negf %192 : vector<1x1xf32>
    %194 = math.exp %193 : vector<1x1xf32>
    %cst_109 = arith.constant 1.000000e+00 : f32
    %195 = vector.broadcast %cst_109 : f32 to vector<1x1xf32>
    %196 = arith.addf %195, %194 : vector<1x1xf32>
    %197 = arith.divf %195, %196 : vector<1x1xf32>
    %c0_110 = arith.constant 0 : index
    %c0_111 = arith.constant 0 : index
    %c0_112 = arith.constant 0 : index
    %198 = vector.load %arg14[%c0_110, %c0_111, %c0_112] : memref<1x1x1xf32, #tpu.memory_space<vmem>>, vector<1x1x1xf32>
    %199 = vector.shape_cast %198 : vector<1x1x1xf32> to vector<1x1xf32>
    %200 = vector.shape_cast %197 : vector<1x1xf32> to vector<1x1x1xf32>
    tpu.vector_store %arg14[%c0_110, %c0_111, %c0_112], %200 {strides = array<i32>} : memref<1x1x1xf32, #tpu.memory_space<vmem>>, vector<1x1x1xf32>,
    %c0_113 = arith.constant 0 : index
    %c0_114 = arith.constant 0 : index
    %c0_115 = arith.constant 0 : index
    %201 = vector.load %arg15[%c0_113, %c0_114, %c0_115] : memref<1x1x75xf32, #tpu.memory_space<vmem>>, vector<1x1x75xf32>
    %202 = vector.shape_cast %201 : vector<1x1x75xf32> to vector<1x75xf32>
    %203 = vector.shape_cast %176 : vector<1x75xf32> to vector<1x1x75xf32>
    tpu.vector_store %arg15[%c0_113, %c0_114, %c0_115], %203 {strides = array<i32>} : memref<1x1x75xf32, #tpu.memory_space<vmem>>, vector<1x1x75xf32>,
    return
  }
  func.func @transform_0(%arg0: i32) -> (i32, i32, i32) {
    %c0_i32 = arith.constant 0 : i32
    %c0_i32_0 = arith.constant 0 : i32
    %c0_i32_1 = arith.constant 0 : i32
    return %arg0, %c0_i32, %c0_i32_0 : i32, i32, i32
  }
  func.func @transform_1(%arg0: i32) -> (i32, i32, i32) {
    %c0_i32 = arith.constant 0 : i32
    %c0_i32_0 = arith.constant 0 : i32
    %c0_i32_1 = arith.constant 0 : i32
    %c0_i32_2 = arith.constant 0 : i32
    return %c0_i32, %c0_i32_0, %c0_i32_1 : i32, i32, i32
  }
  func.func @transform_2(%arg0: i32) -> (i32, i32) {
    %c0_i32 = arith.constant 0 : i32
    %c0_i32_0 = arith.constant 0 : i32
    %c0_i32_1 = arith.constant 0 : i32
    return %c0_i32, %c0_i32_0 : i32, i32
  }
  func.func @transform_3(%arg0: i32) -> (i32, i32, i32) {
    %c0_i32 = arith.constant 0 : i32
    %c0_i32_0 = arith.constant 0 : i32
    %c0_i32_1 = arith.constant 0 : i32
    %c0_i32_2 = arith.constant 0 : i32
    return %c0_i32, %c0_i32_0, %c0_i32_1 : i32, i32, i32
  }
  func.func @transform_4(%arg0: i32) -> (i32, i32) {
    %c0_i32 = arith.constant 0 : i32
    %c0_i32_0 = arith.constant 0 : i32
    %c0_i32_1 = arith.constant 0 : i32
    return %c0_i32, %c0_i32_0 : i32, i32
  }
  func.func @transform_5(%arg0: i32) -> (i32, i32, i32) {
    %c0_i32 = arith.constant 0 : i32
    %c0_i32_0 = arith.constant 0 : i32
    %c0_i32_1 = arith.constant 0 : i32
    %c0_i32_2 = arith.constant 0 : i32
    return %c0_i32, %c0_i32_0, %c0_i32_1 : i32, i32, i32
  }
  func.func @transform_6(%arg0: i32) -> (i32, i32) {
    %c0_i32 = arith.constant 0 : i32
    %c0_i32_0 = arith.constant 0 : i32
    %c0_i32_1 = arith.constant 0 : i32
    return %c0_i32, %c0_i32_0 : i32, i32
  }
  func.func @transform_7(%arg0: i32) -> (i32, i32, i32) {
    %c0_i32 = arith.constant 0 : i32
    %c0_i32_0 = arith.constant 0 : i32
    %c0_i32_1 = arith.constant 0 : i32
    %c0_i32_2 = arith.constant 0 : i32
    return %c0_i32, %c0_i32_0, %c0_i32_1 : i32, i32, i32
  }
  func.func @transform_8(%arg0: i32) -> (i32, i32) {
    %c0_i32 = arith.constant 0 : i32
    %c0_i32_0 = arith.constant 0 : i32
    %c0_i32_1 = arith.constant 0 : i32
    return %c0_i32, %c0_i32_0 : i32, i32
  }
  func.func @transform_9(%arg0: i32) -> (i32, i32) {
    %c0_i32 = arith.constant 0 : i32
    %c0_i32_0 = arith.constant 0 : i32
    %c0_i32_1 = arith.constant 0 : i32
    return %c0_i32, %c0_i32_0 : i32, i32
  }
  func.func @transform_10(%arg0: i32) -> (i32, i32) {
    %c0_i32 = arith.constant 0 : i32
    %c0_i32_0 = arith.constant 0 : i32
    %c0_i32_1 = arith.constant 0 : i32
    return %c0_i32, %c0_i32_0 : i32, i32
  }
  func.func @transform_11(%arg0: i32) -> (i32, i32) {
    %c0_i32 = arith.constant 0 : i32
    %c0_i32_0 = arith.constant 0 : i32
    %c0_i32_1 = arith.constant 0 : i32
    return %c0_i32, %c0_i32_0 : i32, i32
  }
  func.func @transform_12(%arg0: i32) -> (i32, i32) {
    %c0_i32 = arith.constant 0 : i32
    %c0_i32_0 = arith.constant 0 : i32
    %c0_i32_1 = arith.constant 0 : i32
    return %c0_i32, %c0_i32_0 : i32, i32
  }
  func.func @transform_13(%arg0: i32) -> (i32, i32, i32) {
    %c0_i32 = arith.constant 0 : i32
    %c0_i32_0 = arith.constant 0 : i32
    %c0_i32_1 = arith.constant 0 : i32
    return %arg0, %c0_i32, %c0_i32_0 : i32, i32, i32
  }
  func.func @transform_14(%arg0: i32) -> (i32, i32, i32) {
    %c0_i32 = arith.constant 0 : i32
    %c0_i32_0 = arith.constant 0 : i32
    %c0_i32_1 = arith.constant 0 : i32
    return %arg0, %c0_i32, %c0_i32_0 : i32, i32, i32
  }
}

</mosaic_0001>

<llo_original>
// kernel: attn_pooling_forward.1
$region0: #{attn_pooling_forward.1}
  #allocation0 [shape = 'u32[]', space=smem, size = 0x4, offset = 0x4, fixed_abs, tag = 'smem constant byte address 0x4 - core index']
  #allocation1 [shape = 'u32[144,128]{1,0:T(1,128)}', space=vmem, size = 0x12000, scoped, tag = 'internal scratch']
  #allocation2 [shape = 'f32[300,256]{1,0:T(8,128)}', space=vmem, size = 0x4c000, scoped, tag = 'scratch operand']
  #allocation3 [shape = 'f32[300,128]{1,0:T(8,128)}', space=vmem, size = 0x26000, scoped, tag = 'scratch operand']
  #allocation4 [shape = 'f32[300,128]{1,0:T(8,128)}', space=vmem, size = 0x26000, scoped, tag = 'scratch operand']
  #allocation5 [shape = 'f32[150,64]{1,0:T(8,128)}', space=vmem, size = 0x13000, scoped, tag = 'scratch operand']
  %s0 = inlined_call_operand.vmem [shape: bf16[2,300,513], index: 0, kind: input, shape index: {}]
  %s1 = inlined_call_operand.vmem [shape: bf16[3,513,256], index: 1, kind: input, shape index: {}]
  %s2 = inlined_call_operand.vmem [shape: f32[2,256], index: 2, kind: input, shape index: {}]
  %s3 = inlined_call_operand.vmem [shape: bf16[3,256,128], index: 3, kind: input, shape index: {}]
  %s4 = inlined_call_operand.vmem [shape: f32[2,128], index: 4, kind: input, shape index: {}]
  %s5 = inlined_call_operand.vmem [shape: bf16[3,128,128], index: 5, kind: input, shape index: {}]
  %s6 = inlined_call_operand.vmem [shape: f32[2,128], index: 6, kind: input, shape index: {}]
  %s7 = inlined_call_operand.vmem [shape: bf16[3,128,64], index: 7, kind: input, shape index: {}]
  %s8 = inlined_call_operand.vmem [shape: f32[2,64], index: 8, kind: input, shape index: {}]
  %s9 = inlined_call_operand.vmem [shape: f32[75,64], index: 9, kind: input, shape index: {}]
  %s10 = inlined_call_operand.vmem [shape: bf16[1,64], index: 10, kind: input, shape index: {}]
  %s11 = inlined_call_operand.vmem [shape: f32[1,64], index: 11, kind: input, shape index: {}]
  %s12 = inlined_call_operand.vmem [shape: f32[1,2], index: 12, kind: input, shape index: {}]
  %s13 = inlined_call_operand.vmem [shape: f32[2,1,1], index: 13, kind: output, shape index: {0}]
  %s14 = inlined_call_operand.hbm [shape: f32[2,1,75], index: 14, kind: output, shape index: {1}]
  %15 = xla_tuple %s13, %s14
  %s16 = sld [smem:[#allocation0]]
  $region93: #{attn_pooling_forward.1} parent=0
    _
  %s18 = ssub.s32 1, %s16
  %s19 = scalar_select 0, %s18, %s16
  $region1: #{attn_pooling_forward.1} parent=0
    #allocation6 [shape = 'u8[1024]{0}', space=vmem, size = 0x400, scoped, tag = 'output window, operand 1']
    #allocation7 [shape = 's32[2]{0}', space=sflag, size = 0x8, scoped, tag = 'scoped memory for attn_pooling_forward.1']
    %20 = vsyncpa [#allocation7], 0
    %s21 = scalar_lea.sflag [#allocation7], 1
    %22 = vsyncpa %s21, 0
    loop: start=0, step=1, limit=4
    $region2: #{attn_pooling_forward.1} parent=1 // loop_pre_header
      _
    $region3: #{attn_pooling_forward.1} parent=1 // loop_header
      %s24 = sphi 0, %s28
      %p25 = scmp.ge.s32.totalorder %s24, 4
      %s34 = sphi 0, %s36
      %s37 = sphi 0, %s34
      %s38 = sphi 0, %s37
      %s54 = sphi 0, %s38
      %s58 = sphi 0, %s58
      %s60 = sphi 0, %s58
      %s61 = sphi 0, %s60
      %s75 = sphi 0, %s61
      %s79 = sphi 0, %s79
      %s81 = sphi 0, %s79
      %s82 = sphi 0, %s81
      %s96 = sphi 0, %s82
      %s100 = sphi 0, %s100
      %s102 = sphi 0, %s100
      %s103 = sphi 0, %s102
      %s117 = sphi 0, %s103
      %s121 = sphi 0, %s121
      %s123 = sphi 0, %s121
      %s124 = sphi 0, %s123
      %s138 = sphi 0, %s124
      %s142 = sphi 0, %s142
      %s144 = sphi 0, %s142
      %s145 = sphi 0, %s144
      %s159 = sphi 0, %s145
      %s163 = sphi 0, %s163
      %s165 = sphi 0, %s163
      %s166 = sphi 0, %s165
      %s180 = sphi 0, %s166
      %s184 = sphi 0, %s184
      %s186 = sphi 0, %s184
      %s187 = sphi 0, %s186
      %s201 = sphi 0, %s187
      %s205 = sphi 0, %s205
      %s207 = sphi 0, %s205
      %s208 = sphi 0, %s207
      %s222 = sphi 0, %s208
      %s226 = sphi 0, %s226
      %s228 = sphi 0, %s226
      %s229 = sphi 0, %s228
      %s243 = sphi 0, %s229
      %s247 = sphi 0, %s247
      %s249 = sphi 0, %s247
      %s250 = sphi 0, %s249
      %s264 = sphi 0, %s250
      %s268 = sphi 0, %s268
      %s270 = sphi 0, %s268
      %s271 = sphi 0, %s270
      %s285 = sphi 0, %s271
      %s289 = sphi 0, %s289
      %s291 = sphi 0, %s289
      %s292 = sphi 0, %s291
      %s306 = sphi 0, %s292
      %s312 = sphi 0, %s314
      %s315 = sphi 0, %s312
      %s316 = sphi 0, %s315
      %s332 = sphi 0, %s316
      %s338 = sphi 0, %s340
      %s341 = sphi 0, %s338
      %s342 = sphi 0, %s341
      %s358 = sphi 0, %s342
    $region4: #{attn_pooling_forward.1} parent=1 // loop_header_branch
      %27 = sbr.rel (%p25) target = $region8
    $region5: #{attn_pooling_forward.1} parent=1 // loop_body
      %s29 = ssub.s32 %s24, 1
      %s30 = ssub.s32 %s24, 2
      %s31 = sadd.s32 %s24, 1
      %s32 = ssub.s32 %s24, %s31
      %p33 = scmp.eq.s32.totalorder %s32, 0
      %s35 = sadd.s32 %s34, 1
      %s36 = scalar_select %p33, %s34, %s35
      %p39 = pneg %p33
      %p40 = scmp.eq.s32.totalorder %s24, 1
      %p41 = por %p39, %p40
      %p42 = scmp.ne.s32.totalorder %s34, %s37
      %p43 = scmp.eq.s32.totalorder %s24, 0
      %p44 = por %p42, %p43
      %p45 = scmp.ne.s32.totalorder %s34, %s37
      %p46 = scmp.eq.s32.totalorder %s29, 1
      %p47 = por %p45, %p46
      %p48 = scmp.ne.s32.totalorder %s37, %s38
      %p49 = scmp.eq.s32.totalorder %s29, 0
      %p50 = por %p48, %p49
      %p51 = scmp.ne.s32.totalorder %s37, %s38
      %p52 = scmp.eq.s32.totalorder %s30, 1
      %p53 = por %p51, %p52
      %p55 = scmp.ne.s32.totalorder %s38, %s54
      %p56 = scmp.eq.s32.totalorder %s30, 0
      %p57 = por %p55, %p56
      %s59 = sadd.s32 %s58, 1
      %p62 = scmp.eq.s32.totalorder %s24, 1
      %p63 = scmp.ne.s32.totalorder %s58, %s60
      %p64 = scmp.eq.s32.totalorder %s24, 0
      %p65 = por %p63, %p64
      %p66 = scmp.ne.s32.totalorder %s58, %s60
      %p67 = scmp.eq.s32.totalorder %s29, 1
      %p68 = por %p66, %p67
      %p69 = scmp.ne.s32.totalorder %s60, %s61
      %p70 = scmp.eq.s32.totalorder %s29, 0
      %p71 = por %p69, %p70
      %p72 = scmp.ne.s32.totalorder %s60, %s61
      %p73 = scmp.eq.s32.totalorder %s30, 1
      %p74 = por %p72, %p73
      %p76 = scmp.ne.s32.totalorder %s61, %s75
      %p77 = scmp.eq.s32.totalorder %s30, 0
      %p78 = por %p76, %p77
      %s80 = sadd.s32 %s79, 1
      %p83 = scmp.eq.s32.totalorder %s24, 1
      %p84 = scmp.ne.s32.totalorder %s79, %s81
      %p85 = scmp.eq.s32.totalorder %s24, 0
      %p86 = por %p84, %p85
      %p87 = scmp.ne.s32.totalorder %s79, %s81
      %p88 = scmp.eq.s32.totalorder %s29, 1
      %p89 = por %p87, %p88
      %p90 = scmp.ne.s32.totalorder %s81, %s82
      %p91 = scmp.eq.s32.totalorder %s29, 0
      %p92 = por %p90, %p91
      %p93 = scmp.ne.s32.totalorder %s81, %s82
      %p94 = scmp.eq.s32.totalorder %s30, 1
      %p95 = por %p93, %p94
      %p97 = scmp.ne.s32.totalorder %s82, %s96
      %p98 = scmp.eq.s32.totalorder %s30, 0
      %p99 = por %p97, %p98
      %s101 = sadd.s32 %s100, 1
      %p104 = scmp.eq.s32.totalorder %s24, 1
      %p105 = scmp.ne.s32.totalorder %s100, %s102
      %p106 = scmp.eq.s32.totalorder %s24, 0
      %p107 = por %p105, %p106
      %p108 = scmp.ne.s32.totalorder %s100, %s102
      %p109 = scmp.eq.s32.totalorder %s29, 1
      %p110 = por %p108, %p109
      %p111 = scmp.ne.s32.totalorder %s102, %s103
      %p112 = scmp.eq.s32.totalorder %s29, 0
      %p113 = por %p111, %p112
      %p114 = scmp.ne.s32.totalorder %s102, %s103
      %p115 = scmp.eq.s32.totalorder %s30, 1
      %p116 = por %p114, %p115
      %p118 = scmp.ne.s32.totalorder %s103, %s117
      %p119 = scmp.eq.s32.totalorder %s30, 0
      %p120 = por %p118, %p119
      %s122 = sadd.s32 %s121, 1
      %p125 = scmp.eq.s32.totalorder %s24, 1
      %p126 = scmp.ne.s32.totalorder %s121, %s123
      %p127 = scmp.eq.s32.totalorder %s24, 0
      %p128 = por %p126, %p127
      %p129 = scmp.ne.s32.totalorder %s121, %s123
      %p130 = scmp.eq.s32.totalorder %s29, 1
      %p131 = por %p129, %p130
      %p132 = scmp.ne.s32.totalorder %s123, %s124
      %p133 = scmp.eq.s32.totalorder %s29, 0
      %p134 = por %p132, %p133
      %p135 = scmp.ne.s32.totalorder %s123, %s124
      %p136 = scmp.eq.s32.totalorder %s30, 1
      %p137 = por %p135, %p136
      %p139 = scmp.ne.s32.totalorder %s124, %s138
      %p140 = scmp.eq.s32.totalorder %s30, 0
      %p141 = por %p139, %p140
      %s143 = sadd.s32 %s142, 1
      %p146 = scmp.eq.s32.totalorder %s24, 1
      %p147 = scmp.ne.s32.totalorder %s142, %s144
      %p148 = scmp.eq.s32.totalorder %s24, 0
      %p149 = por %p147, %p148
      %p150 = scmp.ne.s32.totalorder %s142, %s144
      %p151 = scmp.eq.s32.totalorder %s29, 1
      %p152 = por %p150, %p151
      %p153 = scmp.ne.s32.totalorder %s144, %s145
      %p154 = scmp.eq.s32.totalorder %s29, 0
      %p155 = por %p153, %p154
      %p156 = scmp.ne.s32.totalorder %s144, %s145
      %p157 = scmp.eq.s32.totalorder %s30, 1
      %p158 = por %p156, %p157
      %p160 = scmp.ne.s32.totalorder %s145, %s159
      %p161 = scmp.eq.s32.totalorder %s30, 0
      %p162 = por %p160, %p161
      %s164 = sadd.s32 %s163, 1
      %p167 = scmp.eq.s32.totalorder %s24, 1
      %p168 = scmp.ne.s32.totalorder %s163, %s165
      %p169 = scmp.eq.s32.totalorder %s24, 0
      %p170 = por %p168, %p169
      %p171 = scmp.ne.s32.totalorder %s163, %s165
      %p172 = scmp.eq.s32.totalorder %s29, 1
      %p173 = por %p171, %p172
      %p174 = scmp.ne.s32.totalorder %s165, %s166
      %p175 = scmp.eq.s32.totalorder %s29, 0
      %p176 = por %p174, %p175
      %p177 = scmp.ne.s32.totalorder %s165, %s166
      %p178 = scmp.eq.s32.totalorder %s30, 1
      %p179 = por %p177, %p178
      %p181 = scmp.ne.s32.totalorder %s166, %s180
      %p182 = scmp.eq.s32.totalorder %s30, 0
      %p183 = por %p181, %p182
      %s185 = sadd.s32 %s184, 1
      %p188 = scmp.eq.s32.totalorder %s24, 1
      %p189 = scmp.ne.s32.totalorder %s184, %s186
      %p190 = scmp.eq.s32.totalorder %s24, 0
      %p191 = por %p189, %p190
      %p192 = scmp.ne.s32.totalorder %s184, %s186
      %p193 = scmp.eq.s32.totalorder %s29, 1
      %p194 = por %p192, %p193
      %p195 = scmp.ne.s32.totalorder %s186, %s187
      %p196 = scmp.eq.s32.totalorder %s29, 0
      %p197 = por %p195, %p196
      %p198 = scmp.ne.s32.totalorder %s186, %s187
      %p199 = scmp.eq.s32.totalorder %s30, 1
      %p200 = por %p198, %p199
      %p202 = scmp.ne.s32.totalorder %s187, %s201
      %p203 = scmp.eq.s32.totalorder %s30, 0
      %p204 = por %p202, %p203
      %s206 = sadd.s32 %s205, 1
      %p209 = scmp.eq.s32.totalorder %s24, 1
      %p210 = scmp.ne.s32.totalorder %s205, %s207
      %p211 = scmp.eq.s32.totalorder %s24, 0
      %p212 = por %p210, %p211
      %p213 = scmp.ne.s32.totalorder %s205, %s207
      %p214 = scmp.eq.s32.totalorder %s29, 1
      %p215 = por %p213, %p214
      %p216 = scmp.ne.s32.totalorder %s207, %s208
      %p217 = scmp.eq.s32.totalorder %s29, 0
      %p218 = por %p216, %p217
      %p219 = scmp.ne.s32.totalorder %s207, %s208
      %p220 = scmp.eq.s32.totalorder %s30, 1
      %p221 = por %p219, %p220
      %p223 = scmp.ne.s32.totalorder %s208, %s222
      %p224 = scmp.eq.s32.totalorder %s30, 0
      %p225 = por %p223, %p224
      %s227 = sadd.s32 %s226, 1
      %p230 = scmp.eq.s32.totalorder %s24, 1
      %p231 = scmp.ne.s32.totalorder %s226, %s228
      %p232 = scmp.eq.s32.totalorder %s24, 0
      %p233 = por %p231, %p232
      %p234 = scmp.ne.s32.totalorder %s226, %s228
      %p235 = scmp.eq.s32.totalorder %s29, 1
      %p236 = por %p234, %p235
      %p237 = scmp.ne.s32.totalorder %s228, %s229
      %p238 = scmp.eq.s32.totalorder %s29, 0
      %p239 = por %p237, %p238
      %p240 = scmp.ne.s32.totalorder %s228, %s229
      %p241 = scmp.eq.s32.totalorder %s30, 1
      %p242 = por %p240, %p241
      %p244 = scmp.ne.s32.totalorder %s229, %s243
      %p245 = scmp.eq.s32.totalorder %s30, 0
      %p246 = por %p244, %p245
      %s248 = sadd.s32 %s247, 1
      %p251 = scmp.eq.s32.totalorder %s24, 1
      %p252 = scmp.ne.s32.totalorder %s247, %s249
      %p253 = scmp.eq.s32.totalorder %s24, 0
      %p254 = por %p252, %p253
      %p255 = scmp.ne.s32.totalorder %s247, %s249
      %p256 = scmp.eq.s32.totalorder %s29, 1
      %p257 = por %p255, %p256
      %p258 = scmp.ne.s32.totalorder %s249, %s250
      %p259 = scmp.eq.s32.totalorder %s29, 0
      %p260 = por %p258, %p259
      %p261 = scmp.ne.s32.totalorder %s249, %s250
      %p262 = scmp.eq.s32.totalorder %s30, 1
      %p263 = por %p261, %p262
      %p265 = scmp.ne.s32.totalorder %s250, %s264
      %p266 = scmp.eq.s32.totalorder %s30, 0
      %p267 = por %p265, %p266
      %s269 = sadd.s32 %s268, 1
      %p272 = scmp.eq.s32.totalorder %s24, 1
      %p273 = scmp.ne.s32.totalorder %s268, %s270
      %p274 = scmp.eq.s32.totalorder %s24, 0
      %p275 = por %p273, %p274
      %p276 = scmp.ne.s32.totalorder %s268, %s270
      %p277 = scmp.eq.s32.totalorder %s29, 1
      %p278 = por %p276, %p277
      %p279 = scmp.ne.s32.totalorder %s270, %s271
      %p280 = scmp.eq.s32.totalorder %s29, 0
      %p281 = por %p279, %p280
      %p282 = scmp.ne.s32.totalorder %s270, %s271
      %p283 = scmp.eq.s32.totalorder %s30, 1
      %p284 = por %p282, %p283
      %p286 = scmp.ne.s32.totalorder %s271, %s285
      %p287 = scmp.eq.s32.totalorder %s30, 0
      %p288 = por %p286, %p287
      %s290 = sadd.s32 %s289, 1
      %p293 = scmp.eq.s32.totalorder %s24, 1
      %p294 = scmp.ne.s32.totalorder %s289, %s291
      %p295 = scmp.eq.s32.totalorder %s24, 0
      %p296 = por %p294, %p295
      %p297 = scmp.ne.s32.totalorder %s289, %s291
      %p298 = scmp.eq.s32.totalorder %s29, 1
      %p299 = por %p297, %p298
      %p300 = scmp.ne.s32.totalorder %s291, %s292
      %p301 = scmp.eq.s32.totalorder %s29, 0
      %p302 = por %p300, %p301
      %p303 = scmp.ne.s32.totalorder %s291, %s292
      %p304 = scmp.eq.s32.totalorder %s30, 1
      %p305 = por %p303, %p304
      %p307 = scmp.ne.s32.totalorder %s292, %s306
      %p308 = scmp.eq.s32.totalorder %s30, 0
      %p309 = por %p307, %p308
      %s310 = ssub.s32 %s24, %s31
      %p311 = scmp.eq.s32.totalorder %s310, 0
      %s313 = sadd.s32 %s312, 1
      %s314 = scalar_select %p311, %s312, %s313
      %p317 = pneg %p311
      %p318 = scmp.eq.s32.totalorder %s24, 1
      %p319 = por %p317, %p318
      %p320 = scmp.ne.s32.totalorder %s312, %s315
      %p321 = scmp.eq.s32.totalorder %s24, 0
      %p322 = por %p320, %p321
      %p323 = scmp.ne.s32.totalorder %s312, %s315
      %p324 = scmp.eq.s32.totalorder %s29, 1
      %p325 = por %p323, %p324
      %p326 = scmp.ne.s32.totalorder %s315, %s316
      %p327 = scmp.eq.s32.totalorder %s29, 0
      %p328 = por %p326, %p327
      %p329 = scmp.ne.s32.totalorder %s315, %s316
      %p330 = scmp.eq.s32.totalorder %s30, 1
      %p331 = por %p329, %p330
      %p333 = scmp.ne.s32.totalorder %s316, %s332
      %p334 = scmp.eq.s32.totalorder %s30, 0
      %p335 = por %p333, %p334
      %s336 = ssub.s32 %s24, %s31
      %p337 = scmp.eq.s32.totalorder %s336, 0
      %s339 = sadd.s32 %s338, 1
      %s340 = scalar_select %p337, %s338, %s339
      %p343 = pneg %p337
      %p344 = scmp.eq.s32.totalorder %s24, 1
      %p345 = por %p343, %p344
      %p346 = scmp.ne.s32.totalorder %s338, %s341
      %p347 = scmp.eq.s32.totalorder %s24, 0
      %p348 = por %p346, %p347
      %p349 = scmp.ne.s32.totalorder %s338, %s341
      %p350 = scmp.eq.s32.totalorder %s29, 1
      %p351 = por %p349, %p350
      %p352 = scmp.ne.s32.totalorder %s341, %s342
      %p353 = scmp.eq.s32.totalorder %s29, 0
      %p354 = por %p352, %p353
      %p355 = scmp.ne.s32.totalorder %s341, %s342
      %p356 = scmp.eq.s32.totalorder %s30, 1
      %p357 = por %p355, %p356
      %p359 = scmp.ne.s32.totalorder %s342, %s358
      %p360 = scmp.eq.s32.totalorder %s30, 0
      %p361 = por %p359, %p360
      %p362 = scmp.le.s32.totalorder 1, %s24
      %p363 = scmp.lt.s32.totalorder %s24, 3
      %p364 = pnand %p362, %p363
      %p365 = pneg %p364
      // Predicated region
      $region9: #{attn_pooling_forward.1} parent=5 // pred_check
        _
      $region10: #{attn_pooling_forward.1} parent=5 // pred_check_branch
        %367 = sbr.rel (%p364) target = $region12
      $region11: #{attn_pooling_forward.1} parent=5 // pred_region
        %s368 = ssub.s32 %s24, 1
        // Predicated region
        $region13: #{attn_pooling_forward.1} parent=11 // pred_check
          %p369 = pneg %p71
        $region14: #{attn_pooling_forward.1} parent=11 // pred_check_branch
          %371 = sbr.rel (%p369) target = $region16
        $region15: #{attn_pooling_forward.1} parent=11 // pred_region
          _
        $region16: #{attn_pooling_forward.1} parent=11 // pred_fallthru
          _
        // Predicated region
        $region17: #{attn_pooling_forward.1} parent=11 // pred_check
          %p372 = pneg %p92
        $region18: #{attn_pooling_forward.1} parent=11 // pred_check_branch
          %374 = sbr.rel (%p372) target = $region20
        $region19: #{attn_pooling_forward.1} parent=11 // pred_region
          _
        $region20: #{attn_pooling_forward.1} parent=11 // pred_fallthru
          _
        // Predicated region
        $region21: #{attn_pooling_forward.1} parent=11 // pred_check
          %p375 = pneg %p113
        $region22: #{attn_pooling_forward.1} parent=11 // pred_check_branch
          %377 = sbr.rel (%p375) target = $region24
        $region23: #{attn_pooling_forward.1} parent=11 // pred_region
          _
        $region24: #{attn_pooling_forward.1} parent=11 // pred_fallthru
          _
        // Predicated region
        $region25: #{attn_pooling_forward.1} parent=11 // pred_check
          %p378 = pneg %p134
        $region26: #{attn_pooling_forward.1} parent=11 // pred_check_branch
          %380 = sbr.rel (%p378) target = $region28
        $region27: #{attn_pooling_forward.1} parent=11 // pred_region
          _
        $region28: #{attn_pooling_forward.1} parent=11 // pred_fallthru
          _
        // Predicated region
        $region29: #{attn_pooling_forward.1} parent=11 // pred_check
          %p381 = pneg %p155
        $region30: #{attn_pooling_forward.1} parent=11 // pred_check_branch
          %383 = sbr.rel (%p381) target = $region32
        $region31: #{attn_pooling_forward.1} parent=11 // pred_region
          _
        $region32: #{attn_pooling_forward.1} parent=11 // pred_fallthru
          _
        // Predicated region
        $region33: #{attn_pooling_forward.1} parent=11 // pred_check
          %p384 = pneg %p176
        $region34: #{attn_pooling_forward.1} parent=11 // pred_check_branch
          %386 = sbr.rel (%p384) target = $region36
        $region35: #{attn_pooling_forward.1} parent=11 // pred_region
          _
        $region36: #{attn_pooling_forward.1} parent=11 // pred_fallthru
          _
        // Predicated region
        $region37: #{attn_pooling_forward.1} parent=11 // pred_check
          %p387 = pneg %p197
        $region38: #{attn_pooling_forward.1} parent=11 // pred_check_branch
          %389 = sbr.rel (%p387) target = $region40
        $region39: #{attn_pooling_forward.1} parent=11 // pred_region
          _
        $region40: #{attn_pooling_forward.1} parent=11 // pred_fallthru
          _
        // Predicated region
        $region41: #{attn_pooling_forward.1} parent=11 // pred_check
          %p390 = pneg %p218
        $region42: #{attn_pooling_forward.1} parent=11 // pred_check_branch
          %392 = sbr.rel (%p390) target = $region44
        $region43: #{attn_pooling_forward.1} parent=11 // pred_region
          _
        $region44: #{attn_pooling_forward.1} parent=11 // pred_fallthru
          _
        // Predicated region
        $region45: #{attn_pooling_forward.1} parent=11 // pred_check
          %p393 = pneg %p239
        $region46: #{attn_pooling_forward.1} parent=11 // pred_check_branch
          %395 = sbr.rel (%p393) target = $region48
        $region47: #{attn_pooling_forward.1} parent=11 // pred_region
          _
        $region48: #{attn_pooling_forward.1} parent=11 // pred_fallthru
          _
        // Predicated region
        $region49: #{attn_pooling_forward.1} parent=11 // pred_check
          %p396 = pneg %p260
        $region50: #{attn_pooling_forward.1} parent=11 // pred_check_branch
          %398 = sbr.rel (%p396) target = $region52
        $region51: #{attn_pooling_forward.1} parent=11 // pred_region
          _
        $region52: #{attn_pooling_forward.1} parent=11 // pred_fallthru
          _
        // Predicated region
        $region53: #{attn_pooling_forward.1} parent=11 // pred_check
          %p399 = pneg %p281
        $region54: #{attn_pooling_forward.1} parent=11 // pred_check_branch
          %401 = sbr.rel (%p399) target = $region56
        $region55: #{attn_pooling_forward.1} parent=11 // pred_region
          _
        $region56: #{attn_pooling_forward.1} parent=11 // pred_fallthru
          _
        // Predicated region
        $region57: #{attn_pooling_forward.1} parent=11 // pred_check
          %p402 = pneg %p302
        $region58: #{attn_pooling_forward.1} parent=11 // pred_check_branch
          %404 = sbr.rel (%p402) target = $region60
        $region59: #{attn_pooling_forward.1} parent=11 // pred_region
          _
        $region60: #{attn_pooling_forward.1} parent=11 // pred_fallthru
          _
      $region12: #{attn_pooling_forward.1} parent=5 // pred_fallthru
        _
      %p405 = scmp.lt.s32.totalorder %s24, 2
      // Predicated region
      $region61: #{attn_pooling_forward.1} parent=5 // pred_check
        %p406 = pneg %p405
      $region62: #{attn_pooling_forward.1} parent=5 // pred_check_branch
        %408 = sbr.rel (%p406) target = $region64
      $region63: #{attn_pooling_forward.1} parent=5 // pred_region
        // Predicated region
        $region65: #{attn_pooling_forward.1} parent=63 // pred_check
          %p409 = pneg %p44
        $region66: #{attn_pooling_forward.1} parent=63 // pred_check_branch
          %411 = sbr.rel (%p409) target = $region68
        $region67: #{attn_pooling_forward.1} parent=63 // pred_region
          %p412 = scmp.lt.s32.totalorder %s24, 1
          %s413 = scalar_select %p412, %s24, 1
          %s414 = smul.addr %s413, 190
          %s415 = smul.addr %s414, 4
          %s416 = scalar_lea.vmem %s0, %s415
        $region68: #{attn_pooling_forward.1} parent=63 // pred_fallthru
          _
      $region64: #{attn_pooling_forward.1} parent=5 // pred_fallthru
        _
      %p417 = scmp.le.s32.totalorder 1, %s24
      %p418 = scmp.lt.s32.totalorder %s24, 3
      %p419 = pnand %p417, %p418
      %p420 = pneg %p419
      // Predicated region
      $region69: #{attn_pooling_forward.1} parent=5 // pred_check
        _
      $region70: #{attn_pooling_forward.1} parent=5 // pred_check_branch
        %422 = sbr.rel (%p419) target = $region72
      $region71: #{attn_pooling_forward.1} parent=5 // pred_region
        %s423 = ssub.s32 %s24, 1
        %p424 = scmp.lt.s32.totalorder %s29, 1
        %s425 = scalar_select %p424, %s29, 1
        %s426 = smul.addr %s425, 190
        %s427 = smul.addr %s426, 4
        %s428 = scalar_lea.vmem %s0, %s427
        %p429 = pneg %p50
        %p430 = pneg %p47
        %p431 = pneg %p71
        %p432 = pneg %p68
        %p433 = pneg %p92
        %p434 = pneg %p89
        %p435 = pneg %p113
        %p436 = pneg %p110
        %p437 = pneg %p134
        %p438 = pneg %p131
        %p439 = pneg %p155
        %p440 = pneg %p152
        %p441 = pneg %p176
        %p442 = pneg %p173
        %p443 = pneg %p197
        %p444 = pneg %p194
        %p445 = pneg %p218
        %p446 = pneg %p215
        %p447 = pneg %p239
        %p448 = pneg %p236
        %p449 = pneg %p260
        %p450 = pneg %p257
        %p451 = pneg %p281
        %p452 = pneg %p278
        %p453 = pneg %p302
        %p454 = pneg %p299
        %p455 = pneg %p328
        %p456 = pneg %p325
        %p457 = scmp.lt.s32.totalorder %s29, 1
        %s458 = scalar_select %p457, %s29, 1
        %s459 = scalar_lea.vmem %s13, %s458
        %p460 = pneg %p354
        %p461 = pneg %p351
        %s462 = sand.u32 %s341, 1
        %s463 = scalar_lea.sflag [#allocation7], %s462
        %s464 = sand.u32 %s341, 1
        %s465 = scalar_lea.vmem [#allocation6], %s464
        %p466 = scmp.lt.s32.totalorder %s29, 1
        %s467 = scalar_select %p466, %s29, 1
        %s468 = smul.addr %s467, 190
        %s469 = smul.addr %s468, 4
        %s470 = scalar_lea.vmem %s0, %s469
        %p471 = scmp.lt.s32.totalorder %s29, 1
        %s472 = scalar_select %p471, %s29, 1
        %s473 = scalar_lea.vmem %s13, %s472
        %v475 = vld [vmem:[%s470] sm:$0xff]
        %v476 = vld [vmem:[%s470 + $0x8] sm:$0xff]
        %v477 = vld [vmem:[%s470 + $0x10] sm:$0xf]
        %v478 = vld [vmem:[%s470 + $0x14] sm:$0xff]
        %v479 = vld [vmem:[%s470 + $0x1c] sm:$0xff]
        %v480 = vld [vmem:[%s470 + $0x24] sm:$0xf]
        %v481 = vld [vmem:[%s470 + $0x28] sm:$0xff]
        %v482 = vld [vmem:[%s470 + $0x30] sm:$0xff]
        %v483 = vld [vmem:[%s470 + $0x38] sm:$0xf]
        %v484 = vld [vmem:[%s470 + $0x3c] sm:$0xff]
        %v485 = vld [vmem:[%s470 + $0x44] sm:$0xff]
        %v486 = vld [vmem:[%s470 + $0x4c] sm:$0xf]
        %v487 = vld [vmem:[%s470 + $0x50] sm:$0xff]
        %v488 = vld [vmem:[%s470 + $0x58] sm:$0xff]
        %v489 = vld [vmem:[%s470 + $0x60] sm:$0xf]
        %v490 = vld [vmem:[%s470 + $0x64] sm:$0xff]
        %v491 = vld [vmem:[%s470 + $0x6c] sm:$0xff]
        %v492 = vld [vmem:[%s470 + $0x74] sm:$0xf]
        %v493 = vld [vmem:[%s470 + $0x78] sm:$0xff]
        %v494 = vld [vmem:[%s470 + $0x80] sm:$0xff]
        %v495 = vld [vmem:[%s470 + $0x88] sm:$0xf]
        %v496 = vld [vmem:[%s470 + $0x8c] sm:$0xff]
        %v497 = vld [vmem:[%s470 + $0x94] sm:$0xff]
        %v498 = vld [vmem:[%s470 + $0x9c] sm:$0xf]
        %v499 = vld [vmem:[%s470 + $0xa0] sm:$0xff]
        %v500 = vld [vmem:[%s470 + $0xa8] sm:$0xff]
        %v501 = vld [vmem:[%s470 + $0xb0] sm:$0xf]
        %v502 = vld [vmem:[%s470 + $0xb4] sm:$0xff]
        %v503 = vld [vmem:[%s470 + $0xbc] sm:$0xff]
        %v504 = vld [vmem:[%s470 + $0xc4] sm:$0xf]
        %v505 = vld [vmem:[%s470 + $0xc8] sm:$0xff]
        %v506 = vld [vmem:[%s470 + $0xd0] sm:$0xff]
        %v507 = vld [vmem:[%s470 + $0xd8] sm:$0xf]
        %v508 = vld [vmem:[%s470 + $0xdc] sm:$0xff]
        %v509 = vld [vmem:[%s470 + $0xe4] sm:$0xff]
        %v510 = vld [vmem:[%s470 + $0xec] sm:$0xf]
        %v511 = vld [vmem:[%s470 + $0xf0] sm:$0xff]
        %v512 = vld [vmem:[%s470 + $0xf8] sm:$0xff]
        %v513 = vld [vmem:[%s470 + $0x100] sm:$0xf]
        %v514 = vld [vmem:[%s470 + $0x104] sm:$0xff]
        %v515 = vld [vmem:[%s470 + $0x10c] sm:$0xff]
        %v516 = vld [vmem:[%s470 + $0x114] sm:$0xf]
        %v517 = vld [vmem:[%s470 + $0x118] sm:$0xff]
        %v518 = vld [vmem:[%s470 + $0x120] sm:$0xff]
        %v519 = vld [vmem:[%s470 + $0x128] sm:$0xf]
        %v520 = vld [vmem:[%s470 + $0x12c] sm:$0xff]
        %v521 = vld [vmem:[%s470 + $0x134] sm:$0xff]
        %v522 = vld [vmem:[%s470 + $0x13c] sm:$0xf]
        %v523 = vld [vmem:[%s470 + $0x140] sm:$0xff]
        %v524 = vld [vmem:[%s470 + $0x148] sm:$0xff]
        %v525 = vld [vmem:[%s470 + $0x150] sm:$0xf]
        %v526 = vld [vmem:[%s470 + $0x154] sm:$0xff]
        %v527 = vld [vmem:[%s470 + $0x15c] sm:$0xff]
        %v528 = vld [vmem:[%s470 + $0x164] sm:$0xf]
        %v529 = vld [vmem:[%s470 + $0x168] sm:$0xff]
        %v530 = vld [vmem:[%s470 + $0x170] sm:$0xff]
        %v531 = vld [vmem:[%s470 + $0x178] sm:$0xf]
        %v532 = vld [vmem:[%s470 + $0x17c] sm:$0xff]
        %v533 = vld [vmem:[%s470 + $0x184] sm:$0xff]
        %v534 = vld [vmem:[%s470 + $0x18c] sm:$0xf]
        %v535 = vld [vmem:[%s470 + $0x190] sm:$0xff]
        %v536 = vld [vmem:[%s470 + $0x198] sm:$0xff]
        %v537 = vld [vmem:[%s470 + $0x1a0] sm:$0xf]
        %v538 = vld [vmem:[%s470 + $0x1a4] sm:$0xff]
        %v539 = vld [vmem:[%s470 + $0x1ac] sm:$0xff]
        %v540 = vld [vmem:[%s470 + $0x1b4] sm:$0xf]
        %v541 = vld [vmem:[%s470 + $0x1b8] sm:$0xff]
        %v542 = vld [vmem:[%s470 + $0x1c0] sm:$0xff]
        %v543 = vld [vmem:[%s470 + $0x1c8] sm:$0xf]
        %v544 = vld [vmem:[%s470 + $0x1cc] sm:$0xff]
        %v545 = vld [vmem:[%s470 + $0x1d4] sm:$0xff]
        %v546 = vld [vmem:[%s470 + $0x1dc] sm:$0xf]
        %v547 = vld [vmem:[%s470 + $0x1e0] sm:$0xff]
        %v548 = vld [vmem:[%s470 + $0x1e8] sm:$0xff]
        %v549 = vld [vmem:[%s470 + $0x1f0] sm:$0xf]
        %v550 = vld [vmem:[%s470 + $0x1f4] sm:$0xff]
        %v551 = vld [vmem:[%s470 + $0x1fc] sm:$0xff]
        %v552 = vld [vmem:[%s470 + $0x204] sm:$0xf]
        %v553 = vld [vmem:[%s470 + $0x208] sm:$0xff]
        %v554 = vld [vmem:[%s470 + $0x210] sm:$0xff]
        %v555 = vld [vmem:[%s470 + $0x218] sm:$0xf]
        %v556 = vld [vmem:[%s470 + $0x21c] sm:$0xff]
        %v557 = vld [vmem:[%s470 + $0x224] sm:$0xff]
        %v558 = vld [vmem:[%s470 + $0x22c] sm:$0xf]
        %v559 = vld [vmem:[%s470 + $0x230] sm:$0xff]
        %v560 = vld [vmem:[%s470 + $0x238] sm:$0xff]
        %v561 = vld [vmem:[%s470 + $0x240] sm:$0xf]
        %v562 = vld [vmem:[%s470 + $0x244] sm:$0xff]
        %v563 = vld [vmem:[%s470 + $0x24c] sm:$0xff]
        %v564 = vld [vmem:[%s470 + $0x254] sm:$0xf]
        %v565 = vld [vmem:[%s470 + $0x258] sm:$0xff]
        %v566 = vld [vmem:[%s470 + $0x260] sm:$0xff]
        %v567 = vld [vmem:[%s470 + $0x268] sm:$0xf]
        %v568 = vld [vmem:[%s470 + $0x26c] sm:$0xff]
        %v569 = vld [vmem:[%s470 + $0x274] sm:$0xff]
        %v570 = vld [vmem:[%s470 + $0x27c] sm:$0xf]
        %v571 = vld [vmem:[%s470 + $0x280] sm:$0xff]
        %v572 = vld [vmem:[%s470 + $0x288] sm:$0xff]
        %v573 = vld [vmem:[%s470 + $0x290] sm:$0xf]
        %v574 = vld [vmem:[%s470 + $0x294] sm:$0xff]
        %v575 = vld [vmem:[%s470 + $0x29c] sm:$0xff]
        %v576 = vld [vmem:[%s470 + $0x2a4] sm:$0xf]
        %v577 = vld [vmem:[%s470 + $0x2a8] sm:$0xff]
        %v578 = vld [vmem:[%s470 + $0x2b0] sm:$0xff]
        %v579 = vld [vmem:[%s470 + $0x2b8] sm:$0xf]
        %v580 = vld [vmem:[%s470 + $0x2bc] sm:$0xff]
        %v581 = vld [vmem:[%s470 + $0x2c4] sm:$0xff]
        %v582 = vld [vmem:[%s470 + $0x2cc] sm:$0xf]
        %v583 = vld [vmem:[%s470 + $0x2d0] sm:$0xff]
        %v584 = vld [vmem:[%s470 + $0x2d8] sm:$0xff]
        %v585 = vld [vmem:[%s470 + $0x2e0] sm:$0xf]
        %v586 = vld [vmem:[%s470 + $0x2e4] sm:$0x33]
        %v587 = vld [vmem:[%s470 + $0x2ec] sm:$0x33]
        %v588 = vld [vmem:[%s470 + $0x2f4] sm:$0x3]
        %s589 = scalar_lea.vmem %s1, 520
        %v590 = vld [vmem:[%s589] sm:$0xff]
        %v591 = vld [vmem:[%s589 + $0x8] sm:$0xff]
        %v592 = vld [vmem:[%s589 + $0x10] sm:$0xff]
        %v593 = vld [vmem:[%s589 + $0x18] sm:$0xff]
        %v594 = vld [vmem:[%s589 + $0x20] sm:$0xff]
        %v595 = vld [vmem:[%s589 + $0x28] sm:$0xff]
        %v596 = vld [vmem:[%s589 + $0x30] sm:$0xff]
        %v597 = vld [vmem:[%s589 + $0x38] sm:$0xff]
        %v598 = vld [vmem:[%s589 + $0x40] sm:$0xff]
        %v599 = vld [vmem:[%s589 + $0x48] sm:$0xff]
        %v600 = vld [vmem:[%s589 + $0x50] sm:$0xff]
        %v601 = vld [vmem:[%s589 + $0x58] sm:$0xff]
        %v602 = vld [vmem:[%s589 + $0x60] sm:$0xff]
        %v603 = vld [vmem:[%s589 + $0x68] sm:$0xff]
        %v604 = vld [vmem:[%s589 + $0x70] sm:$0xff]
        %v605 = vld [vmem:[%s589 + $0x78] sm:$0xff]
        %v606 = vld [vmem:[%s589 + $0x80] sm:$0xff]
        %v607 = vld [vmem:[%s589 + $0x88] sm:$0xff]
        %v608 = vld [vmem:[%s589 + $0x90] sm:$0xff]
        %v609 = vld [vmem:[%s589 + $0x98] sm:$0xff]
        %v610 = vld [vmem:[%s589 + $0xa0] sm:$0xff]
        %v611 = vld [vmem:[%s589 + $0xa8] sm:$0xff]
        %v612 = vld [vmem:[%s589 + $0xb0] sm:$0xff]
        %v613 = vld [vmem:[%s589 + $0xb8] sm:$0xff]
        %v614 = vld [vmem:[%s589 + $0xc0] sm:$0xff]
        %v615 = vld [vmem:[%s589 + $0xc8] sm:$0xff]
        %v616 = vld [vmem:[%s589 + $0xd0] sm:$0xff]
        %v617 = vld [vmem:[%s589 + $0xd8] sm:$0xff]
        %v618 = vld [vmem:[%s589 + $0xe0] sm:$0xff]
        %v619 = vld [vmem:[%s589 + $0xe8] sm:$0xff]
        %v620 = vld [vmem:[%s589 + $0xf0] sm:$0xff]
        %v621 = vld [vmem:[%s589 + $0xf8] sm:$0xff]
        %v622 = vld [vmem:[%s589 + $0x100] sm:$0xff]
        %v623 = vld [vmem:[%s589 + $0x108] sm:$0xff]
        %v624 = vld [vmem:[%s589 + $0x110] sm:$0xff]
        %v625 = vld [vmem:[%s589 + $0x118] sm:$0xff]
        %v626 = vld [vmem:[%s589 + $0x120] sm:$0xff]
        %v627 = vld [vmem:[%s589 + $0x128] sm:$0xff]
        %v628 = vld [vmem:[%s589 + $0x130] sm:$0xff]
        %v629 = vld [vmem:[%s589 + $0x138] sm:$0xff]
        %v630 = vld [vmem:[%s589 + $0x140] sm:$0xff]
        %v631 = vld [vmem:[%s589 + $0x148] sm:$0xff]
        %v632 = vld [vmem:[%s589 + $0x150] sm:$0xff]
        %v633 = vld [vmem:[%s589 + $0x158] sm:$0xff]
        %v634 = vld [vmem:[%s589 + $0x160] sm:$0xff]
        %v635 = vld [vmem:[%s589 + $0x168] sm:$0xff]
        %v636 = vld [vmem:[%s589 + $0x170] sm:$0xff]
        %v637 = vld [vmem:[%s589 + $0x178] sm:$0xff]
        %v638 = vld [vmem:[%s589 + $0x180] sm:$0xff]
        %v639 = vld [vmem:[%s589 + $0x188] sm:$0xff]
        %v640 = vld [vmem:[%s589 + $0x190] sm:$0xff]
        %v641 = vld [vmem:[%s589 + $0x198] sm:$0xff]
        %v642 = vld [vmem:[%s589 + $0x1a0] sm:$0xff]
        %v643 = vld [vmem:[%s589 + $0x1a8] sm:$0xff]
        %v644 = vld [vmem:[%s589 + $0x1b0] sm:$0xff]
        %v645 = vld [vmem:[%s589 + $0x1b8] sm:$0xff]
        %v646 = vld [vmem:[%s589 + $0x1c0] sm:$0xff]
        %v647 = vld [vmem:[%s589 + $0x1c8] sm:$0xff]
        %v648 = vld [vmem:[%s589 + $0x1d0] sm:$0xff]
        %v649 = vld [vmem:[%s589 + $0x1d8] sm:$0xff]
        %v650 = vld [vmem:[%s589 + $0x1e0] sm:$0xff]
        %v651 = vld [vmem:[%s589 + $0x1e8] sm:$0xff]
        %v652 = vld [vmem:[%s589 + $0x1f0] sm:$0xff]
        %v653 = vld [vmem:[%s589 + $0x1f8] sm:$0xff]
        %v654 = vld [vmem:[%s589 + $0x200] sm:$0x11]
        %v769 = vunpack.c.l.b16 %v475
        %v770 = vunpack.c.h.b16 %v475
        %v771 = vunpack.c.l.b16 %v476
        %v772 = vunpack.c.h.b16 %v476
        %v773 = vunpack.c.l.b16 %v477
        %v774 = vunpack.c.l.b16 %v478
        %v775 = vunpack.c.h.b16 %v478
        %v776 = vunpack.c.l.b16 %v479
        %v777 = vunpack.c.h.b16 %v479
        %v778 = vunpack.c.l.b16 %v480
        %v779 = vunpack.c.l.b16 %v481
        %v780 = vunpack.c.h.b16 %v481
        %v781 = vunpack.c.l.b16 %v482
        %v782 = vunpack.c.h.b16 %v482
        %v783 = vunpack.c.l.b16 %v483
        %v784 = vunpack.c.l.b16 %v484
        %v785 = vunpack.c.h.b16 %v484
        %v786 = vunpack.c.l.b16 %v485
        %v787 = vunpack.c.h.b16 %v485
        %v788 = vunpack.c.l.b16 %v486
        %v789 = vunpack.c.l.b16 %v487
        %v790 = vunpack.c.h.b16 %v487
        %v791 = vunpack.c.l.b16 %v488
        %v792 = vunpack.c.h.b16 %v488
        %v793 = vunpack.c.l.b16 %v489
        %v794 = vunpack.c.l.b16 %v490
        %v795 = vunpack.c.h.b16 %v490
        %v796 = vunpack.c.l.b16 %v491
        %v797 = vunpack.c.h.b16 %v491
        %v798 = vunpack.c.l.b16 %v492
        %v799 = vunpack.c.l.b16 %v493
        %v800 = vunpack.c.h.b16 %v493
        %v801 = vunpack.c.l.b16 %v494
        %v802 = vunpack.c.h.b16 %v494
        %v803 = vunpack.c.l.b16 %v495
        %v804 = vunpack.c.l.b16 %v496
        %v805 = vunpack.c.h.b16 %v496
        %v806 = vunpack.c.l.b16 %v497
        %v807 = vunpack.c.h.b16 %v497
        %v808 = vunpack.c.l.b16 %v498
        %v809 = vunpack.c.l.b16 %v499
        %v810 = vunpack.c.h.b16 %v499
        %v811 = vunpack.c.l.b16 %v500
        %v812 = vunpack.c.h.b16 %v500
        %v813 = vunpack.c.l.b16 %v501
        %v814 = vunpack.c.l.b16 %v502
        %v815 = vunpack.c.h.b16 %v502
        %v816 = vunpack.c.l.b16 %v503
        %v817 = vunpack.c.h.b16 %v503
        %v818 = vunpack.c.l.b16 %v504
        %v819 = vunpack.c.l.b16 %v505
        %v820 = vunpack.c.h.b16 %v505
        %v821 = vunpack.c.l.b16 %v506
        %v822 = vunpack.c.h.b16 %v506
        %v823 = vunpack.c.l.b16 %v507
        %v824 = vunpack.c.l.b16 %v508
        %v825 = vunpack.c.h.b16 %v508
        %v826 = vunpack.c.l.b16 %v509
        %v827 = vunpack.c.h.b16 %v509
        %v828 = vunpack.c.l.b16 %v510
        %v829 = vunpack.c.l.b16 %v511
        %v830 = vunpack.c.h.b16 %v511
        %v831 = vunpack.c.l.b16 %v512
        %v832 = vunpack.c.h.b16 %v512
        %v833 = vunpack.c.l.b16 %v513
        %v834 = vunpack.c.l.b16 %v514
        %v835 = vunpack.c.h.b16 %v514
        %v836 = vunpack.c.l.b16 %v515
        %v837 = vunpack.c.h.b16 %v515
        %v838 = vunpack.c.l.b16 %v516
        %v839 = vunpack.c.l.b16 %v517
        %v840 = vunpack.c.h.b16 %v517
        %v841 = vunpack.c.l.b16 %v518
        %v842 = vunpack.c.h.b16 %v518
        %v843 = vunpack.c.l.b16 %v519
        %v844 = vunpack.c.l.b16 %v520
        %v845 = vunpack.c.h.b16 %v520
        %v846 = vunpack.c.l.b16 %v521
        %v847 = vunpack.c.h.b16 %v521
        %v848 = vunpack.c.l.b16 %v522
        %v849 = vunpack.c.l.b16 %v523
        %v850 = vunpack.c.h.b16 %v523
        %v851 = vunpack.c.l.b16 %v524
        %v852 = vunpack.c.h.b16 %v524
        %v853 = vunpack.c.l.b16 %v525
        %v854 = vunpack.c.l.b16 %v526
        %v855 = vunpack.c.h.b16 %v526
        %v856 = vunpack.c.l.b16 %v527
        %v857 = vunpack.c.h.b16 %v527
        %v858 = vunpack.c.l.b16 %v528
        %v859 = vunpack.c.l.b16 %v529
        %v860 = vunpack.c.h.b16 %v529
        %v861 = vunpack.c.l.b16 %v530
        %v862 = vunpack.c.h.b16 %v530
        %v863 = vunpack.c.l.b16 %v531
        %v864 = vunpack.c.l.b16 %v532
        %v865 = vunpack.c.h.b16 %v532
        %v866 = vunpack.c.l.b16 %v533
        %v867 = vunpack.c.h.b16 %v533
        %v868 = vunpack.c.l.b16 %v534
        %v869 = vunpack.c.l.b16 %v535
        %v870 = vunpack.c.h.b16 %v535
        %v871 = vunpack.c.l.b16 %v536
        %v872 = vunpack.c.h.b16 %v536
        %v873 = vunpack.c.l.b16 %v537
        %v874 = vunpack.c.l.b16 %v538
        %v875 = vunpack.c.h.b16 %v538
        %v876 = vunpack.c.l.b16 %v539
        %v877 = vunpack.c.h.b16 %v539
        %v878 = vunpack.c.l.b16 %v540
        %v879 = vunpack.c.l.b16 %v541
        %v880 = vunpack.c.h.b16 %v541
        %v881 = vunpack.c.l.b16 %v542
        %v882 = vunpack.c.h.b16 %v542
        %v883 = vunpack.c.l.b16 %v543
        %v884 = vunpack.c.l.b16 %v544
        %v885 = vunpack.c.h.b16 %v544
        %v886 = vunpack.c.l.b16 %v545
        %v887 = vunpack.c.h.b16 %v545
        %v888 = vunpack.c.l.b16 %v546
        %v889 = vunpack.c.l.b16 %v547
        %v890 = vunpack.c.h.b16 %v547
        %v891 = vunpack.c.l.b16 %v548
        %v892 = vunpack.c.h.b16 %v548
        %v893 = vunpack.c.l.b16 %v549
        %v894 = vunpack.c.l.b16 %v550
        %v895 = vunpack.c.h.b16 %v550
        %v896 = vunpack.c.l.b16 %v551
        %v897 = vunpack.c.h.b16 %v551
        %v898 = vunpack.c.l.b16 %v552
        %v899 = vunpack.c.l.b16 %v553
        %v900 = vunpack.c.h.b16 %v553
        %v901 = vunpack.c.l.b16 %v554
        %v902 = vunpack.c.h.b16 %v554
        %v903 = vunpack.c.l.b16 %v555
        %v904 = vunpack.c.l.b16 %v556
        %v905 = vunpack.c.h.b16 %v556
        %v906 = vunpack.c.l.b16 %v557
        %v907 = vunpack.c.h.b16 %v557
        %v908 = vunpack.c.l.b16 %v558
        %v909 = vunpack.c.l.b16 %v559
        %v910 = vunpack.c.h.b16 %v559
        %v911 = vunpack.c.l.b16 %v560
        %v912 = vunpack.c.h.b16 %v560
        %v913 = vunpack.c.l.b16 %v561
        %v914 = vunpack.c.l.b16 %v562
        %v915 = vunpack.c.h.b16 %v562
        %v916 = vunpack.c.l.b16 %v563
        %v917 = vunpack.c.h.b16 %v563
        %v918 = vunpack.c.l.b16 %v564
        %v919 = vunpack.c.l.b16 %v565
        %v920 = vunpack.c.h.b16 %v565
        %v921 = vunpack.c.l.b16 %v566
        %v922 = vunpack.c.h.b16 %v566
        %v923 = vunpack.c.l.b16 %v567
        %v924 = vunpack.c.l.b16 %v568
        %v925 = vunpack.c.h.b16 %v568
        %v926 = vunpack.c.l.b16 %v569
        %v927 = vunpack.c.h.b16 %v569
        %v928 = vunpack.c.l.b16 %v570
        %v929 = vunpack.c.l.b16 %v571
        %v930 = vunpack.c.h.b16 %v571
        %v931 = vunpack.c.l.b16 %v572
        %v932 = vunpack.c.h.b16 %v572
        %v933 = vunpack.c.l.b16 %v573
        %v934 = vunpack.c.l.b16 %v574
        %v935 = vunpack.c.h.b16 %v574
        %v936 = vunpack.c.l.b16 %v575
        %v937 = vunpack.c.h.b16 %v575
        %v938 = vunpack.c.l.b16 %v576
        %v939 = vunpack.c.l.b16 %v577
        %v940 = vunpack.c.h.b16 %v577
        %v941 = vunpack.c.l.b16 %v578
        %v942 = vunpack.c.h.b16 %v578
        %v943 = vunpack.c.l.b16 %v579
        %v944 = vunpack.c.l.b16 %v580
        %v945 = vunpack.c.h.b16 %v580
        %v946 = vunpack.c.l.b16 %v581
        %v947 = vunpack.c.h.b16 %v581
        %v948 = vunpack.c.l.b16 %v582
        %v949 = vunpack.c.l.b16 %v583
        %v950 = vunpack.c.h.b16 %v583
        %v951 = vunpack.c.l.b16 %v584
        %v952 = vunpack.c.h.b16 %v584
        %v953 = vunpack.c.l.b16 %v585
        %v954 = vunpack.c.l.b16 %v586
        %v955 = vunpack.c.h.b16 %v586
        %v956 = vunpack.c.l.b16 %v587
        %v957 = vunpack.c.h.b16 %v587
        %v958 = vunpack.c.l.b16 %v588
        %v959 = vpack.c.b16 %v774, %v769
        %v960 = vpack.c.b16 %v775, %v770
        %v961 = vpack.c.b16 %v776, %v771
        %v962 = vpack.c.b16 %v777, %v772
        %v963 = vpack.c.b16 %v778, %v773
        %v964 = vpack.c.b16 %v784, %v779
        %v965 = vpack.c.b16 %v785, %v780
        %v966 = vpack.c.b16 %v786, %v781
        %v967 = vpack.c.b16 %v787, %v782
        %v968 = vpack.c.b16 %v788, %v783
        %v969 = vpack.c.b16 %v794, %v789
        %v970 = vpack.c.b16 %v795, %v790
        %v971 = vpack.c.b16 %v796, %v791
        %v972 = vpack.c.b16 %v797, %v792
        %v973 = vpack.c.b16 %v798, %v793
        %v974 = vpack.c.b16 %v804, %v799
        %v975 = vpack.c.b16 %v805, %v800
        %v976 = vpack.c.b16 %v806, %v801
        %v977 = vpack.c.b16 %v807, %v802
        %v978 = vpack.c.b16 %v808, %v803
        %v979 = vpack.c.b16 %v814, %v809
        %v980 = vpack.c.b16 %v815, %v810
        %v981 = vpack.c.b16 %v816, %v811
        %v982 = vpack.c.b16 %v817, %v812
        %v983 = vpack.c.b16 %v818, %v813
        %v984 = vpack.c.b16 %v824, %v819
        %v985 = vpack.c.b16 %v825, %v820
        %v986 = vpack.c.b16 %v826, %v821
        %v987 = vpack.c.b16 %v827, %v822
        %v988 = vpack.c.b16 %v828, %v823
        %v989 = vpack.c.b16 %v834, %v829
        %v990 = vpack.c.b16 %v835, %v830
        %v991 = vpack.c.b16 %v836, %v831
        %v992 = vpack.c.b16 %v837, %v832
        %v993 = vpack.c.b16 %v838, %v833
        %v994 = vpack.c.b16 %v844, %v839
        %v995 = vpack.c.b16 %v845, %v840
        %v996 = vpack.c.b16 %v846, %v841
        %v997 = vpack.c.b16 %v847, %v842
        %v998 = vpack.c.b16 %v848, %v843
        %v999 = vpack.c.b16 %v854, %v849
        %v1000 = vpack.c.b16 %v855, %v850
        %v1001 = vpack.c.b16 %v856, %v851
        %v1002 = vpack.c.b16 %v857, %v852
        %v1003 = vpack.c.b16 %v858, %v853
        %v1004 = vpack.c.b16 %v864, %v859
        %v1005 = vpack.c.b16 %v865, %v860
        %v1006 = vpack.c.b16 %v866, %v861
        %v1007 = vpack.c.b16 %v867, %v862
        %v1008 = vpack.c.b16 %v868, %v863
        %v1009 = vpack.c.b16 %v874, %v869
        %v1010 = vpack.c.b16 %v875, %v870
        %v1011 = vpack.c.b16 %v876, %v871
        %v1012 = vpack.c.b16 %v877, %v872
        %v1013 = vpack.c.b16 %v878, %v873
        %v1014 = vpack.c.b16 %v884, %v879
        %v1015 = vpack.c.b16 %v885, %v880
        %v1016 = vpack.c.b16 %v886, %v881
        %v1017 = vpack.c.b16 %v887, %v882
        %v1018 = vpack.c.b16 %v888, %v883
        %v1019 = vpack.c.b16 %v894, %v889
        %v1020 = vpack.c.b16 %v895, %v890
        %v1021 = vpack.c.b16 %v896, %v891
        %v1022 = vpack.c.b16 %v897, %v892
        %v1023 = vpack.c.b16 %v898, %v893
        %v1024 = vpack.c.b16 %v904, %v899
        %v1025 = vpack.c.b16 %v905, %v900
        %v1026 = vpack.c.b16 %v906, %v901
        %v1027 = vpack.c.b16 %v907, %v902
        %v1028 = vpack.c.b16 %v908, %v903
        %v1029 = vpack.c.b16 %v914, %v909
        %v1030 = vpack.c.b16 %v915, %v910
        %v1031 = vpack.c.b16 %v916, %v911
        %v1032 = vpack.c.b16 %v917, %v912
        %v1033 = vpack.c.b16 %v918, %v913
        %v1034 = vpack.c.b16 %v924, %v919
        %v1035 = vpack.c.b16 %v925, %v920
        %v1036 = vpack.c.b16 %v926, %v921
        %v1037 = vpack.c.b16 %v927, %v922
        %v1038 = vpack.c.b16 %v928, %v923
        %v1039 = vpack.c.b16 %v934, %v929
        %v1040 = vpack.c.b16 %v935, %v930
        %v1041 = vpack.c.b16 %v936, %v931
        %v1042 = vpack.c.b16 %v937, %v932
        %v1043 = vpack.c.b16 %v938, %v933
        %v1044 = vpack.c.b16 %v944, %v939
        %v1045 = vpack.c.b16 %v945, %v940
        %v1046 = vpack.c.b16 %v946, %v941
        %v1047 = vpack.c.b16 %v947, %v942
        %v1048 = vpack.c.b16 %v948, %v943
        %v1049 = vpack.c.b16 %v954, %v949
        %v1050 = vpack.c.b16 %v955, %v950
        %v1051 = vpack.c.b16 %v956, %v951
        %v1052 = vpack.c.b16 %v957, %v952
        %v1053 = vpack.c.b16 %v958, %v953
        %v1195 = vunpack.c.l.b16 %v590
        %v1196 = vunpack.c.h.b16 %v590
        %v1197 = vunpack.c.l.b16 %v591
        %v1198 = vunpack.c.h.b16 %v591
        %v1199 = vunpack.c.l.b16 %v592
        %v1200 = vunpack.c.h.b16 %v592
        %v1201 = vunpack.c.l.b16 %v593
        %v1202 = vunpack.c.h.b16 %v593
        %v1203 = vunpack.c.l.b16 %v594
        %v1204 = vunpack.c.h.b16 %v594
        %v1205 = vunpack.c.l.b16 %v595
        %v1206 = vunpack.c.h.b16 %v595
        %v1207 = vunpack.c.l.b16 %v596
        %v1208 = vunpack.c.h.b16 %v596
        %v1209 = vunpack.c.l.b16 %v597
        %v1210 = vunpack.c.h.b16 %v597
        %v1211 = vunpack.c.l.b16 %v598
        %v1212 = vunpack.c.h.b16 %v598
        %v1213 = vunpack.c.l.b16 %v599
        %v1214 = vunpack.c.h.b16 %v599
        %v1215 = vunpack.c.l.b16 %v600
        %v1216 = vunpack.c.h.b16 %v600
        %v1217 = vunpack.c.l.b16 %v601
        %v1218 = vunpack.c.h.b16 %v601
        %v1219 = vunpack.c.l.b16 %v602
        %v1220 = vunpack.c.h.b16 %v602
        %v1221 = vunpack.c.l.b16 %v603
        %v1222 = vunpack.c.h.b16 %v603
        %v1223 = vunpack.c.l.b16 %v604
        %v1224 = vunpack.c.h.b16 %v604
        %v1225 = vunpack.c.l.b16 %v605
        %v1226 = vunpack.c.h.b16 %v605
        %v1227 = vunpack.c.l.b16 %v606
        %v1228 = vunpack.c.h.b16 %v606
        %v1229 = vunpack.c.l.b16 %v607
        %v1230 = vunpack.c.h.b16 %v607
        %v1231 = vunpack.c.l.b16 %v608
        %v1232 = vunpack.c.h.b16 %v608
        %v1233 = vunpack.c.l.b16 %v609
        %v1234 = vunpack.c.h.b16 %v609
        %v1235 = vunpack.c.l.b16 %v610
        %v1236 = vunpack.c.h.b16 %v610
        %v1237 = vunpack.c.l.b16 %v611
        %v1238 = vunpack.c.h.b16 %v611
        %v1239 = vunpack.c.l.b16 %v612
        %v1240 = vunpack.c.h.b16 %v612
        %v1241 = vunpack.c.l.b16 %v613
        %v1242 = vunpack.c.h.b16 %v613
        %v1243 = vunpack.c.l.b16 %v614
        %v1244 = vunpack.c.h.b16 %v614
        %v1245 = vunpack.c.l.b16 %v615
        %v1246 = vunpack.c.h.b16 %v615
        %v1247 = vunpack.c.l.b16 %v616
        %v1248 = vunpack.c.h.b16 %v616
        %v1249 = vunpack.c.l.b16 %v617
        %v1250 = vunpack.c.h.b16 %v617
        %v1251 = vunpack.c.l.b16 %v618
        %v1252 = vunpack.c.h.b16 %v618
        %v1253 = vunpack.c.l.b16 %v619
        %v1254 = vunpack.c.h.b16 %v619
        %v1255 = vunpack.c.l.b16 %v620
        %v1256 = vunpack.c.h.b16 %v620
        %v1257 = vunpack.c.l.b16 %v621
        %v1258 = vunpack.c.h.b16 %v621
        %v1259 = vunpack.c.l.b16 %v622
        %v1260 = vunpack.c.h.b16 %v622
        %v1261 = vunpack.c.l.b16 %v623
        %v1262 = vunpack.c.h.b16 %v623
        %v1263 = vunpack.c.l.b16 %v624
        %v1264 = vunpack.c.h.b16 %v624
        %v1265 = vunpack.c.l.b16 %v625
        %v1266 = vunpack.c.h.b16 %v625
        %v1267 = vunpack.c.l.b16 %v626
        %v1268 = vunpack.c.h.b16 %v626
        %v1269 = vunpack.c.l.b16 %v627
        %v1270 = vunpack.c.h.b16 %v627
        %v1271 = vunpack.c.l.b16 %v628
        %v1272 = vunpack.c.h.b16 %v628
        %v1273 = vunpack.c.l.b16 %v629
        %v1274 = vunpack.c.h.b16 %v629
        %v1275 = vunpack.c.l.b16 %v630
        %v1276 = vunpack.c.h.b16 %v630
        %v1277 = vunpack.c.l.b16 %v631
        %v1278 = vunpack.c.h.b16 %v631
        %v1279 = vunpack.c.l.b16 %v632
        %v1280 = vunpack.c.h.b16 %v632
        %v1281 = vunpack.c.l.b16 %v633
        %v1282 = vunpack.c.h.b16 %v633
        %v1283 = vunpack.c.l.b16 %v634
        %v1284 = vunpack.c.h.b16 %v634
        %v1285 = vunpack.c.l.b16 %v635
        %v1286 = vunpack.c.h.b16 %v635
        %v1287 = vunpack.c.l.b16 %v636
        %v1288 = vunpack.c.h.b16 %v636
        %v1289 = vunpack.c.l.b16 %v637
        %v1290 = vunpack.c.h.b16 %v637
        %v1291 = vunpack.c.l.b16 %v638
        %v1292 = vunpack.c.h.b16 %v638
        %v1293 = vunpack.c.l.b16 %v639
        %v1294 = vunpack.c.h.b16 %v639
        %v1295 = vunpack.c.l.b16 %v640
        %v1296 = vunpack.c.h.b16 %v640
        %v1297 = vunpack.c.l.b16 %v641
        %v1298 = vunpack.c.h.b16 %v641
        %v1299 = vunpack.c.l.b16 %v642
        %v1300 = vunpack.c.h.b16 %v642
        %v1301 = vunpack.c.l.b16 %v643
        %v1302 = vunpack.c.h.b16 %v643
        %v1303 = vunpack.c.l.b16 %v644
        %v1304 = vunpack.c.h.b16 %v644
        %v1305 = vunpack.c.l.b16 %v645
        %v1306 = vunpack.c.h.b16 %v645
        %v1307 = vunpack.c.l.b16 %v646
        %v1308 = vunpack.c.h.b16 %v646
        %v1309 = vunpack.c.l.b16 %v647
        %v1310 = vunpack.c.h.b16 %v647
        %v1311 = vunpack.c.l.b16 %v648
        %v1312 = vunpack.c.h.b16 %v648
        %v1313 = vunpack.c.l.b16 %v649
        %v1314 = vunpack.c.h.b16 %v649
        %v1315 = vunpack.c.l.b16 %v650
        %v1316 = vunpack.c.h.b16 %v650
        %v1317 = vunpack.c.l.b16 %v651
        %v1318 = vunpack.c.h.b16 %v651
        %v1319 = vunpack.c.l.b16 %v652
        %v1320 = vunpack.c.h.b16 %v652
        %v1321 = vunpack.c.l.b16 %v653
        %v1322 = vunpack.c.h.b16 %v653
        %v1323 = vunpack.c.l.b16 %v654
        %v1324 = vunpack.c.h.b16 %v654
        %v1325 = vpack.c.b16 %v1197, %v1195
        %v1326 = vpack.c.b16 %v1198, %v1196
        %v1327 = vpack.c.b16 %v1201, %v1199
        %v1328 = vpack.c.b16 %v1202, %v1200
        %v1329 = vpack.c.b16 %v1205, %v1203
        %v1330 = vpack.c.b16 %v1206, %v1204
        %v1331 = vpack.c.b16 %v1209, %v1207
        %v1332 = vpack.c.b16 %v1210, %v1208
        %v1333 = vpack.c.b16 %v1213, %v1211
        %v1334 = vpack.c.b16 %v1214, %v1212
        %v1335 = vpack.c.b16 %v1217, %v1215
        %v1336 = vpack.c.b16 %v1218, %v1216
        %v1337 = vpack.c.b16 %v1221, %v1219
        %v1338 = vpack.c.b16 %v1222, %v1220
        %v1339 = vpack.c.b16 %v1225, %v1223
        %v1340 = vpack.c.b16 %v1226, %v1224
        %v1341 = vpack.c.b16 %v1229, %v1227
        %v1342 = vpack.c.b16 %v1230, %v1228
        %v1343 = vpack.c.b16 %v1233, %v1231
        %v1344 = vpack.c.b16 %v1234, %v1232
        %v1345 = vpack.c.b16 %v1237, %v1235
        %v1346 = vpack.c.b16 %v1238, %v1236
        %v1347 = vpack.c.b16 %v1241, %v1239
        %v1348 = vpack.c.b16 %v1242, %v1240
        %v1349 = vpack.c.b16 %v1245, %v1243
        %v1350 = vpack.c.b16 %v1246, %v1244
        %v1351 = vpack.c.b16 %v1249, %v1247
        %v1352 = vpack.c.b16 %v1250, %v1248
        %v1353 = vpack.c.b16 %v1253, %v1251
        %v1354 = vpack.c.b16 %v1254, %v1252
        %v1355 = vpack.c.b16 %v1257, %v1255
        %v1356 = vpack.c.b16 %v1258, %v1256
        %v1357 = vpack.c.b16 %v1261, %v1259
        %v1358 = vpack.c.b16 %v1262, %v1260
        %v1359 = vpack.c.b16 %v1265, %v1263
        %v1360 = vpack.c.b16 %v1266, %v1264
        %v1361 = vpack.c.b16 %v1269, %v1267
        %v1362 = vpack.c.b16 %v1270, %v1268
        %v1363 = vpack.c.b16 %v1273, %v1271
        %v1364 = vpack.c.b16 %v1274, %v1272
        %v1365 = vpack.c.b16 %v1277, %v1275
        %v1366 = vpack.c.b16 %v1278, %v1276
        %v1367 = vpack.c.b16 %v1281, %v1279
        %v1368 = vpack.c.b16 %v1282, %v1280
        %v1369 = vpack.c.b16 %v1285, %v1283
        %v1370 = vpack.c.b16 %v1286, %v1284
        %v1371 = vpack.c.b16 %v1289, %v1287
        %v1372 = vpack.c.b16 %v1290, %v1288
        %v1373 = vpack.c.b16 %v1293, %v1291
        %v1374 = vpack.c.b16 %v1294, %v1292
        %v1375 = vpack.c.b16 %v1297, %v1295
        %v1376 = vpack.c.b16 %v1298, %v1296
        %v1377 = vpack.c.b16 %v1301, %v1299
        %v1378 = vpack.c.b16 %v1302, %v1300
        %v1379 = vpack.c.b16 %v1305, %v1303
        %v1380 = vpack.c.b16 %v1306, %v1304
        %v1381 = vpack.c.b16 %v1309, %v1307
        %v1382 = vpack.c.b16 %v1310, %v1308
        %v1383 = vpack.c.b16 %v1313, %v1311
        %v1384 = vpack.c.b16 %v1314, %v1312
        %v1385 = vpack.c.b16 %v1317, %v1315
        %v1386 = vpack.c.b16 %v1318, %v1316
        %v1387 = vpack.c.b16 %v1321, %v1319
        %v1388 = vpack.c.b16 %v1322, %v1320
        %v1389 = vpack.c.b16 %v1323, %v1323
        %v1390 = vpack.c.b16 %v1324, %v1324
        %vm1455 = vcmask 7168
        %v1457 = vsel %vm1455, %v963, 0
        %v1460 = vsel %vm1455, %v968, 0
        %v1463 = vsel %vm1455, %v973, 0
        %v1466 = vsel %vm1455, %v978, 0
        %v1469 = vsel %vm1455, %v983, 0
        %v1472 = vsel %vm1455, %v988, 0
        %v1475 = vsel %vm1455, %v993, 0
        %v1478 = vsel %vm1455, %v998, 0
        %v1481 = vsel %vm1455, %v1003, 0
        %v1484 = vsel %vm1455, %v1008, 0
        %v1487 = vsel %vm1455, %v1013, 0
        %v1490 = vsel %vm1455, %v1018, 0
        %v1493 = vsel %vm1455, %v1023, 0
        %v1496 = vsel %vm1455, %v1028, 0
        %v1499 = vsel %vm1455, %v1033, 0
        %v1502 = vsel %vm1455, %v1038, 0
        %v1505 = vsel %vm1455, %v1043, 0
        %v1508 = vsel %vm1455, %v1048, 0
        %v1511 = vsel %vm1455, %v1053, 0
        %vm1513 = vcmask 1040384
        %v1514 = vsel 0, 4294967295, 65535
        %v1515 = vsel %vm1513, %v1514, 0
        %v1517 = vand.u32 %v1389, %v1515
        %v1520 = vand.u32 %v1390, %v1515
        %1522 = vmatprep.subr.bf16.mxu0 %v1340
        %1523 = vmatpush1.bf16.msra.mxu0 %v1339
        %1524 = vmatprep.subr.bf16.mxu0 %v1338
        %1525 = vmatpush1.bf16.msra.mxu0 %v1337
        %1526 = vmatprep.subr.bf16.mxu0 %v1336
        %1527 = vmatpush1.bf16.msra.mxu0 %v1335
        %1528 = vmatprep.subr.bf16.mxu0 %v1334
        %1529 = vmatpush1.bf16.msra.mxu0 %v1333
        %1530 = vmatprep.subr.bf16.mxu0 %v1332
        %1531 = vmatpush1.bf16.msra.mxu0 %v1331
        %1532 = vmatprep.subr.bf16.mxu0 %v1330
        %1533 = vmatpush1.bf16.msra.mxu0 %v1329
        %1534 = vmatprep.subr.bf16.mxu0 %v1328
        %1535 = vmatpush1.bf16.msra.mxu0 %v1327
        %1536 = vmatprep.subr.bf16.mxu0 %v1326
        %1537 = vmatpush1.bf16.msra.mxu0 %v1325
        %1538 = vmatprep.subr.bf16.mxu0 %v1356
        %1539 = vmatpush2.bf16.msra.mxu0 %v1355
        %1540 = vmatprep.subr.bf16.mxu0 %v1354
        %1541 = vmatpush2.bf16.msra.mxu0 %v1353
        %1542 = vmatprep.subr.bf16.mxu0 %v1352
        %1543 = vmatpush2.bf16.msra.mxu0 %v1351
        %1544 = vmatprep.subr.bf16.mxu0 %v1350
        %1545 = vmatpush2.bf16.msra.mxu0 %v1349
        %1546 = vmatprep.subr.bf16.mxu0 %v1348
        %1547 = vmatpush2.bf16.msra.mxu0 %v1347
        %1548 = vmatprep.subr.bf16.mxu0 %v1346
        %1549 = vmatpush2.bf16.msra.mxu0 %v1345
        %1550 = vmatprep.subr.bf16.mxu0 %v1344
        %1551 = vmatpush2.bf16.msra.mxu0 %v1343
        %1552 = vmatprep.subr.bf16.mxu0 %v1342
        %1553 = vmatpush2.bf16.msra.mxu0 %v1341
        %1554 = vmatprep.mubr.bf16.mxu0 %v960
        %1555 = vmatmul.mubr.bf16.gmra.mxu0 %v959
        %v1556 = vpop.f32.mrf.mxu0
        %v1557 = vadd.f32 0.0, %v1556
        %v1558 = vpop.f32.mrf.mxu0
        %v1559 = vadd.f32 0.0, %v1558
        %v1560 = vpop.f32.mrf.mxu0
        %v1561 = vadd.f32 0.0, %v1560
        %v1562 = vpop.f32.mrf.mxu0
        %v1563 = vadd.f32 0.0, %v1562
        %1564 = vmatprep.mubr.bf16.mxu0 %v965
        %1565 = vmatmul.mubr.bf16.gmra.mxu0 %v964
        %v1566 = vpop.f32.mrf.mxu0
        %v1567 = vadd.f32 0.0, %v1566
        %v1568 = vpop.f32.mrf.mxu0
        %v1569 = vadd.f32 0.0, %v1568
        %v1570 = vpop.f32.mrf.mxu0
        %v1571 = vadd.f32 0.0, %v1570
        %v1572 = vpop.f32.mrf.mxu0
        %v1573 = vadd.f32 0.0, %v1572
        %1574 = vmatprep.mubr.bf16.mxu0 %v970
        %1575 = vmatmul.mubr.bf16.gmra.mxu0 %v969
        %v1576 = vpop.f32.mrf.mxu0
        %v1577 = vadd.f32 0.0, %v1576
        %v1578 = vpop.f32.mrf.mxu0
        %v1579 = vadd.f32 0.0, %v1578
        %v1580 = vpop.f32.mrf.mxu0
        %v1581 = vadd.f32 0.0, %v1580
        %v1582 = vpop.f32.mrf.mxu0
        %v1583 = vadd.f32 0.0, %v1582
        %1584 = vmatprep.mubr.bf16.mxu0 %v975
        %1585 = vmatmul.mubr.bf16.gmra.mxu0 %v974
        %v1586 = vpop.f32.mrf.mxu0
        %v1587 = vadd.f32 0.0, %v1586
        %v1588 = vpop.f32.mrf.mxu0
        %v1589 = vadd.f32 0.0, %v1588
        %v1590 = vpop.f32.mrf.mxu0
        %v1591 = vadd.f32 0.0, %v1590
        %v1592 = vpop.f32.mrf.mxu0
        %v1593 = vadd.f32 0.0, %v1592
        %1594 = vmatprep.mubr.bf16.mxu0 %v980
        %1595 = vmatmul.mubr.bf16.gmra.mxu0 %v979
        %v1596 = vpop.f32.mrf.mxu0
        %v1597 = vadd.f32 0.0, %v1596
        %v1598 = vpop.f32.mrf.mxu0
        %v1599 = vadd.f32 0.0, %v1598
        %v1600 = vpop.f32.mrf.mxu0
        %v1601 = vadd.f32 0.0, %v1600
        %v1602 = vpop.f32.mrf.mxu0
        %v1603 = vadd.f32 0.0, %v1602
        %1604 = vmatprep.mubr.bf16.mxu0 %v985
        %1605 = vmatmul.mubr.bf16.gmra.mxu0 %v984
        %v1606 = vpop.f32.mrf.mxu0
        %v1607 = vadd.f32 0.0, %v1606
        %v1608 = vpop.f32.mrf.mxu0
        %v1609 = vadd.f32 0.0, %v1608
        %v1610 = vpop.f32.mrf.mxu0
        %v1611 = vadd.f32 0.0, %v1610
        %v1612 = vpop.f32.mrf.mxu0
        %v1613 = vadd.f32 0.0, %v1612
        %1614 = vmatprep.mubr.bf16.mxu0 %v990
        %1615 = vmatmul.mubr.bf16.gmra.mxu0 %v989
        %v1616 = vpop.f32.mrf.mxu0
        %v1617 = vadd.f32 0.0, %v1616
        %v1618 = vpop.f32.mrf.mxu0
        %v1619 = vadd.f32 0.0, %v1618
        %v1620 = vpop.f32.mrf.mxu0
        %v1621 = vadd.f32 0.0, %v1620
        %v1622 = vpop.f32.mrf.mxu0
        %v1623 = vadd.f32 0.0, %v1622
        %1624 = vmatprep.mubr.bf16.mxu0 %v995
        %1625 = vmatmul.mubr.bf16.gmra.mxu0 %v994
        %v1626 = vpop.f32.mrf.mxu0
        %v1627 = vadd.f32 0.0, %v1626
        %v1628 = vpop.f32.mrf.mxu0
        %v1629 = vadd.f32 0.0, %v1628
        %v1630 = vpop.f32.mrf.mxu0
        %v1631 = vadd.f32 0.0, %v1630
        %v1632 = vpop.f32.mrf.mxu0
        %v1633 = vadd.f32 0.0, %v1632
        %1634 = vmatprep.mubr.bf16.mxu0 %v1000
        %1635 = vmatmul.mubr.bf16.gmra.mxu0 %v999
        %v1636 = vpop.f32.mrf.mxu0
        %v1637 = vadd.f32 0.0, %v1636
        %v1638 = vpop.f32.mrf.mxu0
        %v1639 = vadd.f32 0.0, %v1638
        %v1640 = vpop.f32.mrf.mxu0
        %v1641 = vadd.f32 0.0, %v1640
        %v1642 = vpop.f32.mrf.mxu0
        %v1643 = vadd.f32 0.0, %v1642
        %1644 = vmatprep.mubr.bf16.mxu0 %v1005
        %1645 = vmatmul.mubr.bf16.gmra.mxu0 %v1004
        %v1646 = vpop.f32.mrf.mxu0
        %v1647 = vadd.f32 0.0, %v1646
        %v1648 = vpop.f32.mrf.mxu0
        %v1649 = vadd.f32 0.0, %v1648
        %v1650 = vpop.f32.mrf.mxu0
        %v1651 = vadd.f32 0.0, %v1650
        %v1652 = vpop.f32.mrf.mxu0
        %v1653 = vadd.f32 0.0, %v1652
        %1654 = vmatprep.mubr.bf16.mxu0 %v1010
        %1655 = vmatmul.mubr.bf16.gmra.mxu0 %v1009
        %v1656 = vpop.f32.mrf.mxu0
        %v1657 = vadd.f32 0.0, %v1656
        %v1658 = vpop.f32.mrf.mxu0
        %v1659 = vadd.f32 0.0, %v1658
        %v1660 = vpop.f32.mrf.mxu0
        %v1661 = vadd.f32 0.0, %v1660
        %v1662 = vpop.f32.mrf.mxu0
        %v1663 = vadd.f32 0.0, %v1662
        %1664 = vmatprep.mubr.bf16.mxu0 %v1015
        %1665 = vmatmul.mubr.bf16.gmra.mxu0 %v1014
        %v1666 = vpop.f32.mrf.mxu0
        %v1667 = vadd.f32 0.0, %v1666
        %v1668 = vpop.f32.mrf.mxu0
        %v1669 = vadd.f32 0.0, %v1668
        %v1670 = vpop.f32.mrf.mxu0
        %v1671 = vadd.f32 0.0, %v1670
        %v1672 = vpop.f32.mrf.mxu0
        %v1673 = vadd.f32 0.0, %v1672
        %1674 = vmatprep.mubr.bf16.mxu0 %v1020
        %1675 = vmatmul.mubr.bf16.gmra.mxu0 %v1019
        %v1676 = vpop.f32.mrf.mxu0
        %v1677 = vadd.f32 0.0, %v1676
        %v1678 = vpop.f32.mrf.mxu0
        %v1679 = vadd.f32 0.0, %v1678
        %v1680 = vpop.f32.mrf.mxu0
        %v1681 = vadd.f32 0.0, %v1680
        %v1682 = vpop.f32.mrf.mxu0
        %v1683 = vadd.f32 0.0, %v1682
        %1684 = vmatprep.mubr.bf16.mxu0 %v1025
        %1685 = vmatmul.mubr.bf16.gmra.mxu0 %v1024
        %v1686 = vpop.f32.mrf.mxu0
        %v1687 = vadd.f32 0.0, %v1686
        %v1688 = vpop.f32.mrf.mxu0
        %v1689 = vadd.f32 0.0, %v1688
        %v1690 = vpop.f32.mrf.mxu0
        %v1691 = vadd.f32 0.0, %v1690
        %v1692 = vpop.f32.mrf.mxu0
        %v1693 = vadd.f32 0.0, %v1692
        %1694 = vmatprep.mubr.bf16.mxu0 %v1030
        %1695 = vmatmul.mubr.bf16.gmra.mxu0 %v1029
        %v1696 = vpop.f32.mrf.mxu0
        %v1697 = vadd.f32 0.0, %v1696
        %v1698 = vpop.f32.mrf.mxu0
        %v1699 = vadd.f32 0.0, %v1698
        %v1700 = vpop.f32.mrf.mxu0
        %v1701 = vadd.f32 0.0, %v1700
        %v1702 = vpop.f32.mrf.mxu0
        %v1703 = vadd.f32 0.0, %v1702
        %1704 = vmatprep.mubr.bf16.mxu0 %v1035
        %1705 = vmatmul.mubr.bf16.gmra.mxu0 %v1034
        %v1706 = vpop.f32.mrf.mxu0
        %v1707 = vadd.f32 0.0, %v1706
        %v1708 = vpop.f32.mrf.mxu0
        %v1709 = vadd.f32 0.0, %v1708
        %v1710 = vpop.f32.mrf.mxu0
        %v1711 = vadd.f32 0.0, %v1710
        %v1712 = vpop.f32.mrf.mxu0
        %v1713 = vadd.f32 0.0, %v1712
        %1714 = vmatprep.mubr.bf16.mxu0 %v1040
        %1715 = vmatmul.mubr.bf16.gmra.mxu0 %v1039
        %v1716 = vpop.f32.mrf.mxu0
        %v1717 = vadd.f32 0.0, %v1716
        %v1718 = vpop.f32.mrf.mxu0
        %v1719 = vadd.f32 0.0, %v1718
        %v1720 = vpop.f32.mrf.mxu0
        %v1721 = vadd.f32 0.0, %v1720
        %v1722 = vpop.f32.mrf.mxu0
        %v1723 = vadd.f32 0.0, %v1722
        %1724 = vmatprep.mubr.bf16.mxu0 %v1045
        %1725 = vmatmul.mubr.bf16.gmra.mxu0 %v1044
        %v1726 = vpop.f32.mrf.mxu0
        %v1727 = vadd.f32 0.0, %v1726
        %v1728 = vpop.f32.mrf.mxu0
        %v1729 = vadd.f32 0.0, %v1728
        %v1730 = vpop.f32.mrf.mxu0
        %v1731 = vadd.f32 0.0, %v1730
        %v1732 = vpop.f32.mrf.mxu0
        %v1733 = vadd.f32 0.0, %v1732
        %1734 = vmatprep.mubr.bf16.mxu0 %v1050
        %1735 = vmatmul.mubr.bf16.gmra.mxu0 %v1049
        %v1736 = vpop.f32.mrf.mxu0
        %v1737 = vadd.f32 0.0, %v1736
        %v1738 = vpop.f32.mrf.mxu0
        %v1739 = vadd.f32 0.0, %v1738
        %v1740 = vpop.f32.mrf.mxu0
        %v1741 = vadd.f32 0.0, %v1740
        %v1742 = vpop.f32.mrf.mxu0
        %v1743 = vadd.f32 0.0, %v1742
        %1744 = vdwg.mxu0
        %1745 = vmatprep.subr.bf16.mxu0 %v1372
        %1746 = vmatpush1.bf16.msra.mxu0 %v1371
        %1747 = vmatprep.subr.bf16.mxu0 %v1370
        %1748 = vmatpush1.bf16.msra.mxu0 %v1369
        %1749 = vmatprep.subr.bf16.mxu0 %v1368
        %1750 = vmatpush1.bf16.msra.mxu0 %v1367
        %1751 = vmatprep.subr.bf16.mxu0 %v1366
        %1752 = vmatpush1.bf16.msra.mxu0 %v1365
        %1753 = vmatprep.subr.bf16.mxu0 %v1364
        %1754 = vmatpush1.bf16.msra.mxu0 %v1363
        %1755 = vmatprep.subr.bf16.mxu0 %v1362
        %1756 = vmatpush1.bf16.msra.mxu0 %v1361
        %1757 = vmatprep.subr.bf16.mxu0 %v1360
        %1758 = vmatpush1.bf16.msra.mxu0 %v1359
        %1759 = vmatprep.subr.bf16.mxu0 %v1358
        %1760 = vmatpush1.bf16.msra.mxu0 %v1357
        %1761 = vmatprep.subr.bf16.mxu0 %v1388
        %1762 = vmatpush2.bf16.msra.mxu0 %v1387
        %1763 = vmatprep.subr.bf16.mxu0 %v1386
        %1764 = vmatpush2.bf16.msra.mxu0 %v1385
        %1765 = vmatprep.subr.bf16.mxu0 %v1384
        %1766 = vmatpush2.bf16.msra.mxu0 %v1383
        %1767 = vmatprep.subr.bf16.mxu0 %v1382
        %1768 = vmatpush2.bf16.msra.mxu0 %v1381
        %1769 = vmatprep.subr.bf16.mxu0 %v1380
        %1770 = vmatpush2.bf16.msra.mxu0 %v1379
        %1771 = vmatprep.subr.bf16.mxu0 %v1378
        %1772 = vmatpush2.bf16.msra.mxu0 %v1377
        %1773 = vmatprep.subr.bf16.mxu0 %v1376
        %1774 = vmatpush2.bf16.msra.mxu0 %v1375
        %1775 = vmatprep.subr.bf16.mxu0 %v1374
        %1776 = vmatpush2.bf16.msra.mxu0 %v1373
        %1777 = vmatprep.mubr.bf16.mxu0 %v962
        %1778 = vmatmul.mubr.bf16.gmra.mxu0 %v961
        %v1779 = vpop.f32.mrf.mxu0
        %v1780 = vadd.f32 %v1557, %v1779
        %v1781 = vpop.f32.mrf.mxu0
        %v1782 = vadd.f32 %v1559, %v1781
        %v1783 = vpop.f32.mrf.mxu0
        %v1784 = vadd.f32 %v1561, %v1783
        %v1785 = vpop.f32.mrf.mxu0
        %v1786 = vadd.f32 %v1563, %v1785
        %1787 = vmatprep.mubr.bf16.mxu0 %v967
        %1788 = vmatmul.mubr.bf16.gmra.mxu0 %v966
        %v1789 = vpop.f32.mrf.mxu0
        %v1790 = vadd.f32 %v1567, %v1789
        %v1791 = vpop.f32.mrf.mxu0
        %v1792 = vadd.f32 %v1569, %v1791
        %v1793 = vpop.f32.mrf.mxu0
        %v1794 = vadd.f32 %v1571, %v1793
        %v1795 = vpop.f32.mrf.mxu0
        %v1796 = vadd.f32 %v1573, %v1795
        %1797 = vmatprep.mubr.bf16.mxu0 %v972
        %1798 = vmatmul.mubr.bf16.gmra.mxu0 %v971
        %v1799 = vpop.f32.mrf.mxu0
        %v1800 = vadd.f32 %v1577, %v1799
        %v1801 = vpop.f32.mrf.mxu0
        %v1802 = vadd.f32 %v1579, %v1801
        %v1803 = vpop.f32.mrf.mxu0
        %v1804 = vadd.f32 %v1581, %v1803
        %v1805 = vpop.f32.mrf.mxu0
        %v1806 = vadd.f32 %v1583, %v1805
        %1807 = vmatprep.mubr.bf16.mxu0 %v977
        %1808 = vmatmul.mubr.bf16.gmra.mxu0 %v976
        %v1809 = vpop.f32.mrf.mxu0
        %v1810 = vadd.f32 %v1587, %v1809
        %v1811 = vpop.f32.mrf.mxu0
        %v1812 = vadd.f32 %v1589, %v1811
        %v1813 = vpop.f32.mrf.mxu0
        %v1814 = vadd.f32 %v1591, %v1813
        %v1815 = vpop.f32.mrf.mxu0
        %v1816 = vadd.f32 %v1593, %v1815
        %1817 = vmatprep.mubr.bf16.mxu0 %v982
        %1818 = vmatmul.mubr.bf16.gmra.mxu0 %v981
        %v1819 = vpop.f32.mrf.mxu0
        %v1820 = vadd.f32 %v1597, %v1819
        %v1821 = vpop.f32.mrf.mxu0
        %v1822 = vadd.f32 %v1599, %v1821
        %v1823 = vpop.f32.mrf.mxu0
        %v1824 = vadd.f32 %v1601, %v1823
        %v1825 = vpop.f32.mrf.mxu0
        %v1826 = vadd.f32 %v1603, %v1825
        %1827 = vmatprep.mubr.bf16.mxu0 %v987
        %1828 = vmatmul.mubr.bf16.gmra.mxu0 %v986
        %v1829 = vpop.f32.mrf.mxu0
        %v1830 = vadd.f32 %v1607, %v1829
        %v1831 = vpop.f32.mrf.mxu0
        %v1832 = vadd.f32 %v1609, %v1831
        %v1833 = vpop.f32.mrf.mxu0
        %v1834 = vadd.f32 %v1611, %v1833
        %v1835 = vpop.f32.mrf.mxu0
        %v1836 = vadd.f32 %v1613, %v1835
        %1837 = vmatprep.mubr.bf16.mxu0 %v992
        %1838 = vmatmul.mubr.bf16.gmra.mxu0 %v991
        %v1839 = vpop.f32.mrf.mxu0
        %v1840 = vadd.f32 %v1617, %v1839
        %v1841 = vpop.f32.mrf.mxu0
        %v1842 = vadd.f32 %v1619, %v1841
        %v1843 = vpop.f32.mrf.mxu0
        %v1844 = vadd.f32 %v1621, %v1843
        %v1845 = vpop.f32.mrf.mxu0
        %v1846 = vadd.f32 %v1623, %v1845
        %1847 = vmatprep.mubr.bf16.mxu0 %v997
        %1848 = vmatmul.mubr.bf16.gmra.mxu0 %v996
        %v1849 = vpop.f32.mrf.mxu0
        %v1850 = vadd.f32 %v1627, %v1849
        %v1851 = vpop.f32.mrf.mxu0
        %v1852 = vadd.f32 %v1629, %v1851
        %v1853 = vpop.f32.mrf.mxu0
        %v1854 = vadd.f32 %v1631, %v1853
        %v1855 = vpop.f32.mrf.mxu0
        %v1856 = vadd.f32 %v1633, %v1855
        %1857 = vmatprep.mubr.bf16.mxu0 %v1002
        %1858 = vmatmul.mubr.bf16.gmra.mxu0 %v1001
        %v1859 = vpop.f32.mrf.mxu0
        %v1860 = vadd.f32 %v1637, %v1859
        %v1861 = vpop.f32.mrf.mxu0
        %v1862 = vadd.f32 %v1639, %v1861
        %v1863 = vpop.f32.mrf.mxu0
        %v1864 = vadd.f32 %v1641, %v1863
        %v1865 = vpop.f32.mrf.mxu0
        %v1866 = vadd.f32 %v1643, %v1865
        %1867 = vmatprep.mubr.bf16.mxu0 %v1007
        %1868 = vmatmul.mubr.bf16.gmra.mxu0 %v1006
        %v1869 = vpop.f32.mrf.mxu0
        %v1870 = vadd.f32 %v1647, %v1869
        %v1871 = vpop.f32.mrf.mxu0
        %v1872 = vadd.f32 %v1649, %v1871
        %v1873 = vpop.f32.mrf.mxu0
        %v1874 = vadd.f32 %v1651, %v1873
        %v1875 = vpop.f32.mrf.mxu0
        %v1876 = vadd.f32 %v1653, %v1875
        %1877 = vmatprep.mubr.bf16.mxu0 %v1012
        %1878 = vmatmul.mubr.bf16.gmra.mxu0 %v1011
        %v1879 = vpop.f32.mrf.mxu0
        %v1880 = vadd.f32 %v1657, %v1879
        %v1881 = vpop.f32.mrf.mxu0
        %v1882 = vadd.f32 %v1659, %v1881
        %v1883 = vpop.f32.mrf.mxu0
        %v1884 = vadd.f32 %v1661, %v1883
        %v1885 = vpop.f32.mrf.mxu0
        %v1886 = vadd.f32 %v1663, %v1885
        %1887 = vmatprep.mubr.bf16.mxu0 %v1017
        %1888 = vmatmul.mubr.bf16.gmra.mxu0 %v1016
        %v1889 = vpop.f32.mrf.mxu0
        %v1890 = vadd.f32 %v1667, %v1889
        %v1891 = vpop.f32.mrf.mxu0
        %v1892 = vadd.f32 %v1669, %v1891
        %v1893 = vpop.f32.mrf.mxu0
        %v1894 = vadd.f32 %v1671, %v1893
        %v1895 = vpop.f32.mrf.mxu0
        %v1896 = vadd.f32 %v1673, %v1895
        %1897 = vmatprep.mubr.bf16.mxu0 %v1022
        %1898 = vmatmul.mubr.bf16.gmra.mxu0 %v1021
        %v1899 = vpop.f32.mrf.mxu0
        %v1900 = vadd.f32 %v1677, %v1899
        %v1901 = vpop.f32.mrf.mxu0
        %v1902 = vadd.f32 %v1679, %v1901
        %v1903 = vpop.f32.mrf.mxu0
        %v1904 = vadd.f32 %v1681, %v1903
        %v1905 = vpop.f32.mrf.mxu0
        %v1906 = vadd.f32 %v1683, %v1905
        %1907 = vmatprep.mubr.bf16.mxu0 %v1027
        %1908 = vmatmul.mubr.bf16.gmra.mxu0 %v1026
        %v1909 = vpop.f32.mrf.mxu0
        %v1910 = vadd.f32 %v1687, %v1909
        %v1911 = vpop.f32.mrf.mxu0
        %v1912 = vadd.f32 %v1689, %v1911
        %v1913 = vpop.f32.mrf.mxu0
        %v1914 = vadd.f32 %v1691, %v1913
        %v1915 = vpop.f32.mrf.mxu0
        %v1916 = vadd.f32 %v1693, %v1915
        %1917 = vmatprep.mubr.bf16.mxu0 %v1032
        %1918 = vmatmul.mubr.bf16.gmra.mxu0 %v1031
        %v1919 = vpop.f32.mrf.mxu0
        %v1920 = vadd.f32 %v1697, %v1919
        %v1921 = vpop.f32.mrf.mxu0
        %v1922 = vadd.f32 %v1699, %v1921
        %v1923 = vpop.f32.mrf.mxu0
        %v1924 = vadd.f32 %v1701, %v1923
        %v1925 = vpop.f32.mrf.mxu0
        %v1926 = vadd.f32 %v1703, %v1925
        %1927 = vmatprep.mubr.bf16.mxu0 %v1037
        %1928 = vmatmul.mubr.bf16.gmra.mxu0 %v1036
        %v1929 = vpop.f32.mrf.mxu0
        %v1930 = vadd.f32 %v1707, %v1929
        %v1931 = vpop.f32.mrf.mxu0
        %v1932 = vadd.f32 %v1709, %v1931
        %v1933 = vpop.f32.mrf.mxu0
        %v1934 = vadd.f32 %v1711, %v1933
        %v1935 = vpop.f32.mrf.mxu0
        %v1936 = vadd.f32 %v1713, %v1935
        %1937 = vmatprep.mubr.bf16.mxu0 %v1042
        %1938 = vmatmul.mubr.bf16.gmra.mxu0 %v1041
        %v1939 = vpop.f32.mrf.mxu0
        %v1940 = vadd.f32 %v1717, %v1939
        %v1941 = vpop.f32.mrf.mxu0
        %v1942 = vadd.f32 %v1719, %v1941
        %v1943 = vpop.f32.mrf.mxu0
        %v1944 = vadd.f32 %v1721, %v1943
        %v1945 = vpop.f32.mrf.mxu0
        %v1946 = vadd.f32 %v1723, %v1945
        %1947 = vmatprep.mubr.bf16.mxu0 %v1047
        %1948 = vmatmul.mubr.bf16.gmra.mxu0 %v1046
        %v1949 = vpop.f32.mrf.mxu0
        %v1950 = vadd.f32 %v1727, %v1949
        %v1951 = vpop.f32.mrf.mxu0
        %v1952 = vadd.f32 %v1729, %v1951
        %v1953 = vpop.f32.mrf.mxu0
        %v1954 = vadd.f32 %v1731, %v1953
        %v1955 = vpop.f32.mrf.mxu0
        %v1956 = vadd.f32 %v1733, %v1955
        %1957 = vmatprep.mubr.bf16.mxu0 %v1052
        %1958 = vmatmul.mubr.bf16.gmra.mxu0 %v1051
        %v1959 = vpop.f32.mrf.mxu0
        %v1960 = vadd.f32 %v1737, %v1959
        %v1961 = vpop.f32.mrf.mxu0
        %v1962 = vadd.f32 %v1739, %v1961
        %v1963 = vpop.f32.mrf.mxu0
        %v1964 = vadd.f32 %v1741, %v1963
        %v1965 = vpop.f32.mrf.mxu0
        %v1966 = vadd.f32 %v1743, %v1965
        %1967 = vdwg.mxu0
        %1968 = vmatprep.subr.bf16.mxu0 0
        %1969 = vmatpush1.bf16.msra.mxu0 0
        %1970 = vmatprep.subr.bf16.mxu0 0
        %1971 = vmatpush1.bf16.msra.mxu0 0
        %1972 = vmatprep.subr.bf16.mxu0 0
        %1973 = vmatpush1.bf16.msra.mxu0 0
        %1974 = vmatprep.subr.bf16.mxu0 0
        %1975 = vmatpush1.bf16.msra.mxu0 0
        %1976 = vmatprep.subr.bf16.mxu0 0
        %1977 = vmatpush1.bf16.msra.mxu0 0
        %1978 = vmatprep.subr.bf16.mxu0 0
        %1979 = vmatpush1.bf16.msra.mxu0 0
        %1980 = vmatprep.subr.bf16.mxu0 0
        %1981 = vmatpush1.bf16.msra.mxu0 0
        %1982 = vmatprep.subr.bf16.mxu0 %v1520
        %1983 = vmatpush1.bf16.msra.mxu0 %v1517
        %1984 = vmatprep.subr.bf16.mxu0 0
        %1985 = vmatpush2.bf16.msra.mxu0 0
        %1986 = vmatprep.subr.bf16.mxu0 0
        %1987 = vmatpush2.bf16.msra.mxu0 0
        %1988 = vmatprep.subr.bf16.mxu0 0
        %1989 = vmatpush2.bf16.msra.mxu0 0
        %1990 = vmatprep.subr.bf16.mxu0 0
        %1991 = vmatpush2.bf16.msra.mxu0 0
        %1992 = vmatprep.subr.bf16.mxu0 0
        %1993 = vmatpush2.bf16.msra.mxu0 0
        %1994 = vmatprep.subr.bf16.mxu0 0
        %1995 = vmatpush2.bf16.msra.mxu0 0
        %1996 = vmatprep.subr.bf16.mxu0 0
        %1997 = vmatpush2.bf16.msra.mxu0 0
        %1998 = vmatprep.subr.bf16.mxu0 0
        %1999 = vmatpush2.bf16.msra.mxu0 0
        %2000 = vmatprep.mubr.bf16.mxu0 0
        %2001 = vmatmul.mubr.bf16.gmra.mxu0 %v1457
        %v2002 = vpop.f32.mrf.mxu0
        %v2003 = vadd.f32 %v1780, %v2002
        %v2004 = vpop.f32.mrf.mxu0
        %v2005 = vadd.f32 %v1782, %v2004
        %v2006 = vpop.f32.mrf.mxu0
        %v2007 = vadd.f32 %v1784, %v2006
        %v2008 = vpop.f32.mrf.mxu0
        %v2009 = vadd.f32 %v1786, %v2008
        %2010 = vmatprep.mubr.bf16.mxu0 0
        %2011 = vmatmul.mubr.bf16.gmra.mxu0 %v1460
        %v2012 = vpop.f32.mrf.mxu0
        %v2013 = vadd.f32 %v1790, %v2012
        %v2014 = vpop.f32.mrf.mxu0
        %v2015 = vadd.f32 %v1792, %v2014
        %v2016 = vpop.f32.mrf.mxu0
        %v2017 = vadd.f32 %v1794, %v2016
        %v2018 = vpop.f32.mrf.mxu0
        %v2019 = vadd.f32 %v1796, %v2018
        %2020 = vmatprep.mubr.bf16.mxu0 0
        %2021 = vmatmul.mubr.bf16.gmra.mxu0 %v1463
        %v2022 = vpop.f32.mrf.mxu0
        %v2023 = vadd.f32 %v1800, %v2022
        %v2024 = vpop.f32.mrf.mxu0
        %v2025 = vadd.f32 %v1802, %v2024
        %v2026 = vpop.f32.mrf.mxu0
        %v2027 = vadd.f32 %v1804, %v2026
        %v2028 = vpop.f32.mrf.mxu0
        %v2029 = vadd.f32 %v1806, %v2028
        %2030 = vmatprep.mubr.bf16.mxu0 0
        %2031 = vmatmul.mubr.bf16.gmra.mxu0 %v1466
        %v2032 = vpop.f32.mrf.mxu0
        %v2033 = vadd.f32 %v1810, %v2032
        %v2034 = vpop.f32.mrf.mxu0
        %v2035 = vadd.f32 %v1812, %v2034
        %v2036 = vpop.f32.mrf.mxu0
        %v2037 = vadd.f32 %v1814, %v2036
        %v2038 = vpop.f32.mrf.mxu0
        %v2039 = vadd.f32 %v1816, %v2038
        %2040 = vmatprep.mubr.bf16.mxu0 0
        %2041 = vmatmul.mubr.bf16.gmra.mxu0 %v1469
        %v2042 = vpop.f32.mrf.mxu0
        %v2043 = vadd.f32 %v1820, %v2042
        %v2044 = vpop.f32.mrf.mxu0
        %v2045 = vadd.f32 %v1822, %v2044
        %v2046 = vpop.f32.mrf.mxu0
        %v2047 = vadd.f32 %v1824, %v2046
        %v2048 = vpop.f32.mrf.mxu0
        %v2049 = vadd.f32 %v1826, %v2048
        %2050 = vmatprep.mubr.bf16.mxu0 0
        %2051 = vmatmul.mubr.bf16.gmra.mxu0 %v1472
        %v2052 = vpop.f32.mrf.mxu0
        %v2053 = vadd.f32 %v1830, %v2052
        %v2054 = vpop.f32.mrf.mxu0
        %v2055 = vadd.f32 %v1832, %v2054
        %v2056 = vpop.f32.mrf.mxu0
        %v2057 = vadd.f32 %v1834, %v2056
        %v2058 = vpop.f32.mrf.mxu0
        %v2059 = vadd.f32 %v1836, %v2058
        %2060 = vmatprep.mubr.bf16.mxu0 0
        %2061 = vmatmul.mubr.bf16.gmra.mxu0 %v1475
        %v2062 = vpop.f32.mrf.mxu0
        %v2063 = vadd.f32 %v1840, %v2062
        %v2064 = vpop.f32.mrf.mxu0
        %v2065 = vadd.f32 %v1842, %v2064
        %v2066 = vpop.f32.mrf.mxu0
        %v2067 = vadd.f32 %v1844, %v2066
        %v2068 = vpop.f32.mrf.mxu0
        %v2069 = vadd.f32 %v1846, %v2068
        %2070 = vmatprep.mubr.bf16.mxu0 0
        %2071 = vmatmul.mubr.bf16.gmra.mxu0 %v1478
        %v2072 = vpop.f32.mrf.mxu0
        %v2073 = vadd.f32 %v1850, %v2072
        %v2074 = vpop.f32.mrf.mxu0
        %v2075 = vadd.f32 %v1852, %v2074
        %v2076 = vpop.f32.mrf.mxu0
        %v2077 = vadd.f32 %v1854, %v2076
        %v2078 = vpop.f32.mrf.mxu0
        %v2079 = vadd.f32 %v1856, %v2078
        %2080 = vmatprep.mubr.bf16.mxu0 0
        %2081 = vmatmul.mubr.bf16.gmra.mxu0 %v1481
        %v2082 = vpop.f32.mrf.mxu0
        %v2083 = vadd.f32 %v1860, %v2082
        %v2084 = vpop.f32.mrf.mxu0
        %v2085 = vadd.f32 %v1862, %v2084
        %v2086 = vpop.f32.mrf.mxu0
        %v2087 = vadd.f32 %v1864, %v2086
        %v2088 = vpop.f32.mrf.mxu0
        %v2089 = vadd.f32 %v1866, %v2088
        %2090 = vmatprep.mubr.bf16.mxu0 0
        %2091 = vmatmul.mubr.bf16.gmra.mxu0 %v1484
        %v2092 = vpop.f32.mrf.mxu0
        %v2093 = vadd.f32 %v1870, %v2092
        %v2094 = vpop.f32.mrf.mxu0
        %v2095 = vadd.f32 %v1872, %v2094
        %v2096 = vpop.f32.mrf.mxu0
        %v2097 = vadd.f32 %v1874, %v2096
        %v2098 = vpop.f32.mrf.mxu0
        %v2099 = vadd.f32 %v1876, %v2098
        %2100 = vmatprep.mubr.bf16.mxu0 0
        %2101 = vmatmul.mubr.bf16.gmra.mxu0 %v1487
        %v2102 = vpop.f32.mrf.mxu0
        %v2103 = vadd.f32 %v1880, %v2102
        %v2104 = vpop.f32.mrf.mxu0
        %v2105 = vadd.f32 %v1882, %v2104
        %v2106 = vpop.f32.mrf.mxu0
        %v2107 = vadd.f32 %v1884, %v2106
        %v2108 = vpop.f32.mrf.mxu0
        %v2109 = vadd.f32 %v1886, %v2108
        %2110 = vmatprep.mubr.bf16.mxu0 0
        %2111 = vmatmul.mubr.bf16.gmra.mxu0 %v1490
        %v2112 = vpop.f32.mrf.mxu0
        %v2113 = vadd.f32 %v1890, %v2112
        %v2114 = vpop.f32.mrf.mxu0
        %v2115 = vadd.f32 %v1892, %v2114
        %v2116 = vpop.f32.mrf.mxu0
        %v2117 = vadd.f32 %v1894, %v2116
        %v2118 = vpop.f32.mrf.mxu0
        %v2119 = vadd.f32 %v1896, %v2118
        %2120 = vmatprep.mubr.bf16.mxu0 0
        %2121 = vmatmul.mubr.bf16.gmra.mxu0 %v1493
        %v2122 = vpop.f32.mrf.mxu0
        %v2123 = vadd.f32 %v1900, %v2122
        %v2124 = vpop.f32.mrf.mxu0
        %v2125 = vadd.f32 %v1902, %v2124
        %v2126 = vpop.f32.mrf.mxu0
        %v2127 = vadd.f32 %v1904, %v2126
        %v2128 = vpop.f32.mrf.mxu0
        %v2129 = vadd.f32 %v1906, %v2128
        %2130 = vmatprep.mubr.bf16.mxu0 0
        %2131 = vmatmul.mubr.bf16.gmra.mxu0 %v1496
        %v2132 = vpop.f32.mrf.mxu0
        %v2133 = vadd.f32 %v1910, %v2132
        %v2134 = vpop.f32.mrf.mxu0
        %v2135 = vadd.f32 %v1912, %v2134
        %v2136 = vpop.f32.mrf.mxu0
        %v2137 = vadd.f32 %v1914, %v2136
        %v2138 = vpop.f32.mrf.mxu0
        %v2139 = vadd.f32 %v1916, %v2138
        %2140 = vmatprep.mubr.bf16.mxu0 0
        %2141 = vmatmul.mubr.bf16.gmra.mxu0 %v1499
        %v2142 = vpop.f32.mrf.mxu0
        %v2143 = vadd.f32 %v1920, %v2142
        %v2144 = vpop.f32.mrf.mxu0
        %v2145 = vadd.f32 %v1922, %v2144
        %v2146 = vpop.f32.mrf.mxu0
        %v2147 = vadd.f32 %v1924, %v2146
        %v2148 = vpop.f32.mrf.mxu0
        %v2149 = vadd.f32 %v1926, %v2148
        %2150 = vmatprep.mubr.bf16.mxu0 0
        %2151 = vmatmul.mubr.bf16.gmra.mxu0 %v1502
        %v2152 = vpop.f32.mrf.mxu0
        %v2153 = vadd.f32 %v1930, %v2152
        %v2154 = vpop.f32.mrf.mxu0
        %v2155 = vadd.f32 %v1932, %v2154
        %v2156 = vpop.f32.mrf.mxu0
        %v2157 = vadd.f32 %v1934, %v2156
        %v2158 = vpop.f32.mrf.mxu0
        %v2159 = vadd.f32 %v1936, %v2158
        %2160 = vmatprep.mubr.bf16.mxu0 0
        %2161 = vmatmul.mubr.bf16.gmra.mxu0 %v1505
        %v2162 = vpop.f32.mrf.mxu0
        %v2163 = vadd.f32 %v1940, %v2162
        %v2164 = vpop.f32.mrf.mxu0
        %v2165 = vadd.f32 %v1942, %v2164
        %v2166 = vpop.f32.mrf.mxu0
        %v2167 = vadd.f32 %v1944, %v2166
        %v2168 = vpop.f32.mrf.mxu0
        %v2169 = vadd.f32 %v1946, %v2168
        %2170 = vmatprep.mubr.bf16.mxu0 0
        %2171 = vmatmul.mubr.bf16.gmra.mxu0 %v1508
        %v2172 = vpop.f32.mrf.mxu0
        %v2173 = vadd.f32 %v1950, %v2172
        %v2174 = vpop.f32.mrf.mxu0
        %v2175 = vadd.f32 %v1952, %v2174
        %v2176 = vpop.f32.mrf.mxu0
        %v2177 = vadd.f32 %v1954, %v2176
        %v2178 = vpop.f32.mrf.mxu0
        %v2179 = vadd.f32 %v1956, %v2178
        %2180 = vmatprep.mubr.bf16.mxu0 0
        %2181 = vmatmul.mubr.bf16.gmra.mxu0 %v1511
        %v2182 = vpop.f32.mrf.mxu0
        %v2183 = vadd.f32 %v1960, %v2182
        %v2184 = vpop.f32.mrf.mxu0
        %v2185 = vadd.f32 %v1962, %v2184
        %v2186 = vpop.f32.mrf.mxu0
        %v2187 = vadd.f32 %v1964, %v2186
        %v2188 = vpop.f32.mrf.mxu0
        %v2189 = vadd.f32 %v1966, %v2188
        %2190 = vdwg.mxu0
        %v2191 = vld [vmem:[%s1] sm:$0xff]
        %v2192 = vld [vmem:[%s1 + $0x8] sm:$0xff]
        %v2193 = vld [vmem:[%s1 + $0x10] sm:$0xff]
        %v2194 = vld [vmem:[%s1 + $0x18] sm:$0xff]
        %v2195 = vld [vmem:[%s1 + $0x20] sm:$0xff]
        %v2196 = vld [vmem:[%s1 + $0x28] sm:$0xff]
        %v2197 = vld [vmem:[%s1 + $0x30] sm:$0xff]
        %v2198 = vld [vmem:[%s1 + $0x38] sm:$0xff]
        %v2199 = vld [vmem:[%s1 + $0x40] sm:$0xff]
        %v2200 = vld [vmem:[%s1 + $0x48] sm:$0xff]
        %v2201 = vld [vmem:[%s1 + $0x50] sm:$0xff]
        %v2202 = vld [vmem:[%s1 + $0x58] sm:$0xff]
        %v2203 = vld [vmem:[%s1 + $0x60] sm:$0xff]
        %v2204 = vld [vmem:[%s1 + $0x68] sm:$0xff]
        %v2205 = vld [vmem:[%s1 + $0x70] sm:$0xff]
        %v2206 = vld [vmem:[%s1 + $0x78] sm:$0xff]
        %v2207 = vld [vmem:[%s1 + $0x80] sm:$0xff]
        %v2208 = vld [vmem:[%s1 + $0x88] sm:$0xff]
        %v2209 = vld [vmem:[%s1 + $0x90] sm:$0xff]
        %v2210 = vld [vmem:[%s1 + $0x98] sm:$0xff]
        %v2211 = vld [vmem:[%s1 + $0xa0] sm:$0xff]
        %v2212 = vld [vmem:[%s1 + $0xa8] sm:$0xff]
        %v2213 = vld [vmem:[%s1 + $0xb0] sm:$0xff]
        %v2214 = vld [vmem:[%s1 + $0xb8] sm:$0xff]
        %v2215 = vld [vmem:[%s1 + $0xc0] sm:$0xff]
        %v2216 = vld [vmem:[%s1 + $0xc8] sm:$0xff]
        %v2217 = vld [vmem:[%s1 + $0xd0] sm:$0xff]
        %v2218 = vld [vmem:[%s1 + $0xd8] sm:$0xff]
        %v2219 = vld [vmem:[%s1 + $0xe0] sm:$0xff]
        %v2220 = vld [vmem:[%s1 + $0xe8] sm:$0xff]
        %v2221 = vld [vmem:[%s1 + $0xf0] sm:$0xff]
        %v2222 = vld [vmem:[%s1 + $0xf8] sm:$0xff]
        %v2223 = vld [vmem:[%s1 + $0x100] sm:$0xff]
        %v2224 = vld [vmem:[%s1 + $0x108] sm:$0xff]
        %v2225 = vld [vmem:[%s1 + $0x110] sm:$0xff]
        %v2226 = vld [vmem:[%s1 + $0x118] sm:$0xff]
        %v2227 = vld [vmem:[%s1 + $0x120] sm:$0xff]
        %v2228 = vld [vmem:[%s1 + $0x128] sm:$0xff]
        %v2229 = vld [vmem:[%s1 + $0x130] sm:$0xff]
        %v2230 = vld [vmem:[%s1 + $0x138] sm:$0xff]
        %v2231 = vld [vmem:[%s1 + $0x140] sm:$0xff]
        %v2232 = vld [vmem:[%s1 + $0x148] sm:$0xff]
        %v2233 = vld [vmem:[%s1 + $0x150] sm:$0xff]
        %v2234 = vld [vmem:[%s1 + $0x158] sm:$0xff]
        %v2235 = vld [vmem:[%s1 + $0x160] sm:$0xff]
        %v2236 = vld [vmem:[%s1 + $0x168] sm:$0xff]
        %v2237 = vld [vmem:[%s1 + $0x170] sm:$0xff]
        %v2238 = vld [vmem:[%s1 + $0x178] sm:$0xff]
        %v2239 = vld [vmem:[%s1 + $0x180] sm:$0xff]
        %v2240 = vld [vmem:[%s1 + $0x188] sm:$0xff]
        %v2241 = vld [vmem:[%s1 + $0x190] sm:$0xff]
        %v2242 = vld [vmem:[%s1 + $0x198] sm:$0xff]
        %v2243 = vld [vmem:[%s1 + $0x1a0] sm:$0xff]
        %v2244 = vld [vmem:[%s1 + $0x1a8] sm:$0xff]
        %v2245 = vld [vmem:[%s1 + $0x1b0] sm:$0xff]
        %v2246 = vld [vmem:[%s1 + $0x1b8] sm:$0xff]
        %v2247 = vld [vmem:[%s1 + $0x1c0] sm:$0xff]
        %v2248 = vld [vmem:[%s1 + $0x1c8] sm:$0xff]
        %v2249 = vld [vmem:[%s1 + $0x1d0] sm:$0xff]
        %v2250 = vld [vmem:[%s1 + $0x1d8] sm:$0xff]
        %v2251 = vld [vmem:[%s1 + $0x1e0] sm:$0xff]
        %v2252 = vld [vmem:[%s1 + $0x1e8] sm:$0xff]
        %v2253 = vld [vmem:[%s1 + $0x1f0] sm:$0xff]
        %v2254 = vld [vmem:[%s1 + $0x1f8] sm:$0xff]
        %v2255 = vld [vmem:[%s1 + $0x200] sm:$0x11]
        %v2321 = vunpack.c.l.b16 %v2191
        %v2322 = vunpack.c.h.b16 %v2191
        %v2323 = vunpack.c.l.b16 %v2192
        %v2324 = vunpack.c.h.b16 %v2192
        %v2325 = vunpack.c.l.b16 %v2193
        %v2326 = vunpack.c.h.b16 %v2193
        %v2327 = vunpack.c.l.b16 %v2194
        %v2328 = vunpack.c.h.b16 %v2194
        %v2329 = vunpack.c.l.b16 %v2195
        %v2330 = vunpack.c.h.b16 %v2195
        %v2331 = vunpack.c.l.b16 %v2196
        %v2332 = vunpack.c.h.b16 %v2196
        %v2333 = vunpack.c.l.b16 %v2197
        %v2334 = vunpack.c.h.b16 %v2197
        %v2335 = vunpack.c.l.b16 %v2198
        %v2336 = vunpack.c.h.b16 %v2198
        %v2337 = vunpack.c.l.b16 %v2199
        %v2338 = vunpack.c.h.b16 %v2199
        %v2339 = vunpack.c.l.b16 %v2200
        %v2340 = vunpack.c.h.b16 %v2200
        %v2341 = vunpack.c.l.b16 %v2201
        %v2342 = vunpack.c.h.b16 %v2201
        %v2343 = vunpack.c.l.b16 %v2202
        %v2344 = vunpack.c.h.b16 %v2202
        %v2345 = vunpack.c.l.b16 %v2203
        %v2346 = vunpack.c.h.b16 %v2203
        %v2347 = vunpack.c.l.b16 %v2204
        %v2348 = vunpack.c.h.b16 %v2204
        %v2349 = vunpack.c.l.b16 %v2205
        %v2350 = vunpack.c.h.b16 %v2205
        %v2351 = vunpack.c.l.b16 %v2206
        %v2352 = vunpack.c.h.b16 %v2206
        %v2353 = vunpack.c.l.b16 %v2207
        %v2354 = vunpack.c.h.b16 %v2207
        %v2355 = vunpack.c.l.b16 %v2208
        %v2356 = vunpack.c.h.b16 %v2208
        %v2357 = vunpack.c.l.b16 %v2209
        %v2358 = vunpack.c.h.b16 %v2209
        %v2359 = vunpack.c.l.b16 %v2210
        %v2360 = vunpack.c.h.b16 %v2210
        %v2361 = vunpack.c.l.b16 %v2211
        %v2362 = vunpack.c.h.b16 %v2211
        %v2363 = vunpack.c.l.b16 %v2212
        %v2364 = vunpack.c.h.b16 %v2212
        %v2365 = vunpack.c.l.b16 %v2213
        %v2366 = vunpack.c.h.b16 %v2213
        %v2367 = vunpack.c.l.b16 %v2214
        %v2368 = vunpack.c.h.b16 %v2214
        %v2369 = vunpack.c.l.b16 %v2215
        %v2370 = vunpack.c.h.b16 %v2215
        %v2371 = vunpack.c.l.b16 %v2216
        %v2372 = vunpack.c.h.b16 %v2216
        %v2373 = vunpack.c.l.b16 %v2217
        %v2374 = vunpack.c.h.b16 %v2217
        %v2375 = vunpack.c.l.b16 %v2218
        %v2376 = vunpack.c.h.b16 %v2218
        %v2377 = vunpack.c.l.b16 %v2219
        %v2378 = vunpack.c.h.b16 %v2219
        %v2379 = vunpack.c.l.b16 %v2220
        %v2380 = vunpack.c.h.b16 %v2220
        %v2381 = vunpack.c.l.b16 %v2221
        %v2382 = vunpack.c.h.b16 %v2221
        %v2383 = vunpack.c.l.b16 %v2222
        %v2384 = vunpack.c.h.b16 %v2222
        %v2385 = vunpack.c.l.b16 %v2223
        %v2386 = vunpack.c.h.b16 %v2223
        %v2387 = vunpack.c.l.b16 %v2224
        %v2388 = vunpack.c.h.b16 %v2224
        %v2389 = vunpack.c.l.b16 %v2225
        %v2390 = vunpack.c.h.b16 %v2225
        %v2391 = vunpack.c.l.b16 %v2226
        %v2392 = vunpack.c.h.b16 %v2226
        %v2393 = vunpack.c.l.b16 %v2227
        %v2394 = vunpack.c.h.b16 %v2227
        %v2395 = vunpack.c.l.b16 %v2228
        %v2396 = vunpack.c.h.b16 %v2228
        %v2397 = vunpack.c.l.b16 %v2229
        %v2398 = vunpack.c.h.b16 %v2229
        %v2399 = vunpack.c.l.b16 %v2230
        %v2400 = vunpack.c.h.b16 %v2230
        %v2401 = vunpack.c.l.b16 %v2231
        %v2402 = vunpack.c.h.b16 %v2231
        %v2403 = vunpack.c.l.b16 %v2232
        %v2404 = vunpack.c.h.b16 %v2232
        %v2405 = vunpack.c.l.b16 %v2233
        %v2406 = vunpack.c.h.b16 %v2233
        %v2407 = vunpack.c.l.b16 %v2234
        %v2408 = vunpack.c.h.b16 %v2234
        %v2409 = vunpack.c.l.b16 %v2235
        %v2410 = vunpack.c.h.b16 %v2235
        %v2411 = vunpack.c.l.b16 %v2236
        %v2412 = vunpack.c.h.b16 %v2236
        %v2413 = vunpack.c.l.b16 %v2237
        %v2414 = vunpack.c.h.b16 %v2237
        %v2415 = vunpack.c.l.b16 %v2238
        %v2416 = vunpack.c.h.b16 %v2238
        %v2417 = vunpack.c.l.b16 %v2239
        %v2418 = vunpack.c.h.b16 %v2239
        %v2419 = vunpack.c.l.b16 %v2240
        %v2420 = vunpack.c.h.b16 %v2240
        %v2421 = vunpack.c.l.b16 %v2241
        %v2422 = vunpack.c.h.b16 %v2241
        %v2423 = vunpack.c.l.b16 %v2242
        %v2424 = vunpack.c.h.b16 %v2242
        %v2425 = vunpack.c.l.b16 %v2243
        %v2426 = vunpack.c.h.b16 %v2243
        %v2427 = vunpack.c.l.b16 %v2244
        %v2428 = vunpack.c.h.b16 %v2244
        %v2429 = vunpack.c.l.b16 %v2245
        %v2430 = vunpack.c.h.b16 %v2245
        %v2431 = vunpack.c.l.b16 %v2246
        %v2432 = vunpack.c.h.b16 %v2246
        %v2433 = vunpack.c.l.b16 %v2247
        %v2434 = vunpack.c.h.b16 %v2247
        %v2435 = vunpack.c.l.b16 %v2248
        %v2436 = vunpack.c.h.b16 %v2248
        %v2437 = vunpack.c.l.b16 %v2249
        %v2438 = vunpack.c.h.b16 %v2249
        %v2439 = vunpack.c.l.b16 %v2250
        %v2440 = vunpack.c.h.b16 %v2250
        %v2441 = vunpack.c.l.b16 %v2251
        %v2442 = vunpack.c.h.b16 %v2251
        %v2443 = vunpack.c.l.b16 %v2252
        %v2444 = vunpack.c.h.b16 %v2252
        %v2445 = vunpack.c.l.b16 %v2253
        %v2446 = vunpack.c.h.b16 %v2253
        %v2447 = vunpack.c.l.b16 %v2254
        %v2448 = vunpack.c.h.b16 %v2254
        %v2449 = vunpack.c.l.b16 %v2255
        %v2450 = vunpack.c.h.b16 %v2255
        %v2451 = vpack.c.b16 %v2323, %v2321
        %v2452 = vpack.c.b16 %v2324, %v2322
        %v2453 = vpack.c.b16 %v2327, %v2325
        %v2454 = vpack.c.b16 %v2328, %v2326
        %v2455 = vpack.c.b16 %v2331, %v2329
        %v2456 = vpack.c.b16 %v2332, %v2330
        %v2457 = vpack.c.b16 %v2335, %v2333
        %v2458 = vpack.c.b16 %v2336, %v2334
        %v2459 = vpack.c.b16 %v2339, %v2337
        %v2460 = vpack.c.b16 %v2340, %v2338
        %v2461 = vpack.c.b16 %v2343, %v2341
        %v2462 = vpack.c.b16 %v2344, %v2342
        %v2463 = vpack.c.b16 %v2347, %v2345
        %v2464 = vpack.c.b16 %v2348, %v2346
        %v2465 = vpack.c.b16 %v2351, %v2349
        %v2466 = vpack.c.b16 %v2352, %v2350
        %v2467 = vpack.c.b16 %v2355, %v2353
        %v2468 = vpack.c.b16 %v2356, %v2354
        %v2469 = vpack.c.b16 %v2359, %v2357
        %v2470 = vpack.c.b16 %v2360, %v2358
        %v2471 = vpack.c.b16 %v2363, %v2361
        %v2472 = vpack.c.b16 %v2364, %v2362
        %v2473 = vpack.c.b16 %v2367, %v2365
        %v2474 = vpack.c.b16 %v2368, %v2366
        %v2475 = vpack.c.b16 %v2371, %v2369
        %v2476 = vpack.c.b16 %v2372, %v2370
        %v2477 = vpack.c.b16 %v2375, %v2373
        %v2478 = vpack.c.b16 %v2376, %v2374
        %v2479 = vpack.c.b16 %v2379, %v2377
        %v2480 = vpack.c.b16 %v2380, %v2378
        %v2481 = vpack.c.b16 %v2383, %v2381
        %v2482 = vpack.c.b16 %v2384, %v2382
        %v2483 = vpack.c.b16 %v2387, %v2385
        %v2484 = vpack.c.b16 %v2388, %v2386
        %v2485 = vpack.c.b16 %v2391, %v2389
        %v2486 = vpack.c.b16 %v2392, %v2390
        %v2487 = vpack.c.b16 %v2395, %v2393
        %v2488 = vpack.c.b16 %v2396, %v2394
        %v2489 = vpack.c.b16 %v2399, %v2397
        %v2490 = vpack.c.b16 %v2400, %v2398
        %v2491 = vpack.c.b16 %v2403, %v2401
        %v2492 = vpack.c.b16 %v2404, %v2402
        %v2493 = vpack.c.b16 %v2407, %v2405
        %v2494 = vpack.c.b16 %v2408, %v2406
        %v2495 = vpack.c.b16 %v2411, %v2409
        %v2496 = vpack.c.b16 %v2412, %v2410
        %v2497 = vpack.c.b16 %v2415, %v2413
        %v2498 = vpack.c.b16 %v2416, %v2414
        %v2499 = vpack.c.b16 %v2419, %v2417
        %v2500 = vpack.c.b16 %v2420, %v2418
        %v2501 = vpack.c.b16 %v2423, %v2421
        %v2502 = vpack.c.b16 %v2424, %v2422
        %v2503 = vpack.c.b16 %v2427, %v2425
        %v2504 = vpack.c.b16 %v2428, %v2426
        %v2505 = vpack.c.b16 %v2431, %v2429
        %v2506 = vpack.c.b16 %v2432, %v2430
        %v2507 = vpack.c.b16 %v2435, %v2433
        %v2508 = vpack.c.b16 %v2436, %v2434
        %v2509 = vpack.c.b16 %v2439, %v2437
        %v2510 = vpack.c.b16 %v2440, %v2438
        %v2511 = vpack.c.b16 %v2443, %v2441
        %v2512 = vpack.c.b16 %v2444, %v2442
        %v2513 = vpack.c.b16 %v2447, %v2445
        %v2514 = vpack.c.b16 %v2448, %v2446
        %v2515 = vpack.c.b16 %v2449, %v2449
        %v2516 = vpack.c.b16 %v2450, %v2450
        %v2582 = vand.u32 %v2515, %v1515
        %v2585 = vand.u32 %v2516, %v1515
        %2587 = vmatprep.subr.bf16.mxu0 %v2466
        %2588 = vmatpush1.bf16.msra.mxu0 %v2465
        %2589 = vmatprep.subr.bf16.mxu0 %v2464
        %2590 = vmatpush1.bf16.msra.mxu0 %v2463
        %2591 = vmatprep.subr.bf16.mxu0 %v2462
        %2592 = vmatpush1.bf16.msra.mxu0 %v2461
        %2593 = vmatprep.subr.bf16.mxu0 %v2460
        %2594 = vmatpush1.bf16.msra.mxu0 %v2459
        %2595 = vmatprep.subr.bf16.mxu0 %v2458
        %2596 = vmatpush1.bf16.msra.mxu0 %v2457
        %2597 = vmatprep.subr.bf16.mxu0 %v2456
        %2598 = vmatpush1.bf16.msra.mxu0 %v2455
        %2599 = vmatprep.subr.bf16.mxu0 %v2454
        %2600 = vmatpush1.bf16.msra.mxu0 %v2453
        %2601 = vmatprep.subr.bf16.mxu0 %v2452
        %2602 = vmatpush1.bf16.msra.mxu0 %v2451
        %2603 = vmatprep.subr.bf16.mxu0 %v2482
        %2604 = vmatpush2.bf16.msra.mxu0 %v2481
        %2605 = vmatprep.subr.bf16.mxu0 %v2480
        %2606 = vmatpush2.bf16.msra.mxu0 %v2479
        %2607 = vmatprep.subr.bf16.mxu0 %v2478
        %2608 = vmatpush2.bf16.msra.mxu0 %v2477
        %2609 = vmatprep.subr.bf16.mxu0 %v2476
        %2610 = vmatpush2.bf16.msra.mxu0 %v2475
        %2611 = vmatprep.subr.bf16.mxu0 %v2474
        %2612 = vmatpush2.bf16.msra.mxu0 %v2473
        %2613 = vmatprep.subr.bf16.mxu0 %v2472
        %2614 = vmatpush2.bf16.msra.mxu0 %v2471
        %2615 = vmatprep.subr.bf16.mxu0 %v2470
        %2616 = vmatpush2.bf16.msra.mxu0 %v2469
        %2617 = vmatprep.subr.bf16.mxu0 %v2468
        %2618 = vmatpush2.bf16.msra.mxu0 %v2467
        %2619 = vmatprep.mubr.bf16.mxu0 %v960
        %2620 = vmatmul.mubr.bf16.gmra.mxu0 %v959
        %v2621 = vpop.f32.mrf.mxu0
        %v2622 = vadd.f32 0.0, %v2621
        %v2623 = vpop.f32.mrf.mxu0
        %v2624 = vadd.f32 0.0, %v2623
        %v2625 = vpop.f32.mrf.mxu0
        %v2626 = vadd.f32 0.0, %v2625
        %v2627 = vpop.f32.mrf.mxu0
        %v2628 = vadd.f32 0.0, %v2627
        %2629 = vmatprep.mubr.bf16.mxu0 %v965
        %2630 = vmatmul.mubr.bf16.gmra.mxu0 %v964
        %v2631 = vpop.f32.mrf.mxu0
        %v2632 = vadd.f32 0.0, %v2631
        %v2633 = vpop.f32.mrf.mxu0
        %v2634 = vadd.f32 0.0, %v2633
        %v2635 = vpop.f32.mrf.mxu0
        %v2636 = vadd.f32 0.0, %v2635
        %v2637 = vpop.f32.mrf.mxu0
        %v2638 = vadd.f32 0.0, %v2637
        %2639 = vmatprep.mubr.bf16.mxu0 %v970
        %2640 = vmatmul.mubr.bf16.gmra.mxu0 %v969
        %v2641 = vpop.f32.mrf.mxu0
        %v2642 = vadd.f32 0.0, %v2641
        %v2643 = vpop.f32.mrf.mxu0
        %v2644 = vadd.f32 0.0, %v2643
        %v2645 = vpop.f32.mrf.mxu0
        %v2646 = vadd.f32 0.0, %v2645
        %v2647 = vpop.f32.mrf.mxu0
        %v2648 = vadd.f32 0.0, %v2647
        %2649 = vmatprep.mubr.bf16.mxu0 %v975
        %2650 = vmatmul.mubr.bf16.gmra.mxu0 %v974
        %v2651 = vpop.f32.mrf.mxu0
        %v2652 = vadd.f32 0.0, %v2651
        %v2653 = vpop.f32.mrf.mxu0
        %v2654 = vadd.f32 0.0, %v2653
        %v2655 = vpop.f32.mrf.mxu0
        %v2656 = vadd.f32 0.0, %v2655
        %v2657 = vpop.f32.mrf.mxu0
        %v2658 = vadd.f32 0.0, %v2657
        %2659 = vmatprep.mubr.bf16.mxu0 %v980
        %2660 = vmatmul.mubr.bf16.gmra.mxu0 %v979
        %v2661 = vpop.f32.mrf.mxu0
        %v2662 = vadd.f32 0.0, %v2661
        %v2663 = vpop.f32.mrf.mxu0
        %v2664 = vadd.f32 0.0, %v2663
        %v2665 = vpop.f32.mrf.mxu0
        %v2666 = vadd.f32 0.0, %v2665
        %v2667 = vpop.f32.mrf.mxu0
        %v2668 = vadd.f32 0.0, %v2667
        %2669 = vmatprep.mubr.bf16.mxu0 %v985
        %2670 = vmatmul.mubr.bf16.gmra.mxu0 %v984
        %v2671 = vpop.f32.mrf.mxu0
        %v2672 = vadd.f32 0.0, %v2671
        %v2673 = vpop.f32.mrf.mxu0
        %v2674 = vadd.f32 0.0, %v2673
        %v2675 = vpop.f32.mrf.mxu0
        %v2676 = vadd.f32 0.0, %v2675
        %v2677 = vpop.f32.mrf.mxu0
        %v2678 = vadd.f32 0.0, %v2677
        %2679 = vmatprep.mubr.bf16.mxu0 %v990
        %2680 = vmatmul.mubr.bf16.gmra.mxu0 %v989
        %v2681 = vpop.f32.mrf.mxu0
        %v2682 = vadd.f32 0.0, %v2681
        %v2683 = vpop.f32.mrf.mxu0
        %v2684 = vadd.f32 0.0, %v2683
        %v2685 = vpop.f32.mrf.mxu0
        %v2686 = vadd.f32 0.0, %v2685
        %v2687 = vpop.f32.mrf.mxu0
        %v2688 = vadd.f32 0.0, %v2687
        %2689 = vmatprep.mubr.bf16.mxu0 %v995
        %2690 = vmatmul.mubr.bf16.gmra.mxu0 %v994
        %v2691 = vpop.f32.mrf.mxu0
        %v2692 = vadd.f32 0.0, %v2691
        %v2693 = vpop.f32.mrf.mxu0
        %v2694 = vadd.f32 0.0, %v2693
        %v2695 = vpop.f32.mrf.mxu0
        %v2696 = vadd.f32 0.0, %v2695
        %v2697 = vpop.f32.mrf.mxu0
        %v2698 = vadd.f32 0.0, %v2697
        %2699 = vmatprep.mubr.bf16.mxu0 %v1000
        %2700 = vmatmul.mubr.bf16.gmra.mxu0 %v999
        %v2701 = vpop.f32.mrf.mxu0
        %v2702 = vadd.f32 0.0, %v2701
        %v2703 = vpop.f32.mrf.mxu0
        %v2704 = vadd.f32 0.0, %v2703
        %v2705 = vpop.f32.mrf.mxu0
        %v2706 = vadd.f32 0.0, %v2705
        %v2707 = vpop.f32.mrf.mxu0
        %v2708 = vadd.f32 0.0, %v2707
        %2709 = vmatprep.mubr.bf16.mxu0 %v1005
        %2710 = vmatmul.mubr.bf16.gmra.mxu0 %v1004
        %v2711 = vpop.f32.mrf.mxu0
        %v2712 = vadd.f32 0.0, %v2711
        %v2713 = vpop.f32.mrf.mxu0
        %v2714 = vadd.f32 0.0, %v2713
        %v2715 = vpop.f32.mrf.mxu0
        %v2716 = vadd.f32 0.0, %v2715
        %v2717 = vpop.f32.mrf.mxu0
        %v2718 = vadd.f32 0.0, %v2717
        %2719 = vmatprep.mubr.bf16.mxu0 %v1010
        %2720 = vmatmul.mubr.bf16.gmra.mxu0 %v1009
        %v2721 = vpop.f32.mrf.mxu0
        %v2722 = vadd.f32 0.0, %v2721
        %v2723 = vpop.f32.mrf.mxu0
        %v2724 = vadd.f32 0.0, %v2723
        %v2725 = vpop.f32.mrf.mxu0
        %v2726 = vadd.f32 0.0, %v2725
        %v2727 = vpop.f32.mrf.mxu0
        %v2728 = vadd.f32 0.0, %v2727
        %2729 = vmatprep.mubr.bf16.mxu0 %v1015
        %2730 = vmatmul.mubr.bf16.gmra.mxu0 %v1014
        %v2731 = vpop.f32.mrf.mxu0
        %v2732 = vadd.f32 0.0, %v2731
        %v2733 = vpop.f32.mrf.mxu0
        %v2734 = vadd.f32 0.0, %v2733
        %v2735 = vpop.f32.mrf.mxu0
        %v2736 = vadd.f32 0.0, %v2735
        %v2737 = vpop.f32.mrf.mxu0
        %v2738 = vadd.f32 0.0, %v2737
        %2739 = vmatprep.mubr.bf16.mxu0 %v1020
        %2740 = vmatmul.mubr.bf16.gmra.mxu0 %v1019
        %v2741 = vpop.f32.mrf.mxu0
        %v2742 = vadd.f32 0.0, %v2741
        %v2743 = vpop.f32.mrf.mxu0
        %v2744 = vadd.f32 0.0, %v2743
        %v2745 = vpop.f32.mrf.mxu0
        %v2746 = vadd.f32 0.0, %v2745
        %v2747 = vpop.f32.mrf.mxu0
        %v2748 = vadd.f32 0.0, %v2747
        %2749 = vmatprep.mubr.bf16.mxu0 %v1025
        %2750 = vmatmul.mubr.bf16.gmra.mxu0 %v1024
        %v2751 = vpop.f32.mrf.mxu0
        %v2752 = vadd.f32 0.0, %v2751
        %v2753 = vpop.f32.mrf.mxu0
        %v2754 = vadd.f32 0.0, %v2753
        %v2755 = vpop.f32.mrf.mxu0
        %v2756 = vadd.f32 0.0, %v2755
        %v2757 = vpop.f32.mrf.mxu0
        %v2758 = vadd.f32 0.0, %v2757
        %2759 = vmatprep.mubr.bf16.mxu0 %v1030
        %2760 = vmatmul.mubr.bf16.gmra.mxu0 %v1029
        %v2761 = vpop.f32.mrf.mxu0
        %v2762 = vadd.f32 0.0, %v2761
        %v2763 = vpop.f32.mrf.mxu0
        %v2764 = vadd.f32 0.0, %v2763
        %v2765 = vpop.f32.mrf.mxu0
        %v2766 = vadd.f32 0.0, %v2765
        %v2767 = vpop.f32.mrf.mxu0
        %v2768 = vadd.f32 0.0, %v2767
        %2769 = vmatprep.mubr.bf16.mxu0 %v1035
        %2770 = vmatmul.mubr.bf16.gmra.mxu0 %v1034
        %v2771 = vpop.f32.mrf.mxu0
        %v2772 = vadd.f32 0.0, %v2771
        %v2773 = vpop.f32.mrf.mxu0
        %v2774 = vadd.f32 0.0, %v2773
        %v2775 = vpop.f32.mrf.mxu0
        %v2776 = vadd.f32 0.0, %v2775
        %v2777 = vpop.f32.mrf.mxu0
        %v2778 = vadd.f32 0.0, %v2777
        %2779 = vmatprep.mubr.bf16.mxu0 %v1040
        %2780 = vmatmul.mubr.bf16.gmra.mxu0 %v1039
        %v2781 = vpop.f32.mrf.mxu0
        %v2782 = vadd.f32 0.0, %v2781
        %v2783 = vpop.f32.mrf.mxu0
        %v2784 = vadd.f32 0.0, %v2783
        %v2785 = vpop.f32.mrf.mxu0
        %v2786 = vadd.f32 0.0, %v2785
        %v2787 = vpop.f32.mrf.mxu0
        %v2788 = vadd.f32 0.0, %v2787
        %2789 = vmatprep.mubr.bf16.mxu0 %v1045
        %2790 = vmatmul.mubr.bf16.gmra.mxu0 %v1044
        %v2791 = vpop.f32.mrf.mxu0
        %v2792 = vadd.f32 0.0, %v2791
        %v2793 = vpop.f32.mrf.mxu0
        %v2794 = vadd.f32 0.0, %v2793
        %v2795 = vpop.f32.mrf.mxu0
        %v2796 = vadd.f32 0.0, %v2795
        %v2797 = vpop.f32.mrf.mxu0
        %v2798 = vadd.f32 0.0, %v2797
        %2799 = vmatprep.mubr.bf16.mxu0 %v1050
        %2800 = vmatmul.mubr.bf16.gmra.mxu0 %v1049
        %v2801 = vpop.f32.mrf.mxu0
        %v2802 = vadd.f32 0.0, %v2801
        %v2803 = vpop.f32.mrf.mxu0
        %v2804 = vadd.f32 0.0, %v2803
        %v2805 = vpop.f32.mrf.mxu0
        %v2806 = vadd.f32 0.0, %v2805
        %v2807 = vpop.f32.mrf.mxu0
        %v2808 = vadd.f32 0.0, %v2807
        %2809 = vdwg.mxu0
        %2810 = vmatprep.subr.bf16.mxu0 %v2498
        %2811 = vmatpush1.bf16.msra.mxu0 %v2497
        %2812 = vmatprep.subr.bf16.mxu0 %v2496
        %2813 = vmatpush1.bf16.msra.mxu0 %v2495
        %2814 = vmatprep.subr.bf16.mxu0 %v2494
        %2815 = vmatpush1.bf16.msra.mxu0 %v2493
        %2816 = vmatprep.subr.bf16.mxu0 %v2492
        %2817 = vmatpush1.bf16.msra.mxu0 %v2491
        %2818 = vmatprep.subr.bf16.mxu0 %v2490
        %2819 = vmatpush1.bf16.msra.mxu0 %v2489
        %2820 = vmatprep.subr.bf16.mxu0 %v2488
        %2821 = vmatpush1.bf16.msra.mxu0 %v2487
        %2822 = vmatprep.subr.bf16.mxu0 %v2486
        %2823 = vmatpush1.bf16.msra.mxu0 %v2485
        %2824 = vmatprep.subr.bf16.mxu0 %v2484
        %2825 = vmatpush1.bf16.msra.mxu0 %v2483
        %2826 = vmatprep.subr.bf16.mxu0 %v2514
        %2827 = vmatpush2.bf16.msra.mxu0 %v2513
        %2828 = vmatprep.subr.bf16.mxu0 %v2512
        %2829 = vmatpush2.bf16.msra.mxu0 %v2511
        %2830 = vmatprep.subr.bf16.mxu0 %v2510
        %2831 = vmatpush2.bf16.msra.mxu0 %v2509
        %2832 = vmatprep.subr.bf16.mxu0 %v2508
        %2833 = vmatpush2.bf16.msra.mxu0 %v2507
        %2834 = vmatprep.subr.bf16.mxu0 %v2506
        %2835 = vmatpush2.bf16.msra.mxu0 %v2505
        %2836 = vmatprep.subr.bf16.mxu0 %v2504
        %2837 = vmatpush2.bf16.msra.mxu0 %v2503
        %2838 = vmatprep.subr.bf16.mxu0 %v2502
        %2839 = vmatpush2.bf16.msra.mxu0 %v2501
        %2840 = vmatprep.subr.bf16.mxu0 %v2500
        %2841 = vmatpush2.bf16.msra.mxu0 %v2499
        %2842 = vmatprep.mubr.bf16.mxu0 %v962
        %2843 = vmatmul.mubr.bf16.gmra.mxu0 %v961
        %v2844 = vpop.f32.mrf.mxu0
        %v2845 = vadd.f32 %v2622, %v2844
        %v2846 = vpop.f32.mrf.mxu0
        %v2847 = vadd.f32 %v2624, %v2846
        %v2848 = vpop.f32.mrf.mxu0
        %v2849 = vadd.f32 %v2626, %v2848
        %v2850 = vpop.f32.mrf.mxu0
        %v2851 = vadd.f32 %v2628, %v2850
        %2852 = vmatprep.mubr.bf16.mxu0 %v967
        %2853 = vmatmul.mubr.bf16.gmra.mxu0 %v966
        %v2854 = vpop.f32.mrf.mxu0
        %v2855 = vadd.f32 %v2632, %v2854
        %v2856 = vpop.f32.mrf.mxu0
        %v2857 = vadd.f32 %v2634, %v2856
        %v2858 = vpop.f32.mrf.mxu0
        %v2859 = vadd.f32 %v2636, %v2858
        %v2860 = vpop.f32.mrf.mxu0
        %v2861 = vadd.f32 %v2638, %v2860
        %2862 = vmatprep.mubr.bf16.mxu0 %v972
        %2863 = vmatmul.mubr.bf16.gmra.mxu0 %v971
        %v2864 = vpop.f32.mrf.mxu0
        %v2865 = vadd.f32 %v2642, %v2864
        %v2866 = vpop.f32.mrf.mxu0
        %v2867 = vadd.f32 %v2644, %v2866
        %v2868 = vpop.f32.mrf.mxu0
        %v2869 = vadd.f32 %v2646, %v2868
        %v2870 = vpop.f32.mrf.mxu0
        %v2871 = vadd.f32 %v2648, %v2870
        %2872 = vmatprep.mubr.bf16.mxu0 %v977
        %2873 = vmatmul.mubr.bf16.gmra.mxu0 %v976
        %v2874 = vpop.f32.mrf.mxu0
        %v2875 = vadd.f32 %v2652, %v2874
        %v2876 = vpop.f32.mrf.mxu0
        %v2877 = vadd.f32 %v2654, %v2876
        %v2878 = vpop.f32.mrf.mxu0
        %v2879 = vadd.f32 %v2656, %v2878
        %v2880 = vpop.f32.mrf.mxu0
        %v2881 = vadd.f32 %v2658, %v2880
        %2882 = vmatprep.mubr.bf16.mxu0 %v982
        %2883 = vmatmul.mubr.bf16.gmra.mxu0 %v981
        %v2884 = vpop.f32.mrf.mxu0
        %v2885 = vadd.f32 %v2662, %v2884
        %v2886 = vpop.f32.mrf.mxu0
        %v2887 = vadd.f32 %v2664, %v2886
        %v2888 = vpop.f32.mrf.mxu0
        %v2889 = vadd.f32 %v2666, %v2888
        %v2890 = vpop.f32.mrf.mxu0
        %v2891 = vadd.f32 %v2668, %v2890
        %2892 = vmatprep.mubr.bf16.mxu0 %v987
        %2893 = vmatmul.mubr.bf16.gmra.mxu0 %v986
        %v2894 = vpop.f32.mrf.mxu0
        %v2895 = vadd.f32 %v2672, %v2894
        %v2896 = vpop.f32.mrf.mxu0
        %v2897 = vadd.f32 %v2674, %v2896
        %v2898 = vpop.f32.mrf.mxu0
        %v2899 = vadd.f32 %v2676, %v2898
        %v2900 = vpop.f32.mrf.mxu0
        %v2901 = vadd.f32 %v2678, %v2900
        %2902 = vmatprep.mubr.bf16.mxu0 %v992
        %2903 = vmatmul.mubr.bf16.gmra.mxu0 %v991
        %v2904 = vpop.f32.mrf.mxu0
        %v2905 = vadd.f32 %v2682, %v2904
        %v2906 = vpop.f32.mrf.mxu0
        %v2907 = vadd.f32 %v2684, %v2906
        %v2908 = vpop.f32.mrf.mxu0
        %v2909 = vadd.f32 %v2686, %v2908
        %v2910 = vpop.f32.mrf.mxu0
        %v2911 = vadd.f32 %v2688, %v2910
        %2912 = vmatprep.mubr.bf16.mxu0 %v997
        %2913 = vmatmul.mubr.bf16.gmra.mxu0 %v996
        %v2914 = vpop.f32.mrf.mxu0
        %v2915 = vadd.f32 %v2692, %v2914
        %v2916 = vpop.f32.mrf.mxu0
        %v2917 = vadd.f32 %v2694, %v2916
        %v2918 = vpop.f32.mrf.mxu0
        %v2919 = vadd.f32 %v2696, %v2918
        %v2920 = vpop.f32.mrf.mxu0
        %v2921 = vadd.f32 %v2698, %v2920
        %2922 = vmatprep.mubr.bf16.mxu0 %v1002
        %2923 = vmatmul.mubr.bf16.gmra.mxu0 %v1001
        %v2924 = vpop.f32.mrf.mxu0
        %v2925 = vadd.f32 %v2702, %v2924
        %v2926 = vpop.f32.mrf.mxu0
        %v2927 = vadd.f32 %v2704, %v2926
        %v2928 = vpop.f32.mrf.mxu0
        %v2929 = vadd.f32 %v2706, %v2928
        %v2930 = vpop.f32.mrf.mxu0
        %v2931 = vadd.f32 %v2708, %v2930
        %2932 = vmatprep.mubr.bf16.mxu0 %v1007
        %2933 = vmatmul.mubr.bf16.gmra.mxu0 %v1006
        %v2934 = vpop.f32.mrf.mxu0
        %v2935 = vadd.f32 %v2712, %v2934
        %v2936 = vpop.f32.mrf.mxu0
        %v2937 = vadd.f32 %v2714, %v2936
        %v2938 = vpop.f32.mrf.mxu0
        %v2939 = vadd.f32 %v2716, %v2938
        %v2940 = vpop.f32.mrf.mxu0
        %v2941 = vadd.f32 %v2718, %v2940
        %2942 = vmatprep.mubr.bf16.mxu0 %v1012
        %2943 = vmatmul.mubr.bf16.gmra.mxu0 %v1011
        %v2944 = vpop.f32.mrf.mxu0
        %v2945 = vadd.f32 %v2722, %v2944
        %v2946 = vpop.f32.mrf.mxu0
        %v2947 = vadd.f32 %v2724, %v2946
        %v2948 = vpop.f32.mrf.mxu0
        %v2949 = vadd.f32 %v2726, %v2948
        %v2950 = vpop.f32.mrf.mxu0
        %v2951 = vadd.f32 %v2728, %v2950
        %2952 = vmatprep.mubr.bf16.mxu0 %v1017
        %2953 = vmatmul.mubr.bf16.gmra.mxu0 %v1016
        %v2954 = vpop.f32.mrf.mxu0
        %v2955 = vadd.f32 %v2732, %v2954
        %v2956 = vpop.f32.mrf.mxu0
        %v2957 = vadd.f32 %v2734, %v2956
        %v2958 = vpop.f32.mrf.mxu0
        %v2959 = vadd.f32 %v2736, %v2958
        %v2960 = vpop.f32.mrf.mxu0
        %v2961 = vadd.f32 %v2738, %v2960
        %2962 = vmatprep.mubr.bf16.mxu0 %v1022
        %2963 = vmatmul.mubr.bf16.gmra.mxu0 %v1021
        %v2964 = vpop.f32.mrf.mxu0
        %v2965 = vadd.f32 %v2742, %v2964
        %v2966 = vpop.f32.mrf.mxu0
        %v2967 = vadd.f32 %v2744, %v2966
        %v2968 = vpop.f32.mrf.mxu0
        %v2969 = vadd.f32 %v2746, %v2968
        %v2970 = vpop.f32.mrf.mxu0
        %v2971 = vadd.f32 %v2748, %v2970
        %2972 = vmatprep.mubr.bf16.mxu0 %v1027
        %2973 = vmatmul.mubr.bf16.gmra.mxu0 %v1026
        %v2974 = vpop.f32.mrf.mxu0
        %v2975 = vadd.f32 %v2752, %v2974
        %v2976 = vpop.f32.mrf.mxu0
        %v2977 = vadd.f32 %v2754, %v2976
        %v2978 = vpop.f32.mrf.mxu0
        %v2979 = vadd.f32 %v2756, %v2978
        %v2980 = vpop.f32.mrf.mxu0
        %v2981 = vadd.f32 %v2758, %v2980
        %2982 = vmatprep.mubr.bf16.mxu0 %v1032
        %2983 = vmatmul.mubr.bf16.gmra.mxu0 %v1031
        %v2984 = vpop.f32.mrf.mxu0
        %v2985 = vadd.f32 %v2762, %v2984
        %v2986 = vpop.f32.mrf.mxu0
        %v2987 = vadd.f32 %v2764, %v2986
        %v2988 = vpop.f32.mrf.mxu0
        %v2989 = vadd.f32 %v2766, %v2988
        %v2990 = vpop.f32.mrf.mxu0
        %v2991 = vadd.f32 %v2768, %v2990
        %2992 = vmatprep.mubr.bf16.mxu0 %v1037
        %2993 = vmatmul.mubr.bf16.gmra.mxu0 %v1036
        %v2994 = vpop.f32.mrf.mxu0
        %v2995 = vadd.f32 %v2772, %v2994
        %v2996 = vpop.f32.mrf.mxu0
        %v2997 = vadd.f32 %v2774, %v2996
        %v2998 = vpop.f32.mrf.mxu0
        %v2999 = vadd.f32 %v2776, %v2998
        %v3000 = vpop.f32.mrf.mxu0
        %v3001 = vadd.f32 %v2778, %v3000
        %3002 = vmatprep.mubr.bf16.mxu0 %v1042
        %3003 = vmatmul.mubr.bf16.gmra.mxu0 %v1041
        %v3004 = vpop.f32.mrf.mxu0
        %v3005 = vadd.f32 %v2782, %v3004
        %v3006 = vpop.f32.mrf.mxu0
        %v3007 = vadd.f32 %v2784, %v3006
        %v3008 = vpop.f32.mrf.mxu0
        %v3009 = vadd.f32 %v2786, %v3008
        %v3010 = vpop.f32.mrf.mxu0
        %v3011 = vadd.f32 %v2788, %v3010
        %3012 = vmatprep.mubr.bf16.mxu0 %v1047
        %3013 = vmatmul.mubr.bf16.gmra.mxu0 %v1046
        %v3014 = vpop.f32.mrf.mxu0
        %v3015 = vadd.f32 %v2792, %v3014
        %v3016 = vpop.f32.mrf.mxu0
        %v3017 = vadd.f32 %v2794, %v3016
        %v3018 = vpop.f32.mrf.mxu0
        %v3019 = vadd.f32 %v2796, %v3018
        %v3020 = vpop.f32.mrf.mxu0
        %v3021 = vadd.f32 %v2798, %v3020
        %3022 = vmatprep.mubr.bf16.mxu0 %v1052
        %3023 = vmatmul.mubr.bf16.gmra.mxu0 %v1051
        %v3024 = vpop.f32.mrf.mxu0
        %v3025 = vadd.f32 %v2802, %v3024
        %v3026 = vpop.f32.mrf.mxu0
        %v3027 = vadd.f32 %v2804, %v3026
        %v3028 = vpop.f32.mrf.mxu0
        %v3029 = vadd.f32 %v2806, %v3028
        %v3030 = vpop.f32.mrf.mxu0
        %v3031 = vadd.f32 %v2808, %v3030
        %3032 = vdwg.mxu0
        %3033 = vmatprep.subr.bf16.mxu0 0
        %3034 = vmatpush1.bf16.msra.mxu0 0
        %3035 = vmatprep.subr.bf16.mxu0 0
        %3036 = vmatpush1.bf16.msra.mxu0 0
        %3037 = vmatprep.subr.bf16.mxu0 0
        %3038 = vmatpush1.bf16.msra.mxu0 0
        %3039 = vmatprep.subr.bf16.mxu0 0
        %3040 = vmatpush1.bf16.msra.mxu0 0
        %3041 = vmatprep.subr.bf16.mxu0 0
        %3042 = vmatpush1.bf16.msra.mxu0 0
        %3043 = vmatprep.subr.bf16.mxu0 0
        %3044 = vmatpush1.bf16.msra.mxu0 0
        %3045 = vmatprep.subr.bf16.mxu0 0
        %3046 = vmatpush1.bf16.msra.mxu0 0
        %3047 = vmatprep.subr.bf16.mxu0 %v2585
        %3048 = vmatpush1.bf16.msra.mxu0 %v2582
        %3049 = vmatprep.subr.bf16.mxu0 0
        %3050 = vmatpush2.bf16.msra.mxu0 0
        %3051 = vmatprep.subr.bf16.mxu0 0
        %3052 = vmatpush2.bf16.msra.mxu0 0
        %3053 = vmatprep.subr.bf16.mxu0 0
        %3054 = vmatpush2.bf16.msra.mxu0 0
        %3055 = vmatprep.subr.bf16.mxu0 0
        %3056 = vmatpush2.bf16.msra.mxu0 0
        %3057 = vmatprep.subr.bf16.mxu0 0
        %3058 = vmatpush2.bf16.msra.mxu0 0
        %3059 = vmatprep.subr.bf16.mxu0 0
        %3060 = vmatpush2.bf16.msra.mxu0 0
        %3061 = vmatprep.subr.bf16.mxu0 0
        %3062 = vmatpush2.bf16.msra.mxu0 0
        %3063 = vmatprep.subr.bf16.mxu0 0
        %3064 = vmatpush2.bf16.msra.mxu0 0
        %3065 = vmatprep.mubr.bf16.mxu0 0
        %3066 = vmatmul.mubr.bf16.gmra.mxu0 %v1457
        %v3067 = vpop.f32.mrf.mxu0
        %v3068 = vadd.f32 %v2845, %v3067
        %v3069 = vpop.f32.mrf.mxu0
        %v3070 = vadd.f32 %v2847, %v3069
        %v3071 = vpop.f32.mrf.mxu0
        %v3072 = vadd.f32 %v2849, %v3071
        %v3073 = vpop.f32.mrf.mxu0
        %v3074 = vadd.f32 %v2851, %v3073
        %3075 = vmatprep.mubr.bf16.mxu0 0
        %3076 = vmatmul.mubr.bf16.gmra.mxu0 %v1460
        %v3077 = vpop.f32.mrf.mxu0
        %v3078 = vadd.f32 %v2855, %v3077
        %v3079 = vpop.f32.mrf.mxu0
        %v3080 = vadd.f32 %v2857, %v3079
        %v3081 = vpop.f32.mrf.mxu0
        %v3082 = vadd.f32 %v2859, %v3081
        %v3083 = vpop.f32.mrf.mxu0
        %v3084 = vadd.f32 %v2861, %v3083
        %3085 = vmatprep.mubr.bf16.mxu0 0
        %3086 = vmatmul.mubr.bf16.gmra.mxu0 %v1463
        %v3087 = vpop.f32.mrf.mxu0
        %v3088 = vadd.f32 %v2865, %v3087
        %v3089 = vpop.f32.mrf.mxu0
        %v3090 = vadd.f32 %v2867, %v3089
        %v3091 = vpop.f32.mrf.mxu0
        %v3092 = vadd.f32 %v2869, %v3091
        %v3093 = vpop.f32.mrf.mxu0
        %v3094 = vadd.f32 %v2871, %v3093
        %3095 = vmatprep.mubr.bf16.mxu0 0
        %3096 = vmatmul.mubr.bf16.gmra.mxu0 %v1466
        %v3097 = vpop.f32.mrf.mxu0
        %v3098 = vadd.f32 %v2875, %v3097
        %v3099 = vpop.f32.mrf.mxu0
        %v3100 = vadd.f32 %v2877, %v3099
        %v3101 = vpop.f32.mrf.mxu0
        %v3102 = vadd.f32 %v2879, %v3101
        %v3103 = vpop.f32.mrf.mxu0
        %v3104 = vadd.f32 %v2881, %v3103
        %3105 = vmatprep.mubr.bf16.mxu0 0
        %3106 = vmatmul.mubr.bf16.gmra.mxu0 %v1469
        %v3107 = vpop.f32.mrf.mxu0
        %v3108 = vadd.f32 %v2885, %v3107
        %v3109 = vpop.f32.mrf.mxu0
        %v3110 = vadd.f32 %v2887, %v3109
        %v3111 = vpop.f32.mrf.mxu0
        %v3112 = vadd.f32 %v2889, %v3111
        %v3113 = vpop.f32.mrf.mxu0
        %v3114 = vadd.f32 %v2891, %v3113
        %3115 = vmatprep.mubr.bf16.mxu0 0
        %3116 = vmatmul.mubr.bf16.gmra.mxu0 %v1472
        %v3117 = vpop.f32.mrf.mxu0
        %v3118 = vadd.f32 %v2895, %v3117
        %v3119 = vpop.f32.mrf.mxu0
        %v3120 = vadd.f32 %v2897, %v3119
        %v3121 = vpop.f32.mrf.mxu0
        %v3122 = vadd.f32 %v2899, %v3121
        %v3123 = vpop.f32.mrf.mxu0
        %v3124 = vadd.f32 %v2901, %v3123
        %3125 = vmatprep.mubr.bf16.mxu0 0
        %3126 = vmatmul.mubr.bf16.gmra.mxu0 %v1475
        %v3127 = vpop.f32.mrf.mxu0
        %v3128 = vadd.f32 %v2905, %v3127
        %v3129 = vpop.f32.mrf.mxu0
        %v3130 = vadd.f32 %v2907, %v3129
        %v3131 = vpop.f32.mrf.mxu0
        %v3132 = vadd.f32 %v2909, %v3131
        %v3133 = vpop.f32.mrf.mxu0
        %v3134 = vadd.f32 %v2911, %v3133
        %3135 = vmatprep.mubr.bf16.mxu0 0
        %3136 = vmatmul.mubr.bf16.gmra.mxu0 %v1478
        %v3137 = vpop.f32.mrf.mxu0
        %v3138 = vadd.f32 %v2915, %v3137
        %v3139 = vpop.f32.mrf.mxu0
        %v3140 = vadd.f32 %v2917, %v3139
        %v3141 = vpop.f32.mrf.mxu0
        %v3142 = vadd.f32 %v2919, %v3141
        %v3143 = vpop.f32.mrf.mxu0
        %v3144 = vadd.f32 %v2921, %v3143
        %3145 = vmatprep.mubr.bf16.mxu0 0
        %3146 = vmatmul.mubr.bf16.gmra.mxu0 %v1481
        %v3147 = vpop.f32.mrf.mxu0
        %v3148 = vadd.f32 %v2925, %v3147
        %v3149 = vpop.f32.mrf.mxu0
        %v3150 = vadd.f32 %v2927, %v3149
        %v3151 = vpop.f32.mrf.mxu0
        %v3152 = vadd.f32 %v2929, %v3151
        %v3153 = vpop.f32.mrf.mxu0
        %v3154 = vadd.f32 %v2931, %v3153
        %3155 = vmatprep.mubr.bf16.mxu0 0
        %3156 = vmatmul.mubr.bf16.gmra.mxu0 %v1484
        %v3157 = vpop.f32.mrf.mxu0
        %v3158 = vadd.f32 %v2935, %v3157
        %v3159 = vpop.f32.mrf.mxu0
        %v3160 = vadd.f32 %v2937, %v3159
        %v3161 = vpop.f32.mrf.mxu0
        %v3162 = vadd.f32 %v2939, %v3161
        %v3163 = vpop.f32.mrf.mxu0
        %v3164 = vadd.f32 %v2941, %v3163
        %3165 = vmatprep.mubr.bf16.mxu0 0
        %3166 = vmatmul.mubr.bf16.gmra.mxu0 %v1487
        %v3167 = vpop.f32.mrf.mxu0
        %v3168 = vadd.f32 %v2945, %v3167
        %v3169 = vpop.f32.mrf.mxu0
        %v3170 = vadd.f32 %v2947, %v3169
        %v3171 = vpop.f32.mrf.mxu0
        %v3172 = vadd.f32 %v2949, %v3171
        %v3173 = vpop.f32.mrf.mxu0
        %v3174 = vadd.f32 %v2951, %v3173
        %3175 = vmatprep.mubr.bf16.mxu0 0
        %3176 = vmatmul.mubr.bf16.gmra.mxu0 %v1490
        %v3177 = vpop.f32.mrf.mxu0
        %v3178 = vadd.f32 %v2955, %v3177
        %v3179 = vpop.f32.mrf.mxu0
        %v3180 = vadd.f32 %v2957, %v3179
        %v3181 = vpop.f32.mrf.mxu0
        %v3182 = vadd.f32 %v2959, %v3181
        %v3183 = vpop.f32.mrf.mxu0
        %v3184 = vadd.f32 %v2961, %v3183
        %3185 = vmatprep.mubr.bf16.mxu0 0
        %3186 = vmatmul.mubr.bf16.gmra.mxu0 %v1493
        %v3187 = vpop.f32.mrf.mxu0
        %v3188 = vadd.f32 %v2965, %v3187
        %v3189 = vpop.f32.mrf.mxu0
        %v3190 = vadd.f32 %v2967, %v3189
        %v3191 = vpop.f32.mrf.mxu0
        %v3192 = vadd.f32 %v2969, %v3191
        %v3193 = vpop.f32.mrf.mxu0
        %v3194 = vadd.f32 %v2971, %v3193
        %3195 = vmatprep.mubr.bf16.mxu0 0
        %3196 = vmatmul.mubr.bf16.gmra.mxu0 %v1496
        %v3197 = vpop.f32.mrf.mxu0
        %v3198 = vadd.f32 %v2975, %v3197
        %v3199 = vpop.f32.mrf.mxu0
        %v3200 = vadd.f32 %v2977, %v3199
        %v3201 = vpop.f32.mrf.mxu0
        %v3202 = vadd.f32 %v2979, %v3201
        %v3203 = vpop.f32.mrf.mxu0
        %v3204 = vadd.f32 %v2981, %v3203
        %3205 = vmatprep.mubr.bf16.mxu0 0
        %3206 = vmatmul.mubr.bf16.gmra.mxu0 %v1499
        %v3207 = vpop.f32.mrf.mxu0
        %v3208 = vadd.f32 %v2985, %v3207
        %v3209 = vpop.f32.mrf.mxu0
        %v3210 = vadd.f32 %v2987, %v3209
        %v3211 = vpop.f32.mrf.mxu0
        %v3212 = vadd.f32 %v2989, %v3211
        %v3213 = vpop.f32.mrf.mxu0
        %v3214 = vadd.f32 %v2991, %v3213
        %3215 = vmatprep.mubr.bf16.mxu0 0
        %3216 = vmatmul.mubr.bf16.gmra.mxu0 %v1502
        %v3217 = vpop.f32.mrf.mxu0
        %v3218 = vadd.f32 %v2995, %v3217
        %v3219 = vpop.f32.mrf.mxu0
        %v3220 = vadd.f32 %v2997, %v3219
        %v3221 = vpop.f32.mrf.mxu0
        %v3222 = vadd.f32 %v2999, %v3221
        %v3223 = vpop.f32.mrf.mxu0
        %v3224 = vadd.f32 %v3001, %v3223
        %3225 = vmatprep.mubr.bf16.mxu0 0
        %3226 = vmatmul.mubr.bf16.gmra.mxu0 %v1505
        %v3227 = vpop.f32.mrf.mxu0
        %v3228 = vadd.f32 %v3005, %v3227
        %v3229 = vpop.f32.mrf.mxu0
        %v3230 = vadd.f32 %v3007, %v3229
        %v3231 = vpop.f32.mrf.mxu0
        %v3232 = vadd.f32 %v3009, %v3231
        %v3233 = vpop.f32.mrf.mxu0
        %v3234 = vadd.f32 %v3011, %v3233
        %3235 = vmatprep.mubr.bf16.mxu0 0
        %3236 = vmatmul.mubr.bf16.gmra.mxu0 %v1508
        %v3237 = vpop.f32.mrf.mxu0
        %v3238 = vadd.f32 %v3015, %v3237
        %v3239 = vpop.f32.mrf.mxu0
        %v3240 = vadd.f32 %v3017, %v3239
        %v3241 = vpop.f32.mrf.mxu0
        %v3242 = vadd.f32 %v3019, %v3241
        %v3243 = vpop.f32.mrf.mxu0
        %v3244 = vadd.f32 %v3021, %v3243
        %3245 = vmatprep.mubr.bf16.mxu0 0
        %3246 = vmatmul.mubr.bf16.gmra.mxu0 %v1511
        %v3247 = vpop.f32.mrf.mxu0
        %v3248 = vadd.f32 %v3025, %v3247
        %v3249 = vpop.f32.mrf.mxu0
        %v3250 = vadd.f32 %v3027, %v3249
        %v3251 = vpop.f32.mrf.mxu0
        %v3252 = vadd.f32 %v3029, %v3251
        %v3253 = vpop.f32.mrf.mxu0
        %v3254 = vadd.f32 %v3031, %v3253
        %3255 = vdwg.mxu0
        %s3256 = scalar_lea.vmem %s1, 1040
        %v3257 = vld [vmem:[%s3256] sm:$0xff]
        %v3258 = vld [vmem:[%s3256 + $0x8] sm:$0xff]
        %v3259 = vld [vmem:[%s3256 + $0x10] sm:$0xff]
        %v3260 = vld [vmem:[%s3256 + $0x18] sm:$0xff]
        %v3261 = vld [vmem:[%s3256 + $0x20] sm:$0xff]
        %v3262 = vld [vmem:[%s3256 + $0x28] sm:$0xff]
        %v3263 = vld [vmem:[%s3256 + $0x30] sm:$0xff]
        %v3264 = vld [vmem:[%s3256 + $0x38] sm:$0xff]
        %v3265 = vld [vmem:[%s3256 + $0x40] sm:$0xff]
        %v3266 = vld [vmem:[%s3256 + $0x48] sm:$0xff]
        %v3267 = vld [vmem:[%s3256 + $0x50] sm:$0xff]
        %v3268 = vld [vmem:[%s3256 + $0x58] sm:$0xff]
        %v3269 = vld [vmem:[%s3256 + $0x60] sm:$0xff]
        %v3270 = vld [vmem:[%s3256 + $0x68] sm:$0xff]
        %v3271 = vld [vmem:[%s3256 + $0x70] sm:$0xff]
        %v3272 = vld [vmem:[%s3256 + $0x78] sm:$0xff]
        %v3273 = vld [vmem:[%s3256 + $0x80] sm:$0xff]
        %v3274 = vld [vmem:[%s3256 + $0x88] sm:$0xff]
        %v3275 = vld [vmem:[%s3256 + $0x90] sm:$0xff]
        %v3276 = vld [vmem:[%s3256 + $0x98] sm:$0xff]
        %v3277 = vld [vmem:[%s3256 + $0xa0] sm:$0xff]
        %v3278 = vld [vmem:[%s3256 + $0xa8] sm:$0xff]
        %v3279 = vld [vmem:[%s3256 + $0xb0] sm:$0xff]
        %v3280 = vld [vmem:[%s3256 + $0xb8] sm:$0xff]
        %v3281 = vld [vmem:[%s3256 + $0xc0] sm:$0xff]
        %v3282 = vld [vmem:[%s3256 + $0xc8] sm:$0xff]
        %v3283 = vld [vmem:[%s3256 + $0xd0] sm:$0xff]
        %v3284 = vld [vmem:[%s3256 + $0xd8] sm:$0xff]
        %v3285 = vld [vmem:[%s3256 + $0xe0] sm:$0xff]
        %v3286 = vld [vmem:[%s3256 + $0xe8] sm:$0xff]
        %v3287 = vld [vmem:[%s3256 + $0xf0] sm:$0xff]
        %v3288 = vld [vmem:[%s3256 + $0xf8] sm:$0xff]
        %v3289 = vld [vmem:[%s3256 + $0x100] sm:$0xff]
        %v3290 = vld [vmem:[%s3256 + $0x108] sm:$0xff]
        %v3291 = vld [vmem:[%s3256 + $0x110] sm:$0xff]
        %v3292 = vld [vmem:[%s3256 + $0x118] sm:$0xff]
        %v3293 = vld [vmem:[%s3256 + $0x120] sm:$0xff]
        %v3294 = vld [vmem:[%s3256 + $0x128] sm:$0xff]
        %v3295 = vld [vmem:[%s3256 + $0x130] sm:$0xff]
        %v3296 = vld [vmem:[%s3256 + $0x138] sm:$0xff]
        %v3297 = vld [vmem:[%s3256 + $0x140] sm:$0xff]
        %v3298 = vld [vmem:[%s3256 + $0x148] sm:$0xff]
        %v3299 = vld [vmem:[%s3256 + $0x150] sm:$0xff]
        %v3300 = vld [vmem:[%s3256 + $0x158] sm:$0xff]
        %v3301 = vld [vmem:[%s3256 + $0x160] sm:$0xff]
        %v3302 = vld [vmem:[%s3256 + $0x168] sm:$0xff]
        %v3303 = vld [vmem:[%s3256 + $0x170] sm:$0xff]
        %v3304 = vld [vmem:[%s3256 + $0x178] sm:$0xff]
        %v3305 = vld [vmem:[%s3256 + $0x180] sm:$0xff]
        %v3306 = vld [vmem:[%s3256 + $0x188] sm:$0xff]
        %v3307 = vld [vmem:[%s3256 + $0x190] sm:$0xff]
        %v3308 = vld [vmem:[%s3256 + $0x198] sm:$0xff]
        %v3309 = vld [vmem:[%s3256 + $0x1a0] sm:$0xff]
        %v3310 = vld [vmem:[%s3256 + $0x1a8] sm:$0xff]
        %v3311 = vld [vmem:[%s3256 + $0x1b0] sm:$0xff]
        %v3312 = vld [vmem:[%s3256 + $0x1b8] sm:$0xff]
        %v3313 = vld [vmem:[%s3256 + $0x1c0] sm:$0xff]
        %v3314 = vld [vmem:[%s3256 + $0x1c8] sm:$0xff]
        %v3315 = vld [vmem:[%s3256 + $0x1d0] sm:$0xff]
        %v3316 = vld [vmem:[%s3256 + $0x1d8] sm:$0xff]
        %v3317 = vld [vmem:[%s3256 + $0x1e0] sm:$0xff]
        %v3318 = vld [vmem:[%s3256 + $0x1e8] sm:$0xff]
        %v3319 = vld [vmem:[%s3256 + $0x1f0] sm:$0xff]
        %v3320 = vld [vmem:[%s3256 + $0x1f8] sm:$0xff]
        %v3321 = vld [vmem:[%s3256 + $0x200] sm:$0x11]
        %vm3322 = vsmask.f32 7424
        %v3324 = vshrl.u32 %v959, 16
        %v3326 = vshll.u32 %v959, 16
        %v3328 = vrot.slane %v3326, 1
        %v3329 = vor.u32 %v3324, %v3328
        %v3331 = vshll.u32 %v964, 16
        %v3333 = vrot.slane %v3331, 1
        %v3334 = vsel %vm3322, %v3329, %v3333
        %v3336 = vshrl.u32 %v960, 16
        %v3338 = vshll.u32 %v960, 16
        %v3340 = vrot.slane %v3338, 1
        %v3341 = vor.u32 %v3336, %v3340
        %v3343 = vshll.u32 %v965, 16
        %v3345 = vrot.slane %v3343, 1
        %v3346 = vsel %vm3322, %v3341, %v3345
        %v3348 = vshrl.u32 %v961, 16
        %v3350 = vshll.u32 %v961, 16
        %v3352 = vrot.slane %v3350, 1
        %v3353 = vor.u32 %v3348, %v3352
        %v3355 = vshll.u32 %v966, 16
        %v3357 = vrot.slane %v3355, 1
        %v3358 = vsel %vm3322, %v3353, %v3357
        %v3360 = vshrl.u32 %v962, 16
        %v3362 = vshll.u32 %v962, 16
        %v3364 = vrot.slane %v3362, 1
        %v3365 = vor.u32 %v3360, %v3364
        %v3367 = vshll.u32 %v967, 16
        %v3369 = vrot.slane %v3367, 1
        %v3370 = vsel %vm3322, %v3365, %v3369
        %v3371 = vshrl.u32 %v963, 16
        %v3373 = vshll.u32 %v963, 16
        %v3375 = vrot.slane %v3373, 1
        %v3376 = vor.u32 %v3371, %v3375
        %v3377 = vshll.u32 %v968, 16
        %v3379 = vrot.slane %v3377, 1
        %v3380 = vsel %vm3322, %v3376, %v3379
        %v3381 = vshrl.u32 %v964, 16
        %v3383 = vor.u32 %v3381, %v3333
        %v3385 = vshll.u32 %v969, 16
        %v3387 = vrot.slane %v3385, 1
        %v3388 = vsel %vm3322, %v3383, %v3387
        %v3389 = vshrl.u32 %v965, 16
        %v3391 = vor.u32 %v3389, %v3345
        %v3393 = vshll.u32 %v970, 16
        %v3395 = vrot.slane %v3393, 1
        %v3396 = vsel %vm3322, %v3391, %v3395
        %v3397 = vshrl.u32 %v966, 16
        %v3399 = vor.u32 %v3397, %v3357
        %v3401 = vshll.u32 %v971, 16
        %v3403 = vrot.slane %v3401, 1
        %v3404 = vsel %vm3322, %v3399, %v3403
        %v3405 = vshrl.u32 %v967, 16
        %v3407 = vor.u32 %v3405, %v3369
        %v3409 = vshll.u32 %v972, 16
        %v3411 = vrot.slane %v3409, 1
        %v3412 = vsel %vm3322, %v3407, %v3411
        %v3413 = vshrl.u32 %v968, 16
        %v3415 = vor.u32 %v3413, %v3379
        %v3416 = vshll.u32 %v973, 16
        %v3418 = vrot.slane %v3416, 1
        %v3419 = vsel %vm3322, %v3415, %v3418
        %v3420 = vshrl.u32 %v969, 16
        %v3422 = vor.u32 %v3420, %v3387
        %v3424 = vshll.u32 %v974, 16
        %v3426 = vrot.slane %v3424, 1
        %v3427 = vsel %vm3322, %v3422, %v3426
        %v3428 = vshrl.u32 %v970, 16
        %v3430 = vor.u32 %v3428, %v3395
        %v3432 = vshll.u32 %v975, 16
        %v3434 = vrot.slane %v3432, 1
        %v3435 = vsel %vm3322, %v3430, %v3434
        %v3436 = vshrl.u32 %v971, 16
        %v3438 = vor.u32 %v3436, %v3403
        %v3440 = vshll.u32 %v976, 16
        %v3442 = vrot.slane %v3440, 1
        %v3443 = vsel %vm3322, %v3438, %v3442
        %v3444 = vshrl.u32 %v972, 16
        %v3446 = vor.u32 %v3444, %v3411
        %v3448 = vshll.u32 %v977, 16
        %v3450 = vrot.slane %v3448, 1
        %v3451 = vsel %vm3322, %v3446, %v3450
        %v3452 = vshrl.u32 %v973, 16
        %v3454 = vor.u32 %v3452, %v3418
        %v3455 = vshll.u32 %v978, 16
        %v3457 = vrot.slane %v3455, 1
        %v3458 = vsel %vm3322, %v3454, %v3457
        %v3459 = vshrl.u32 %v974, 16
        %v3461 = vor.u32 %v3459, %v3426
        %v3463 = vshll.u32 %v979, 16
        %v3465 = vrot.slane %v3463, 1
        %v3466 = vsel %vm3322, %v3461, %v3465
        %v3467 = vshrl.u32 %v975, 16
        %v3469 = vor.u32 %v3467, %v3434
        %v3471 = vshll.u32 %v980, 16
        %v3473 = vrot.slane %v3471, 1
        %v3474 = vsel %vm3322, %v3469, %v3473
        %v3475 = vshrl.u32 %v976, 16
        %v3477 = vor.u32 %v3475, %v3442
        %v3479 = vshll.u32 %v981, 16
        %v3481 = vrot.slane %v3479, 1
        %v3482 = vsel %vm3322, %v3477, %v3481
        %v3483 = vshrl.u32 %v977, 16
        %v3485 = vor.u32 %v3483, %v3450
        %v3487 = vshll.u32 %v982, 16
        %v3489 = vrot.slane %v3487, 1
        %v3490 = vsel %vm3322, %v3485, %v3489
        %v3491 = vshrl.u32 %v978, 16
        %v3493 = vor.u32 %v3491, %v3457
        %v3494 = vshll.u32 %v983, 16
        %v3496 = vrot.slane %v3494, 1
        %v3497 = vsel %vm3322, %v3493, %v3496
        %v3498 = vshrl.u32 %v979, 16
        %v3500 = vor.u32 %v3498, %v3465
        %v3502 = vshll.u32 %v984, 16
        %v3504 = vrot.slane %v3502, 1
        %v3505 = vsel %vm3322, %v3500, %v3504
        %v3506 = vshrl.u32 %v980, 16
        %v3508 = vor.u32 %v3506, %v3473
        %v3510 = vshll.u32 %v985, 16
        %v3512 = vrot.slane %v3510, 1
        %v3513 = vsel %vm3322, %v3508, %v3512
        %v3514 = vshrl.u32 %v981, 16
        %v3516 = vor.u32 %v3514, %v3481
        %v3518 = vshll.u32 %v986, 16
        %v3520 = vrot.slane %v3518, 1
        %v3521 = vsel %vm3322, %v3516, %v3520
        %v3522 = vshrl.u32 %v982, 16
        %v3524 = vor.u32 %v3522, %v3489
        %v3526 = vshll.u32 %v987, 16
        %v3528 = vrot.slane %v3526, 1
        %v3529 = vsel %vm3322, %v3524, %v3528
        %v3530 = vshrl.u32 %v983, 16
        %v3532 = vor.u32 %v3530, %v3496
        %v3533 = vshll.u32 %v988, 16
        %v3535 = vrot.slane %v3533, 1
        %v3536 = vsel %vm3322, %v3532, %v3535
        %v3537 = vshrl.u32 %v984, 16
        %v3539 = vor.u32 %v3537, %v3504
        %v3541 = vshll.u32 %v989, 16
        %v3543 = vrot.slane %v3541, 1
        %v3544 = vsel %vm3322, %v3539, %v3543
        %v3545 = vshrl.u32 %v985, 16
        %v3547 = vor.u32 %v3545, %v3512
        %v3549 = vshll.u32 %v990, 16
        %v3551 = vrot.slane %v3549, 1
        %v3552 = vsel %vm3322, %v3547, %v3551
        %v3553 = vshrl.u32 %v986, 16
        %v3555 = vor.u32 %v3553, %v3520
        %v3557 = vshll.u32 %v991, 16
        %v3559 = vrot.slane %v3557, 1
        %v3560 = vsel %vm3322, %v3555, %v3559
        %v3561 = vshrl.u32 %v987, 16
        %v3563 = vor.u32 %v3561, %v3528
        %v3565 = vshll.u32 %v992, 16
        %v3567 = vrot.slane %v3565, 1
        %v3568 = vsel %vm3322, %v3563, %v3567
        %v3569 = vshrl.u32 %v988, 16
        %v3571 = vor.u32 %v3569, %v3535
        %v3572 = vshll.u32 %v993, 16
        %v3574 = vrot.slane %v3572, 1
        %v3575 = vsel %vm3322, %v3571, %v3574
        %v3576 = vshrl.u32 %v989, 16
        %v3578 = vor.u32 %v3576, %v3543
        %v3580 = vshll.u32 %v994, 16
        %v3582 = vrot.slane %v3580, 1
        %v3583 = vsel %vm3322, %v3578, %v3582
        %v3584 = vshrl.u32 %v990, 16
        %v3586 = vor.u32 %v3584, %v3551
        %v3588 = vshll.u32 %v995, 16
        %v3590 = vrot.slane %v3588, 1
        %v3591 = vsel %vm3322, %v3586, %v3590
        %v3592 = vshrl.u32 %v991, 16
        %v3594 = vor.u32 %v3592, %v3559
        %v3596 = vshll.u32 %v996, 16
        %v3598 = vrot.slane %v3596, 1
        %v3599 = vsel %vm3322, %v3594, %v3598
        %v3600 = vshrl.u32 %v992, 16
        %v3602 = vor.u32 %v3600, %v3567
        %v3604 = vshll.u32 %v997, 16
        %v3606 = vrot.slane %v3604, 1
        %v3607 = vsel %vm3322, %v3602, %v3606
        %v3608 = vshrl.u32 %v993, 16
        %v3610 = vor.u32 %v3608, %v3574
        %v3611 = vshll.u32 %v998, 16
        %v3613 = vrot.slane %v3611, 1
        %v3614 = vsel %vm3322, %v3610, %v3613
        %v3615 = vshrl.u32 %v994, 16
        %v3617 = vor.u32 %v3615, %v3582
        %v3619 = vshll.u32 %v999, 16
        %v3621 = vrot.slane %v3619, 1
        %v3622 = vsel %vm3322, %v3617, %v3621
        %v3623 = vshrl.u32 %v995, 16
        %v3625 = vor.u32 %v3623, %v3590
        %v3627 = vshll.u32 %v1000, 16
        %v3629 = vrot.slane %v3627, 1
        %v3630 = vsel %vm3322, %v3625, %v3629
        %v3631 = vshrl.u32 %v996, 16
        %v3633 = vor.u32 %v3631, %v3598
        %v3635 = vshll.u32 %v1001, 16
        %v3637 = vrot.slane %v3635, 1
        %v3638 = vsel %vm3322, %v3633, %v3637
        %v3639 = vshrl.u32 %v997, 16
        %v3641 = vor.u32 %v3639, %v3606
        %v3643 = vshll.u32 %v1002, 16
        %v3645 = vrot.slane %v3643, 1
        %v3646 = vsel %vm3322, %v3641, %v3645
        %v3647 = vshrl.u32 %v998, 16
        %v3649 = vor.u32 %v3647, %v3613
        %v3650 = vshll.u32 %v1003, 16
        %v3652 = vrot.slane %v3650, 1
        %v3653 = vsel %vm3322, %v3649, %v3652
        %v3654 = vshrl.u32 %v999, 16
        %v3656 = vor.u32 %v3654, %v3621
        %v3658 = vshll.u32 %v1004, 16
        %v3660 = vrot.slane %v3658, 1
        %v3661 = vsel %vm3322, %v3656, %v3660
        %v3662 = vshrl.u32 %v1000, 16
        %v3664 = vor.u32 %v3662, %v3629
        %v3666 = vshll.u32 %v1005, 16
        %v3668 = vrot.slane %v3666, 1
        %v3669 = vsel %vm3322, %v3664, %v3668
        %v3670 = vshrl.u32 %v1001, 16
        %v3672 = vor.u32 %v3670, %v3637
        %v3674 = vshll.u32 %v1006, 16
        %v3676 = vrot.slane %v3674, 1
        %v3677 = vsel %vm3322, %v3672, %v3676
        %v3678 = vshrl.u32 %v1002, 16
        %v3680 = vor.u32 %v3678, %v3645
        %v3682 = vshll.u32 %v1007, 16
        %v3684 = vrot.slane %v3682, 1
        %v3685 = vsel %vm3322, %v3680, %v3684
        %v3686 = vshrl.u32 %v1003, 16
        %v3688 = vor.u32 %v3686, %v3652
        %v3689 = vshll.u32 %v1008, 16
        %v3691 = vrot.slane %v3689, 1
        %v3692 = vsel %vm3322, %v3688, %v3691
        %v3693 = vshrl.u32 %v1004, 16
        %v3695 = vor.u32 %v3693, %v3660
        %v3697 = vshll.u32 %v1009, 16
        %v3699 = vrot.slane %v3697, 1
        %v3700 = vsel %vm3322, %v3695, %v3699
        %v3701 = vshrl.u32 %v1005, 16
        %v3703 = vor.u32 %v3701, %v3668
        %v3705 = vshll.u32 %v1010, 16
        %v3707 = vrot.slane %v3705, 1
        %v3708 = vsel %vm3322, %v3703, %v3707
        %v3709 = vshrl.u32 %v1006, 16
        %v3711 = vor.u32 %v3709, %v3676
        %v3713 = vshll.u32 %v1011, 16
        %v3715 = vrot.slane %v3713, 1
        %v3716 = vsel %vm3322, %v3711, %v3715
        %v3717 = vshrl.u32 %v1007, 16
        %v3719 = vor.u32 %v3717, %v3684
        %v3721 = vshll.u32 %v1012, 16
        %v3723 = vrot.slane %v3721, 1
        %v3724 = vsel %vm3322, %v3719, %v3723
        %v3725 = vshrl.u32 %v1008, 16
        %v3727 = vor.u32 %v3725, %v3691
        %v3728 = vshll.u32 %v1013, 16
        %v3730 = vrot.slane %v3728, 1
        %v3731 = vsel %vm3322, %v3727, %v3730
        %v3732 = vshrl.u32 %v1009, 16
        %v3734 = vor.u32 %v3732, %v3699
        %v3736 = vshll.u32 %v1014, 16
        %v3738 = vrot.slane %v3736, 1
        %v3739 = vsel %vm3322, %v3734, %v3738
        %v3740 = vshrl.u32 %v1010, 16
        %v3742 = vor.u32 %v3740, %v3707
        %v3744 = vshll.u32 %v1015, 16
        %v3746 = vrot.slane %v3744, 1
        %v3747 = vsel %vm3322, %v3742, %v3746
        %v3748 = vshrl.u32 %v1011, 16
        %v3750 = vor.u32 %v3748, %v3715
        %v3752 = vshll.u32 %v1016, 16
        %v3754 = vrot.slane %v3752, 1
        %v3755 = vsel %vm3322, %v3750, %v3754
        %v3756 = vshrl.u32 %v1012, 16
        %v3758 = vor.u32 %v3756, %v3723
        %v3760 = vshll.u32 %v1017, 16
        %v3762 = vrot.slane %v3760, 1
        %v3763 = vsel %vm3322, %v3758, %v3762
        %v3764 = vshrl.u32 %v1013, 16
        %v3766 = vor.u32 %v3764, %v3730
        %v3767 = vshll.u32 %v1018, 16
        %v3769 = vrot.slane %v3767, 1
        %v3770 = vsel %vm3322, %v3766, %v3769
        %v3771 = vshrl.u32 %v1014, 16
        %v3773 = vor.u32 %v3771, %v3738
        %v3775 = vshll.u32 %v1019, 16
        %v3777 = vrot.slane %v3775, 1
        %v3778 = vsel %vm3322, %v3773, %v3777
        %v3779 = vshrl.u32 %v1015, 16
        %v3781 = vor.u32 %v3779, %v3746
        %v3783 = vshll.u32 %v1020, 16
        %v3785 = vrot.slane %v3783, 1
        %v3786 = vsel %vm3322, %v3781, %v3785
        %v3787 = vshrl.u32 %v1016, 16
        %v3789 = vor.u32 %v3787, %v3754
        %v3791 = vshll.u32 %v1021, 16
        %v3793 = vrot.slane %v3791, 1
        %v3794 = vsel %vm3322, %v3789, %v3793
        %v3795 = vshrl.u32 %v1017, 16
        %v3797 = vor.u32 %v3795, %v3762
        %v3799 = vshll.u32 %v1022, 16
        %v3801 = vrot.slane %v3799, 1
        %v3802 = vsel %vm3322, %v3797, %v3801
        %v3803 = vshrl.u32 %v1018, 16
        %v3805 = vor.u32 %v3803, %v3769
        %v3806 = vshll.u32 %v1023, 16
        %v3808 = vrot.slane %v3806, 1
        %v3809 = vsel %vm3322, %v3805, %v3808
        %v3810 = vshrl.u32 %v1019, 16
        %v3812 = vor.u32 %v3810, %v3777
        %v3814 = vshll.u32 %v1024, 16
        %v3816 = vrot.slane %v3814, 1
        %v3817 = vsel %vm3322, %v3812, %v3816
        %v3818 = vshrl.u32 %v1020, 16
        %v3820 = vor.u32 %v3818, %v3785
        %v3822 = vshll.u32 %v1025, 16
        %v3824 = vrot.slane %v3822, 1
        %v3825 = vsel %vm3322, %v3820, %v3824
        %v3826 = vshrl.u32 %v1021, 16
        %v3828 = vor.u32 %v3826, %v3793
        %v3830 = vshll.u32 %v1026, 16
        %v3832 = vrot.slane %v3830, 1
        %v3833 = vsel %vm3322, %v3828, %v3832
        %v3834 = vshrl.u32 %v1022, 16
        %v3836 = vor.u32 %v3834, %v3801
        %v3838 = vshll.u32 %v1027, 16
        %v3840 = vrot.slane %v3838, 1
        %v3841 = vsel %vm3322, %v3836, %v3840
        %v3842 = vshrl.u32 %v1023, 16
        %v3844 = vor.u32 %v3842, %v3808
        %v3845 = vshll.u32 %v1028, 16
        %v3847 = vrot.slane %v3845, 1
        %v3848 = vsel %vm3322, %v3844, %v3847
        %v3849 = vshrl.u32 %v1024, 16
        %v3851 = vor.u32 %v3849, %v3816
        %v3853 = vshll.u32 %v1029, 16
        %v3855 = vrot.slane %v3853, 1
        %v3856 = vsel %vm3322, %v3851, %v3855
        %v3857 = vshrl.u32 %v1025, 16
        %v3859 = vor.u32 %v3857, %v3824
        %v3861 = vshll.u32 %v1030, 16
        %v3863 = vrot.slane %v3861, 1
        %v3864 = vsel %vm3322, %v3859, %v3863
        %v3865 = vshrl.u32 %v1026, 16
        %v3867 = vor.u32 %v3865, %v3832
        %v3869 = vshll.u32 %v1031, 16
        %v3871 = vrot.slane %v3869, 1
        %v3872 = vsel %vm3322, %v3867, %v3871
        %v3873 = vshrl.u32 %v1027, 16
        %v3875 = vor.u32 %v3873, %v3840
        %v3877 = vshll.u32 %v1032, 16
        %v3879 = vrot.slane %v3877, 1
        %v3880 = vsel %vm3322, %v3875, %v3879
        %v3881 = vshrl.u32 %v1028, 16
        %v3883 = vor.u32 %v3881, %v3847
        %v3884 = vshll.u32 %v1033, 16
        %v3886 = vrot.slane %v3884, 1
        %v3887 = vsel %vm3322, %v3883, %v3886
        %v3888 = vshrl.u32 %v1029, 16
        %v3890 = vor.u32 %v3888, %v3855
        %v3892 = vshll.u32 %v1034, 16
        %v3894 = vrot.slane %v3892, 1
        %v3895 = vsel %vm3322, %v3890, %v3894
        %v3896 = vshrl.u32 %v1030, 16
        %v3898 = vor.u32 %v3896, %v3863
        %v3900 = vshll.u32 %v1035, 16
        %v3902 = vrot.slane %v3900, 1
        %v3903 = vsel %vm3322, %v3898, %v3902
        %v3904 = vshrl.u32 %v1031, 16
        %v3906 = vor.u32 %v3904, %v3871
        %v3908 = vshll.u32 %v1036, 16
        %v3910 = vrot.slane %v3908, 1
        %v3911 = vsel %vm3322, %v3906, %v3910
        %v3912 = vshrl.u32 %v1032, 16
        %v3914 = vor.u32 %v3912, %v3879
        %v3916 = vshll.u32 %v1037, 16
        %v3918 = vrot.slane %v3916, 1
        %v3919 = vsel %vm3322, %v3914, %v3918
        %v3920 = vshrl.u32 %v1033, 16
        %v3922 = vor.u32 %v3920, %v3886
        %v3923 = vshll.u32 %v1038, 16
        %v3925 = vrot.slane %v3923, 1
        %v3926 = vsel %vm3322, %v3922, %v3925
        %v3927 = vshrl.u32 %v1034, 16
        %v3929 = vor.u32 %v3927, %v3894
        %v3931 = vshll.u32 %v1039, 16
        %v3933 = vrot.slane %v3931, 1
        %v3934 = vsel %vm3322, %v3929, %v3933
        %v3935 = vshrl.u32 %v1035, 16
        %v3937 = vor.u32 %v3935, %v3902
        %v3939 = vshll.u32 %v1040, 16
        %v3941 = vrot.slane %v3939, 1
        %v3942 = vsel %vm3322, %v3937, %v3941
        %v3943 = vshrl.u32 %v1036, 16
        %v3945 = vor.u32 %v3943, %v3910
        %v3947 = vshll.u32 %v1041, 16
        %v3949 = vrot.slane %v3947, 1
        %v3950 = vsel %vm3322, %v3945, %v3949
        %v3951 = vshrl.u32 %v1037, 16
        %v3953 = vor.u32 %v3951, %v3918
        %v3955 = vshll.u32 %v1042, 16
        %v3957 = vrot.slane %v3955, 1
        %v3958 = vsel %vm3322, %v3953, %v3957
        %v3959 = vshrl.u32 %v1038, 16
        %v3961 = vor.u32 %v3959, %v3925
        %v3962 = vshll.u32 %v1043, 16
        %v3964 = vrot.slane %v3962, 1
        %v3965 = vsel %vm3322, %v3961, %v3964
        %v3966 = vshrl.u32 %v1039, 16
        %v3968 = vor.u32 %v3966, %v3933
        %v3970 = vshll.u32 %v1044, 16
        %v3972 = vrot.slane %v3970, 1
        %v3973 = vsel %vm3322, %v3968, %v3972
        %v3974 = vshrl.u32 %v1040, 16
        %v3976 = vor.u32 %v3974, %v3941
        %v3978 = vshll.u32 %v1045, 16
        %v3980 = vrot.slane %v3978, 1
        %v3981 = vsel %vm3322, %v3976, %v3980
        %v3982 = vshrl.u32 %v1041, 16
        %v3984 = vor.u32 %v3982, %v3949
        %v3986 = vshll.u32 %v1046, 16
        %v3988 = vrot.slane %v3986, 1
        %v3989 = vsel %vm3322, %v3984, %v3988
        %v3990 = vshrl.u32 %v1042, 16
        %v3992 = vor.u32 %v3990, %v3957
        %v3994 = vshll.u32 %v1047, 16
        %v3996 = vrot.slane %v3994, 1
        %v3997 = vsel %vm3322, %v3992, %v3996
        %v3998 = vshrl.u32 %v1043, 16
        %v4000 = vor.u32 %v3998, %v3964
        %v4001 = vshll.u32 %v1048, 16
        %v4003 = vrot.slane %v4001, 1
        %v4004 = vsel %vm3322, %v4000, %v4003
        %v4005 = vshrl.u32 %v1044, 16
        %v4007 = vor.u32 %v4005, %v3972
        %v4009 = vshll.u32 %v1049, 16
        %v4011 = vrot.slane %v4009, 1
        %v4012 = vsel %vm3322, %v4007, %v4011
        %v4013 = vshrl.u32 %v1045, 16
        %v4015 = vor.u32 %v4013, %v3980
        %v4017 = vshll.u32 %v1050, 16
        %v4019 = vrot.slane %v4017, 1
        %v4020 = vsel %vm3322, %v4015, %v4019
        %v4021 = vshrl.u32 %v1046, 16
        %v4023 = vor.u32 %v4021, %v3988
        %v4025 = vshll.u32 %v1051, 16
        %v4027 = vrot.slane %v4025, 1
        %v4028 = vsel %vm3322, %v4023, %v4027
        %v4029 = vshrl.u32 %v1047, 16
        %v4031 = vor.u32 %v4029, %v3996
        %v4033 = vshll.u32 %v1052, 16
        %v4035 = vrot.slane %v4033, 1
        %v4036 = vsel %vm3322, %v4031, %v4035
        %v4037 = vshrl.u32 %v1048, 16
        %v4039 = vor.u32 %v4037, %v4003
        %v4040 = vshll.u32 %v1053, 16
        %v4042 = vrot.slane %v4040, 1
        %v4043 = vsel %vm3322, %v4039, %v4042
        %v4044 = vshrl.u32 %v1049, 16
        %v4046 = vor.u32 %v4044, %v4011
        %v4047 = vshrl.u32 %v1050, 16
        %v4049 = vor.u32 %v4047, %v4019
        %v4050 = vshrl.u32 %v1051, 16
        %v4052 = vor.u32 %v4050, %v4027
        %v4053 = vshrl.u32 %v1052, 16
        %v4055 = vor.u32 %v4053, %v4035
        %v4056 = vshrl.u32 %v1053, 16
        %v4058 = vor.u32 %v4056, %v4042
        %v4200 = vunpack.c.l.b16 %v3257
        %v4201 = vunpack.c.h.b16 %v3257
        %v4202 = vunpack.c.l.b16 %v3258
        %v4203 = vunpack.c.h.b16 %v3258
        %v4204 = vunpack.c.l.b16 %v3259
        %v4205 = vunpack.c.h.b16 %v3259
        %v4206 = vunpack.c.l.b16 %v3260
        %v4207 = vunpack.c.h.b16 %v3260
        %v4208 = vunpack.c.l.b16 %v3261
        %v4209 = vunpack.c.h.b16 %v3261
        %v4210 = vunpack.c.l.b16 %v3262
        %v4211 = vunpack.c.h.b16 %v3262
        %v4212 = vunpack.c.l.b16 %v3263
        %v4213 = vunpack.c.h.b16 %v3263
        %v4214 = vunpack.c.l.b16 %v3264
        %v4215 = vunpack.c.h.b16 %v3264
        %v4216 = vunpack.c.l.b16 %v3265
        %v4217 = vunpack.c.h.b16 %v3265
        %v4218 = vunpack.c.l.b16 %v3266
        %v4219 = vunpack.c.h.b16 %v3266
        %v4220 = vunpack.c.l.b16 %v3267
        %v4221 = vunpack.c.h.b16 %v3267
        %v4222 = vunpack.c.l.b16 %v3268
        %v4223 = vunpack.c.h.b16 %v3268
        %v4224 = vunpack.c.l.b16 %v3269
        %v4225 = vunpack.c.h.b16 %v3269
        %v4226 = vunpack.c.l.b16 %v3270
        %v4227 = vunpack.c.h.b16 %v3270
        %v4228 = vunpack.c.l.b16 %v3271
        %v4229 = vunpack.c.h.b16 %v3271
        %v4230 = vunpack.c.l.b16 %v3272
        %v4231 = vunpack.c.h.b16 %v3272
        %v4232 = vunpack.c.l.b16 %v3273
        %v4233 = vunpack.c.h.b16 %v3273
        %v4234 = vunpack.c.l.b16 %v3274
        %v4235 = vunpack.c.h.b16 %v3274
        %v4236 = vunpack.c.l.b16 %v3275
        %v4237 = vunpack.c.h.b16 %v3275
        %v4238 = vunpack.c.l.b16 %v3276
        %v4239 = vunpack.c.h.b16 %v3276
        %v4240 = vunpack.c.l.b16 %v3277
        %v4241 = vunpack.c.h.b16 %v3277
        %v4242 = vunpack.c.l.b16 %v3278
        %v4243 = vunpack.c.h.b16 %v3278
        %v4244 = vunpack.c.l.b16 %v3279
        %v4245 = vunpack.c.h.b16 %v3279
        %v4246 = vunpack.c.l.b16 %v3280
        %v4247 = vunpack.c.h.b16 %v3280
        %v4248 = vunpack.c.l.b16 %v3281
        %v4249 = vunpack.c.h.b16 %v3281
        %v4250 = vunpack.c.l.b16 %v3282
        %v4251 = vunpack.c.h.b16 %v3282
        %v4252 = vunpack.c.l.b16 %v3283
        %v4253 = vunpack.c.h.b16 %v3283
        %v4254 = vunpack.c.l.b16 %v3284
        %v4255 = vunpack.c.h.b16 %v3284
        %v4256 = vunpack.c.l.b16 %v3285
        %v4257 = vunpack.c.h.b16 %v3285
        %v4258 = vunpack.c.l.b16 %v3286
        %v4259 = vunpack.c.h.b16 %v3286
        %v4260 = vunpack.c.l.b16 %v3287
        %v4261 = vunpack.c.h.b16 %v3287
        %v4262 = vunpack.c.l.b16 %v3288
        %v4263 = vunpack.c.h.b16 %v3288
        %v4264 = vunpack.c.l.b16 %v3289
        %v4265 = vunpack.c.h.b16 %v3289
        %v4266 = vunpack.c.l.b16 %v3290
        %v4267 = vunpack.c.h.b16 %v3290
        %v4268 = vunpack.c.l.b16 %v3291
        %v4269 = vunpack.c.h.b16 %v3291
        %v4270 = vunpack.c.l.b16 %v3292
        %v4271 = vunpack.c.h.b16 %v3292
        %v4272 = vunpack.c.l.b16 %v3293
        %v4273 = vunpack.c.h.b16 %v3293
        %v4274 = vunpack.c.l.b16 %v3294
        %v4275 = vunpack.c.h.b16 %v3294
        %v4276 = vunpack.c.l.b16 %v3295
        %v4277 = vunpack.c.h.b16 %v3295
        %v4278 = vunpack.c.l.b16 %v3296
        %v4279 = vunpack.c.h.b16 %v3296
        %v4280 = vunpack.c.l.b16 %v3297
        %v4281 = vunpack.c.h.b16 %v3297
        %v4282 = vunpack.c.l.b16 %v3298
        %v4283 = vunpack.c.h.b16 %v3298
        %v4284 = vunpack.c.l.b16 %v3299
        %v4285 = vunpack.c.h.b16 %v3299
        %v4286 = vunpack.c.l.b16 %v3300
        %v4287 = vunpack.c.h.b16 %v3300
        %v4288 = vunpack.c.l.b16 %v3301
        %v4289 = vunpack.c.h.b16 %v3301
        %v4290 = vunpack.c.l.b16 %v3302
        %v4291 = vunpack.c.h.b16 %v3302
        %v4292 = vunpack.c.l.b16 %v3303
        %v4293 = vunpack.c.h.b16 %v3303
        %v4294 = vunpack.c.l.b16 %v3304
        %v4295 = vunpack.c.h.b16 %v3304
        %v4296 = vunpack.c.l.b16 %v3305
        %v4297 = vunpack.c.h.b16 %v3305
        %v4298 = vunpack.c.l.b16 %v3306
        %v4299 = vunpack.c.h.b16 %v3306
        %v4300 = vunpack.c.l.b16 %v3307
        %v4301 = vunpack.c.h.b16 %v3307
        %v4302 = vunpack.c.l.b16 %v3308
        %v4303 = vunpack.c.h.b16 %v3308
        %v4304 = vunpack.c.l.b16 %v3309
        %v4305 = vunpack.c.h.b16 %v3309
        %v4306 = vunpack.c.l.b16 %v3310
        %v4307 = vunpack.c.h.b16 %v3310
        %v4308 = vunpack.c.l.b16 %v3311
        %v4309 = vunpack.c.h.b16 %v3311
        %v4310 = vunpack.c.l.b16 %v3312
        %v4311 = vunpack.c.h.b16 %v3312
        %v4312 = vunpack.c.l.b16 %v3313
        %v4313 = vunpack.c.h.b16 %v3313
        %v4314 = vunpack.c.l.b16 %v3314
        %v4315 = vunpack.c.h.b16 %v3314
        %v4316 = vunpack.c.l.b16 %v3315
        %v4317 = vunpack.c.h.b16 %v3315
        %v4318 = vunpack.c.l.b16 %v3316
        %v4319 = vunpack.c.h.b16 %v3316
        %v4320 = vunpack.c.l.b16 %v3317
        %v4321 = vunpack.c.h.b16 %v3317
        %v4322 = vunpack.c.l.b16 %v3318
        %v4323 = vunpack.c.h.b16 %v3318
        %v4324 = vunpack.c.l.b16 %v3319
        %v4325 = vunpack.c.h.b16 %v3319
        %v4326 = vunpack.c.l.b16 %v3320
        %v4327 = vunpack.c.h.b16 %v3320
        %v4328 = vunpack.c.l.b16 %v3321
        %v4329 = vunpack.c.h.b16 %v3321
        %v4330 = vpack.c.b16 %v4202, %v4200
        %v4331 = vpack.c.b16 %v4203, %v4201
        %v4332 = vpack.c.b16 %v4206, %v4204
        %v4333 = vpack.c.b16 %v4207, %v4205
        %v4334 = vpack.c.b16 %v4210, %v4208
        %v4335 = vpack.c.b16 %v4211, %v4209
        %v4336 = vpack.c.b16 %v4214, %v4212
        %v4337 = vpack.c.b16 %v4215, %v4213
        %v4338 = vpack.c.b16 %v4218, %v4216
        %v4339 = vpack.c.b16 %v4219, %v4217
        %v4340 = vpack.c.b16 %v4222, %v4220
        %v4341 = vpack.c.b16 %v4223, %v4221
        %v4342 = vpack.c.b16 %v4226, %v4224
        %v4343 = vpack.c.b16 %v4227, %v4225
        %v4344 = vpack.c.b16 %v4230, %v4228
        %v4345 = vpack.c.b16 %v4231, %v4229
        %v4346 = vpack.c.b16 %v4234, %v4232
        %v4347 = vpack.c.b16 %v4235, %v4233
        %v4348 = vpack.c.b16 %v4238, %v4236
        %v4349 = vpack.c.b16 %v4239, %v4237
        %v4350 = vpack.c.b16 %v4242, %v4240
        %v4351 = vpack.c.b16 %v4243, %v4241
        %v4352 = vpack.c.b16 %v4246, %v4244
        %v4353 = vpack.c.b16 %v4247, %v4245
        %v4354 = vpack.c.b16 %v4250, %v4248
        %v4355 = vpack.c.b16 %v4251, %v4249
        %v4356 = vpack.c.b16 %v4254, %v4252
        %v4357 = vpack.c.b16 %v4255, %v4253
        %v4358 = vpack.c.b16 %v4258, %v4256
        %v4359 = vpack.c.b16 %v4259, %v4257
        %v4360 = vpack.c.b16 %v4262, %v4260
        %v4361 = vpack.c.b16 %v4263, %v4261
        %v4362 = vpack.c.b16 %v4266, %v4264
        %v4363 = vpack.c.b16 %v4267, %v4265
        %v4364 = vpack.c.b16 %v4270, %v4268
        %v4365 = vpack.c.b16 %v4271, %v4269
        %v4366 = vpack.c.b16 %v4274, %v4272
        %v4367 = vpack.c.b16 %v4275, %v4273
        %v4368 = vpack.c.b16 %v4278, %v4276
        %v4369 = vpack.c.b16 %v4279, %v4277
        %v4370 = vpack.c.b16 %v4282, %v4280
        %v4371 = vpack.c.b16 %v4283, %v4281
        %v4372 = vpack.c.b16 %v4286, %v4284
        %v4373 = vpack.c.b16 %v4287, %v4285
        %v4374 = vpack.c.b16 %v4290, %v4288
        %v4375 = vpack.c.b16 %v4291, %v4289
        %v4376 = vpack.c.b16 %v4294, %v4292
        %v4377 = vpack.c.b16 %v4295, %v4293
        %v4378 = vpack.c.b16 %v4298, %v4296
        %v4379 = vpack.c.b16 %v4299, %v4297
        %v4380 = vpack.c.b16 %v4302, %v4300
        %v4381 = vpack.c.b16 %v4303, %v4301
        %v4382 = vpack.c.b16 %v4306, %v4304
        %v4383 = vpack.c.b16 %v4307, %v4305
        %v4384 = vpack.c.b16 %v4310, %v4308
        %v4385 = vpack.c.b16 %v4311, %v4309
        %v4386 = vpack.c.b16 %v4314, %v4312
        %v4387 = vpack.c.b16 %v4315, %v4313
        %v4388 = vpack.c.b16 %v4318, %v4316
        %v4389 = vpack.c.b16 %v4319, %v4317
        %v4390 = vpack.c.b16 %v4322, %v4320
        %v4391 = vpack.c.b16 %v4323, %v4321
        %v4392 = vpack.c.b16 %v4326, %v4324
        %v4393 = vpack.c.b16 %v4327, %v4325
        %v4394 = vpack.c.b16 %v4328, %v4328
        %v4395 = vpack.c.b16 %v4329, %v4329
        %v4461 = vsel %vm1455, %v3380, 0
        %v4464 = vsel %vm1455, %v3419, 0
        %v4467 = vsel %vm1455, %v3458, 0
        %v4470 = vsel %vm1455, %v3497, 0
        %v4473 = vsel %vm1455, %v3536, 0
        %v4476 = vsel %vm1455, %v3575, 0
        %v4479 = vsel %vm1455, %v3614, 0
        %v4482 = vsel %vm1455, %v3653, 0
        %v4485 = vsel %vm1455, %v3692, 0
        %v4488 = vsel %vm1455, %v3731, 0
        %v4491 = vsel %vm1455, %v3770, 0
        %v4494 = vsel %vm1455, %v3809, 0
        %v4497 = vsel %vm1455, %v3848, 0
        %v4500 = vsel %vm1455, %v3887, 0
        %v4503 = vsel %vm1455, %v3926, 0
        %v4506 = vsel %vm1455, %v3965, 0
        %v4509 = vsel %vm1455, %v4004, 0
        %v4512 = vsel %vm1455, %v4043, 0
        %v4515 = vsel %vm1455, %v4058, 0
        %v4518 = vand.u32 %v4394, %v1515
        %v4521 = vand.u32 %v4395, %v1515
        %4523 = vmatprep.subr.bf16.mxu0 %v4345
        %4524 = vmatpush1.bf16.msra.mxu0 %v4344
        %4525 = vmatprep.subr.bf16.mxu0 %v4343
        %4526 = vmatpush1.bf16.msra.mxu0 %v4342
        %4527 = vmatprep.subr.bf16.mxu0 %v4341
        %4528 = vmatpush1.bf16.msra.mxu0 %v4340
        %4529 = vmatprep.subr.bf16.mxu0 %v4339
        %4530 = vmatpush1.bf16.msra.mxu0 %v4338
        %4531 = vmatprep.subr.bf16.mxu0 %v4337
        %4532 = vmatpush1.bf16.msra.mxu0 %v4336
        %4533 = vmatprep.subr.bf16.mxu0 %v4335
        %4534 = vmatpush1.bf16.msra.mxu0 %v4334
        %4535 = vmatprep.subr.bf16.mxu0 %v4333
        %4536 = vmatpush1.bf16.msra.mxu0 %v4332
        %4537 = vmatprep.subr.bf16.mxu0 %v4331
        %4538 = vmatpush1.bf16.msra.mxu0 %v4330
        %4539 = vmatprep.subr.bf16.mxu0 %v4361
        %4540 = vmatpush2.bf16.msra.mxu0 %v4360
        %4541 = vmatprep.subr.bf16.mxu0 %v4359
        %4542 = vmatpush2.bf16.msra.mxu0 %v4358
        %4543 = vmatprep.subr.bf16.mxu0 %v4357
        %4544 = vmatpush2.bf16.msra.mxu0 %v4356
        %4545 = vmatprep.subr.bf16.mxu0 %v4355
        %4546 = vmatpush2.bf16.msra.mxu0 %v4354
        %4547 = vmatprep.subr.bf16.mxu0 %v4353
        %4548 = vmatpush2.bf16.msra.mxu0 %v4352
        %4549 = vmatprep.subr.bf16.mxu0 %v4351
        %4550 = vmatpush2.bf16.msra.mxu0 %v4350
        %4551 = vmatprep.subr.bf16.mxu0 %v4349
        %4552 = vmatpush2.bf16.msra.mxu0 %v4348
        %4553 = vmatprep.subr.bf16.mxu0 %v4347
        %4554 = vmatpush2.bf16.msra.mxu0 %v4346
        %4555 = vmatprep.mubr.bf16.mxu0 %v3346
        %4556 = vmatmul.mubr.bf16.gmra.mxu0 %v3334
        %v4557 = vpop.f32.mrf.mxu0
        %v4558 = vadd.f32 0.0, %v4557
        %v4559 = vpop.f32.mrf.mxu0
        %v4560 = vadd.f32 0.0, %v4559
        %v4561 = vpop.f32.mrf.mxu0
        %v4562 = vadd.f32 0.0, %v4561
        %v4563 = vpop.f32.mrf.mxu0
        %v4564 = vadd.f32 0.0, %v4563
        %4565 = vmatprep.mubr.bf16.mxu0 %v3396
        %4566 = vmatmul.mubr.bf16.gmra.mxu0 %v3388
        %v4567 = vpop.f32.mrf.mxu0
        %v4568 = vadd.f32 0.0, %v4567
        %v4569 = vpop.f32.mrf.mxu0
        %v4570 = vadd.f32 0.0, %v4569
        %v4571 = vpop.f32.mrf.mxu0
        %v4572 = vadd.f32 0.0, %v4571
        %v4573 = vpop.f32.mrf.mxu0
        %v4574 = vadd.f32 0.0, %v4573
        %4575 = vmatprep.mubr.bf16.mxu0 %v3435
        %4576 = vmatmul.mubr.bf16.gmra.mxu0 %v3427
        %v4577 = vpop.f32.mrf.mxu0
        %v4578 = vadd.f32 0.0, %v4577
        %v4579 = vpop.f32.mrf.mxu0
        %v4580 = vadd.f32 0.0, %v4579
        %v4581 = vpop.f32.mrf.mxu0
        %v4582 = vadd.f32 0.0, %v4581
        %v4583 = vpop.f32.mrf.mxu0
        %v4584 = vadd.f32 0.0, %v4583
        %4585 = vmatprep.mubr.bf16.mxu0 %v3474
        %4586 = vmatmul.mubr.bf16.gmra.mxu0 %v3466
        %v4587 = vpop.f32.mrf.mxu0
        %v4588 = vadd.f32 0.0, %v4587
        %v4589 = vpop.f32.mrf.mxu0
        %v4590 = vadd.f32 0.0, %v4589
        %v4591 = vpop.f32.mrf.mxu0
        %v4592 = vadd.f32 0.0, %v4591
        %v4593 = vpop.f32.mrf.mxu0
        %v4594 = vadd.f32 0.0, %v4593
        %4595 = vmatprep.mubr.bf16.mxu0 %v3513
        %4596 = vmatmul.mubr.bf16.gmra.mxu0 %v3505
        %v4597 = vpop.f32.mrf.mxu0
        %v4598 = vadd.f32 0.0, %v4597
        %v4599 = vpop.f32.mrf.mxu0
        %v4600 = vadd.f32 0.0, %v4599
        %v4601 = vpop.f32.mrf.mxu0
        %v4602 = vadd.f32 0.0, %v4601
        %v4603 = vpop.f32.mrf.mxu0
        %v4604 = vadd.f32 0.0, %v4603
        %4605 = vmatprep.mubr.bf16.mxu0 %v3552
        %4606 = vmatmul.mubr.bf16.gmra.mxu0 %v3544
        %v4607 = vpop.f32.mrf.mxu0
        %v4608 = vadd.f32 0.0, %v4607
        %v4609 = vpop.f32.mrf.mxu0
        %v4610 = vadd.f32 0.0, %v4609
        %v4611 = vpop.f32.mrf.mxu0
        %v4612 = vadd.f32 0.0, %v4611
        %v4613 = vpop.f32.mrf.mxu0
        %v4614 = vadd.f32 0.0, %v4613
        %4615 = vmatprep.mubr.bf16.mxu0 %v3591
        %4616 = vmatmul.mubr.bf16.gmra.mxu0 %v3583
        %v4617 = vpop.f32.mrf.mxu0
        %v4618 = vadd.f32 0.0, %v4617
        %v4619 = vpop.f32.mrf.mxu0
        %v4620 = vadd.f32 0.0, %v4619
        %v4621 = vpop.f32.mrf.mxu0
        %v4622 = vadd.f32 0.0, %v4621
        %v4623 = vpop.f32.mrf.mxu0
        %v4624 = vadd.f32 0.0, %v4623
        %4625 = vmatprep.mubr.bf16.mxu0 %v3630
        %4626 = vmatmul.mubr.bf16.gmra.mxu0 %v3622
        %v4627 = vpop.f32.mrf.mxu0
        %v4628 = vadd.f32 0.0, %v4627
        %v4629 = vpop.f32.mrf.mxu0
        %v4630 = vadd.f32 0.0, %v4629
        %v4631 = vpop.f32.mrf.mxu0
        %v4632 = vadd.f32 0.0, %v4631
        %v4633 = vpop.f32.mrf.mxu0
        %v4634 = vadd.f32 0.0, %v4633
        %4635 = vmatprep.mubr.bf16.mxu0 %v3669
        %4636 = vmatmul.mubr.bf16.gmra.mxu0 %v3661
        %v4637 = vpop.f32.mrf.mxu0
        %v4638 = vadd.f32 0.0, %v4637
        %v4639 = vpop.f32.mrf.mxu0
        %v4640 = vadd.f32 0.0, %v4639
        %v4641 = vpop.f32.mrf.mxu0
        %v4642 = vadd.f32 0.0, %v4641
        %v4643 = vpop.f32.mrf.mxu0
        %v4644 = vadd.f32 0.0, %v4643
        %4645 = vmatprep.mubr.bf16.mxu0 %v3708
        %4646 = vmatmul.mubr.bf16.gmra.mxu0 %v3700
        %v4647 = vpop.f32.mrf.mxu0
        %v4648 = vadd.f32 0.0, %v4647
        %v4649 = vpop.f32.mrf.mxu0
        %v4650 = vadd.f32 0.0, %v4649
        %v4651 = vpop.f32.mrf.mxu0
        %v4652 = vadd.f32 0.0, %v4651
        %v4653 = vpop.f32.mrf.mxu0
        %v4654 = vadd.f32 0.0, %v4653
        %4655 = vmatprep.mubr.bf16.mxu0 %v3747
        %4656 = vmatmul.mubr.bf16.gmra.mxu0 %v3739
        %v4657 = vpop.f32.mrf.mxu0
        %v4658 = vadd.f32 0.0, %v4657
        %v4659 = vpop.f32.mrf.mxu0
        %v4660 = vadd.f32 0.0, %v4659
        %v4661 = vpop.f32.mrf.mxu0
        %v4662 = vadd.f32 0.0, %v4661
        %v4663 = vpop.f32.mrf.mxu0
        %v4664 = vadd.f32 0.0, %v4663
        %4665 = vmatprep.mubr.bf16.mxu0 %v3786
        %4666 = vmatmul.mubr.bf16.gmra.mxu0 %v3778
        %v4667 = vpop.f32.mrf.mxu0
        %v4668 = vadd.f32 0.0, %v4667
        %v4669 = vpop.f32.mrf.mxu0
        %v4670 = vadd.f32 0.0, %v4669
        %v4671 = vpop.f32.mrf.mxu0
        %v4672 = vadd.f32 0.0, %v4671
        %v4673 = vpop.f32.mrf.mxu0
        %v4674 = vadd.f32 0.0, %v4673
        %4675 = vmatprep.mubr.bf16.mxu0 %v3825
        %4676 = vmatmul.mubr.bf16.gmra.mxu0 %v3817
        %v4677 = vpop.f32.mrf.mxu0
        %v4678 = vadd.f32 0.0, %v4677
        %v4679 = vpop.f32.mrf.mxu0
        %v4680 = vadd.f32 0.0, %v4679
        %v4681 = vpop.f32.mrf.mxu0
        %v4682 = vadd.f32 0.0, %v4681
        %v4683 = vpop.f32.mrf.mxu0
        %v4684 = vadd.f32 0.0, %v4683
        %4685 = vmatprep.mubr.bf16.mxu0 %v3864
        %4686 = vmatmul.mubr.bf16.gmra.mxu0 %v3856
        %v4687 = vpop.f32.mrf.mxu0
        %v4688 = vadd.f32 0.0, %v4687
        %v4689 = vpop.f32.mrf.mxu0
        %v4690 = vadd.f32 0.0, %v4689
        %v4691 = vpop.f32.mrf.mxu0
        %v4692 = vadd.f32 0.0, %v4691
        %v4693 = vpop.f32.mrf.mxu0
        %v4694 = vadd.f32 0.0, %v4693
        %4695 = vmatprep.mubr.bf16.mxu0 %v3903
        %4696 = vmatmul.mubr.bf16.gmra.mxu0 %v3895
        %v4697 = vpop.f32.mrf.mxu0
        %v4698 = vadd.f32 0.0, %v4697
        %v4699 = vpop.f32.mrf.mxu0
        %v4700 = vadd.f32 0.0, %v4699
        %v4701 = vpop.f32.mrf.mxu0
        %v4702 = vadd.f32 0.0, %v4701
        %v4703 = vpop.f32.mrf.mxu0
        %v4704 = vadd.f32 0.0, %v4703
        %4705 = vmatprep.mubr.bf16.mxu0 %v3942
        %4706 = vmatmul.mubr.bf16.gmra.mxu0 %v3934
        %v4707 = vpop.f32.mrf.mxu0
        %v4708 = vadd.f32 0.0, %v4707
        %v4709 = vpop.f32.mrf.mxu0
        %v4710 = vadd.f32 0.0, %v4709
        %v4711 = vpop.f32.mrf.mxu0
        %v4712 = vadd.f32 0.0, %v4711
        %v4713 = vpop.f32.mrf.mxu0
        %v4714 = vadd.f32 0.0, %v4713
        %4715 = vmatprep.mubr.bf16.mxu0 %v3981
        %4716 = vmatmul.mubr.bf16.gmra.mxu0 %v3973
        %v4717 = vpop.f32.mrf.mxu0
        %v4718 = vadd.f32 0.0, %v4717
        %v4719 = vpop.f32.mrf.mxu0
        %v4720 = vadd.f32 0.0, %v4719
        %v4721 = vpop.f32.mrf.mxu0
        %v4722 = vadd.f32 0.0, %v4721
        %v4723 = vpop.f32.mrf.mxu0
        %v4724 = vadd.f32 0.0, %v4723
        %4725 = vmatprep.mubr.bf16.mxu0 %v4020
        %4726 = vmatmul.mubr.bf16.gmra.mxu0 %v4012
        %v4727 = vpop.f32.mrf.mxu0
        %v4728 = vadd.f32 0.0, %v4727
        %v4729 = vpop.f32.mrf.mxu0
        %v4730 = vadd.f32 0.0, %v4729
        %v4731 = vpop.f32.mrf.mxu0
        %v4732 = vadd.f32 0.0, %v4731
        %v4733 = vpop.f32.mrf.mxu0
        %v4734 = vadd.f32 0.0, %v4733
        %4735 = vmatprep.mubr.bf16.mxu0 %v4049
        %4736 = vmatmul.mubr.bf16.gmra.mxu0 %v4046
        %v4737 = vpop.f32.mrf.mxu0
        %v4738 = vadd.f32 0.0, %v4737
        %v4739 = vpop.f32.mrf.mxu0
        %v4740 = vadd.f32 0.0, %v4739
        %v4741 = vpop.f32.mrf.mxu0
        %v4742 = vadd.f32 0.0, %v4741
        %v4743 = vpop.f32.mrf.mxu0
        %v4744 = vadd.f32 0.0, %v4743
        %4745 = vdwg.mxu0
        %4746 = vmatprep.subr.bf16.mxu0 %v4377
        %4747 = vmatpush1.bf16.msra.mxu0 %v4376
        %4748 = vmatprep.subr.bf16.mxu0 %v4375
        %4749 = vmatpush1.bf16.msra.mxu0 %v4374
        %4750 = vmatprep.subr.bf16.mxu0 %v4373
        %4751 = vmatpush1.bf16.msra.mxu0 %v4372
        %4752 = vmatprep.subr.bf16.mxu0 %v4371
        %4753 = vmatpush1.bf16.msra.mxu0 %v4370
        %4754 = vmatprep.subr.bf16.mxu0 %v4369
        %4755 = vmatpush1.bf16.msra.mxu0 %v4368
        %4756 = vmatprep.subr.bf16.mxu0 %v4367
        %4757 = vmatpush1.bf16.msra.mxu0 %v4366
        %4758 = vmatprep.subr.bf16.mxu0 %v4365
        %4759 = vmatpush1.bf16.msra.mxu0 %v4364
        %4760 = vmatprep.subr.bf16.mxu0 %v4363
        %4761 = vmatpush1.bf16.msra.mxu0 %v4362
        %4762 = vmatprep.subr.bf16.mxu0 %v4393
        %4763 = vmatpush2.bf16.msra.mxu0 %v4392
        %4764 = vmatprep.subr.bf16.mxu0 %v4391
        %4765 = vmatpush2.bf16.msra.mxu0 %v4390
        %4766 = vmatprep.subr.bf16.mxu0 %v4389
        %4767 = vmatpush2.bf16.msra.mxu0 %v4388
        %4768 = vmatprep.subr.bf16.mxu0 %v4387
        %4769 = vmatpush2.bf16.msra.mxu0 %v4386
        %4770 = vmatprep.subr.bf16.mxu0 %v4385
        %4771 = vmatpush2.bf16.msra.mxu0 %v4384
        %4772 = vmatprep.subr.bf16.mxu0 %v4383
        %4773 = vmatpush2.bf16.msra.mxu0 %v4382
        %4774 = vmatprep.subr.bf16.mxu0 %v4381
        %4775 = vmatpush2.bf16.msra.mxu0 %v4380
        %4776 = vmatprep.subr.bf16.mxu0 %v4379
        %4777 = vmatpush2.bf16.msra.mxu0 %v4378
        %4778 = vmatprep.mubr.bf16.mxu0 %v3370
        %4779 = vmatmul.mubr.bf16.gmra.mxu0 %v3358
        %v4780 = vpop.f32.mrf.mxu0
        %v4781 = vadd.f32 %v4558, %v4780
        %v4782 = vpop.f32.mrf.mxu0
        %v4783 = vadd.f32 %v4560, %v4782
        %v4784 = vpop.f32.mrf.mxu0
        %v4785 = vadd.f32 %v4562, %v4784
        %v4786 = vpop.f32.mrf.mxu0
        %v4787 = vadd.f32 %v4564, %v4786
        %4788 = vmatprep.mubr.bf16.mxu0 %v3412
        %4789 = vmatmul.mubr.bf16.gmra.mxu0 %v3404
        %v4790 = vpop.f32.mrf.mxu0
        %v4791 = vadd.f32 %v4568, %v4790
        %v4792 = vpop.f32.mrf.mxu0
        %v4793 = vadd.f32 %v4570, %v4792
        %v4794 = vpop.f32.mrf.mxu0
        %v4795 = vadd.f32 %v4572, %v4794
        %v4796 = vpop.f32.mrf.mxu0
        %v4797 = vadd.f32 %v4574, %v4796
        %4798 = vmatprep.mubr.bf16.mxu0 %v3451
        %4799 = vmatmul.mubr.bf16.gmra.mxu0 %v3443
        %v4800 = vpop.f32.mrf.mxu0
        %v4801 = vadd.f32 %v4578, %v4800
        %v4802 = vpop.f32.mrf.mxu0
        %v4803 = vadd.f32 %v4580, %v4802
        %v4804 = vpop.f32.mrf.mxu0
        %v4805 = vadd.f32 %v4582, %v4804
        %v4806 = vpop.f32.mrf.mxu0
        %v4807 = vadd.f32 %v4584, %v4806
        %4808 = vmatprep.mubr.bf16.mxu0 %v3490
        %4809 = vmatmul.mubr.bf16.gmra.mxu0 %v3482
        %v4810 = vpop.f32.mrf.mxu0
        %v4811 = vadd.f32 %v4588, %v4810
        %v4812 = vpop.f32.mrf.mxu0
        %v4813 = vadd.f32 %v4590, %v4812
        %v4814 = vpop.f32.mrf.mxu0
        %v4815 = vadd.f32 %v4592, %v4814
        %v4816 = vpop.f32.mrf.mxu0
        %v4817 = vadd.f32 %v4594, %v4816
        %4818 = vmatprep.mubr.bf16.mxu0 %v3529
        %4819 = vmatmul.mubr.bf16.gmra.mxu0 %v3521
        %v4820 = vpop.f32.mrf.mxu0
        %v4821 = vadd.f32 %v4598, %v4820
        %v4822 = vpop.f32.mrf.mxu0
        %v4823 = vadd.f32 %v4600, %v4822
        %v4824 = vpop.f32.mrf.mxu0
        %v4825 = vadd.f32 %v4602, %v4824
        %v4826 = vpop.f32.mrf.mxu0
        %v4827 = vadd.f32 %v4604, %v4826
        %4828 = vmatprep.mubr.bf16.mxu0 %v3568
        %4829 = vmatmul.mubr.bf16.gmra.mxu0 %v3560
        %v4830 = vpop.f32.mrf.mxu0
        %v4831 = vadd.f32 %v4608, %v4830
        %v4832 = vpop.f32.mrf.mxu0
        %v4833 = vadd.f32 %v4610, %v4832
        %v4834 = vpop.f32.mrf.mxu0
        %v4835 = vadd.f32 %v4612, %v4834
        %v4836 = vpop.f32.mrf.mxu0
        %v4837 = vadd.f32 %v4614, %v4836
        %4838 = vmatprep.mubr.bf16.mxu0 %v3607
        %4839 = vmatmul.mubr.bf16.gmra.mxu0 %v3599
        %v4840 = vpop.f32.mrf.mxu0
        %v4841 = vadd.f32 %v4618, %v4840
        %v4842 = vpop.f32.mrf.mxu0
        %v4843 = vadd.f32 %v4620, %v4842
        %v4844 = vpop.f32.mrf.mxu0
        %v4845 = vadd.f32 %v4622, %v4844
        %v4846 = vpop.f32.mrf.mxu0
        %v4847 = vadd.f32 %v4624, %v4846
        %4848 = vmatprep.mubr.bf16.mxu0 %v3646
        %4849 = vmatmul.mubr.bf16.gmra.mxu0 %v3638
        %v4850 = vpop.f32.mrf.mxu0
        %v4851 = vadd.f32 %v4628, %v4850
        %v4852 = vpop.f32.mrf.mxu0
        %v4853 = vadd.f32 %v4630, %v4852
        %v4854 = vpop.f32.mrf.mxu0
        %v4855 = vadd.f32 %v4632, %v4854
        %v4856 = vpop.f32.mrf.mxu0
        %v4857 = vadd.f32 %v4634, %v4856
        %4858 = vmatprep.mubr.bf16.mxu0 %v3685
        %4859 = vmatmul.mubr.bf16.gmra.mxu0 %v3677
        %v4860 = vpop.f32.mrf.mxu0
        %v4861 = vadd.f32 %v4638, %v4860
        %v4862 = vpop.f32.mrf.mxu0
        %v4863 = vadd.f32 %v4640, %v4862
        %v4864 = vpop.f32.mrf.mxu0
        %v4865 = vadd.f32 %v4642, %v4864
        %v4866 = vpop.f32.mrf.mxu0
        %v4867 = vadd.f32 %v4644, %v4866
        %4868 = vmatprep.mubr.bf16.mxu0 %v3724
        %4869 = vmatmul.mubr.bf16.gmra.mxu0 %v3716
        %v4870 = vpop.f32.mrf.mxu0
        %v4871 = vadd.f32 %v4648, %v4870
        %v4872 = vpop.f32.mrf.mxu0
        %v4873 = vadd.f32 %v4650, %v4872
        %v4874 = vpop.f32.mrf.mxu0
        %v4875 = vadd.f32 %v4652, %v4874
        %v4876 = vpop.f32.mrf.mxu0
        %v4877 = vadd.f32 %v4654, %v4876
        %4878 = vmatprep.mubr.bf16.mxu0 %v3763
        %4879 = vmatmul.mubr.bf16.gmra.mxu0 %v3755
        %v4880 = vpop.f32.mrf.mxu0
        %v4881 = vadd.f32 %v4658, %v4880
        %v4882 = vpop.f32.mrf.mxu0
        %v4883 = vadd.f32 %v4660, %v4882
        %v4884 = vpop.f32.mrf.mxu0
        %v4885 = vadd.f32 %v4662, %v4884
        %v4886 = vpop.f32.mrf.mxu0
        %v4887 = vadd.f32 %v4664, %v4886
        %4888 = vmatprep.mubr.bf16.mxu0 %v3802
        %4889 = vmatmul.mubr.bf16.gmra.mxu0 %v3794
        %v4890 = vpop.f32.mrf.mxu0
        %v4891 = vadd.f32 %v4668, %v4890
        %v4892 = vpop.f32.mrf.mxu0
        %v4893 = vadd.f32 %v4670, %v4892
        %v4894 = vpop.f32.mrf.mxu0
        %v4895 = vadd.f32 %v4672, %v4894
        %v4896 = vpop.f32.mrf.mxu0
        %v4897 = vadd.f32 %v4674, %v4896
        %4898 = vmatprep.mubr.bf16.mxu0 %v3841
        %4899 = vmatmul.mubr.bf16.gmra.mxu0 %v3833
        %v4900 = vpop.f32.mrf.mxu0
        %v4901 = vadd.f32 %v4678, %v4900
        %v4902 = vpop.f32.mrf.mxu0
        %v4903 = vadd.f32 %v4680, %v4902
        %v4904 = vpop.f32.mrf.mxu0
        %v4905 = vadd.f32 %v4682, %v4904
        %v4906 = vpop.f32.mrf.mxu0
        %v4907 = vadd.f32 %v4684, %v4906
        %4908 = vmatprep.mubr.bf16.mxu0 %v3880
        %4909 = vmatmul.mubr.bf16.gmra.mxu0 %v3872
        %v4910 = vpop.f32.mrf.mxu0
        %v4911 = vadd.f32 %v4688, %v4910
        %v4912 = vpop.f32.mrf.mxu0
        %v4913 = vadd.f32 %v4690, %v4912
        %v4914 = vpop.f32.mrf.mxu0
        %v4915 = vadd.f32 %v4692, %v4914
        %v4916 = vpop.f32.mrf.mxu0
        %v4917 = vadd.f32 %v4694, %v4916
        %4918 = vmatprep.mubr.bf16.mxu0 %v3919
        %4919 = vmatmul.mubr.bf16.gmra.mxu0 %v3911
        %v4920 = vpop.f32.mrf.mxu0
        %v4921 = vadd.f32 %v4698, %v4920
        %v4922 = vpop.f32.mrf.mxu0
        %v4923 = vadd.f32 %v4700, %v4922
        %v4924 = vpop.f32.mrf.mxu0
        %v4925 = vadd.f32 %v4702, %v4924
        %v4926 = vpop.f32.mrf.mxu0
        %v4927 = vadd.f32 %v4704, %v4926
        %4928 = vmatprep.mubr.bf16.mxu0 %v3958
        %4929 = vmatmul.mubr.bf16.gmra.mxu0 %v3950
        %v4930 = vpop.f32.mrf.mxu0
        %v4931 = vadd.f32 %v4708, %v4930
        %v4932 = vpop.f32.mrf.mxu0
        %v4933 = vadd.f32 %v4710, %v4932
        %v4934 = vpop.f32.mrf.mxu0
        %v4935 = vadd.f32 %v4712, %v4934
        %v4936 = vpop.f32.mrf.mxu0
        %v4937 = vadd.f32 %v4714, %v4936
        %4938 = vmatprep.mubr.bf16.mxu0 %v3997
        %4939 = vmatmul.mubr.bf16.gmra.mxu0 %v3989
        %v4940 = vpop.f32.mrf.mxu0
        %v4941 = vadd.f32 %v4718, %v4940
        %v4942 = vpop.f32.mrf.mxu0
        %v4943 = vadd.f32 %v4720, %v4942
        %v4944 = vpop.f32.mrf.mxu0
        %v4945 = vadd.f32 %v4722, %v4944
        %v4946 = vpop.f32.mrf.mxu0
        %v4947 = vadd.f32 %v4724, %v4946
        %4948 = vmatprep.mubr.bf16.mxu0 %v4036
        %4949 = vmatmul.mubr.bf16.gmra.mxu0 %v4028
        %v4950 = vpop.f32.mrf.mxu0
        %v4951 = vadd.f32 %v4728, %v4950
        %v4952 = vpop.f32.mrf.mxu0
        %v4953 = vadd.f32 %v4730, %v4952
        %v4954 = vpop.f32.mrf.mxu0
        %v4955 = vadd.f32 %v4732, %v4954
        %v4956 = vpop.f32.mrf.mxu0
        %v4957 = vadd.f32 %v4734, %v4956
        %4958 = vmatprep.mubr.bf16.mxu0 %v4055
        %4959 = vmatmul.mubr.bf16.gmra.mxu0 %v4052
        %v4960 = vpop.f32.mrf.mxu0
        %v4961 = vadd.f32 %v4738, %v4960
        %v4962 = vpop.f32.mrf.mxu0
        %v4963 = vadd.f32 %v4740, %v4962
        %v4964 = vpop.f32.mrf.mxu0
        %v4965 = vadd.f32 %v4742, %v4964
        %v4966 = vpop.f32.mrf.mxu0
        %v4967 = vadd.f32 %v4744, %v4966
        %4968 = vdwg.mxu0
        %4969 = vmatprep.subr.bf16.mxu0 0
        %4970 = vmatpush1.bf16.msra.mxu0 0
        %4971 = vmatprep.subr.bf16.mxu0 0
        %4972 = vmatpush1.bf16.msra.mxu0 0
        %4973 = vmatprep.subr.bf16.mxu0 0
        %4974 = vmatpush1.bf16.msra.mxu0 0
        %4975 = vmatprep.subr.bf16.mxu0 0
        %4976 = vmatpush1.bf16.msra.mxu0 0
        %4977 = vmatprep.subr.bf16.mxu0 0
        %4978 = vmatpush1.bf16.msra.mxu0 0
        %4979 = vmatprep.subr.bf16.mxu0 0
        %4980 = vmatpush1.bf16.msra.mxu0 0
        %4981 = vmatprep.subr.bf16.mxu0 0
        %4982 = vmatpush1.bf16.msra.mxu0 0
        %4983 = vmatprep.subr.bf16.mxu0 %v4521
        %4984 = vmatpush1.bf16.msra.mxu0 %v4518
        %4985 = vmatprep.subr.bf16.mxu0 0
        %4986 = vmatpush2.bf16.msra.mxu0 0
        %4987 = vmatprep.subr.bf16.mxu0 0
        %4988 = vmatpush2.bf16.msra.mxu0 0
        %4989 = vmatprep.subr.bf16.mxu0 0
        %4990 = vmatpush2.bf16.msra.mxu0 0
        %4991 = vmatprep.subr.bf16.mxu0 0
        %4992 = vmatpush2.bf16.msra.mxu0 0
        %4993 = vmatprep.subr.bf16.mxu0 0
        %4994 = vmatpush2.bf16.msra.mxu0 0
        %4995 = vmatprep.subr.bf16.mxu0 0
        %4996 = vmatpush2.bf16.msra.mxu0 0
        %4997 = vmatprep.subr.bf16.mxu0 0
        %4998 = vmatpush2.bf16.msra.mxu0 0
        %4999 = vmatprep.subr.bf16.mxu0 0
        %5000 = vmatpush2.bf16.msra.mxu0 0
        %5001 = vmatprep.mubr.bf16.mxu0 0
        %5002 = vmatmul.mubr.bf16.gmra.mxu0 %v4461
        %v5003 = vpop.f32.mrf.mxu0
        %v5004 = vadd.f32 %v4781, %v5003
        %v5005 = vpop.f32.mrf.mxu0
        %v5006 = vadd.f32 %v4783, %v5005
        %v5007 = vpop.f32.mrf.mxu0
        %v5008 = vadd.f32 %v4785, %v5007
        %v5009 = vpop.f32.mrf.mxu0
        %v5010 = vadd.f32 %v4787, %v5009
        %5011 = vmatprep.mubr.bf16.mxu0 0
        %5012 = vmatmul.mubr.bf16.gmra.mxu0 %v4464
        %v5013 = vpop.f32.mrf.mxu0
        %v5014 = vadd.f32 %v4791, %v5013
        %v5015 = vpop.f32.mrf.mxu0
        %v5016 = vadd.f32 %v4793, %v5015
        %v5017 = vpop.f32.mrf.mxu0
        %v5018 = vadd.f32 %v4795, %v5017
        %v5019 = vpop.f32.mrf.mxu0
        %v5020 = vadd.f32 %v4797, %v5019
        %5021 = vmatprep.mubr.bf16.mxu0 0
        %5022 = vmatmul.mubr.bf16.gmra.mxu0 %v4467
        %v5023 = vpop.f32.mrf.mxu0
        %v5024 = vadd.f32 %v4801, %v5023
        %v5025 = vpop.f32.mrf.mxu0
        %v5026 = vadd.f32 %v4803, %v5025
        %v5027 = vpop.f32.mrf.mxu0
        %v5028 = vadd.f32 %v4805, %v5027
        %v5029 = vpop.f32.mrf.mxu0
        %v5030 = vadd.f32 %v4807, %v5029
        %5031 = vmatprep.mubr.bf16.mxu0 0
        %5032 = vmatmul.mubr.bf16.gmra.mxu0 %v4470
        %v5033 = vpop.f32.mrf.mxu0
        %v5034 = vadd.f32 %v4811, %v5033
        %v5035 = vpop.f32.mrf.mxu0
        %v5036 = vadd.f32 %v4813, %v5035
        %v5037 = vpop.f32.mrf.mxu0
        %v5038 = vadd.f32 %v4815, %v5037
        %v5039 = vpop.f32.mrf.mxu0
        %v5040 = vadd.f32 %v4817, %v5039
        %5041 = vmatprep.mubr.bf16.mxu0 0
        %5042 = vmatmul.mubr.bf16.gmra.mxu0 %v4473
        %v5043 = vpop.f32.mrf.mxu0
        %v5044 = vadd.f32 %v4821, %v5043
        %v5045 = vpop.f32.mrf.mxu0
        %v5046 = vadd.f32 %v4823, %v5045
        %v5047 = vpop.f32.mrf.mxu0
        %v5048 = vadd.f32 %v4825, %v5047
        %v5049 = vpop.f32.mrf.mxu0
        %v5050 = vadd.f32 %v4827, %v5049
        %5051 = vmatprep.mubr.bf16.mxu0 0
        %5052 = vmatmul.mubr.bf16.gmra.mxu0 %v4476
        %v5053 = vpop.f32.mrf.mxu0
        %v5054 = vadd.f32 %v4831, %v5053
        %v5055 = vpop.f32.mrf.mxu0
        %v5056 = vadd.f32 %v4833, %v5055
        %v5057 = vpop.f32.mrf.mxu0
        %v5058 = vadd.f32 %v4835, %v5057
        %v5059 = vpop.f32.mrf.mxu0
        %v5060 = vadd.f32 %v4837, %v5059
        %5061 = vmatprep.mubr.bf16.mxu0 0
        %5062 = vmatmul.mubr.bf16.gmra.mxu0 %v4479
        %v5063 = vpop.f32.mrf.mxu0
        %v5064 = vadd.f32 %v4841, %v5063
        %v5065 = vpop.f32.mrf.mxu0
        %v5066 = vadd.f32 %v4843, %v5065
        %v5067 = vpop.f32.mrf.mxu0
        %v5068 = vadd.f32 %v4845, %v5067
        %v5069 = vpop.f32.mrf.mxu0
        %v5070 = vadd.f32 %v4847, %v5069
        %5071 = vmatprep.mubr.bf16.mxu0 0
        %5072 = vmatmul.mubr.bf16.gmra.mxu0 %v4482
        %v5073 = vpop.f32.mrf.mxu0
        %v5074 = vadd.f32 %v4851, %v5073
        %v5075 = vpop.f32.mrf.mxu0
        %v5076 = vadd.f32 %v4853, %v5075
        %v5077 = vpop.f32.mrf.mxu0
        %v5078 = vadd.f32 %v4855, %v5077
        %v5079 = vpop.f32.mrf.mxu0
        %v5080 = vadd.f32 %v4857, %v5079
        %5081 = vmatprep.mubr.bf16.mxu0 0
        %5082 = vmatmul.mubr.bf16.gmra.mxu0 %v4485
        %v5083 = vpop.f32.mrf.mxu0
        %v5084 = vadd.f32 %v4861, %v5083
        %v5085 = vpop.f32.mrf.mxu0
        %v5086 = vadd.f32 %v4863, %v5085
        %v5087 = vpop.f32.mrf.mxu0
        %v5088 = vadd.f32 %v4865, %v5087
        %v5089 = vpop.f32.mrf.mxu0
        %v5090 = vadd.f32 %v4867, %v5089
        %5091 = vmatprep.mubr.bf16.mxu0 0
        %5092 = vmatmul.mubr.bf16.gmra.mxu0 %v4488
        %v5093 = vpop.f32.mrf.mxu0
        %v5094 = vadd.f32 %v4871, %v5093
        %v5095 = vpop.f32.mrf.mxu0
        %v5096 = vadd.f32 %v4873, %v5095
        %v5097 = vpop.f32.mrf.mxu0
        %v5098 = vadd.f32 %v4875, %v5097
        %v5099 = vpop.f32.mrf.mxu0
        %v5100 = vadd.f32 %v4877, %v5099
        %5101 = vmatprep.mubr.bf16.mxu0 0
        %5102 = vmatmul.mubr.bf16.gmra.mxu0 %v4491
        %v5103 = vpop.f32.mrf.mxu0
        %v5104 = vadd.f32 %v4881, %v5103
        %v5105 = vpop.f32.mrf.mxu0
        %v5106 = vadd.f32 %v4883, %v5105
        %v5107 = vpop.f32.mrf.mxu0
        %v5108 = vadd.f32 %v4885, %v5107
        %v5109 = vpop.f32.mrf.mxu0
        %v5110 = vadd.f32 %v4887, %v5109
        %5111 = vmatprep.mubr.bf16.mxu0 0
        %5112 = vmatmul.mubr.bf16.gmra.mxu0 %v4494
        %v5113 = vpop.f32.mrf.mxu0
        %v5114 = vadd.f32 %v4891, %v5113
        %v5115 = vpop.f32.mrf.mxu0
        %v5116 = vadd.f32 %v4893, %v5115
        %v5117 = vpop.f32.mrf.mxu0
        %v5118 = vadd.f32 %v4895, %v5117
        %v5119 = vpop.f32.mrf.mxu0
        %v5120 = vadd.f32 %v4897, %v5119
        %5121 = vmatprep.mubr.bf16.mxu0 0
        %5122 = vmatmul.mubr.bf16.gmra.mxu0 %v4497
        %v5123 = vpop.f32.mrf.mxu0
        %v5124 = vadd.f32 %v4901, %v5123
        %v5125 = vpop.f32.mrf.mxu0
        %v5126 = vadd.f32 %v4903, %v5125
        %v5127 = vpop.f32.mrf.mxu0
        %v5128 = vadd.f32 %v4905, %v5127
        %v5129 = vpop.f32.mrf.mxu0
        %v5130 = vadd.f32 %v4907, %v5129
        %5131 = vmatprep.mubr.bf16.mxu0 0
        %5132 = vmatmul.mubr.bf16.gmra.mxu0 %v4500
        %v5133 = vpop.f32.mrf.mxu0
        %v5134 = vadd.f32 %v4911, %v5133
        %v5135 = vpop.f32.mrf.mxu0
        %v5136 = vadd.f32 %v4913, %v5135
        %v5137 = vpop.f32.mrf.mxu0
        %v5138 = vadd.f32 %v4915, %v5137
        %v5139 = vpop.f32.mrf.mxu0
        %v5140 = vadd.f32 %v4917, %v5139
        %5141 = vmatprep.mubr.bf16.mxu0 0
        %5142 = vmatmul.mubr.bf16.gmra.mxu0 %v4503
        %v5143 = vpop.f32.mrf.mxu0
        %v5144 = vadd.f32 %v4921, %v5143
        %v5145 = vpop.f32.mrf.mxu0
        %v5146 = vadd.f32 %v4923, %v5145
        %v5147 = vpop.f32.mrf.mxu0
        %v5148 = vadd.f32 %v4925, %v5147
        %v5149 = vpop.f32.mrf.mxu0
        %v5150 = vadd.f32 %v4927, %v5149
        %5151 = vmatprep.mubr.bf16.mxu0 0
        %5152 = vmatmul.mubr.bf16.gmra.mxu0 %v4506
        %v5153 = vpop.f32.mrf.mxu0
        %v5154 = vadd.f32 %v4931, %v5153
        %v5155 = vpop.f32.mrf.mxu0
        %v5156 = vadd.f32 %v4933, %v5155
        %v5157 = vpop.f32.mrf.mxu0
        %v5158 = vadd.f32 %v4935, %v5157
        %v5159 = vpop.f32.mrf.mxu0
        %v5160 = vadd.f32 %v4937, %v5159
        %5161 = vmatprep.mubr.bf16.mxu0 0
        %5162 = vmatmul.mubr.bf16.gmra.mxu0 %v4509
        %v5163 = vpop.f32.mrf.mxu0
        %v5164 = vadd.f32 %v4941, %v5163
        %v5165 = vpop.f32.mrf.mxu0
        %v5166 = vadd.f32 %v4943, %v5165
        %v5167 = vpop.f32.mrf.mxu0
        %v5168 = vadd.f32 %v4945, %v5167
        %v5169 = vpop.f32.mrf.mxu0
        %v5170 = vadd.f32 %v4947, %v5169
        %5171 = vmatprep.mubr.bf16.mxu0 0
        %5172 = vmatmul.mubr.bf16.gmra.mxu0 %v4512
        %v5173 = vpop.f32.mrf.mxu0
        %v5174 = vadd.f32 %v4951, %v5173
        %v5175 = vpop.f32.mrf.mxu0
        %v5176 = vadd.f32 %v4953, %v5175
        %v5177 = vpop.f32.mrf.mxu0
        %v5178 = vadd.f32 %v4955, %v5177
        %v5179 = vpop.f32.mrf.mxu0
        %v5180 = vadd.f32 %v4957, %v5179
        %5181 = vmatprep.mubr.bf16.mxu0 0
        %5182 = vmatmul.mubr.bf16.gmra.mxu0 %v4515
        %v5183 = vpop.f32.mrf.mxu0
        %v5184 = vadd.f32 %v4961, %v5183
        %v5185 = vpop.f32.mrf.mxu0
        %v5186 = vadd.f32 %v4963, %v5185
        %v5187 = vpop.f32.mrf.mxu0
        %v5188 = vadd.f32 %v4965, %v5187
        %v5189 = vpop.f32.mrf.mxu0
        %v5190 = vadd.f32 %v4967, %v5189
        %5191 = vdwg.mxu0
        %v5192 = vadd.f32 %v2003, %v5004
        %v5193 = vadd.f32 %v2005, %v5006
        %v5196 = vcombine.low %v5192, %v5193
        %v5198 = vunpack.c.l.s4 1966171168
        %v5199 = vunpack.c.0.s8 %v5198
        %v5200 = vlaneseq
        %v5201 = vshrl.u32 %v5200, 7
        %v5202 = vsub.s32 %v5199, %v5201
        %v5203 = vrot.slane %v5196, %v5202
        %v5205 = vunpack.c.l.s4 1966171168
        %v5206 = vunpack.c.0.s8 %v5205
        %v5207 = vlaneseq
        %v5208 = vshrl.u32 %v5207, 7
        %v5209 = vsub.s32 %v5206, %v5208
        %v5210 = vrot.slane %v5203, %v5209
        %v5212 = vlaneseq
        %vm5213 = vcmp.ge.s32.totalorder %v5212, 0
        %vm5214 = vcmp.lt.s32.totalorder %v5212, 256
        %vm5215 = vmand %vm5213, %vm5214
        %5216 = vst.msk [vmem:[#allocation2] ss:$8 sm:$0x3] %vm5215, %v5210
        %5217 = vst.msk [vmem:[#allocation2] ss:$8 sm:$0x0] %vm5215, %v5210
        %v5294 = vrot.slane %v3068, 7
        %v5295 = vrot.slane %v3070, 7
        %v5296 = vrot.slane %v3072, 7
        %v5297 = vsel %vm1513, %v5294, %v5296
        %v5298 = vrot.slane %v3074, 7
        %v5299 = vsel %vm1513, %v5295, %v5298
        %v5300 = vrot.slane %v3078, 7
        %v5301 = vsel %vm1513, %v5296, %v5300
        %v5302 = vrot.slane %v3080, 7
        %v5303 = vsel %vm1513, %v5298, %v5302
        %v5304 = vrot.slane %v3082, 7
        %v5305 = vsel %vm1513, %v5300, %v5304
        %v5306 = vrot.slane %v3084, 7
        %v5307 = vsel %vm1513, %v5302, %v5306
        %v5308 = vrot.slane %v3088, 7
        %v5309 = vsel %vm1513, %v5304, %v5308
        %v5310 = vrot.slane %v3090, 7
        %v5311 = vsel %vm1513, %v5306, %v5310
        %v5312 = vrot.slane %v3092, 7
        %v5313 = vsel %vm1513, %v5308, %v5312
        %v5314 = vrot.slane %v3094, 7
        %v5315 = vsel %vm1513, %v5310, %v5314
        %v5316 = vrot.slane %v3098, 7
        %v5317 = vsel %vm1513, %v5312, %v5316
        %v5318 = vrot.slane %v3100, 7
        %v5319 = vsel %vm1513, %v5314, %v5318
        %v5320 = vrot.slane %v3102, 7
        %v5321 = vsel %vm1513, %v5316, %v5320
        %v5322 = vrot.slane %v3104, 7
        %v5323 = vsel %vm1513, %v5318, %v5322
        %v5324 = vrot.slane %v3108, 7
        %v5325 = vsel %vm1513, %v5320, %v5324
        %v5326 = vrot.slane %v3110, 7
        %v5327 = vsel %vm1513, %v5322, %v5326
        %v5328 = vrot.slane %v3112, 7
        %v5329 = vsel %vm1513, %v5324, %v5328
        %v5330 = vrot.slane %v3114, 7
        %v5331 = vsel %vm1513, %v5326, %v5330
        %v5332 = vrot.slane %v3118, 7
        %v5333 = vsel %vm1513, %v5328, %v5332
        %v5334 = vrot.slane %v3120, 7
        %v5335 = vsel %vm1513, %v5330, %v5334
        %v5336 = vrot.slane %v3122, 7
        %v5337 = vsel %vm1513, %v5332, %v5336
        %v5338 = vrot.slane %v3124, 7
        %v5339 = vsel %vm1513, %v5334, %v5338
        %v5340 = vrot.slane %v3128, 7
        %v5341 = vsel %vm1513, %v5336, %v5340
        %v5342 = vrot.slane %v3130, 7
        %v5343 = vsel %vm1513, %v5338, %v5342
        %v5344 = vrot.slane %v3132, 7
        %v5345 = vsel %vm1513, %v5340, %v5344
        %v5346 = vrot.slane %v3134, 7
        %v5347 = vsel %vm1513, %v5342, %v5346
        %v5348 = vrot.slane %v3138, 7
        %v5349 = vsel %vm1513, %v5344, %v5348
        %v5350 = vrot.slane %v3140, 7
        %v5351 = vsel %vm1513, %v5346, %v5350
        %v5352 = vrot.slane %v3142, 7
        %v5353 = vsel %vm1513, %v5348, %v5352
        %v5354 = vrot.slane %v3144, 7
        %v5355 = vsel %vm1513, %v5350, %v5354
        %v5356 = vrot.slane %v3148, 7
        %v5357 = vsel %vm1513, %v5352, %v5356
        %v5358 = vrot.slane %v3150, 7
        %v5359 = vsel %vm1513, %v5354, %v5358
        %v5360 = vrot.slane %v3152, 7
        %v5361 = vsel %vm1513, %v5356, %v5360
        %v5362 = vrot.slane %v3154, 7
        %v5363 = vsel %vm1513, %v5358, %v5362
        %v5364 = vrot.slane %v3158, 7
        %v5365 = vsel %vm1513, %v5360, %v5364
        %v5366 = vrot.slane %v3160, 7
        %v5367 = vsel %vm1513, %v5362, %v5366
        %v5368 = vrot.slane %v3162, 7
        %v5369 = vsel %vm1513, %v5364, %v5368
        %v5370 = vrot.slane %v3164, 7
        %v5371 = vsel %vm1513, %v5366, %v5370
        %v5372 = vrot.slane %v3168, 7
        %v5373 = vsel %vm1513, %v5368, %v5372
        %v5374 = vrot.slane %v3170, 7
        %v5375 = vsel %vm1513, %v5370, %v5374
        %v5376 = vrot.slane %v3172, 7
        %v5377 = vsel %vm1513, %v5372, %v5376
        %v5378 = vrot.slane %v3174, 7
        %v5379 = vsel %vm1513, %v5374, %v5378
        %v5380 = vrot.slane %v3178, 7
        %v5381 = vsel %vm1513, %v5376, %v5380
        %v5382 = vrot.slane %v3180, 7
        %v5383 = vsel %vm1513, %v5378, %v5382
        %v5384 = vrot.slane %v3182, 7
        %v5385 = vsel %vm1513, %v5380, %v5384
        %v5386 = vrot.slane %v3184, 7
        %v5387 = vsel %vm1513, %v5382, %v5386
        %v5388 = vrot.slane %v3188, 7
        %v5389 = vsel %vm1513, %v5384, %v5388
        %v5390 = vrot.slane %v3190, 7
        %v5391 = vsel %vm1513, %v5386, %v5390
        %v5392 = vrot.slane %v3192, 7
        %v5393 = vsel %vm1513, %v5388, %v5392
        %v5394 = vrot.slane %v3194, 7
        %v5395 = vsel %vm1513, %v5390, %v5394
        %v5396 = vrot.slane %v3198, 7
        %v5397 = vsel %vm1513, %v5392, %v5396
        %v5398 = vrot.slane %v3200, 7
        %v5399 = vsel %vm1513, %v5394, %v5398
        %v5400 = vrot.slane %v3202, 7
        %v5401 = vsel %vm1513, %v5396, %v5400
        %v5402 = vrot.slane %v3204, 7
        %v5403 = vsel %vm1513, %v5398, %v5402
        %v5404 = vrot.slane %v3208, 7
        %v5405 = vsel %vm1513, %v5400, %v5404
        %v5406 = vrot.slane %v3210, 7
        %v5407 = vsel %vm1513, %v5402, %v5406
        %v5408 = vrot.slane %v3212, 7
        %v5409 = vsel %vm1513, %v5404, %v5408
        %v5410 = vrot.slane %v3214, 7
        %v5411 = vsel %vm1513, %v5406, %v5410
        %v5412 = vrot.slane %v3218, 7
        %v5413 = vsel %vm1513, %v5408, %v5412
        %v5414 = vrot.slane %v3220, 7
        %v5415 = vsel %vm1513, %v5410, %v5414
        %v5416 = vrot.slane %v3222, 7
        %v5417 = vsel %vm1513, %v5412, %v5416
        %v5418 = vrot.slane %v3224, 7
        %v5419 = vsel %vm1513, %v5414, %v5418
        %v5420 = vrot.slane %v3228, 7
        %v5421 = vsel %vm1513, %v5416, %v5420
        %v5422 = vrot.slane %v3230, 7
        %v5423 = vsel %vm1513, %v5418, %v5422
        %v5424 = vrot.slane %v3232, 7
        %v5425 = vsel %vm1513, %v5420, %v5424
        %v5426 = vrot.slane %v3234, 7
        %v5427 = vsel %vm1513, %v5422, %v5426
        %v5428 = vrot.slane %v3238, 7
        %v5429 = vsel %vm1513, %v5424, %v5428
        %v5430 = vrot.slane %v3240, 7
        %v5431 = vsel %vm1513, %v5426, %v5430
        %v5432 = vrot.slane %v3242, 7
        %v5433 = vsel %vm1513, %v5428, %v5432
        %v5434 = vrot.slane %v3244, 7
        %v5435 = vsel %vm1513, %v5430, %v5434
        %v5436 = vrot.slane %v3248, 7
        %v5437 = vsel %vm1513, %v5432, %v5436
        %v5438 = vrot.slane %v3250, 7
        %v5439 = vsel %vm1513, %v5434, %v5438
        %v5440 = vrot.slane %v3252, 7
        %v5441 = vsel %vm1513, %v5436, %v5440
        %v5442 = vrot.slane %v3254, 7
        %v5443 = vsel %vm1513, %v5438, %v5442
        %v5520 = vadd.f32 %v2003, %v5294
        %v5521 = vadd.f32 %v2005, %v5295
        %v5522 = vadd.f32 %v2007, %v5297
        %v5523 = vadd.f32 %v2009, %v5299
        %v5524 = vadd.f32 %v2013, %v5301
        %v5525 = vadd.f32 %v2015, %v5303
        %v5526 = vadd.f32 %v2017, %v5305
        %v5527 = vadd.f32 %v2019, %v5307
        %v5528 = vadd.f32 %v2023, %v5309
        %v5529 = vadd.f32 %v2025, %v5311
        %v5530 = vadd.f32 %v2027, %v5313
        %v5531 = vadd.f32 %v2029, %v5315
        %v5532 = vadd.f32 %v2033, %v5317
        %v5533 = vadd.f32 %v2035, %v5319
        %v5534 = vadd.f32 %v2037, %v5321
        %v5535 = vadd.f32 %v2039, %v5323
        %v5536 = vadd.f32 %v2043, %v5325
        %v5537 = vadd.f32 %v2045, %v5327
        %v5538 = vadd.f32 %v2047, %v5329
        %v5539 = vadd.f32 %v2049, %v5331
        %v5540 = vadd.f32 %v2053, %v5333
        %v5541 = vadd.f32 %v2055, %v5335
        %v5542 = vadd.f32 %v2057, %v5337
        %v5543 = vadd.f32 %v2059, %v5339
        %v5544 = vadd.f32 %v2063, %v5341
        %v5545 = vadd.f32 %v2065, %v5343
        %v5546 = vadd.f32 %v2067, %v5345
        %v5547 = vadd.f32 %v2069, %v5347
        %v5548 = vadd.f32 %v2073, %v5349
        %v5549 = vadd.f32 %v2075, %v5351
        %v5550 = vadd.f32 %v2077, %v5353
        %v5551 = vadd.f32 %v2079, %v5355
        %v5552 = vadd.f32 %v2083, %v5357
        %v5553 = vadd.f32 %v2085, %v5359
        %v5554 = vadd.f32 %v2087, %v5361
        %v5555 = vadd.f32 %v2089, %v5363
        %v5556 = vadd.f32 %v2093, %v5365
        %v5557 = vadd.f32 %v2095, %v5367
        %v5558 = vadd.f32 %v2097, %v5369
        %v5559 = vadd.f32 %v2099, %v5371
        %v5560 = vadd.f32 %v2103, %v5373
        %v5561 = vadd.f32 %v2105, %v5375
        %v5562 = vadd.f32 %v2107, %v5377
        %v5563 = vadd.f32 %v2109, %v5379
        %v5564 = vadd.f32 %v2113, %v5381
        %v5565 = vadd.f32 %v2115, %v5383
        %v5566 = vadd.f32 %v2117, %v5385
        %v5567 = vadd.f32 %v2119, %v5387
        %v5568 = vadd.f32 %v2123, %v5389
        %v5569 = vadd.f32 %v2125, %v5391
        %v5570 = vadd.f32 %v2127, %v5393
        %v5571 = vadd.f32 %v2129, %v5395
        %v5572 = vadd.f32 %v2133, %v5397
        %v5573 = vadd.f32 %v2135, %v5399
        %v5574 = vadd.f32 %v2137, %v5401
        %v5575 = vadd.f32 %v2139, %v5403
        %v5576 = vadd.f32 %v2143, %v5405
        %v5577 = vadd.f32 %v2145, %v5407
        %v5578 = vadd.f32 %v2147, %v5409
        %v5579 = vadd.f32 %v2149, %v5411
        %v5580 = vadd.f32 %v2153, %v5413
        %v5581 = vadd.f32 %v2155, %v5415
        %v5582 = vadd.f32 %v2157, %v5417
        %v5583 = vadd.f32 %v2159, %v5419
        %v5584 = vadd.f32 %v2163, %v5421
        %v5585 = vadd.f32 %v2165, %v5423
        %v5586 = vadd.f32 %v2167, %v5425
        %v5587 = vadd.f32 %v2169, %v5427
        %v5588 = vadd.f32 %v2173, %v5429
        %v5589 = vadd.f32 %v2175, %v5431
        %v5590 = vadd.f32 %v2177, %v5433
        %v5591 = vadd.f32 %v2179, %v5435
        %v5592 = vadd.f32 %v2183, %v5437
        %v5593 = vadd.f32 %v2185, %v5439
        %v5594 = vadd.f32 %v2187, %v5441
        %v5595 = vadd.f32 %v2189, %v5443
        %v5596 = vadd.f32 %v5520, %v5004
        %v5597 = vadd.f32 %v5521, %v5006
        %v5598 = vadd.f32 %v5522, %v5008
        %v5599 = vadd.f32 %v5523, %v5010
        %v5600 = vadd.f32 %v5524, %v5014
        %v5601 = vadd.f32 %v5525, %v5016
        %v5602 = vadd.f32 %v5526, %v5018
        %v5603 = vadd.f32 %v5527, %v5020
        %v5604 = vadd.f32 %v5528, %v5024
        %v5605 = vadd.f32 %v5529, %v5026
        %v5606 = vadd.f32 %v5530, %v5028
        %v5607 = vadd.f32 %v5531, %v5030
        %v5608 = vadd.f32 %v5532, %v5034
        %v5609 = vadd.f32 %v5533, %v5036
        %v5610 = vadd.f32 %v5534, %v5038
        %v5611 = vadd.f32 %v5535, %v5040
        %v5612 = vadd.f32 %v5536, %v5044
        %v5613 = vadd.f32 %v5537, %v5046
        %v5614 = vadd.f32 %v5538, %v5048
        %v5615 = vadd.f32 %v5539, %v5050
        %v5616 = vadd.f32 %v5540, %v5054
        %v5617 = vadd.f32 %v5541, %v5056
        %v5618 = vadd.f32 %v5542, %v5058
        %v5619 = vadd.f32 %v5543, %v5060
        %v5620 = vadd.f32 %v5544, %v5064
        %v5621 = vadd.f32 %v5545, %v5066
        %v5622 = vadd.f32 %v5546, %v5068
        %v5623 = vadd.f32 %v5547, %v5070
        %v5624 = vadd.f32 %v5548, %v5074
        %v5625 = vadd.f32 %v5549, %v5076
        %v5626 = vadd.f32 %v5550, %v5078
        %v5627 = vadd.f32 %v5551, %v5080
        %v5628 = vadd.f32 %v5552, %v5084
        %v5629 = vadd.f32 %v5553, %v5086
        %v5630 = vadd.f32 %v5554, %v5088
        %v5631 = vadd.f32 %v5555, %v5090
        %v5632 = vadd.f32 %v5556, %v5094
        %v5633 = vadd.f32 %v5557, %v5096
        %v5634 = vadd.f32 %v5558, %v5098
        %v5635 = vadd.f32 %v5559, %v5100
        %v5636 = vadd.f32 %v5560, %v5104
        %v5637 = vadd.f32 %v5561, %v5106
        %v5638 = vadd.f32 %v5562, %v5108
        %v5639 = vadd.f32 %v5563, %v5110
        %v5640 = vadd.f32 %v5564, %v5114
        %v5641 = vadd.f32 %v5565, %v5116
        %v5642 = vadd.f32 %v5566, %v5118
        %v5643 = vadd.f32 %v5567, %v5120
        %v5644 = vadd.f32 %v5568, %v5124
        %v5645 = vadd.f32 %v5569, %v5126
        %v5646 = vadd.f32 %v5570, %v5128
        %v5647 = vadd.f32 %v5571, %v5130
        %v5648 = vadd.f32 %v5572, %v5134
        %v5649 = vadd.f32 %v5573, %v5136
        %v5650 = vadd.f32 %v5574, %v5138
        %v5651 = vadd.f32 %v5575, %v5140
        %v5652 = vadd.f32 %v5576, %v5144
        %v5653 = vadd.f32 %v5577, %v5146
        %v5654 = vadd.f32 %v5578, %v5148
        %v5655 = vadd.f32 %v5579, %v5150
        %v5656 = vadd.f32 %v5580, %v5154
        %v5657 = vadd.f32 %v5581, %v5156
        %v5658 = vadd.f32 %v5582, %v5158
        %v5659 = vadd.f32 %v5583, %v5160
        %v5660 = vadd.f32 %v5584, %v5164
        %v5661 = vadd.f32 %v5585, %v5166
        %v5662 = vadd.f32 %v5586, %v5168
        %v5663 = vadd.f32 %v5587, %v5170
        %v5664 = vadd.f32 %v5588, %v5174
        %v5665 = vadd.f32 %v5589, %v5176
        %v5666 = vadd.f32 %v5590, %v5178
        %v5667 = vadd.f32 %v5591, %v5180
        %v5668 = vadd.f32 %v5592, %v5184
        %v5669 = vadd.f32 %v5593, %v5186
        %v5670 = vadd.f32 %v5594, %v5188
        %v5671 = vadd.f32 %v5595, %v5190
        %5672 = vst [vmem:[#allocation2] sm:$0xfe] %v5596
        %5673 = vst [vmem:[#allocation2 + $0x8] sm:$0xfe] %v5597
        %5674 = vst [vmem:[#allocation2 + $0x10] sm:$0xff] %v5598
        %5675 = vst [vmem:[#allocation2 + $0x18] sm:$0xff] %v5599
        %5676 = vst [vmem:[#allocation2 + $0x20] sm:$0xff] %v5600
        %5677 = vst [vmem:[#allocation2 + $0x28] sm:$0xff] %v5601
        %5678 = vst [vmem:[#allocation2 + $0x30] sm:$0xff] %v5602
        %5679 = vst [vmem:[#allocation2 + $0x38] sm:$0xff] %v5603
        %5680 = vst [vmem:[#allocation2 + $0x40] sm:$0xff] %v5604
        %5681 = vst [vmem:[#allocation2 + $0x48] sm:$0xff] %v5605
        %5682 = vst [vmem:[#allocation2 + $0x50] sm:$0xff] %v5606
        %5683 = vst [vmem:[#allocation2 + $0x58] sm:$0xff] %v5607
        %5684 = vst [vmem:[#allocation2 + $0x60] sm:$0xff] %v5608
        %5685 = vst [vmem:[#allocation2 + $0x68] sm:$0xff] %v5609
        %5686 = vst [vmem:[#allocation2 + $0x70] sm:$0xff] %v5610
        %5687 = vst [vmem:[#allocation2 + $0x78] sm:$0xff] %v5611
        %5688 = vst [vmem:[#allocation2 + $0x80] sm:$0xff] %v5612
        %5689 = vst [vmem:[#allocation2 + $0x88] sm:$0xff] %v5613
        %5690 = vst [vmem:[#allocation2 + $0x90] sm:$0xff] %v5614
        %5691 = vst [vmem:[#allocation2 + $0x98] sm:$0xff] %v5615
        %5692 = vst [vmem:[#allocation2 + $0xa0] sm:$0xff] %v5616
        %5693 = vst [vmem:[#allocation2 + $0xa8] sm:$0xff] %v5617
        %5694 = vst [vmem:[#allocation2 + $0xb0] sm:$0xff] %v5618
        %5695 = vst [vmem:[#allocation2 + $0xb8] sm:$0xff] %v5619
        %5696 = vst [vmem:[#allocation2 + $0xc0] sm:$0xff] %v5620
        %5697 = vst [vmem:[#allocation2 + $0xc8] sm:$0xff] %v5621
        %5698 = vst [vmem:[#allocation2 + $0xd0] sm:$0xff] %v5622
        %5699 = vst [vmem:[#allocation2 + $0xd8] sm:$0xff] %v5623
        %5700 = vst [vmem:[#allocation2 + $0xe0] sm:$0xff] %v5624
        %5701 = vst [vmem:[#allocation2 + $0xe8] sm:$0xff] %v5625
        %5702 = vst [vmem:[#allocation2 + $0xf0] sm:$0xff] %v5626
        %5703 = vst [vmem:[#allocation2 + $0xf8] sm:$0xff] %v5627
        %5704 = vst [vmem:[#allocation2 + $0x100] sm:$0xff] %v5628
        %5705 = vst [vmem:[#allocation2 + $0x108] sm:$0xff] %v5629
        %5706 = vst [vmem:[#allocation2 + $0x110] sm:$0xff] %v5630
        %5707 = vst [vmem:[#allocation2 + $0x118] sm:$0xff] %v5631
        %5708 = vst [vmem:[#allocation2 + $0x120] sm:$0xff] %v5632
        %5709 = vst [vmem:[#allocation2 + $0x128] sm:$0xff] %v5633
        %5710 = vst [vmem:[#allocation2 + $0x130] sm:$0xff] %v5634
        %5711 = vst [vmem:[#allocation2 + $0x138] sm:$0xff] %v5635
        %5712 = vst [vmem:[#allocation2 + $0x140] sm:$0xff] %v5636
        %5713 = vst [vmem:[#allocation2 + $0x148] sm:$0xff] %v5637
        %5714 = vst [vmem:[#allocation2 + $0x150] sm:$0xff] %v5638
        %5715 = vst [vmem:[#allocation2 + $0x158] sm:$0xff] %v5639
        %5716 = vst [vmem:[#allocation2 + $0x160] sm:$0xff] %v5640
        %5717 = vst [vmem:[#allocation2 + $0x168] sm:$0xff] %v5641
        %5718 = vst [vmem:[#allocation2 + $0x170] sm:$0xff] %v5642
        %5719 = vst [vmem:[#allocation2 + $0x178] sm:$0xff] %v5643
        %5720 = vst [vmem:[#allocation2 + $0x180] sm:$0xff] %v5644
        %5721 = vst [vmem:[#allocation2 + $0x188] sm:$0xff] %v5645
        %5722 = vst [vmem:[#allocation2 + $0x190] sm:$0xff] %v5646
        %5723 = vst [vmem:[#allocation2 + $0x198] sm:$0xff] %v5647
        %5724 = vst [vmem:[#allocation2 + $0x1a0] sm:$0xff] %v5648
        %5725 = vst [vmem:[#allocation2 + $0x1a8] sm:$0xff] %v5649
        %5726 = vst [vmem:[#allocation2 + $0x1b0] sm:$0xff] %v5650
        %5727 = vst [vmem:[#allocation2 + $0x1b8] sm:$0xff] %v5651
        %5728 = vst [vmem:[#allocation2 + $0x1c0] sm:$0xff] %v5652
        %5729 = vst [vmem:[#allocation2 + $0x1c8] sm:$0xff] %v5653
        %5730 = vst [vmem:[#allocation2 + $0x1d0] sm:$0xff] %v5654
        %5731 = vst [vmem:[#allocation2 + $0x1d8] sm:$0xff] %v5655
        %5732 = vst [vmem:[#allocation2 + $0x1e0] sm:$0xff] %v5656
        %5733 = vst [vmem:[#allocation2 + $0x1e8] sm:$0xff] %v5657
        %5734 = vst [vmem:[#allocation2 + $0x1f0] sm:$0xff] %v5658
        %5735 = vst [vmem:[#allocation2 + $0x1f8] sm:$0xff] %v5659
        %5736 = vst [vmem:[#allocation2 + $0x200] sm:$0xff] %v5660
        %5737 = vst [vmem:[#allocation2 + $0x208] sm:$0xff] %v5661
        %5738 = vst [vmem:[#allocation2 + $0x210] sm:$0xff] %v5662
        %5739 = vst [vmem:[#allocation2 + $0x218] sm:$0xff] %v5663
        %5740 = vst [vmem:[#allocation2 + $0x220] sm:$0xff] %v5664
        %5741 = vst [vmem:[#allocation2 + $0x228] sm:$0xff] %v5665
        %5742 = vst [vmem:[#allocation2 + $0x230] sm:$0xff] %v5666
        %5743 = vst [vmem:[#allocation2 + $0x238] sm:$0xff] %v5667
        %5744 = vst [vmem:[#allocation2 + $0x240] sm:$0xff] %v5668
        %5745 = vst [vmem:[#allocation2 + $0x248] sm:$0xff] %v5669
        %5746 = vst [vmem:[#allocation2 + $0x250] sm:$0x7] %v5670
        %5747 = vst [vmem:[#allocation2 + $0x258] sm:$0x7] %v5671
        %v5750 = vadd.f32 %v2187, %v5440
        %v5751 = vadd.f32 %v2189, %v5442
        %v5754 = vcombine.low %v5750, %v5751
        %v5756 = vunpack.c.l.s4 1966171168
        %v5757 = vunpack.c.0.s8 %v5756
        %v5758 = vlaneseq
        %v5759 = vshrl.u32 %v5758, 7
        %v5760 = vsub.s32 %v5757, %v5759
        %v5761 = vrot.slane %v5754, %v5760
        %v5762 = vcombine.high %v5761, %v5761
        %v5764 = vunpack.c.l.s4 1966171168
        %v5765 = vunpack.c.0.s8 %v5764
        %v5766 = vlaneseq
        %v5767 = vshrl.u32 %v5766, 7
        %v5768 = vsub.s32 %v5765, %v5767
        %v5769 = vrot.slane %v5762, %v5768
        %v5770 = vcombine.high %v5769, %v5769
        %s5772 = scalar_lea.vmem [#allocation2], 595
        %5773 = vst.msk [vmem:[%s5772] ss:$8 sm:$0x3] %vm5215, %v5770
        %5774 = vst.msk [vmem:[%s5772] ss:$8 sm:$0x0] %vm5215, %v5770
        %v5775 = vld [vmem:[%s2] sm:$0xf]
        %v5776 = vld [vmem:[#allocation2] sm:$0xff]
        %v5777 = vld [vmem:[#allocation2 + $0x8] sm:$0xff]
        %v5778 = vld [vmem:[#allocation2 + $0x10] sm:$0xff]
        %v5779 = vld [vmem:[#allocation2 + $0x18] sm:$0xff]
        %v5780 = vld [vmem:[#allocation2 + $0x20] sm:$0xff]
        %v5781 = vld [vmem:[#allocation2 + $0x28] sm:$0xff]
        %v5782 = vld [vmem:[#allocation2 + $0x30] sm:$0xff]
        %v5783 = vld [vmem:[#allocation2 + $0x38] sm:$0xff]
        %v5784 = vld [vmem:[#allocation2 + $0x40] sm:$0xff]
        %v5785 = vld [vmem:[#allocation2 + $0x48] sm:$0xff]
        %v5786 = vld [vmem:[#allocation2 + $0x50] sm:$0xff]
        %v5787 = vld [vmem:[#allocation2 + $0x58] sm:$0xff]
        %v5788 = vld [vmem:[#allocation2 + $0x60] sm:$0xff]
        %v5789 = vld [vmem:[#allocation2 + $0x68] sm:$0xff]
        %v5790 = vld [vmem:[#allocation2 + $0x70] sm:$0xff]
        %v5791 = vld [vmem:[#allocation2 + $0x78] sm:$0xff]
        %v5792 = vld [vmem:[#allocation2 + $0x80] sm:$0xff]
        %v5793 = vld [vmem:[#allocation2 + $0x88] sm:$0xff]
        %v5794 = vld [vmem:[#allocation2 + $0x90] sm:$0xff]
        %v5795 = vld [vmem:[#allocation2 + $0x98] sm:$0xff]
        %v5796 = vld [vmem:[#allocation2 + $0xa0] sm:$0xff]
        %v5797 = vld [vmem:[#allocation2 + $0xa8] sm:$0xff]
        %v5798 = vld [vmem:[#allocation2 + $0xb0] sm:$0xff]
        %v5799 = vld [vmem:[#allocation2 + $0xb8] sm:$0xff]
        %v5800 = vld [vmem:[#allocation2 + $0xc0] sm:$0xff]
        %v5801 = vld [vmem:[#allocation2 + $0xc8] sm:$0xff]
        %v5802 = vld [vmem:[#allocation2 + $0xd0] sm:$0xff]
        %v5803 = vld [vmem:[#allocation2 + $0xd8] sm:$0xff]
        %v5804 = vld [vmem:[#allocation2 + $0xe0] sm:$0xff]
        %v5805 = vld [vmem:[#allocation2 + $0xe8] sm:$0xff]
        %v5806 = vld [vmem:[#allocation2 + $0xf0] sm:$0xff]
        %v5807 = vld [vmem:[#allocation2 + $0xf8] sm:$0xff]
        %v5808 = vld [vmem:[#allocation2 + $0x100] sm:$0xff]
        %v5809 = vld [vmem:[#allocation2 + $0x108] sm:$0xff]
        %v5810 = vld [vmem:[#allocation2 + $0x110] sm:$0xff]
        %v5811 = vld [vmem:[#allocation2 + $0x118] sm:$0xff]
        %v5812 = vld [vmem:[#allocation2 + $0x120] sm:$0xff]
        %v5813 = vld [vmem:[#allocation2 + $0x128] sm:$0xff]
        %v5814 = vld [vmem:[#allocation2 + $0x130] sm:$0xff]
        %v5815 = vld [vmem:[#allocation2 + $0x138] sm:$0xff]
        %v5816 = vld [vmem:[#allocation2 + $0x140] sm:$0xff]
        %v5817 = vld [vmem:[#allocation2 + $0x148] sm:$0xff]
        %v5818 = vld [vmem:[#allocation2 + $0x150] sm:$0xff]
        %v5819 = vld [vmem:[#allocation2 + $0x158] sm:$0xff]
        %v5820 = vld [vmem:[#allocation2 + $0x160] sm:$0xff]
        %v5821 = vld [vmem:[#allocation2 + $0x168] sm:$0xff]
        %v5822 = vld [vmem:[#allocation2 + $0x170] sm:$0xff]
        %v5823 = vld [vmem:[#allocation2 + $0x178] sm:$0xff]
        %v5824 = vld [vmem:[#allocation2 + $0x180] sm:$0xff]
        %v5825 = vld [vmem:[#allocation2 + $0x188] sm:$0xff]
        %v5826 = vld [vmem:[#allocation2 + $0x190] sm:$0xff]
        %v5827 = vld [vmem:[#allocation2 + $0x198] sm:$0xff]
        %v5828 = vld [vmem:[#allocation2 + $0x1a0] sm:$0xff]
        %v5829 = vld [vmem:[#allocation2 + $0x1a8] sm:$0xff]
        %v5830 = vld [vmem:[#allocation2 + $0x1b0] sm:$0xff]
        %v5831 = vld [vmem:[#allocation2 + $0x1b8] sm:$0xff]
        %v5832 = vld [vmem:[#allocation2 + $0x1c0] sm:$0xff]
        %v5833 = vld [vmem:[#allocation2 + $0x1c8] sm:$0xff]
        %v5834 = vld [vmem:[#allocation2 + $0x1d0] sm:$0xff]
        %v5835 = vld [vmem:[#allocation2 + $0x1d8] sm:$0xff]
        %v5836 = vld [vmem:[#allocation2 + $0x1e0] sm:$0xff]
        %v5837 = vld [vmem:[#allocation2 + $0x1e8] sm:$0xff]
        %v5838 = vld [vmem:[#allocation2 + $0x1f0] sm:$0xff]
        %v5839 = vld [vmem:[#allocation2 + $0x1f8] sm:$0xff]
        %v5840 = vld [vmem:[#allocation2 + $0x200] sm:$0xff]
        %v5841 = vld [vmem:[#allocation2 + $0x208] sm:$0xff]
        %v5842 = vld [vmem:[#allocation2 + $0x210] sm:$0xff]
        %v5843 = vld [vmem:[#allocation2 + $0x218] sm:$0xff]
        %v5844 = vld [vmem:[#allocation2 + $0x220] sm:$0xff]
        %v5845 = vld [vmem:[#allocation2 + $0x228] sm:$0xff]
        %v5846 = vld [vmem:[#allocation2 + $0x230] sm:$0xff]
        %v5847 = vld [vmem:[#allocation2 + $0x238] sm:$0xff]
        %v5848 = vld [vmem:[#allocation2 + $0x240] sm:$0xff]
        %v5849 = vld [vmem:[#allocation2 + $0x248] sm:$0xff]
        %v5850 = vld [vmem:[#allocation2 + $0x250] sm:$0xf]
        %v5851 = vld [vmem:[#allocation2 + $0x258] sm:$0xf]
        %v5853 = vlaneseq
        %v5854 = vshrl.u32 %v5853, 7
        %v5855 = vsub.s32 0, %v5854
        %v5856 = vrot.slane %v5775, %v5855
        %v5857 = vlaneseq
        %v5858 = vshrl.u32 %v5857, 7
        %v5859 = vsub.s32 2, %v5858
        %v5860 = vrot.slane %v5775, %v5859
        %v5863 = vlaneseq
        %v5864 = vshrl.u32 %v5863, 7
        %v5865 = vsub.s32 0, %v5864
        %v5866 = vrot.slane %v5856, %v5865
        %v5867 = vlaneseq
        %v5868 = vshrl.u32 %v5867, 7
        %v5869 = vsub.s32 0, %v5868
        %v5870 = vrot.slane %v5860, %v5869
        %v5871 = vmul.f32 %v5776, %v5866
        %v5872 = vmul.f32 %v5777, %v5870
        %v5873 = vmul.f32 %v5778, %v5866
        %v5874 = vmul.f32 %v5779, %v5870
        %v5875 = vmul.f32 %v5780, %v5866
        %v5876 = vmul.f32 %v5781, %v5870
        %v5877 = vmul.f32 %v5782, %v5866
        %v5878 = vmul.f32 %v5783, %v5870
        %v5879 = vmul.f32 %v5784, %v5866
        %v5880 = vmul.f32 %v5785, %v5870
        %v5881 = vmul.f32 %v5786, %v5866
        %v5882 = vmul.f32 %v5787, %v5870
        %v5883 = vmul.f32 %v5788, %v5866
        %v5884 = vmul.f32 %v5789, %v5870
        %v5885 = vmul.f32 %v5790, %v5866
        %v5886 = vmul.f32 %v5791, %v5870
        %v5887 = vmul.f32 %v5792, %v5866
        %v5888 = vmul.f32 %v5793, %v5870
        %v5889 = vmul.f32 %v5794, %v5866
        %v5890 = vmul.f32 %v5795, %v5870
        %v5891 = vmul.f32 %v5796, %v5866
        %v5892 = vmul.f32 %v5797, %v5870
        %v5893 = vmul.f32 %v5798, %v5866
        %v5894 = vmul.f32 %v5799, %v5870
        %v5895 = vmul.f32 %v5800, %v5866
        %v5896 = vmul.f32 %v5801, %v5870
        %v5897 = vmul.f32 %v5802, %v5866
        %v5898 = vmul.f32 %v5803, %v5870
        %v5899 = vmul.f32 %v5804, %v5866
        %v5900 = vmul.f32 %v5805, %v5870
        %v5901 = vmul.f32 %v5806, %v5866
        %v5902 = vmul.f32 %v5807, %v5870
        %v5903 = vmul.f32 %v5808, %v5866
        %v5904 = vmul.f32 %v5809, %v5870
        %v5905 = vmul.f32 %v5810, %v5866
        %v5906 = vmul.f32 %v5811, %v5870
        %v5907 = vmul.f32 %v5812, %v5866
        %v5908 = vmul.f32 %v5813, %v5870
        %v5909 = vmul.f32 %v5814, %v5866
        %v5910 = vmul.f32 %v5815, %v5870
        %v5911 = vmul.f32 %v5816, %v5866
        %v5912 = vmul.f32 %v5817, %v5870
        %v5913 = vmul.f32 %v5818, %v5866
        %v5914 = vmul.f32 %v5819, %v5870
        %v5915 = vmul.f32 %v5820, %v5866
        %v5916 = vmul.f32 %v5821, %v5870
        %v5917 = vmul.f32 %v5822, %v5866
        %v5918 = vmul.f32 %v5823, %v5870
        %v5919 = vmul.f32 %v5824, %v5866
        %v5920 = vmul.f32 %v5825, %v5870
        %v5921 = vmul.f32 %v5826, %v5866
        %v5922 = vmul.f32 %v5827, %v5870
        %v5923 = vmul.f32 %v5828, %v5866
        %v5924 = vmul.f32 %v5829, %v5870
        %v5925 = vmul.f32 %v5830, %v5866
        %v5926 = vmul.f32 %v5831, %v5870
        %v5927 = vmul.f32 %v5832, %v5866
        %v5928 = vmul.f32 %v5833, %v5870
        %v5929 = vmul.f32 %v5834, %v5866
        %v5930 = vmul.f32 %v5835, %v5870
        %v5931 = vmul.f32 %v5836, %v5866
        %v5932 = vmul.f32 %v5837, %v5870
        %v5933 = vmul.f32 %v5838, %v5866
        %v5934 = vmul.f32 %v5839, %v5870
        %v5935 = vmul.f32 %v5840, %v5866
        %v5936 = vmul.f32 %v5841, %v5870
        %v5937 = vmul.f32 %v5842, %v5866
        %v5938 = vmul.f32 %v5843, %v5870
        %v5939 = vmul.f32 %v5844, %v5866
        %v5940 = vmul.f32 %v5845, %v5870
        %v5941 = vmul.f32 %v5846, %v5866
        %v5942 = vmul.f32 %v5847, %v5870
        %v5943 = vmul.f32 %v5848, %v5866
        %v5944 = vmul.f32 %v5849, %v5870
        %v5945 = vmul.f32 %v5850, %v5866
        %v5946 = vmul.f32 %v5851, %v5870
        %v5947 = vlaneseq
        %v5948 = vshrl.u32 %v5947, 7
        %v5949 = vsub.s32 1, %v5948
        %v5950 = vrot.slane %v5775, %v5949
        %v5951 = vlaneseq
        %v5952 = vshrl.u32 %v5951, 7
        %v5953 = vsub.s32 3, %v5952
        %v5954 = vrot.slane %v5775, %v5953
        %v5957 = vlaneseq
        %v5958 = vshrl.u32 %v5957, 7
        %v5959 = vsub.s32 1, %v5958
        %v5960 = vrot.slane %v5950, %v5959
        %v5961 = vlaneseq
        %v5962 = vshrl.u32 %v5961, 7
        %v5963 = vsub.s32 1, %v5962
        %v5964 = vrot.slane %v5954, %v5963
        %v5965 = vadd.f32 %v5871, %v5960
        %v5966 = vadd.f32 %v5872, %v5964
        %v5967 = vadd.f32 %v5873, %v5960
        %v5968 = vadd.f32 %v5874, %v5964
        %v5969 = vadd.f32 %v5875, %v5960
        %v5970 = vadd.f32 %v5876, %v5964
        %v5971 = vadd.f32 %v5877, %v5960
        %v5972 = vadd.f32 %v5878, %v5964
        %v5973 = vadd.f32 %v5879, %v5960
        %v5974 = vadd.f32 %v5880, %v5964
        %v5975 = vadd.f32 %v5881, %v5960
        %v5976 = vadd.f32 %v5882, %v5964
        %v5977 = vadd.f32 %v5883, %v5960
        %v5978 = vadd.f32 %v5884, %v5964
        %v5979 = vadd.f32 %v5885, %v5960
        %v5980 = vadd.f32 %v5886, %v5964
        %v5981 = vadd.f32 %v5887, %v5960
        %v5982 = vadd.f32 %v5888, %v5964
        %v5983 = vadd.f32 %v5889, %v5960
        %v5984 = vadd.f32 %v5890, %v5964
        %v5985 = vadd.f32 %v5891, %v5960
        %v5986 = vadd.f32 %v5892, %v5964
        %v5987 = vadd.f32 %v5893, %v5960
        %v5988 = vadd.f32 %v5894, %v5964
        %v5989 = vadd.f32 %v5895, %v5960
        %v5990 = vadd.f32 %v5896, %v5964
        %v5991 = vadd.f32 %v5897, %v5960
        %v5992 = vadd.f32 %v5898, %v5964
        %v5993 = vadd.f32 %v5899, %v5960
        %v5994 = vadd.f32 %v5900, %v5964
        %v5995 = vadd.f32 %v5901, %v5960
        %v5996 = vadd.f32 %v5902, %v5964
        %v5997 = vadd.f32 %v5903, %v5960
        %v5998 = vadd.f32 %v5904, %v5964
        %v5999 = vadd.f32 %v5905, %v5960
        %v6000 = vadd.f32 %v5906, %v5964
        %v6001 = vadd.f32 %v5907, %v5960
        %v6002 = vadd.f32 %v5908, %v5964
        %v6003 = vadd.f32 %v5909, %v5960
        %v6004 = vadd.f32 %v5910, %v5964
        %v6005 = vadd.f32 %v5911, %v5960
        %v6006 = vadd.f32 %v5912, %v5964
        %v6007 = vadd.f32 %v5913, %v5960
        %v6008 = vadd.f32 %v5914, %v5964
        %v6009 = vadd.f32 %v5915, %v5960
        %v6010 = vadd.f32 %v5916, %v5964
        %v6011 = vadd.f32 %v5917, %v5960
        %v6012 = vadd.f32 %v5918, %v5964
        %v6013 = vadd.f32 %v5919, %v5960
        %v6014 = vadd.f32 %v5920, %v5964
        %v6015 = vadd.f32 %v5921, %v5960
        %v6016 = vadd.f32 %v5922, %v5964
        %v6017 = vadd.f32 %v5923, %v5960
        %v6018 = vadd.f32 %v5924, %v5964
        %v6019 = vadd.f32 %v5925, %v5960
        %v6020 = vadd.f32 %v5926, %v5964
        %v6021 = vadd.f32 %v5927, %v5960
        %v6022 = vadd.f32 %v5928, %v5964
        %v6023 = vadd.f32 %v5929, %v5960
        %v6024 = vadd.f32 %v5930, %v5964
        %v6025 = vadd.f32 %v5931, %v5960
        %v6026 = vadd.f32 %v5932, %v5964
        %v6027 = vadd.f32 %v5933, %v5960
        %v6028 = vadd.f32 %v5934, %v5964
        %v6029 = vadd.f32 %v5935, %v5960
        %v6030 = vadd.f32 %v5936, %v5964
        %v6031 = vadd.f32 %v5937, %v5960
        %v6032 = vadd.f32 %v5938, %v5964
        %v6033 = vadd.f32 %v5939, %v5960
        %v6034 = vadd.f32 %v5940, %v5964
        %v6035 = vadd.f32 %v5941, %v5960
        %v6036 = vadd.f32 %v5942, %v5964
        %v6037 = vadd.f32 %v5943, %v5960
        %v6038 = vadd.f32 %v5944, %v5964
        %v6039 = vadd.f32 %v5945, %v5960
        %v6040 = vadd.f32 %v5946, %v5964
        %v6041 = vmax.f32 %v5965, 0.0
        %v6042 = vmax.f32 %v5966, 0.0
        %v6043 = vmax.f32 %v5967, 0.0
        %v6044 = vmax.f32 %v5968, 0.0
        %v6045 = vmax.f32 %v5969, 0.0
        %v6046 = vmax.f32 %v5970, 0.0
        %v6047 = vmax.f32 %v5971, 0.0
        %v6048 = vmax.f32 %v5972, 0.0
        %v6049 = vmax.f32 %v5973, 0.0
        %v6050 = vmax.f32 %v5974, 0.0
        %v6051 = vmax.f32 %v5975, 0.0
        %v6052 = vmax.f32 %v5976, 0.0
        %v6053 = vmax.f32 %v5977, 0.0
        %v6054 = vmax.f32 %v5978, 0.0
        %v6055 = vmax.f32 %v5979, 0.0
        %v6056 = vmax.f32 %v5980, 0.0
        %v6057 = vmax.f32 %v5981, 0.0
        %v6058 = vmax.f32 %v5982, 0.0
        %v6059 = vmax.f32 %v5983, 0.0
        %v6060 = vmax.f32 %v5984, 0.0
        %v6061 = vmax.f32 %v5985, 0.0
        %v6062 = vmax.f32 %v5986, 0.0
        %v6063 = vmax.f32 %v5987, 0.0
        %v6064 = vmax.f32 %v5988, 0.0
        %v6065 = vmax.f32 %v5989, 0.0
        %v6066 = vmax.f32 %v5990, 0.0
        %v6067 = vmax.f32 %v5991, 0.0
        %v6068 = vmax.f32 %v5992, 0.0
        %v6069 = vmax.f32 %v5993, 0.0
        %v6070 = vmax.f32 %v5994, 0.0
        %v6071 = vmax.f32 %v5995, 0.0
        %v6072 = vmax.f32 %v5996, 0.0
        %v6073 = vmax.f32 %v5997, 0.0
        %v6074 = vmax.f32 %v5998, 0.0
        %v6075 = vmax.f32 %v5999, 0.0
        %v6076 = vmax.f32 %v6000, 0.0
        %v6077 = vmax.f32 %v6001, 0.0
        %v6078 = vmax.f32 %v6002, 0.0
        %v6079 = vmax.f32 %v6003, 0.0
        %v6080 = vmax.f32 %v6004, 0.0
        %v6081 = vmax.f32 %v6005, 0.0
        %v6082 = vmax.f32 %v6006, 0.0
        %v6083 = vmax.f32 %v6007, 0.0
        %v6084 = vmax.f32 %v6008, 0.0
        %v6085 = vmax.f32 %v6009, 0.0
        %v6086 = vmax.f32 %v6010, 0.0
        %v6087 = vmax.f32 %v6011, 0.0
        %v6088 = vmax.f32 %v6012, 0.0
        %v6089 = vmax.f32 %v6013, 0.0
        %v6090 = vmax.f32 %v6014, 0.0
        %v6091 = vmax.f32 %v6015, 0.0
        %v6092 = vmax.f32 %v6016, 0.0
        %v6093 = vmax.f32 %v6017, 0.0
        %v6094 = vmax.f32 %v6018, 0.0
        %v6095 = vmax.f32 %v6019, 0.0
        %v6096 = vmax.f32 %v6020, 0.0
        %v6097 = vmax.f32 %v6021, 0.0
        %v6098 = vmax.f32 %v6022, 0.0
        %v6099 = vmax.f32 %v6023, 0.0
        %v6100 = vmax.f32 %v6024, 0.0
        %v6101 = vmax.f32 %v6025, 0.0
        %v6102 = vmax.f32 %v6026, 0.0
        %v6103 = vmax.f32 %v6027, 0.0
        %v6104 = vmax.f32 %v6028, 0.0
        %v6105 = vmax.f32 %v6029, 0.0
        %v6106 = vmax.f32 %v6030, 0.0
        %v6107 = vmax.f32 %v6031, 0.0
        %v6108 = vmax.f32 %v6032, 0.0
        %v6109 = vmax.f32 %v6033, 0.0
        %v6110 = vmax.f32 %v6034, 0.0
        %v6111 = vmax.f32 %v6035, 0.0
        %v6112 = vmax.f32 %v6036, 0.0
        %v6113 = vmax.f32 %v6037, 0.0
        %v6114 = vmax.f32 %v6038, 0.0
        %v6115 = vmax.f32 %v6039, 0.0
        %v6116 = vmax.f32 %v6040, 0.0
        %v6117 = vpack.c.bf16 %v6043, %v6041
        %v6118 = vpack.c.bf16 %v6044, %v6042
        %v6119 = vpack.c.bf16 %v6047, %v6045
        %v6120 = vpack.c.bf16 %v6048, %v6046
        %v6121 = vpack.c.bf16 %v6051, %v6049
        %v6122 = vpack.c.bf16 %v6052, %v6050
        %v6123 = vpack.c.bf16 %v6055, %v6053
        %v6124 = vpack.c.bf16 %v6056, %v6054
        %v6125 = vpack.c.bf16 %v6059, %v6057
        %v6126 = vpack.c.bf16 %v6060, %v6058
        %v6127 = vpack.c.bf16 %v6063, %v6061
        %v6128 = vpack.c.bf16 %v6064, %v6062
        %v6129 = vpack.c.bf16 %v6067, %v6065
        %v6130 = vpack.c.bf16 %v6068, %v6066
        %v6131 = vpack.c.bf16 %v6071, %v6069
        %v6132 = vpack.c.bf16 %v6072, %v6070
        %v6133 = vpack.c.bf16 %v6075, %v6073
        %v6134 = vpack.c.bf16 %v6076, %v6074
        %v6135 = vpack.c.bf16 %v6079, %v6077
        %v6136 = vpack.c.bf16 %v6080, %v6078
        %v6137 = vpack.c.bf16 %v6083, %v6081
        %v6138 = vpack.c.bf16 %v6084, %v6082
        %v6139 = vpack.c.bf16 %v6087, %v6085
        %v6140 = vpack.c.bf16 %v6088, %v6086
        %v6141 = vpack.c.bf16 %v6091, %v6089
        %v6142 = vpack.c.bf16 %v6092, %v6090
        %v6143 = vpack.c.bf16 %v6095, %v6093
        %v6144 = vpack.c.bf16 %v6096, %v6094
        %v6145 = vpack.c.bf16 %v6099, %v6097
        %v6146 = vpack.c.bf16 %v6100, %v6098
        %v6147 = vpack.c.bf16 %v6103, %v6101
        %v6148 = vpack.c.bf16 %v6104, %v6102
        %v6149 = vpack.c.bf16 %v6107, %v6105
        %v6150 = vpack.c.bf16 %v6108, %v6106
        %v6151 = vpack.c.bf16 %v6111, %v6109
        %v6152 = vpack.c.bf16 %v6112, %v6110
        %v6153 = vpack.c.bf16 %v6115, %v6113
        %v6154 = vpack.c.bf16 %v6116, %v6114
        %s6155 = scalar_lea.vmem %s3, 128
        %v6156 = vld [vmem:[%s6155] sm:$0xf]
        %v6157 = vld [vmem:[%s6155 + $0x4] sm:$0xf]
        %v6158 = vld [vmem:[%s6155 + $0x8] sm:$0xf]
        %v6159 = vld [vmem:[%s6155 + $0xc] sm:$0xf]
        %v6160 = vld [vmem:[%s6155 + $0x10] sm:$0xf]
        %v6161 = vld [vmem:[%s6155 + $0x14] sm:$0xf]
        %v6162 = vld [vmem:[%s6155 + $0x18] sm:$0xf]
        %v6163 = vld [vmem:[%s6155 + $0x1c] sm:$0xf]
        %v6164 = vld [vmem:[%s6155 + $0x20] sm:$0xf]
        %v6165 = vld [vmem:[%s6155 + $0x24] sm:$0xf]
        %v6166 = vld [vmem:[%s6155 + $0x28] sm:$0xf]
        %v6167 = vld [vmem:[%s6155 + $0x2c] sm:$0xf]
        %v6168 = vld [vmem:[%s6155 + $0x30] sm:$0xf]
        %v6169 = vld [vmem:[%s6155 + $0x34] sm:$0xf]
        %v6170 = vld [vmem:[%s6155 + $0x38] sm:$0xf]
        %v6171 = vld [vmem:[%s6155 + $0x3c] sm:$0xf]
        %v6172 = vld [vmem:[%s6155 + $0x40] sm:$0xf]
        %v6173 = vld [vmem:[%s6155 + $0x44] sm:$0xf]
        %v6174 = vld [vmem:[%s6155 + $0x48] sm:$0xf]
        %v6175 = vld [vmem:[%s6155 + $0x4c] sm:$0xf]
        %v6176 = vld [vmem:[%s6155 + $0x50] sm:$0xf]
        %v6177 = vld [vmem:[%s6155 + $0x54] sm:$0xf]
        %v6178 = vld [vmem:[%s6155 + $0x58] sm:$0xf]
        %v6179 = vld [vmem:[%s6155 + $0x5c] sm:$0xf]
        %v6180 = vld [vmem:[%s6155 + $0x60] sm:$0xf]
        %v6181 = vld [vmem:[%s6155 + $0x64] sm:$0xf]
        %v6182 = vld [vmem:[%s6155 + $0x68] sm:$0xf]
        %v6183 = vld [vmem:[%s6155 + $0x6c] sm:$0xf]
        %v6184 = vld [vmem:[%s6155 + $0x70] sm:$0xf]
        %v6185 = vld [vmem:[%s6155 + $0x74] sm:$0xf]
        %v6186 = vld [vmem:[%s6155 + $0x78] sm:$0xf]
        %v6187 = vld [vmem:[%s6155 + $0x7c] sm:$0xf]
        %v6220 = vunpack.c.l.b16 %v6156
        %v6221 = vunpack.c.l.b16 %v6157
        %v6222 = vunpack.c.l.b16 %v6158
        %v6223 = vunpack.c.l.b16 %v6159
        %v6224 = vunpack.c.l.b16 %v6160
        %v6225 = vunpack.c.l.b16 %v6161
        %v6226 = vunpack.c.l.b16 %v6162
        %v6227 = vunpack.c.l.b16 %v6163
        %v6228 = vunpack.c.l.b16 %v6164
        %v6229 = vunpack.c.l.b16 %v6165
        %v6230 = vunpack.c.l.b16 %v6166
        %v6231 = vunpack.c.l.b16 %v6167
        %v6232 = vunpack.c.l.b16 %v6168
        %v6233 = vunpack.c.l.b16 %v6169
        %v6234 = vunpack.c.l.b16 %v6170
        %v6235 = vunpack.c.l.b16 %v6171
        %v6236 = vunpack.c.l.b16 %v6172
        %v6237 = vunpack.c.l.b16 %v6173
        %v6238 = vunpack.c.l.b16 %v6174
        %v6239 = vunpack.c.l.b16 %v6175
        %v6240 = vunpack.c.l.b16 %v6176
        %v6241 = vunpack.c.l.b16 %v6177
        %v6242 = vunpack.c.l.b16 %v6178
        %v6243 = vunpack.c.l.b16 %v6179
        %v6244 = vunpack.c.l.b16 %v6180
        %v6245 = vunpack.c.l.b16 %v6181
        %v6246 = vunpack.c.l.b16 %v6182
        %v6247 = vunpack.c.l.b16 %v6183
        %v6248 = vunpack.c.l.b16 %v6184
        %v6249 = vunpack.c.l.b16 %v6185
        %v6250 = vunpack.c.l.b16 %v6186
        %v6251 = vunpack.c.l.b16 %v6187
        %v6252 = vpack.c.b16 %v6221, %v6220
        %v6253 = vpack.c.b16 %v6223, %v6222
        %v6254 = vpack.c.b16 %v6225, %v6224
        %v6255 = vpack.c.b16 %v6227, %v6226
        %v6256 = vpack.c.b16 %v6229, %v6228
        %v6257 = vpack.c.b16 %v6231, %v6230
        %v6258 = vpack.c.b16 %v6233, %v6232
        %v6259 = vpack.c.b16 %v6235, %v6234
        %v6260 = vpack.c.b16 %v6237, %v6236
        %v6261 = vpack.c.b16 %v6239, %v6238
        %v6262 = vpack.c.b16 %v6241, %v6240
        %v6263 = vpack.c.b16 %v6243, %v6242
        %v6264 = vpack.c.b16 %v6245, %v6244
        %v6265 = vpack.c.b16 %v6247, %v6246
        %v6266 = vpack.c.b16 %v6249, %v6248
        %v6267 = vpack.c.b16 %v6251, %v6250
        %6284 = vmatprep.subr.bf16.mxu0 0
        %6285 = vmatpush1.bf16.msra.mxu0 %v6259
        %6286 = vmatprep.subr.bf16.mxu0 0
        %6287 = vmatpush1.bf16.msra.mxu0 %v6258
        %6288 = vmatprep.subr.bf16.mxu0 0
        %6289 = vmatpush1.bf16.msra.mxu0 %v6257
        %6290 = vmatprep.subr.bf16.mxu0 0
        %6291 = vmatpush1.bf16.msra.mxu0 %v6256
        %6292 = vmatprep.subr.bf16.mxu0 0
        %6293 = vmatpush1.bf16.msra.mxu0 %v6255
        %6294 = vmatprep.subr.bf16.mxu0 0
        %6295 = vmatpush1.bf16.msra.mxu0 %v6254
        %6296 = vmatprep.subr.bf16.mxu0 0
        %6297 = vmatpush1.bf16.msra.mxu0 %v6253
        %6298 = vmatprep.subr.bf16.mxu0 0
        %6299 = vmatpush1.bf16.msra.mxu0 %v6252
        %6300 = vmatprep.subr.bf16.mxu0 0
        %6301 = vmatpush2.bf16.msra.mxu0 %v6267
        %6302 = vmatprep.subr.bf16.mxu0 0
        %6303 = vmatpush2.bf16.msra.mxu0 %v6266
        %6304 = vmatprep.subr.bf16.mxu0 0
        %6305 = vmatpush2.bf16.msra.mxu0 %v6265
        %6306 = vmatprep.subr.bf16.mxu0 0
        %6307 = vmatpush2.bf16.msra.mxu0 %v6264
        %6308 = vmatprep.subr.bf16.mxu0 0
        %6309 = vmatpush2.bf16.msra.mxu0 %v6263
        %6310 = vmatprep.subr.bf16.mxu0 0
        %6311 = vmatpush2.bf16.msra.mxu0 %v6262
        %6312 = vmatprep.subr.bf16.mxu0 0
        %6313 = vmatpush2.bf16.msra.mxu0 %v6261
        %6314 = vmatprep.subr.bf16.mxu0 0
        %6315 = vmatpush2.bf16.msra.mxu0 %v6260
        %6316 = vmatprep.mubr.bf16.mxu0 %v6118
        %6317 = vmatmul.mubr.bf16.gmra.mxu0 %v6117
        %v6318 = vpop.f32.mrf.mxu0
        %v6319 = vadd.f32 0.0, %v6318
        %v6320 = vpop.f32.mrf.mxu0
        %v6321 = vpop.f32.mrf.mxu0
        %v6322 = vadd.f32 0.0, %v6321
        %v6323 = vpop.f32.mrf.mxu0
        %6324 = vmatprep.mubr.bf16.mxu0 %v6120
        %6325 = vmatmul.mubr.bf16.gmra.mxu0 %v6119
        %v6326 = vpop.f32.mrf.mxu0
        %v6327 = vadd.f32 0.0, %v6326
        %v6328 = vpop.f32.mrf.mxu0
        %v6329 = vpop.f32.mrf.mxu0
        %v6330 = vadd.f32 0.0, %v6329
        %v6331 = vpop.f32.mrf.mxu0
        %6332 = vmatprep.mubr.bf16.mxu0 %v6122
        %6333 = vmatmul.mubr.bf16.gmra.mxu0 %v6121
        %v6334 = vpop.f32.mrf.mxu0
        %v6335 = vadd.f32 0.0, %v6334
        %v6336 = vpop.f32.mrf.mxu0
        %v6337 = vpop.f32.mrf.mxu0
        %v6338 = vadd.f32 0.0, %v6337
        %v6339 = vpop.f32.mrf.mxu0
        %6340 = vmatprep.mubr.bf16.mxu0 %v6124
        %6341 = vmatmul.mubr.bf16.gmra.mxu0 %v6123
        %v6342 = vpop.f32.mrf.mxu0
        %v6343 = vadd.f32 0.0, %v6342
        %v6344 = vpop.f32.mrf.mxu0
        %v6345 = vpop.f32.mrf.mxu0
        %v6346 = vadd.f32 0.0, %v6345
        %v6347 = vpop.f32.mrf.mxu0
        %6348 = vmatprep.mubr.bf16.mxu0 %v6126
        %6349 = vmatmul.mubr.bf16.gmra.mxu0 %v6125
        %v6350 = vpop.f32.mrf.mxu0
        %v6351 = vadd.f32 0.0, %v6350
        %v6352 = vpop.f32.mrf.mxu0
        %v6353 = vpop.f32.mrf.mxu0
        %v6354 = vadd.f32 0.0, %v6353
        %v6355 = vpop.f32.mrf.mxu0
        %6356 = vmatprep.mubr.bf16.mxu0 %v6128
        %6357 = vmatmul.mubr.bf16.gmra.mxu0 %v6127
        %v6358 = vpop.f32.mrf.mxu0
        %v6359 = vadd.f32 0.0, %v6358
        %v6360 = vpop.f32.mrf.mxu0
        %v6361 = vpop.f32.mrf.mxu0
        %v6362 = vadd.f32 0.0, %v6361
        %v6363 = vpop.f32.mrf.mxu0
        %6364 = vmatprep.mubr.bf16.mxu0 %v6130
        %6365 = vmatmul.mubr.bf16.gmra.mxu0 %v6129
        %v6366 = vpop.f32.mrf.mxu0
        %v6367 = vadd.f32 0.0, %v6366
        %v6368 = vpop.f32.mrf.mxu0
        %v6369 = vpop.f32.mrf.mxu0
        %v6370 = vadd.f32 0.0, %v6369
        %v6371 = vpop.f32.mrf.mxu0
        %6372 = vmatprep.mubr.bf16.mxu0 %v6132
        %6373 = vmatmul.mubr.bf16.gmra.mxu0 %v6131
        %v6374 = vpop.f32.mrf.mxu0
        %v6375 = vadd.f32 0.0, %v6374
        %v6376 = vpop.f32.mrf.mxu0
        %v6377 = vpop.f32.mrf.mxu0
        %v6378 = vadd.f32 0.0, %v6377
        %v6379 = vpop.f32.mrf.mxu0
        %6380 = vmatprep.mubr.bf16.mxu0 %v6134
        %6381 = vmatmul.mubr.bf16.gmra.mxu0 %v6133
        %v6382 = vpop.f32.mrf.mxu0
        %v6383 = vadd.f32 0.0, %v6382
        %v6384 = vpop.f32.mrf.mxu0
        %v6385 = vpop.f32.mrf.mxu0
        %v6386 = vadd.f32 0.0, %v6385
        %v6387 = vpop.f32.mrf.mxu0
        %6388 = vmatprep.mubr.bf16.mxu0 %v6136
        %6389 = vmatmul.mubr.bf16.gmra.mxu0 %v6135
        %v6390 = vpop.f32.mrf.mxu0
        %v6391 = vadd.f32 0.0, %v6390
        %v6392 = vpop.f32.mrf.mxu0
        %v6393 = vpop.f32.mrf.mxu0
        %v6394 = vadd.f32 0.0, %v6393
        %v6395 = vpop.f32.mrf.mxu0
        %6396 = vmatprep.mubr.bf16.mxu0 %v6138
        %6397 = vmatmul.mubr.bf16.gmra.mxu0 %v6137
        %v6398 = vpop.f32.mrf.mxu0
        %v6399 = vadd.f32 0.0, %v6398
        %v6400 = vpop.f32.mrf.mxu0
        %v6401 = vpop.f32.mrf.mxu0
        %v6402 = vadd.f32 0.0, %v6401
        %v6403 = vpop.f32.mrf.mxu0
        %6404 = vmatprep.mubr.bf16.mxu0 %v6140
        %6405 = vmatmul.mubr.bf16.gmra.mxu0 %v6139
        %v6406 = vpop.f32.mrf.mxu0
        %v6407 = vadd.f32 0.0, %v6406
        %v6408 = vpop.f32.mrf.mxu0
        %v6409 = vpop.f32.mrf.mxu0
        %v6410 = vadd.f32 0.0, %v6409
        %v6411 = vpop.f32.mrf.mxu0
        %6412 = vmatprep.mubr.bf16.mxu0 %v6142
        %6413 = vmatmul.mubr.bf16.gmra.mxu0 %v6141
        %v6414 = vpop.f32.mrf.mxu0
        %v6415 = vadd.f32 0.0, %v6414
        %v6416 = vpop.f32.mrf.mxu0
        %v6417 = vpop.f32.mrf.mxu0
        %v6418 = vadd.f32 0.0, %v6417
        %v6419 = vpop.f32.mrf.mxu0
        %6420 = vmatprep.mubr.bf16.mxu0 %v6144
        %6421 = vmatmul.mubr.bf16.gmra.mxu0 %v6143
        %v6422 = vpop.f32.mrf.mxu0
        %v6423 = vadd.f32 0.0, %v6422
        %v6424 = vpop.f32.mrf.mxu0
        %v6425 = vpop.f32.mrf.mxu0
        %v6426 = vadd.f32 0.0, %v6425
        %v6427 = vpop.f32.mrf.mxu0
        %6428 = vmatprep.mubr.bf16.mxu0 %v6146
        %6429 = vmatmul.mubr.bf16.gmra.mxu0 %v6145
        %v6430 = vpop.f32.mrf.mxu0
        %v6431 = vadd.f32 0.0, %v6430
        %v6432 = vpop.f32.mrf.mxu0
        %v6433 = vpop.f32.mrf.mxu0
        %v6434 = vadd.f32 0.0, %v6433
        %v6435 = vpop.f32.mrf.mxu0
        %6436 = vmatprep.mubr.bf16.mxu0 %v6148
        %6437 = vmatmul.mubr.bf16.gmra.mxu0 %v6147
        %v6438 = vpop.f32.mrf.mxu0
        %v6439 = vadd.f32 0.0, %v6438
        %v6440 = vpop.f32.mrf.mxu0
        %v6441 = vpop.f32.mrf.mxu0
        %v6442 = vadd.f32 0.0, %v6441
        %v6443 = vpop.f32.mrf.mxu0
        %6444 = vmatprep.mubr.bf16.mxu0 %v6150
        %6445 = vmatmul.mubr.bf16.gmra.mxu0 %v6149
        %v6446 = vpop.f32.mrf.mxu0
        %v6447 = vadd.f32 0.0, %v6446
        %v6448 = vpop.f32.mrf.mxu0
        %v6449 = vpop.f32.mrf.mxu0
        %v6450 = vadd.f32 0.0, %v6449
        %v6451 = vpop.f32.mrf.mxu0
        %6452 = vmatprep.mubr.bf16.mxu0 %v6152
        %6453 = vmatmul.mubr.bf16.gmra.mxu0 %v6151
        %v6454 = vpop.f32.mrf.mxu0
        %v6455 = vadd.f32 0.0, %v6454
        %v6456 = vpop.f32.mrf.mxu0
        %v6457 = vpop.f32.mrf.mxu0
        %v6458 = vadd.f32 0.0, %v6457
        %v6459 = vpop.f32.mrf.mxu0
        %6460 = vmatprep.mubr.bf16.mxu0 %v6154
        %6461 = vmatmul.mubr.bf16.gmra.mxu0 %v6153
        %v6462 = vpop.f32.mrf.mxu0
        %v6463 = vadd.f32 0.0, %v6462
        %v6464 = vpop.f32.mrf.mxu0
        %v6465 = vpop.f32.mrf.mxu0
        %v6466 = vadd.f32 0.0, %v6465
        %v6467 = vpop.f32.mrf.mxu0
        %6468 = vdwg.mxu0
        %v6469 = vld [vmem:[%s3] sm:$0xf]
        %v6470 = vld [vmem:[%s3 + $0x4] sm:$0xf]
        %v6471 = vld [vmem:[%s3 + $0x8] sm:$0xf]
        %v6472 = vld [vmem:[%s3 + $0xc] sm:$0xf]
        %v6473 = vld [vmem:[%s3 + $0x10] sm:$0xf]
        %v6474 = vld [vmem:[%s3 + $0x14] sm:$0xf]
        %v6475 = vld [vmem:[%s3 + $0x18] sm:$0xf]
        %v6476 = vld [vmem:[%s3 + $0x1c] sm:$0xf]
        %v6477 = vld [vmem:[%s3 + $0x20] sm:$0xf]
        %v6478 = vld [vmem:[%s3 + $0x24] sm:$0xf]
        %v6479 = vld [vmem:[%s3 + $0x28] sm:$0xf]
        %v6480 = vld [vmem:[%s3 + $0x2c] sm:$0xf]
        %v6481 = vld [vmem:[%s3 + $0x30] sm:$0xf]
        %v6482 = vld [vmem:[%s3 + $0x34] sm:$0xf]
        %v6483 = vld [vmem:[%s3 + $0x38] sm:$0xf]
        %v6484 = vld [vmem:[%s3 + $0x3c] sm:$0xf]
        %v6485 = vld [vmem:[%s3 + $0x40] sm:$0xf]
        %v6486 = vld [vmem:[%s3 + $0x44] sm:$0xf]
        %v6487 = vld [vmem:[%s3 + $0x48] sm:$0xf]
        %v6488 = vld [vmem:[%s3 + $0x4c] sm:$0xf]
        %v6489 = vld [vmem:[%s3 + $0x50] sm:$0xf]
        %v6490 = vld [vmem:[%s3 + $0x54] sm:$0xf]
        %v6491 = vld [vmem:[%s3 + $0x58] sm:$0xf]
        %v6492 = vld [vmem:[%s3 + $0x5c] sm:$0xf]
        %v6493 = vld [vmem:[%s3 + $0x60] sm:$0xf]
        %v6494 = vld [vmem:[%s3 + $0x64] sm:$0xf]
        %v6495 = vld [vmem:[%s3 + $0x68] sm:$0xf]
        %v6496 = vld [vmem:[%s3 + $0x6c] sm:$0xf]
        %v6497 = vld [vmem:[%s3 + $0x70] sm:$0xf]
        %v6498 = vld [vmem:[%s3 + $0x74] sm:$0xf]
        %v6499 = vld [vmem:[%s3 + $0x78] sm:$0xf]
        %v6500 = vld [vmem:[%s3 + $0x7c] sm:$0xf]
        %v6533 = vunpack.c.l.b16 %v6469
        %v6534 = vunpack.c.l.b16 %v6470
        %v6535 = vunpack.c.l.b16 %v6471
        %v6536 = vunpack.c.l.b16 %v6472
        %v6537 = vunpack.c.l.b16 %v6473
        %v6538 = vunpack.c.l.b16 %v6474
        %v6539 = vunpack.c.l.b16 %v6475
        %v6540 = vunpack.c.l.b16 %v6476
        %v6541 = vunpack.c.l.b16 %v6477
        %v6542 = vunpack.c.l.b16 %v6478
        %v6543 = vunpack.c.l.b16 %v6479
        %v6544 = vunpack.c.l.b16 %v6480
        %v6545 = vunpack.c.l.b16 %v6481
        %v6546 = vunpack.c.l.b16 %v6482
        %v6547 = vunpack.c.l.b16 %v6483
        %v6548 = vunpack.c.l.b16 %v6484
        %v6549 = vunpack.c.l.b16 %v6485
        %v6550 = vunpack.c.l.b16 %v6486
        %v6551 = vunpack.c.l.b16 %v6487
        %v6552 = vunpack.c.l.b16 %v6488
        %v6553 = vunpack.c.l.b16 %v6489
        %v6554 = vunpack.c.l.b16 %v6490
        %v6555 = vunpack.c.l.b16 %v6491
        %v6556 = vunpack.c.l.b16 %v6492
        %v6557 = vunpack.c.l.b16 %v6493
        %v6558 = vunpack.c.l.b16 %v6494
        %v6559 = vunpack.c.l.b16 %v6495
        %v6560 = vunpack.c.l.b16 %v6496
        %v6561 = vunpack.c.l.b16 %v6497
        %v6562 = vunpack.c.l.b16 %v6498
        %v6563 = vunpack.c.l.b16 %v6499
        %v6564 = vunpack.c.l.b16 %v6500
        %v6565 = vpack.c.b16 %v6534, %v6533
        %v6566 = vpack.c.b16 %v6536, %v6535
        %v6567 = vpack.c.b16 %v6538, %v6537
        %v6568 = vpack.c.b16 %v6540, %v6539
        %v6569 = vpack.c.b16 %v6542, %v6541
        %v6570 = vpack.c.b16 %v6544, %v6543
        %v6571 = vpack.c.b16 %v6546, %v6545
        %v6572 = vpack.c.b16 %v6548, %v6547
        %v6573 = vpack.c.b16 %v6550, %v6549
        %v6574 = vpack.c.b16 %v6552, %v6551
        %v6575 = vpack.c.b16 %v6554, %v6553
        %v6576 = vpack.c.b16 %v6556, %v6555
        %v6577 = vpack.c.b16 %v6558, %v6557
        %v6578 = vpack.c.b16 %v6560, %v6559
        %v6579 = vpack.c.b16 %v6562, %v6561
        %v6580 = vpack.c.b16 %v6564, %v6563
        %6597 = vmatprep.subr.bf16.mxu0 0
        %6598 = vmatpush1.bf16.msra.mxu0 %v6572
        %6599 = vmatprep.subr.bf16.mxu0 0
        %6600 = vmatpush1.bf16.msra.mxu0 %v6571
        %6601 = vmatprep.subr.bf16.mxu0 0
        %6602 = vmatpush1.bf16.msra.mxu0 %v6570
        %6603 = vmatprep.subr.bf16.mxu0 0
        %6604 = vmatpush1.bf16.msra.mxu0 %v6569
        %6605 = vmatprep.subr.bf16.mxu0 0
        %6606 = vmatpush1.bf16.msra.mxu0 %v6568
        %6607 = vmatprep.subr.bf16.mxu0 0
        %6608 = vmatpush1.bf16.msra.mxu0 %v6567
        %6609 = vmatprep.subr.bf16.mxu0 0
        %6610 = vmatpush1.bf16.msra.mxu0 %v6566
        %6611 = vmatprep.subr.bf16.mxu0 0
        %6612 = vmatpush1.bf16.msra.mxu0 %v6565
        %6613 = vmatprep.subr.bf16.mxu0 0
        %6614 = vmatpush2.bf16.msra.mxu0 %v6580
        %6615 = vmatprep.subr.bf16.mxu0 0
        %6616 = vmatpush2.bf16.msra.mxu0 %v6579
        %6617 = vmatprep.subr.bf16.mxu0 0
        %6618 = vmatpush2.bf16.msra.mxu0 %v6578
        %6619 = vmatprep.subr.bf16.mxu0 0
        %6620 = vmatpush2.bf16.msra.mxu0 %v6577
        %6621 = vmatprep.subr.bf16.mxu0 0
        %6622 = vmatpush2.bf16.msra.mxu0 %v6576
        %6623 = vmatprep.subr.bf16.mxu0 0
        %6624 = vmatpush2.bf16.msra.mxu0 %v6575
        %6625 = vmatprep.subr.bf16.mxu0 0
        %6626 = vmatpush2.bf16.msra.mxu0 %v6574
        %6627 = vmatprep.subr.bf16.mxu0 0
        %6628 = vmatpush2.bf16.msra.mxu0 %v6573
        %6629 = vmatprep.mubr.bf16.mxu0 %v6118
        %6630 = vmatmul.mubr.bf16.gmra.mxu0 %v6117
        %v6631 = vpop.f32.mrf.mxu0
        %v6632 = vadd.f32 0.0, %v6631
        %v6633 = vpop.f32.mrf.mxu0
        %v6634 = vpop.f32.mrf.mxu0
        %v6635 = vadd.f32 0.0, %v6634
        %v6636 = vpop.f32.mrf.mxu0
        %6637 = vmatprep.mubr.bf16.mxu0 %v6120
        %6638 = vmatmul.mubr.bf16.gmra.mxu0 %v6119
        %v6639 = vpop.f32.mrf.mxu0
        %v6640 = vadd.f32 0.0, %v6639
        %v6641 = vpop.f32.mrf.mxu0
        %v6642 = vpop.f32.mrf.mxu0
        %v6643 = vadd.f32 0.0, %v6642
        %v6644 = vpop.f32.mrf.mxu0
        %6645 = vmatprep.mubr.bf16.mxu0 %v6122
        %6646 = vmatmul.mubr.bf16.gmra.mxu0 %v6121
        %v6647 = vpop.f32.mrf.mxu0
        %v6648 = vadd.f32 0.0, %v6647
        %v6649 = vpop.f32.mrf.mxu0
        %v6650 = vpop.f32.mrf.mxu0
        %v6651 = vadd.f32 0.0, %v6650
        %v6652 = vpop.f32.mrf.mxu0
        %6653 = vmatprep.mubr.bf16.mxu0 %v6124
        %6654 = vmatmul.mubr.bf16.gmra.mxu0 %v6123
        %v6655 = vpop.f32.mrf.mxu0
        %v6656 = vadd.f32 0.0, %v6655
        %v6657 = vpop.f32.mrf.mxu0
        %v6658 = vpop.f32.mrf.mxu0
        %v6659 = vadd.f32 0.0, %v6658
        %v6660 = vpop.f32.mrf.mxu0
        %6661 = vmatprep.mubr.bf16.mxu0 %v6126
        %6662 = vmatmul.mubr.bf16.gmra.mxu0 %v6125
        %v6663 = vpop.f32.mrf.mxu0
        %v6664 = vadd.f32 0.0, %v6663
        %v6665 = vpop.f32.mrf.mxu0
        %v6666 = vpop.f32.mrf.mxu0
        %v6667 = vadd.f32 0.0, %v6666
        %v6668 = vpop.f32.mrf.mxu0
        %6669 = vmatprep.mubr.bf16.mxu0 %v6128
        %6670 = vmatmul.mubr.bf16.gmra.mxu0 %v6127
        %v6671 = vpop.f32.mrf.mxu0
        %v6672 = vadd.f32 0.0, %v6671
        %v6673 = vpop.f32.mrf.mxu0
        %v6674 = vpop.f32.mrf.mxu0
        %v6675 = vadd.f32 0.0, %v6674
        %v6676 = vpop.f32.mrf.mxu0
        %6677 = vmatprep.mubr.bf16.mxu0 %v6130
        %6678 = vmatmul.mubr.bf16.gmra.mxu0 %v6129
        %v6679 = vpop.f32.mrf.mxu0
        %v6680 = vadd.f32 0.0, %v6679
        %v6681 = vpop.f32.mrf.mxu0
        %v6682 = vpop.f32.mrf.mxu0
        %v6683 = vadd.f32 0.0, %v6682
        %v6684 = vpop.f32.mrf.mxu0
        %6685 = vmatprep.mubr.bf16.mxu0 %v6132
        %6686 = vmatmul.mubr.bf16.gmra.mxu0 %v6131
        %v6687 = vpop.f32.mrf.mxu0
        %v6688 = vadd.f32 0.0, %v6687
        %v6689 = vpop.f32.mrf.mxu0
        %v6690 = vpop.f32.mrf.mxu0
        %v6691 = vadd.f32 0.0, %v6690
        %v6692 = vpop.f32.mrf.mxu0
        %6693 = vmatprep.mubr.bf16.mxu0 %v6134
        %6694 = vmatmul.mubr.bf16.gmra.mxu0 %v6133
        %v6695 = vpop.f32.mrf.mxu0
        %v6696 = vadd.f32 0.0, %v6695
        %v6697 = vpop.f32.mrf.mxu0
        %v6698 = vpop.f32.mrf.mxu0
        %v6699 = vadd.f32 0.0, %v6698
        %v6700 = vpop.f32.mrf.mxu0
        %6701 = vmatprep.mubr.bf16.mxu0 %v6136
        %6702 = vmatmul.mubr.bf16.gmra.mxu0 %v6135
        %v6703 = vpop.f32.mrf.mxu0
        %v6704 = vadd.f32 0.0, %v6703
        %v6705 = vpop.f32.mrf.mxu0
        %v6706 = vpop.f32.mrf.mxu0
        %v6707 = vadd.f32 0.0, %v6706
        %v6708 = vpop.f32.mrf.mxu0
        %6709 = vmatprep.mubr.bf16.mxu0 %v6138
        %6710 = vmatmul.mubr.bf16.gmra.mxu0 %v6137
        %v6711 = vpop.f32.mrf.mxu0
        %v6712 = vadd.f32 0.0, %v6711
        %v6713 = vpop.f32.mrf.mxu0
        %v6714 = vpop.f32.mrf.mxu0
        %v6715 = vadd.f32 0.0, %v6714
        %v6716 = vpop.f32.mrf.mxu0
        %6717 = vmatprep.mubr.bf16.mxu0 %v6140
        %6718 = vmatmul.mubr.bf16.gmra.mxu0 %v6139
        %v6719 = vpop.f32.mrf.mxu0
        %v6720 = vadd.f32 0.0, %v6719
        %v6721 = vpop.f32.mrf.mxu0
        %v6722 = vpop.f32.mrf.mxu0
        %v6723 = vadd.f32 0.0, %v6722
        %v6724 = vpop.f32.mrf.mxu0
        %6725 = vmatprep.mubr.bf16.mxu0 %v6142
        %6726 = vmatmul.mubr.bf16.gmra.mxu0 %v6141
        %v6727 = vpop.f32.mrf.mxu0
        %v6728 = vadd.f32 0.0, %v6727
        %v6729 = vpop.f32.mrf.mxu0
        %v6730 = vpop.f32.mrf.mxu0
        %v6731 = vadd.f32 0.0, %v6730
        %v6732 = vpop.f32.mrf.mxu0
        %6733 = vmatprep.mubr.bf16.mxu0 %v6144
        %6734 = vmatmul.mubr.bf16.gmra.mxu0 %v6143
        %v6735 = vpop.f32.mrf.mxu0
        %v6736 = vadd.f32 0.0, %v6735
        %v6737 = vpop.f32.mrf.mxu0
        %v6738 = vpop.f32.mrf.mxu0
        %v6739 = vadd.f32 0.0, %v6738
        %v6740 = vpop.f32.mrf.mxu0
        %6741 = vmatprep.mubr.bf16.mxu0 %v6146
        %6742 = vmatmul.mubr.bf16.gmra.mxu0 %v6145
        %v6743 = vpop.f32.mrf.mxu0
        %v6744 = vadd.f32 0.0, %v6743
        %v6745 = vpop.f32.mrf.mxu0
        %v6746 = vpop.f32.mrf.mxu0
        %v6747 = vadd.f32 0.0, %v6746
        %v6748 = vpop.f32.mrf.mxu0
        %6749 = vmatprep.mubr.bf16.mxu0 %v6148
        %6750 = vmatmul.mubr.bf16.gmra.mxu0 %v6147
        %v6751 = vpop.f32.mrf.mxu0
        %v6752 = vadd.f32 0.0, %v6751
        %v6753 = vpop.f32.mrf.mxu0
        %v6754 = vpop.f32.mrf.mxu0
        %v6755 = vadd.f32 0.0, %v6754
        %v6756 = vpop.f32.mrf.mxu0
        %6757 = vmatprep.mubr.bf16.mxu0 %v6150
        %6758 = vmatmul.mubr.bf16.gmra.mxu0 %v6149
        %v6759 = vpop.f32.mrf.mxu0
        %v6760 = vadd.f32 0.0, %v6759
        %v6761 = vpop.f32.mrf.mxu0
        %v6762 = vpop.f32.mrf.mxu0
        %v6763 = vadd.f32 0.0, %v6762
        %v6764 = vpop.f32.mrf.mxu0
        %6765 = vmatprep.mubr.bf16.mxu0 %v6152
        %6766 = vmatmul.mubr.bf16.gmra.mxu0 %v6151
        %v6767 = vpop.f32.mrf.mxu0
        %v6768 = vadd.f32 0.0, %v6767
        %v6769 = vpop.f32.mrf.mxu0
        %v6770 = vpop.f32.mrf.mxu0
        %v6771 = vadd.f32 0.0, %v6770
        %v6772 = vpop.f32.mrf.mxu0
        %6773 = vmatprep.mubr.bf16.mxu0 %v6154
        %6774 = vmatmul.mubr.bf16.gmra.mxu0 %v6153
        %v6775 = vpop.f32.mrf.mxu0
        %v6776 = vadd.f32 0.0, %v6775
        %v6777 = vpop.f32.mrf.mxu0
        %v6778 = vpop.f32.mrf.mxu0
        %v6779 = vadd.f32 0.0, %v6778
        %v6780 = vpop.f32.mrf.mxu0
        %6781 = vdwg.mxu0
        %s6782 = scalar_lea.vmem %s3, 256
        %v6783 = vld [vmem:[%s6782] sm:$0xf]
        %v6784 = vld [vmem:[%s6782 + $0x4] sm:$0xf]
        %v6785 = vld [vmem:[%s6782 + $0x8] sm:$0xf]
        %v6786 = vld [vmem:[%s6782 + $0xc] sm:$0xf]
        %v6787 = vld [vmem:[%s6782 + $0x10] sm:$0xf]
        %v6788 = vld [vmem:[%s6782 + $0x14] sm:$0xf]
        %v6789 = vld [vmem:[%s6782 + $0x18] sm:$0xf]
        %v6790 = vld [vmem:[%s6782 + $0x1c] sm:$0xf]
        %v6791 = vld [vmem:[%s6782 + $0x20] sm:$0xf]
        %v6792 = vld [vmem:[%s6782 + $0x24] sm:$0xf]
        %v6793 = vld [vmem:[%s6782 + $0x28] sm:$0xf]
        %v6794 = vld [vmem:[%s6782 + $0x2c] sm:$0xf]
        %v6795 = vld [vmem:[%s6782 + $0x30] sm:$0xf]
        %v6796 = vld [vmem:[%s6782 + $0x34] sm:$0xf]
        %v6797 = vld [vmem:[%s6782 + $0x38] sm:$0xf]
        %v6798 = vld [vmem:[%s6782 + $0x3c] sm:$0xf]
        %v6799 = vld [vmem:[%s6782 + $0x40] sm:$0xf]
        %v6800 = vld [vmem:[%s6782 + $0x44] sm:$0xf]
        %v6801 = vld [vmem:[%s6782 + $0x48] sm:$0xf]
        %v6802 = vld [vmem:[%s6782 + $0x4c] sm:$0xf]
        %v6803 = vld [vmem:[%s6782 + $0x50] sm:$0xf]
        %v6804 = vld [vmem:[%s6782 + $0x54] sm:$0xf]
        %v6805 = vld [vmem:[%s6782 + $0x58] sm:$0xf]
        %v6806 = vld [vmem:[%s6782 + $0x5c] sm:$0xf]
        %v6807 = vld [vmem:[%s6782 + $0x60] sm:$0xf]
        %v6808 = vld [vmem:[%s6782 + $0x64] sm:$0xf]
        %v6809 = vld [vmem:[%s6782 + $0x68] sm:$0xf]
        %v6810 = vld [vmem:[%s6782 + $0x6c] sm:$0xf]
        %v6811 = vld [vmem:[%s6782 + $0x70] sm:$0xf]
        %v6812 = vld [vmem:[%s6782 + $0x74] sm:$0xf]
        %v6813 = vld [vmem:[%s6782 + $0x78] sm:$0xf]
        %v6814 = vld [vmem:[%s6782 + $0x7c] sm:$0xf]
        %vm6853 = vcmask 1046528
        %v6854 = vrot.slane %v6117, 1
        %v6855 = vrot.slane %v6119, 1
        %v6856 = vsel %vm6853, %v6854, %v6855
        %v6857 = vrot.slane %v6118, 1
        %v6858 = vrot.slane %v6120, 1
        %v6859 = vsel %vm6853, %v6857, %v6858
        %v6860 = vrot.slane %v6121, 1
        %v6861 = vsel %vm6853, %v6855, %v6860
        %v6862 = vrot.slane %v6122, 1
        %v6863 = vsel %vm6853, %v6858, %v6862
        %v6864 = vrot.slane %v6123, 1
        %v6865 = vsel %vm6853, %v6860, %v6864
        %v6866 = vrot.slane %v6124, 1
        %v6867 = vsel %vm6853, %v6862, %v6866
        %v6868 = vrot.slane %v6125, 1
        %v6869 = vsel %vm6853, %v6864, %v6868
        %v6870 = vrot.slane %v6126, 1
        %v6871 = vsel %vm6853, %v6866, %v6870
        %v6872 = vrot.slane %v6127, 1
        %v6873 = vsel %vm6853, %v6868, %v6872
        %v6874 = vrot.slane %v6128, 1
        %v6875 = vsel %vm6853, %v6870, %v6874
        %v6876 = vrot.slane %v6129, 1
        %v6877 = vsel %vm6853, %v6872, %v6876
        %v6878 = vrot.slane %v6130, 1
        %v6879 = vsel %vm6853, %v6874, %v6878
        %v6880 = vrot.slane %v6131, 1
        %v6881 = vsel %vm6853, %v6876, %v6880
        %v6882 = vrot.slane %v6132, 1
        %v6883 = vsel %vm6853, %v6878, %v6882
        %v6884 = vrot.slane %v6133, 1
        %v6885 = vsel %vm6853, %v6880, %v6884
        %v6886 = vrot.slane %v6134, 1
        %v6887 = vsel %vm6853, %v6882, %v6886
        %v6888 = vrot.slane %v6135, 1
        %v6889 = vsel %vm6853, %v6884, %v6888
        %v6890 = vrot.slane %v6136, 1
        %v6891 = vsel %vm6853, %v6886, %v6890
        %v6892 = vrot.slane %v6137, 1
        %v6893 = vsel %vm6853, %v6888, %v6892
        %v6894 = vrot.slane %v6138, 1
        %v6895 = vsel %vm6853, %v6890, %v6894
        %v6896 = vrot.slane %v6139, 1
        %v6897 = vsel %vm6853, %v6892, %v6896
        %v6898 = vrot.slane %v6140, 1
        %v6899 = vsel %vm6853, %v6894, %v6898
        %v6900 = vrot.slane %v6141, 1
        %v6901 = vsel %vm6853, %v6896, %v6900
        %v6902 = vrot.slane %v6142, 1
        %v6903 = vsel %vm6853, %v6898, %v6902
        %v6904 = vrot.slane %v6143, 1
        %v6905 = vsel %vm6853, %v6900, %v6904
        %v6906 = vrot.slane %v6144, 1
        %v6907 = vsel %vm6853, %v6902, %v6906
        %v6908 = vrot.slane %v6145, 1
        %v6909 = vsel %vm6853, %v6904, %v6908
        %v6910 = vrot.slane %v6146, 1
        %v6911 = vsel %vm6853, %v6906, %v6910
        %v6912 = vrot.slane %v6147, 1
        %v6913 = vsel %vm6853, %v6908, %v6912
        %v6914 = vrot.slane %v6148, 1
        %v6915 = vsel %vm6853, %v6910, %v6914
        %v6916 = vrot.slane %v6149, 1
        %v6917 = vsel %vm6853, %v6912, %v6916
        %v6918 = vrot.slane %v6150, 1
        %v6919 = vsel %vm6853, %v6914, %v6918
        %v6920 = vrot.slane %v6151, 1
        %v6921 = vsel %vm6853, %v6916, %v6920
        %v6922 = vrot.slane %v6152, 1
        %v6923 = vsel %vm6853, %v6918, %v6922
        %v6924 = vrot.slane %v6153, 1
        %v6925 = vsel %vm6853, %v6920, %v6924
        %v6926 = vrot.slane %v6154, 1
        %v6927 = vsel %vm6853, %v6922, %v6926
        %v6998 = vunpack.c.l.b16 %v6783
        %v6999 = vunpack.c.l.b16 %v6784
        %v7000 = vunpack.c.l.b16 %v6785
        %v7001 = vunpack.c.l.b16 %v6786
        %v7002 = vunpack.c.l.b16 %v6787
        %v7003 = vunpack.c.l.b16 %v6788
        %v7004 = vunpack.c.l.b16 %v6789
        %v7005 = vunpack.c.l.b16 %v6790
        %v7006 = vunpack.c.l.b16 %v6791
        %v7007 = vunpack.c.l.b16 %v6792
        %v7008 = vunpack.c.l.b16 %v6793
        %v7009 = vunpack.c.l.b16 %v6794
        %v7010 = vunpack.c.l.b16 %v6795
        %v7011 = vunpack.c.l.b16 %v6796
        %v7012 = vunpack.c.l.b16 %v6797
        %v7013 = vunpack.c.l.b16 %v6798
        %v7014 = vunpack.c.l.b16 %v6799
        %v7015 = vunpack.c.l.b16 %v6800
        %v7016 = vunpack.c.l.b16 %v6801
        %v7017 = vunpack.c.l.b16 %v6802
        %v7018 = vunpack.c.l.b16 %v6803
        %v7019 = vunpack.c.l.b16 %v6804
        %v7020 = vunpack.c.l.b16 %v6805
        %v7021 = vunpack.c.l.b16 %v6806
        %v7022 = vunpack.c.l.b16 %v6807
        %v7023 = vunpack.c.l.b16 %v6808
        %v7024 = vunpack.c.l.b16 %v6809
        %v7025 = vunpack.c.l.b16 %v6810
        %v7026 = vunpack.c.l.b16 %v6811
        %v7027 = vunpack.c.l.b16 %v6812
        %v7028 = vunpack.c.l.b16 %v6813
        %v7029 = vunpack.c.l.b16 %v6814
        %v7030 = vpack.c.b16 %v6999, %v6998
        %v7031 = vpack.c.b16 %v7001, %v7000
        %v7032 = vpack.c.b16 %v7003, %v7002
        %v7033 = vpack.c.b16 %v7005, %v7004
        %v7034 = vpack.c.b16 %v7007, %v7006
        %v7035 = vpack.c.b16 %v7009, %v7008
        %v7036 = vpack.c.b16 %v7011, %v7010
        %v7037 = vpack.c.b16 %v7013, %v7012
        %v7038 = vpack.c.b16 %v7015, %v7014
        %v7039 = vpack.c.b16 %v7017, %v7016
        %v7040 = vpack.c.b16 %v7019, %v7018
        %v7041 = vpack.c.b16 %v7021, %v7020
        %v7042 = vpack.c.b16 %v7023, %v7022
        %v7043 = vpack.c.b16 %v7025, %v7024
        %v7044 = vpack.c.b16 %v7027, %v7026
        %v7045 = vpack.c.b16 %v7029, %v7028
        %7062 = vmatprep.subr.bf16.mxu0 0
        %7063 = vmatpush1.bf16.msra.mxu0 %v7037
        %7064 = vmatprep.subr.bf16.mxu0 0
        %7065 = vmatpush1.bf16.msra.mxu0 %v7036
        %7066 = vmatprep.subr.bf16.mxu0 0
        %7067 = vmatpush1.bf16.msra.mxu0 %v7035
        %7068 = vmatprep.subr.bf16.mxu0 0
        %7069 = vmatpush1.bf16.msra.mxu0 %v7034
        %7070 = vmatprep.subr.bf16.mxu0 0
        %7071 = vmatpush1.bf16.msra.mxu0 %v7033
        %7072 = vmatprep.subr.bf16.mxu0 0
        %7073 = vmatpush1.bf16.msra.mxu0 %v7032
        %7074 = vmatprep.subr.bf16.mxu0 0
        %7075 = vmatpush1.bf16.msra.mxu0 %v7031
        %7076 = vmatprep.subr.bf16.mxu0 0
        %7077 = vmatpush1.bf16.msra.mxu0 %v7030
        %7078 = vmatprep.subr.bf16.mxu0 0
        %7079 = vmatpush2.bf16.msra.mxu0 %v7045
        %7080 = vmatprep.subr.bf16.mxu0 0
        %7081 = vmatpush2.bf16.msra.mxu0 %v7044
        %7082 = vmatprep.subr.bf16.mxu0 0
        %7083 = vmatpush2.bf16.msra.mxu0 %v7043
        %7084 = vmatprep.subr.bf16.mxu0 0
        %7085 = vmatpush2.bf16.msra.mxu0 %v7042
        %7086 = vmatprep.subr.bf16.mxu0 0
        %7087 = vmatpush2.bf16.msra.mxu0 %v7041
        %7088 = vmatprep.subr.bf16.mxu0 0
        %7089 = vmatpush2.bf16.msra.mxu0 %v7040
        %7090 = vmatprep.subr.bf16.mxu0 0
        %7091 = vmatpush2.bf16.msra.mxu0 %v7039
        %7092 = vmatprep.subr.bf16.mxu0 0
        %7093 = vmatpush2.bf16.msra.mxu0 %v7038
        %7094 = vmatprep.mubr.bf16.mxu0 %v6859
        %7095 = vmatmul.mubr.bf16.gmra.mxu0 %v6856
        %v7096 = vpop.f32.mrf.mxu0
        %v7097 = vadd.f32 0.0, %v7096
        %v7098 = vpop.f32.mrf.mxu0
        %v7099 = vpop.f32.mrf.mxu0
        %v7100 = vadd.f32 0.0, %v7099
        %v7101 = vpop.f32.mrf.mxu0
        %7102 = vmatprep.mubr.bf16.mxu0 %v6863
        %7103 = vmatmul.mubr.bf16.gmra.mxu0 %v6861
        %v7104 = vpop.f32.mrf.mxu0
        %v7105 = vadd.f32 0.0, %v7104
        %v7106 = vpop.f32.mrf.mxu0
        %v7107 = vpop.f32.mrf.mxu0
        %v7108 = vadd.f32 0.0, %v7107
        %v7109 = vpop.f32.mrf.mxu0
        %7110 = vmatprep.mubr.bf16.mxu0 %v6867
        %7111 = vmatmul.mubr.bf16.gmra.mxu0 %v6865
        %v7112 = vpop.f32.mrf.mxu0
        %v7113 = vadd.f32 0.0, %v7112
        %v7114 = vpop.f32.mrf.mxu0
        %v7115 = vpop.f32.mrf.mxu0
        %v7116 = vadd.f32 0.0, %v7115
        %v7117 = vpop.f32.mrf.mxu0
        %7118 = vmatprep.mubr.bf16.mxu0 %v6871
        %7119 = vmatmul.mubr.bf16.gmra.mxu0 %v6869
        %v7120 = vpop.f32.mrf.mxu0
        %v7121 = vadd.f32 0.0, %v7120
        %v7122 = vpop.f32.mrf.mxu0
        %v7123 = vpop.f32.mrf.mxu0
        %v7124 = vadd.f32 0.0, %v7123
        %v7125 = vpop.f32.mrf.mxu0
        %7126 = vmatprep.mubr.bf16.mxu0 %v6875
        %7127 = vmatmul.mubr.bf16.gmra.mxu0 %v6873
        %v7128 = vpop.f32.mrf.mxu0
        %v7129 = vadd.f32 0.0, %v7128
        %v7130 = vpop.f32.mrf.mxu0
        %v7131 = vpop.f32.mrf.mxu0
        %v7132 = vadd.f32 0.0, %v7131
        %v7133 = vpop.f32.mrf.mxu0
        %7134 = vmatprep.mubr.bf16.mxu0 %v6879
        %7135 = vmatmul.mubr.bf16.gmra.mxu0 %v6877
        %v7136 = vpop.f32.mrf.mxu0
        %v7137 = vadd.f32 0.0, %v7136
        %v7138 = vpop.f32.mrf.mxu0
        %v7139 = vpop.f32.mrf.mxu0
        %v7140 = vadd.f32 0.0, %v7139
        %v7141 = vpop.f32.mrf.mxu0
        %7142 = vmatprep.mubr.bf16.mxu0 %v6883
        %7143 = vmatmul.mubr.bf16.gmra.mxu0 %v6881
        %v7144 = vpop.f32.mrf.mxu0
        %v7145 = vadd.f32 0.0, %v7144
        %v7146 = vpop.f32.mrf.mxu0
        %v7147 = vpop.f32.mrf.mxu0
        %v7148 = vadd.f32 0.0, %v7147
        %v7149 = vpop.f32.mrf.mxu0
        %7150 = vmatprep.mubr.bf16.mxu0 %v6887
        %7151 = vmatmul.mubr.bf16.gmra.mxu0 %v6885
        %v7152 = vpop.f32.mrf.mxu0
        %v7153 = vadd.f32 0.0, %v7152
        %v7154 = vpop.f32.mrf.mxu0
        %v7155 = vpop.f32.mrf.mxu0
        %v7156 = vadd.f32 0.0, %v7155
        %v7157 = vpop.f32.mrf.mxu0
        %7158 = vmatprep.mubr.bf16.mxu0 %v6891
        %7159 = vmatmul.mubr.bf16.gmra.mxu0 %v6889
        %v7160 = vpop.f32.mrf.mxu0
        %v7161 = vadd.f32 0.0, %v7160
        %v7162 = vpop.f32.mrf.mxu0
        %v7163 = vpop.f32.mrf.mxu0
        %v7164 = vadd.f32 0.0, %v7163
        %v7165 = vpop.f32.mrf.mxu0
        %7166 = vmatprep.mubr.bf16.mxu0 %v6895
        %7167 = vmatmul.mubr.bf16.gmra.mxu0 %v6893
        %v7168 = vpop.f32.mrf.mxu0
        %v7169 = vadd.f32 0.0, %v7168
        %v7170 = vpop.f32.mrf.mxu0
        %v7171 = vpop.f32.mrf.mxu0
        %v7172 = vadd.f32 0.0, %v7171
        %v7173 = vpop.f32.mrf.mxu0
        %7174 = vmatprep.mubr.bf16.mxu0 %v6899
        %7175 = vmatmul.mubr.bf16.gmra.mxu0 %v6897
        %v7176 = vpop.f32.mrf.mxu0
        %v7177 = vadd.f32 0.0, %v7176
        %v7178 = vpop.f32.mrf.mxu0
        %v7179 = vpop.f32.mrf.mxu0
        %v7180 = vadd.f32 0.0, %v7179
        %v7181 = vpop.f32.mrf.mxu0
        %7182 = vmatprep.mubr.bf16.mxu0 %v6903
        %7183 = vmatmul.mubr.bf16.gmra.mxu0 %v6901
        %v7184 = vpop.f32.mrf.mxu0
        %v7185 = vadd.f32 0.0, %v7184
        %v7186 = vpop.f32.mrf.mxu0
        %v7187 = vpop.f32.mrf.mxu0
        %v7188 = vadd.f32 0.0, %v7187
        %v7189 = vpop.f32.mrf.mxu0
        %7190 = vmatprep.mubr.bf16.mxu0 %v6907
        %7191 = vmatmul.mubr.bf16.gmra.mxu0 %v6905
        %v7192 = vpop.f32.mrf.mxu0
        %v7193 = vadd.f32 0.0, %v7192
        %v7194 = vpop.f32.mrf.mxu0
        %v7195 = vpop.f32.mrf.mxu0
        %v7196 = vadd.f32 0.0, %v7195
        %v7197 = vpop.f32.mrf.mxu0
        %7198 = vmatprep.mubr.bf16.mxu0 %v6911
        %7199 = vmatmul.mubr.bf16.gmra.mxu0 %v6909
        %v7200 = vpop.f32.mrf.mxu0
        %v7201 = vadd.f32 0.0, %v7200
        %v7202 = vpop.f32.mrf.mxu0
        %v7203 = vpop.f32.mrf.mxu0
        %v7204 = vadd.f32 0.0, %v7203
        %v7205 = vpop.f32.mrf.mxu0
        %7206 = vmatprep.mubr.bf16.mxu0 %v6915
        %7207 = vmatmul.mubr.bf16.gmra.mxu0 %v6913
        %v7208 = vpop.f32.mrf.mxu0
        %v7209 = vadd.f32 0.0, %v7208
        %v7210 = vpop.f32.mrf.mxu0
        %v7211 = vpop.f32.mrf.mxu0
        %v7212 = vadd.f32 0.0, %v7211
        %v7213 = vpop.f32.mrf.mxu0
        %7214 = vmatprep.mubr.bf16.mxu0 %v6919
        %7215 = vmatmul.mubr.bf16.gmra.mxu0 %v6917
        %v7216 = vpop.f32.mrf.mxu0
        %v7217 = vadd.f32 0.0, %v7216
        %v7218 = vpop.f32.mrf.mxu0
        %v7219 = vpop.f32.mrf.mxu0
        %v7220 = vadd.f32 0.0, %v7219
        %v7221 = vpop.f32.mrf.mxu0
        %7222 = vmatprep.mubr.bf16.mxu0 %v6923
        %7223 = vmatmul.mubr.bf16.gmra.mxu0 %v6921
        %v7224 = vpop.f32.mrf.mxu0
        %v7225 = vadd.f32 0.0, %v7224
        %v7226 = vpop.f32.mrf.mxu0
        %v7227 = vpop.f32.mrf.mxu0
        %v7228 = vadd.f32 0.0, %v7227
        %v7229 = vpop.f32.mrf.mxu0
        %7230 = vmatprep.mubr.bf16.mxu0 %v6927
        %7231 = vmatmul.mubr.bf16.gmra.mxu0 %v6925
        %v7232 = vpop.f32.mrf.mxu0
        %v7233 = vadd.f32 0.0, %v7232
        %v7234 = vpop.f32.mrf.mxu0
        %v7235 = vpop.f32.mrf.mxu0
        %v7236 = vadd.f32 0.0, %v7235
        %v7237 = vpop.f32.mrf.mxu0
        %7238 = vmatprep.mubr.bf16.mxu0 %v6926
        %7239 = vmatmul.mubr.bf16.gmra.mxu0 %v6924
        %v7240 = vpop.f32.mrf.mxu0
        %v7241 = vadd.f32 0.0, %v7240
        %v7242 = vpop.f32.mrf.mxu0
        %v7243 = vpop.f32.mrf.mxu0
        %v7244 = vadd.f32 0.0, %v7243
        %v7245 = vpop.f32.mrf.mxu0
        %7246 = vdwg.mxu0
        %v7247 = vadd.f32 %v6319, %v7097
        %7248 = vst [vmem:[#allocation3] sm:$0x3] %v7247
        %vm7286 = vcmask 1041408
        %v7287 = vrot.slane %v6632, 6
        %v7288 = vrot.slane %v6635, 6
        %v7289 = vsel %vm7286, %v7287, %v7288
        %v7290 = vrot.slane %v6640, 6
        %v7291 = vsel %vm7286, %v7288, %v7290
        %v7292 = vrot.slane %v6643, 6
        %v7293 = vsel %vm7286, %v7290, %v7292
        %v7294 = vrot.slane %v6648, 6
        %v7295 = vsel %vm7286, %v7292, %v7294
        %v7296 = vrot.slane %v6651, 6
        %v7297 = vsel %vm7286, %v7294, %v7296
        %v7298 = vrot.slane %v6656, 6
        %v7299 = vsel %vm7286, %v7296, %v7298
        %v7300 = vrot.slane %v6659, 6
        %v7301 = vsel %vm7286, %v7298, %v7300
        %v7302 = vrot.slane %v6664, 6
        %v7303 = vsel %vm7286, %v7300, %v7302
        %v7304 = vrot.slane %v6667, 6
        %v7305 = vsel %vm7286, %v7302, %v7304
        %v7306 = vrot.slane %v6672, 6
        %v7307 = vsel %vm7286, %v7304, %v7306
        %v7308 = vrot.slane %v6675, 6
        %v7309 = vsel %vm7286, %v7306, %v7308
        %v7310 = vrot.slane %v6680, 6
        %v7311 = vsel %vm7286, %v7308, %v7310
        %v7312 = vrot.slane %v6683, 6
        %v7313 = vsel %vm7286, %v7310, %v7312
        %v7314 = vrot.slane %v6688, 6
        %v7315 = vsel %vm7286, %v7312, %v7314
        %v7316 = vrot.slane %v6691, 6
        %v7317 = vsel %vm7286, %v7314, %v7316
        %v7318 = vrot.slane %v6696, 6
        %v7319 = vsel %vm7286, %v7316, %v7318
        %v7320 = vrot.slane %v6699, 6
        %v7321 = vsel %vm7286, %v7318, %v7320
        %v7322 = vrot.slane %v6704, 6
        %v7323 = vsel %vm7286, %v7320, %v7322
        %v7324 = vrot.slane %v6707, 6
        %v7325 = vsel %vm7286, %v7322, %v7324
        %v7326 = vrot.slane %v6712, 6
        %v7327 = vsel %vm7286, %v7324, %v7326
        %v7328 = vrot.slane %v6715, 6
        %v7329 = vsel %vm7286, %v7326, %v7328
        %v7330 = vrot.slane %v6720, 6
        %v7331 = vsel %vm7286, %v7328, %v7330
        %v7332 = vrot.slane %v6723, 6
        %v7333 = vsel %vm7286, %v7330, %v7332
        %v7334 = vrot.slane %v6728, 6
        %v7335 = vsel %vm7286, %v7332, %v7334
        %v7336 = vrot.slane %v6731, 6
        %v7337 = vsel %vm7286, %v7334, %v7336
        %v7338 = vrot.slane %v6736, 6
        %v7339 = vsel %vm7286, %v7336, %v7338
        %v7340 = vrot.slane %v6739, 6
        %v7341 = vsel %vm7286, %v7338, %v7340
        %v7342 = vrot.slane %v6744, 6
        %v7343 = vsel %vm7286, %v7340, %v7342
        %v7344 = vrot.slane %v6747, 6
        %v7345 = vsel %vm7286, %v7342, %v7344
        %v7346 = vrot.slane %v6752, 6
        %v7347 = vsel %vm7286, %v7344, %v7346
        %v7348 = vrot.slane %v6755, 6
        %v7349 = vsel %vm7286, %v7346, %v7348
        %v7350 = vrot.slane %v6760, 6
        %v7351 = vsel %vm7286, %v7348, %v7350
        %v7352 = vrot.slane %v6763, 6
        %v7353 = vsel %vm7286, %v7350, %v7352
        %v7354 = vrot.slane %v6768, 6
        %v7355 = vsel %vm7286, %v7352, %v7354
        %v7356 = vrot.slane %v6771, 6
        %v7357 = vsel %vm7286, %v7354, %v7356
        %v7358 = vrot.slane %v6776, 6
        %v7359 = vsel %vm7286, %v7356, %v7358
        %v7398 = vadd.f32 %v6319, %v7287
        %v7399 = vadd.f32 %v6322, %v7289
        %v7400 = vadd.f32 %v6327, %v7291
        %v7401 = vadd.f32 %v6330, %v7293
        %v7402 = vadd.f32 %v6335, %v7295
        %v7403 = vadd.f32 %v6338, %v7297
        %v7404 = vadd.f32 %v6343, %v7299
        %v7405 = vadd.f32 %v6346, %v7301
        %v7406 = vadd.f32 %v6351, %v7303
        %v7407 = vadd.f32 %v6354, %v7305
        %v7408 = vadd.f32 %v6359, %v7307
        %v7409 = vadd.f32 %v6362, %v7309
        %v7410 = vadd.f32 %v6367, %v7311
        %v7411 = vadd.f32 %v6370, %v7313
        %v7412 = vadd.f32 %v6375, %v7315
        %v7413 = vadd.f32 %v6378, %v7317
        %v7414 = vadd.f32 %v6383, %v7319
        %v7415 = vadd.f32 %v6386, %v7321
        %v7416 = vadd.f32 %v6391, %v7323
        %v7417 = vadd.f32 %v6394, %v7325
        %v7418 = vadd.f32 %v6399, %v7327
        %v7419 = vadd.f32 %v6402, %v7329
        %v7420 = vadd.f32 %v6407, %v7331
        %v7421 = vadd.f32 %v6410, %v7333
        %v7422 = vadd.f32 %v6415, %v7335
        %v7423 = vadd.f32 %v6418, %v7337
        %v7424 = vadd.f32 %v6423, %v7339
        %v7425 = vadd.f32 %v6426, %v7341
        %v7426 = vadd.f32 %v6431, %v7343
        %v7427 = vadd.f32 %v6434, %v7345
        %v7428 = vadd.f32 %v6439, %v7347
        %v7429 = vadd.f32 %v6442, %v7349
        %v7430 = vadd.f32 %v6447, %v7351
        %v7431 = vadd.f32 %v6450, %v7353
        %v7432 = vadd.f32 %v6455, %v7355
        %v7433 = vadd.f32 %v6458, %v7357
        %v7434 = vadd.f32 %v6463, %v7359
        %v7435 = vadd.f32 %v6466, %v7358
        %v7436 = vadd.f32 %v7398, %v7097
        %v7437 = vadd.f32 %v7399, %v7100
        %v7438 = vadd.f32 %v7400, %v7105
        %v7439 = vadd.f32 %v7401, %v7108
        %v7440 = vadd.f32 %v7402, %v7113
        %v7441 = vadd.f32 %v7403, %v7116
        %v7442 = vadd.f32 %v7404, %v7121
        %v7443 = vadd.f32 %v7405, %v7124
        %v7444 = vadd.f32 %v7406, %v7129
        %v7445 = vadd.f32 %v7407, %v7132
        %v7446 = vadd.f32 %v7408, %v7137
        %v7447 = vadd.f32 %v7409, %v7140
        %v7448 = vadd.f32 %v7410, %v7145
        %v7449 = vadd.f32 %v7411, %v7148
        %v7450 = vadd.f32 %v7412, %v7153
        %v7451 = vadd.f32 %v7413, %v7156
        %v7452 = vadd.f32 %v7414, %v7161
        %v7453 = vadd.f32 %v7415, %v7164
        %v7454 = vadd.f32 %v7416, %v7169
        %v7455 = vadd.f32 %v7417, %v7172
        %v7456 = vadd.f32 %v7418, %v7177
        %v7457 = vadd.f32 %v7419, %v7180
        %v7458 = vadd.f32 %v7420, %v7185
        %v7459 = vadd.f32 %v7421, %v7188
        %v7460 = vadd.f32 %v7422, %v7193
        %v7461 = vadd.f32 %v7423, %v7196
        %v7462 = vadd.f32 %v7424, %v7201
        %v7463 = vadd.f32 %v7425, %v7204
        %v7464 = vadd.f32 %v7426, %v7209
        %v7465 = vadd.f32 %v7427, %v7212
        %v7466 = vadd.f32 %v7428, %v7217
        %v7467 = vadd.f32 %v7429, %v7220
        %v7468 = vadd.f32 %v7430, %v7225
        %v7469 = vadd.f32 %v7431, %v7228
        %v7470 = vadd.f32 %v7432, %v7233
        %v7471 = vadd.f32 %v7433, %v7236
        %v7472 = vadd.f32 %v7434, %v7241
        %v7473 = vadd.f32 %v7435, %v7244
        %7474 = vst [vmem:[#allocation3] sm:$0xfc] %v7436
        %7475 = vst [vmem:[#allocation3 + $0x8] sm:$0xff] %v7437
        %7476 = vst [vmem:[#allocation3 + $0x10] sm:$0xff] %v7438
        %7477 = vst [vmem:[#allocation3 + $0x18] sm:$0xff] %v7439
        %7478 = vst [vmem:[#allocation3 + $0x20] sm:$0xff] %v7440
        %7479 = vst [vmem:[#allocation3 + $0x28] sm:$0xff] %v7441
        %7480 = vst [vmem:[#allocation3 + $0x30] sm:$0xff] %v7442
        %7481 = vst [vmem:[#allocation3 + $0x38] sm:$0xff] %v7443
        %7482 = vst [vmem:[#allocation3 + $0x40] sm:$0xff] %v7444
        %7483 = vst [vmem:[#allocation3 + $0x48] sm:$0xff] %v7445
        %7484 = vst [vmem:[#allocation3 + $0x50] sm:$0xff] %v7446
        %7485 = vst [vmem:[#allocation3 + $0x58] sm:$0xff] %v7447
        %7486 = vst [vmem:[#allocation3 + $0x60] sm:$0xff] %v7448
        %7487 = vst [vmem:[#allocation3 + $0x68] sm:$0xff] %v7449
        %7488 = vst [vmem:[#allocation3 + $0x70] sm:$0xff] %v7450
        %7489 = vst [vmem:[#allocation3 + $0x78] sm:$0xff] %v7451
        %7490 = vst [vmem:[#allocation3 + $0x80] sm:$0xff] %v7452
        %7491 = vst [vmem:[#allocation3 + $0x88] sm:$0xff] %v7453
        %7492 = vst [vmem:[#allocation3 + $0x90] sm:$0xff] %v7454
        %7493 = vst [vmem:[#allocation3 + $0x98] sm:$0xff] %v7455
        %7494 = vst [vmem:[#allocation3 + $0xa0] sm:$0xff] %v7456
        %7495 = vst [vmem:[#allocation3 + $0xa8] sm:$0xff] %v7457
        %7496 = vst [vmem:[#allocation3 + $0xb0] sm:$0xff] %v7458
        %7497 = vst [vmem:[#allocation3 + $0xb8] sm:$0xff] %v7459
        %7498 = vst [vmem:[#allocation3 + $0xc0] sm:$0xff] %v7460
        %7499 = vst [vmem:[#allocation3 + $0xc8] sm:$0xff] %v7461
        %7500 = vst [vmem:[#allocation3 + $0xd0] sm:$0xff] %v7462
        %7501 = vst [vmem:[#allocation3 + $0xd8] sm:$0xff] %v7463
        %7502 = vst [vmem:[#allocation3 + $0xe0] sm:$0xff] %v7464
        %7503 = vst [vmem:[#allocation3 + $0xe8] sm:$0xff] %v7465
        %7504 = vst [vmem:[#allocation3 + $0xf0] sm:$0xff] %v7466
        %7505 = vst [vmem:[#allocation3 + $0xf8] sm:$0xff] %v7467
        %7506 = vst [vmem:[#allocation3 + $0x100] sm:$0xff] %v7468
        %7507 = vst [vmem:[#allocation3 + $0x108] sm:$0xff] %v7469
        %7508 = vst [vmem:[#allocation3 + $0x110] sm:$0xff] %v7470
        %7509 = vst [vmem:[#allocation3 + $0x118] sm:$0xff] %v7471
        %7510 = vst [vmem:[#allocation3 + $0x120] sm:$0xff] %v7472
        %7511 = vst [vmem:[#allocation3 + $0x128] sm:$0x3] %v7473
        %v7513 = vrot.slane %v6779, 6
        %v7515 = vadd.f32 %v6466, %v7513
        %7516 = vst [vmem:[#allocation3 + $0x128] sm:$0xc] %v7515
        %v7517 = vld [vmem:[%s4] sm:$0x3]
        %v7518 = vld [vmem:[#allocation3] sm:$0xff]
        %v7519 = vld [vmem:[#allocation3 + $0x8] sm:$0xff]
        %v7520 = vld [vmem:[#allocation3 + $0x10] sm:$0xff]
        %v7521 = vld [vmem:[#allocation3 + $0x18] sm:$0xff]
        %v7522 = vld [vmem:[#allocation3 + $0x20] sm:$0xff]
        %v7523 = vld [vmem:[#allocation3 + $0x28] sm:$0xff]
        %v7524 = vld [vmem:[#allocation3 + $0x30] sm:$0xff]
        %v7525 = vld [vmem:[#allocation3 + $0x38] sm:$0xff]
        %v7526 = vld [vmem:[#allocation3 + $0x40] sm:$0xff]
        %v7527 = vld [vmem:[#allocation3 + $0x48] sm:$0xff]
        %v7528 = vld [vmem:[#allocation3 + $0x50] sm:$0xff]
        %v7529 = vld [vmem:[#allocation3 + $0x58] sm:$0xff]
        %v7530 = vld [vmem:[#allocation3 + $0x60] sm:$0xff]
        %v7531 = vld [vmem:[#allocation3 + $0x68] sm:$0xff]
        %v7532 = vld [vmem:[#allocation3 + $0x70] sm:$0xff]
        %v7533 = vld [vmem:[#allocation3 + $0x78] sm:$0xff]
        %v7534 = vld [vmem:[#allocation3 + $0x80] sm:$0xff]
        %v7535 = vld [vmem:[#allocation3 + $0x88] sm:$0xff]
        %v7536 = vld [vmem:[#allocation3 + $0x90] sm:$0xff]
        %v7537 = vld [vmem:[#allocation3 + $0x98] sm:$0xff]
        %v7538 = vld [vmem:[#allocation3 + $0xa0] sm:$0xff]
        %v7539 = vld [vmem:[#allocation3 + $0xa8] sm:$0xff]
        %v7540 = vld [vmem:[#allocation3 + $0xb0] sm:$0xff]
        %v7541 = vld [vmem:[#allocation3 + $0xb8] sm:$0xff]
        %v7542 = vld [vmem:[#allocation3 + $0xc0] sm:$0xff]
        %v7543 = vld [vmem:[#allocation3 + $0xc8] sm:$0xff]
        %v7544 = vld [vmem:[#allocation3 + $0xd0] sm:$0xff]
        %v7545 = vld [vmem:[#allocation3 + $0xd8] sm:$0xff]
        %v7546 = vld [vmem:[#allocation3 + $0xe0] sm:$0xff]
        %v7547 = vld [vmem:[#allocation3 + $0xe8] sm:$0xff]
        %v7548 = vld [vmem:[#allocation3 + $0xf0] sm:$0xff]
        %v7549 = vld [vmem:[#allocation3 + $0xf8] sm:$0xff]
        %v7550 = vld [vmem:[#allocation3 + $0x100] sm:$0xff]
        %v7551 = vld [vmem:[#allocation3 + $0x108] sm:$0xff]
        %v7552 = vld [vmem:[#allocation3 + $0x110] sm:$0xff]
        %v7553 = vld [vmem:[#allocation3 + $0x118] sm:$0xff]
        %v7554 = vld [vmem:[#allocation3 + $0x120] sm:$0xff]
        %v7555 = vld [vmem:[#allocation3 + $0x128] sm:$0xf]
        %v7556 = vlaneseq
        %v7557 = vshrl.u32 %v7556, 7
        %v7558 = vsub.s32 0, %v7557
        %v7559 = vrot.slane %v7517, %v7558
        %v7560 = vmul.f32 %v7518, %v7559
        %v7561 = vmul.f32 %v7519, %v7559
        %v7562 = vmul.f32 %v7520, %v7559
        %v7563 = vmul.f32 %v7521, %v7559
        %v7564 = vmul.f32 %v7522, %v7559
        %v7565 = vmul.f32 %v7523, %v7559
        %v7566 = vmul.f32 %v7524, %v7559
        %v7567 = vmul.f32 %v7525, %v7559
        %v7568 = vmul.f32 %v7526, %v7559
        %v7569 = vmul.f32 %v7527, %v7559
        %v7570 = vmul.f32 %v7528, %v7559
        %v7571 = vmul.f32 %v7529, %v7559
        %v7572 = vmul.f32 %v7530, %v7559
        %v7573 = vmul.f32 %v7531, %v7559
        %v7574 = vmul.f32 %v7532, %v7559
        %v7575 = vmul.f32 %v7533, %v7559
        %v7576 = vmul.f32 %v7534, %v7559
        %v7577 = vmul.f32 %v7535, %v7559
        %v7578 = vmul.f32 %v7536, %v7559
        %v7579 = vmul.f32 %v7537, %v7559
        %v7580 = vmul.f32 %v7538, %v7559
        %v7581 = vmul.f32 %v7539, %v7559
        %v7582 = vmul.f32 %v7540, %v7559
        %v7583 = vmul.f32 %v7541, %v7559
        %v7584 = vmul.f32 %v7542, %v7559
        %v7585 = vmul.f32 %v7543, %v7559
        %v7586 = vmul.f32 %v7544, %v7559
        %v7587 = vmul.f32 %v7545, %v7559
        %v7588 = vmul.f32 %v7546, %v7559
        %v7589 = vmul.f32 %v7547, %v7559
        %v7590 = vmul.f32 %v7548, %v7559
        %v7591 = vmul.f32 %v7549, %v7559
        %v7592 = vmul.f32 %v7550, %v7559
        %v7593 = vmul.f32 %v7551, %v7559
        %v7594 = vmul.f32 %v7552, %v7559
        %v7595 = vmul.f32 %v7553, %v7559
        %v7596 = vmul.f32 %v7554, %v7559
        %v7597 = vmul.f32 %v7555, %v7559
        %v7598 = vlaneseq
        %v7599 = vshrl.u32 %v7598, 7
        %v7600 = vsub.s32 1, %v7599
        %v7601 = vrot.slane %v7517, %v7600
        %v7602 = vadd.f32 %v7560, %v7601
        %v7603 = vadd.f32 %v7561, %v7601
        %v7604 = vadd.f32 %v7562, %v7601
        %v7605 = vadd.f32 %v7563, %v7601
        %v7606 = vadd.f32 %v7564, %v7601
        %v7607 = vadd.f32 %v7565, %v7601
        %v7608 = vadd.f32 %v7566, %v7601
        %v7609 = vadd.f32 %v7567, %v7601
        %v7610 = vadd.f32 %v7568, %v7601
        %v7611 = vadd.f32 %v7569, %v7601
        %v7612 = vadd.f32 %v7570, %v7601
        %v7613 = vadd.f32 %v7571, %v7601
        %v7614 = vadd.f32 %v7572, %v7601
        %v7615 = vadd.f32 %v7573, %v7601
        %v7616 = vadd.f32 %v7574, %v7601
        %v7617 = vadd.f32 %v7575, %v7601
        %v7618 = vadd.f32 %v7576, %v7601
        %v7619 = vadd.f32 %v7577, %v7601
        %v7620 = vadd.f32 %v7578, %v7601
        %v7621 = vadd.f32 %v7579, %v7601
        %v7622 = vadd.f32 %v7580, %v7601
        %v7623 = vadd.f32 %v7581, %v7601
        %v7624 = vadd.f32 %v7582, %v7601
        %v7625 = vadd.f32 %v7583, %v7601
        %v7626 = vadd.f32 %v7584, %v7601
        %v7627 = vadd.f32 %v7585, %v7601
        %v7628 = vadd.f32 %v7586, %v7601
        %v7629 = vadd.f32 %v7587, %v7601
        %v7630 = vadd.f32 %v7588, %v7601
        %v7631 = vadd.f32 %v7589, %v7601
        %v7632 = vadd.f32 %v7590, %v7601
        %v7633 = vadd.f32 %v7591, %v7601
        %v7634 = vadd.f32 %v7592, %v7601
        %v7635 = vadd.f32 %v7593, %v7601
        %v7636 = vadd.f32 %v7594, %v7601
        %v7637 = vadd.f32 %v7595, %v7601
        %v7638 = vadd.f32 %v7596, %v7601
        %v7639 = vadd.f32 %v7597, %v7601
        %v7640 = vmax.f32 %v7602, 0.0
        %v7641 = vmax.f32 %v7603, 0.0
        %v7642 = vmax.f32 %v7604, 0.0
        %v7643 = vmax.f32 %v7605, 0.0
        %v7644 = vmax.f32 %v7606, 0.0
        %v7645 = vmax.f32 %v7607, 0.0
        %v7646 = vmax.f32 %v7608, 0.0
        %v7647 = vmax.f32 %v7609, 0.0
        %v7648 = vmax.f32 %v7610, 0.0
        %v7649 = vmax.f32 %v7611, 0.0
        %v7650 = vmax.f32 %v7612, 0.0
        %v7651 = vmax.f32 %v7613, 0.0
        %v7652 = vmax.f32 %v7614, 0.0
        %v7653 = vmax.f32 %v7615, 0.0
        %v7654 = vmax.f32 %v7616, 0.0
        %v7655 = vmax.f32 %v7617, 0.0
        %v7656 = vmax.f32 %v7618, 0.0
        %v7657 = vmax.f32 %v7619, 0.0
        %v7658 = vmax.f32 %v7620, 0.0
        %v7659 = vmax.f32 %v7621, 0.0
        %v7660 = vmax.f32 %v7622, 0.0
        %v7661 = vmax.f32 %v7623, 0.0
        %v7662 = vmax.f32 %v7624, 0.0
        %v7663 = vmax.f32 %v7625, 0.0
        %v7664 = vmax.f32 %v7626, 0.0
        %v7665 = vmax.f32 %v7627, 0.0
        %v7666 = vmax.f32 %v7628, 0.0
        %v7667 = vmax.f32 %v7629, 0.0
        %v7668 = vmax.f32 %v7630, 0.0
        %v7669 = vmax.f32 %v7631, 0.0
        %v7670 = vmax.f32 %v7632, 0.0
        %v7671 = vmax.f32 %v7633, 0.0
        %v7672 = vmax.f32 %v7634, 0.0
        %v7673 = vmax.f32 %v7635, 0.0
        %v7674 = vmax.f32 %v7636, 0.0
        %v7675 = vmax.f32 %v7637, 0.0
        %v7676 = vmax.f32 %v7638, 0.0
        %v7677 = vmax.f32 %v7639, 0.0
        %v7678 = vpack.c.bf16 %v7641, %v7640
        %v7679 = vpack.c.bf16 %v7643, %v7642
        %v7680 = vpack.c.bf16 %v7645, %v7644
        %v7681 = vpack.c.bf16 %v7647, %v7646
        %v7682 = vpack.c.bf16 %v7649, %v7648
        %v7683 = vpack.c.bf16 %v7651, %v7650
        %v7684 = vpack.c.bf16 %v7653, %v7652
        %v7685 = vpack.c.bf16 %v7655, %v7654
        %v7686 = vpack.c.bf16 %v7657, %v7656
        %v7687 = vpack.c.bf16 %v7659, %v7658
        %v7688 = vpack.c.bf16 %v7661, %v7660
        %v7689 = vpack.c.bf16 %v7663, %v7662
        %v7690 = vpack.c.bf16 %v7665, %v7664
        %v7691 = vpack.c.bf16 %v7667, %v7666
        %v7692 = vpack.c.bf16 %v7669, %v7668
        %v7693 = vpack.c.bf16 %v7671, %v7670
        %v7694 = vpack.c.bf16 %v7673, %v7672
        %v7695 = vpack.c.bf16 %v7675, %v7674
        %v7696 = vpack.c.bf16 %v7677, %v7676
        %s7697 = scalar_lea.vmem %s5, 64
        %v7698 = vld [vmem:[%s7697] sm:$0xf]
        %v7699 = vld [vmem:[%s7697 + $0x4] sm:$0xf]
        %v7700 = vld [vmem:[%s7697 + $0x8] sm:$0xf]
        %v7701 = vld [vmem:[%s7697 + $0xc] sm:$0xf]
        %v7702 = vld [vmem:[%s7697 + $0x10] sm:$0xf]
        %v7703 = vld [vmem:[%s7697 + $0x14] sm:$0xf]
        %v7704 = vld [vmem:[%s7697 + $0x18] sm:$0xf]
        %v7705 = vld [vmem:[%s7697 + $0x1c] sm:$0xf]
        %v7706 = vld [vmem:[%s7697 + $0x20] sm:$0xf]
        %v7707 = vld [vmem:[%s7697 + $0x24] sm:$0xf]
        %v7708 = vld [vmem:[%s7697 + $0x28] sm:$0xf]
        %v7709 = vld [vmem:[%s7697 + $0x2c] sm:$0xf]
        %v7710 = vld [vmem:[%s7697 + $0x30] sm:$0xf]
        %v7711 = vld [vmem:[%s7697 + $0x34] sm:$0xf]
        %v7712 = vld [vmem:[%s7697 + $0x38] sm:$0xf]
        %v7713 = vld [vmem:[%s7697 + $0x3c] sm:$0xf]
        %v7730 = vunpack.c.l.b16 %v7698
        %v7731 = vunpack.c.l.b16 %v7699
        %v7732 = vunpack.c.l.b16 %v7700
        %v7733 = vunpack.c.l.b16 %v7701
        %v7734 = vunpack.c.l.b16 %v7702
        %v7735 = vunpack.c.l.b16 %v7703
        %v7736 = vunpack.c.l.b16 %v7704
        %v7737 = vunpack.c.l.b16 %v7705
        %v7738 = vunpack.c.l.b16 %v7706
        %v7739 = vunpack.c.l.b16 %v7707
        %v7740 = vunpack.c.l.b16 %v7708
        %v7741 = vunpack.c.l.b16 %v7709
        %v7742 = vunpack.c.l.b16 %v7710
        %v7743 = vunpack.c.l.b16 %v7711
        %v7744 = vunpack.c.l.b16 %v7712
        %v7745 = vunpack.c.l.b16 %v7713
        %v7746 = vpack.c.b16 %v7731, %v7730
        %v7747 = vpack.c.b16 %v7733, %v7732
        %v7748 = vpack.c.b16 %v7735, %v7734
        %v7749 = vpack.c.b16 %v7737, %v7736
        %v7750 = vpack.c.b16 %v7739, %v7738
        %v7751 = vpack.c.b16 %v7741, %v7740
        %v7752 = vpack.c.b16 %v7743, %v7742
        %v7753 = vpack.c.b16 %v7745, %v7744
        %7762 = vmatprep.subr.bf16.mxu0 0
        %7763 = vmatpush1.bf16.msra.mxu0 %v7753
        %7764 = vmatprep.subr.bf16.mxu0 0
        %7765 = vmatpush1.bf16.msra.mxu0 %v7752
        %7766 = vmatprep.subr.bf16.mxu0 0
        %7767 = vmatpush1.bf16.msra.mxu0 %v7751
        %7768 = vmatprep.subr.bf16.mxu0 0
        %7769 = vmatpush1.bf16.msra.mxu0 %v7750
        %7770 = vmatprep.subr.bf16.mxu0 0
        %7771 = vmatpush1.bf16.msra.mxu0 %v7749
        %7772 = vmatprep.subr.bf16.mxu0 0
        %7773 = vmatpush1.bf16.msra.mxu0 %v7748
        %7774 = vmatprep.subr.bf16.mxu0 0
        %7775 = vmatpush1.bf16.msra.mxu0 %v7747
        %7776 = vmatprep.subr.bf16.mxu0 0
        %7777 = vmatpush1.bf16.msra.mxu0 %v7746
        %7778 = vmatprep.subr.bf16.mxu0 0
        %7779 = vmatpush2.bf16.msra.mxu0 0
        %7780 = vmatprep.subr.bf16.mxu0 0
        %7781 = vmatpush2.bf16.msra.mxu0 0
        %7782 = vmatprep.subr.bf16.mxu0 0
        %7783 = vmatpush2.bf16.msra.mxu0 0
        %7784 = vmatprep.subr.bf16.mxu0 0
        %7785 = vmatpush2.bf16.msra.mxu0 0
        %7786 = vmatprep.subr.bf16.mxu0 0
        %7787 = vmatpush2.bf16.msra.mxu0 0
        %7788 = vmatprep.subr.bf16.mxu0 0
        %7789 = vmatpush2.bf16.msra.mxu0 0
        %7790 = vmatprep.subr.bf16.mxu0 0
        %7791 = vmatpush2.bf16.msra.mxu0 0
        %7792 = vmatprep.subr.bf16.mxu0 0
        %7793 = vmatpush2.bf16.msra.mxu0 0
        %7794 = vmatprep.mubr.bf16.mxu0 0
        %7795 = vmatmul.mubr.bf16.gmra.mxu0 %v7678
        %v7796 = vpop.f32.mrf.mxu0
        %v7797 = vadd.f32 0.0, %v7796
        %v7798 = vpop.f32.mrf.mxu0
        %v7799 = vpop.f32.mrf.mxu0
        %v7800 = vadd.f32 0.0, %v7799
        %v7801 = vpop.f32.mrf.mxu0
        %7802 = vmatprep.mubr.bf16.mxu0 0
        %7803 = vmatmul.mubr.bf16.gmra.mxu0 %v7679
        %v7804 = vpop.f32.mrf.mxu0
        %v7805 = vadd.f32 0.0, %v7804
        %v7806 = vpop.f32.mrf.mxu0
        %v7807 = vpop.f32.mrf.mxu0
        %v7808 = vadd.f32 0.0, %v7807
        %v7809 = vpop.f32.mrf.mxu0
        %7810 = vmatprep.mubr.bf16.mxu0 0
        %7811 = vmatmul.mubr.bf16.gmra.mxu0 %v7680
        %v7812 = vpop.f32.mrf.mxu0
        %v7813 = vadd.f32 0.0, %v7812
        %v7814 = vpop.f32.mrf.mxu0
        %v7815 = vpop.f32.mrf.mxu0
        %v7816 = vadd.f32 0.0, %v7815
        %v7817 = vpop.f32.mrf.mxu0
        %7818 = vmatprep.mubr.bf16.mxu0 0
        %7819 = vmatmul.mubr.bf16.gmra.mxu0 %v7681
        %v7820 = vpop.f32.mrf.mxu0
        %v7821 = vadd.f32 0.0, %v7820
        %v7822 = vpop.f32.mrf.mxu0
        %v7823 = vpop.f32.mrf.mxu0
        %v7824 = vadd.f32 0.0, %v7823
        %v7825 = vpop.f32.mrf.mxu0
        %7826 = vmatprep.mubr.bf16.mxu0 0
        %7827 = vmatmul.mubr.bf16.gmra.mxu0 %v7682
        %v7828 = vpop.f32.mrf.mxu0
        %v7829 = vadd.f32 0.0, %v7828
        %v7830 = vpop.f32.mrf.mxu0
        %v7831 = vpop.f32.mrf.mxu0
        %v7832 = vadd.f32 0.0, %v7831
        %v7833 = vpop.f32.mrf.mxu0
        %7834 = vmatprep.mubr.bf16.mxu0 0
        %7835 = vmatmul.mubr.bf16.gmra.mxu0 %v7683
        %v7836 = vpop.f32.mrf.mxu0
        %v7837 = vadd.f32 0.0, %v7836
        %v7838 = vpop.f32.mrf.mxu0
        %v7839 = vpop.f32.mrf.mxu0
        %v7840 = vadd.f32 0.0, %v7839
        %v7841 = vpop.f32.mrf.mxu0
        %7842 = vmatprep.mubr.bf16.mxu0 0
        %7843 = vmatmul.mubr.bf16.gmra.mxu0 %v7684
        %v7844 = vpop.f32.mrf.mxu0
        %v7845 = vadd.f32 0.0, %v7844
        %v7846 = vpop.f32.mrf.mxu0
        %v7847 = vpop.f32.mrf.mxu0
        %v7848 = vadd.f32 0.0, %v7847
        %v7849 = vpop.f32.mrf.mxu0
        %7850 = vmatprep.mubr.bf16.mxu0 0
        %7851 = vmatmul.mubr.bf16.gmra.mxu0 %v7685
        %v7852 = vpop.f32.mrf.mxu0
        %v7853 = vadd.f32 0.0, %v7852
        %v7854 = vpop.f32.mrf.mxu0
        %v7855 = vpop.f32.mrf.mxu0
        %v7856 = vadd.f32 0.0, %v7855
        %v7857 = vpop.f32.mrf.mxu0
        %7858 = vmatprep.mubr.bf16.mxu0 0
        %7859 = vmatmul.mubr.bf16.gmra.mxu0 %v7686
        %v7860 = vpop.f32.mrf.mxu0
        %v7861 = vadd.f32 0.0, %v7860
        %v7862 = vpop.f32.mrf.mxu0
        %v7863 = vpop.f32.mrf.mxu0
        %v7864 = vadd.f32 0.0, %v7863
        %v7865 = vpop.f32.mrf.mxu0
        %7866 = vmatprep.mubr.bf16.mxu0 0
        %7867 = vmatmul.mubr.bf16.gmra.mxu0 %v7687
        %v7868 = vpop.f32.mrf.mxu0
        %v7869 = vadd.f32 0.0, %v7868
        %v7870 = vpop.f32.mrf.mxu0
        %v7871 = vpop.f32.mrf.mxu0
        %v7872 = vadd.f32 0.0, %v7871
        %v7873 = vpop.f32.mrf.mxu0
        %7874 = vmatprep.mubr.bf16.mxu0 0
        %7875 = vmatmul.mubr.bf16.gmra.mxu0 %v7688
        %v7876 = vpop.f32.mrf.mxu0
        %v7877 = vadd.f32 0.0, %v7876
        %v7878 = vpop.f32.mrf.mxu0
        %v7879 = vpop.f32.mrf.mxu0
        %v7880 = vadd.f32 0.0, %v7879
        %v7881 = vpop.f32.mrf.mxu0
        %7882 = vmatprep.mubr.bf16.mxu0 0
        %7883 = vmatmul.mubr.bf16.gmra.mxu0 %v7689
        %v7884 = vpop.f32.mrf.mxu0
        %v7885 = vadd.f32 0.0, %v7884
        %v7886 = vpop.f32.mrf.mxu0
        %v7887 = vpop.f32.mrf.mxu0
        %v7888 = vadd.f32 0.0, %v7887
        %v7889 = vpop.f32.mrf.mxu0
        %7890 = vmatprep.mubr.bf16.mxu0 0
        %7891 = vmatmul.mubr.bf16.gmra.mxu0 %v7690
        %v7892 = vpop.f32.mrf.mxu0
        %v7893 = vadd.f32 0.0, %v7892
        %v7894 = vpop.f32.mrf.mxu0
        %v7895 = vpop.f32.mrf.mxu0
        %v7896 = vadd.f32 0.0, %v7895
        %v7897 = vpop.f32.mrf.mxu0
        %7898 = vmatprep.mubr.bf16.mxu0 0
        %7899 = vmatmul.mubr.bf16.gmra.mxu0 %v7691
        %v7900 = vpop.f32.mrf.mxu0
        %v7901 = vadd.f32 0.0, %v7900
        %v7902 = vpop.f32.mrf.mxu0
        %v7903 = vpop.f32.mrf.mxu0
        %v7904 = vadd.f32 0.0, %v7903
        %v7905 = vpop.f32.mrf.mxu0
        %7906 = vmatprep.mubr.bf16.mxu0 0
        %7907 = vmatmul.mubr.bf16.gmra.mxu0 %v7692
        %v7908 = vpop.f32.mrf.mxu0
        %v7909 = vadd.f32 0.0, %v7908
        %v7910 = vpop.f32.mrf.mxu0
        %v7911 = vpop.f32.mrf.mxu0
        %v7912 = vadd.f32 0.0, %v7911
        %v7913 = vpop.f32.mrf.mxu0
        %7914 = vmatprep.mubr.bf16.mxu0 0
        %7915 = vmatmul.mubr.bf16.gmra.mxu0 %v7693
        %v7916 = vpop.f32.mrf.mxu0
        %v7917 = vadd.f32 0.0, %v7916
        %v7918 = vpop.f32.mrf.mxu0
        %v7919 = vpop.f32.mrf.mxu0
        %v7920 = vadd.f32 0.0, %v7919
        %v7921 = vpop.f32.mrf.mxu0
        %7922 = vmatprep.mubr.bf16.mxu0 0
        %7923 = vmatmul.mubr.bf16.gmra.mxu0 %v7694
        %v7924 = vpop.f32.mrf.mxu0
        %v7925 = vadd.f32 0.0, %v7924
        %v7926 = vpop.f32.mrf.mxu0
        %v7927 = vpop.f32.mrf.mxu0
        %v7928 = vadd.f32 0.0, %v7927
        %v7929 = vpop.f32.mrf.mxu0
        %7930 = vmatprep.mubr.bf16.mxu0 0
        %7931 = vmatmul.mubr.bf16.gmra.mxu0 %v7695
        %v7932 = vpop.f32.mrf.mxu0
        %v7933 = vadd.f32 0.0, %v7932
        %v7934 = vpop.f32.mrf.mxu0
        %v7935 = vpop.f32.mrf.mxu0
        %v7936 = vadd.f32 0.0, %v7935
        %v7937 = vpop.f32.mrf.mxu0
        %7938 = vmatprep.mubr.bf16.mxu0 0
        %7939 = vmatmul.mubr.bf16.gmra.mxu0 %v7696
        %v7940 = vpop.f32.mrf.mxu0
        %v7941 = vadd.f32 0.0, %v7940
        %v7942 = vpop.f32.mrf.mxu0
        %v7943 = vpop.f32.mrf.mxu0
        %v7944 = vadd.f32 0.0, %v7943
        %v7945 = vpop.f32.mrf.mxu0
        %7946 = vdwg.mxu0
        %v7947 = vld [vmem:[%s5] sm:$0xf]
        %v7948 = vld [vmem:[%s5 + $0x4] sm:$0xf]
        %v7949 = vld [vmem:[%s5 + $0x8] sm:$0xf]
        %v7950 = vld [vmem:[%s5 + $0xc] sm:$0xf]
        %v7951 = vld [vmem:[%s5 + $0x10] sm:$0xf]
        %v7952 = vld [vmem:[%s5 + $0x14] sm:$0xf]
        %v7953 = vld [vmem:[%s5 + $0x18] sm:$0xf]
        %v7954 = vld [vmem:[%s5 + $0x1c] sm:$0xf]
        %v7955 = vld [vmem:[%s5 + $0x20] sm:$0xf]
        %v7956 = vld [vmem:[%s5 + $0x24] sm:$0xf]
        %v7957 = vld [vmem:[%s5 + $0x28] sm:$0xf]
        %v7958 = vld [vmem:[%s5 + $0x2c] sm:$0xf]
        %v7959 = vld [vmem:[%s5 + $0x30] sm:$0xf]
        %v7960 = vld [vmem:[%s5 + $0x34] sm:$0xf]
        %v7961 = vld [vmem:[%s5 + $0x38] sm:$0xf]
        %v7962 = vld [vmem:[%s5 + $0x3c] sm:$0xf]
        %v7979 = vunpack.c.l.b16 %v7947
        %v7980 = vunpack.c.l.b16 %v7948
        %v7981 = vunpack.c.l.b16 %v7949
        %v7982 = vunpack.c.l.b16 %v7950
        %v7983 = vunpack.c.l.b16 %v7951
        %v7984 = vunpack.c.l.b16 %v7952
        %v7985 = vunpack.c.l.b16 %v7953
        %v7986 = vunpack.c.l.b16 %v7954
        %v7987 = vunpack.c.l.b16 %v7955
        %v7988 = vunpack.c.l.b16 %v7956
        %v7989 = vunpack.c.l.b16 %v7957
        %v7990 = vunpack.c.l.b16 %v7958
        %v7991 = vunpack.c.l.b16 %v7959
        %v7992 = vunpack.c.l.b16 %v7960
        %v7993 = vunpack.c.l.b16 %v7961
        %v7994 = vunpack.c.l.b16 %v7962
        %v7995 = vpack.c.b16 %v7980, %v7979
        %v7996 = vpack.c.b16 %v7982, %v7981
        %v7997 = vpack.c.b16 %v7984, %v7983
        %v7998 = vpack.c.b16 %v7986, %v7985
        %v7999 = vpack.c.b16 %v7988, %v7987
        %v8000 = vpack.c.b16 %v7990, %v7989
        %v8001 = vpack.c.b16 %v7992, %v7991
        %v8002 = vpack.c.b16 %v7994, %v7993
        %8011 = vmatprep.subr.bf16.mxu0 0
        %8012 = vmatpush1.bf16.msra.mxu0 %v8002
        %8013 = vmatprep.subr.bf16.mxu0 0
        %8014 = vmatpush1.bf16.msra.mxu0 %v8001
        %8015 = vmatprep.subr.bf16.mxu0 0
        %8016 = vmatpush1.bf16.msra.mxu0 %v8000
        %8017 = vmatprep.subr.bf16.mxu0 0
        %8018 = vmatpush1.bf16.msra.mxu0 %v7999
        %8019 = vmatprep.subr.bf16.mxu0 0
        %8020 = vmatpush1.bf16.msra.mxu0 %v7998
        %8021 = vmatprep.subr.bf16.mxu0 0
        %8022 = vmatpush1.bf16.msra.mxu0 %v7997
        %8023 = vmatprep.subr.bf16.mxu0 0
        %8024 = vmatpush1.bf16.msra.mxu0 %v7996
        %8025 = vmatprep.subr.bf16.mxu0 0
        %8026 = vmatpush1.bf16.msra.mxu0 %v7995
        %8027 = vmatprep.subr.bf16.mxu0 0
        %8028 = vmatpush2.bf16.msra.mxu0 0
        %8029 = vmatprep.subr.bf16.mxu0 0
        %8030 = vmatpush2.bf16.msra.mxu0 0
        %8031 = vmatprep.subr.bf16.mxu0 0
        %8032 = vmatpush2.bf16.msra.mxu0 0
        %8033 = vmatprep.subr.bf16.mxu0 0
        %8034 = vmatpush2.bf16.msra.mxu0 0
        %8035 = vmatprep.subr.bf16.mxu0 0
        %8036 = vmatpush2.bf16.msra.mxu0 0
        %8037 = vmatprep.subr.bf16.mxu0 0
        %8038 = vmatpush2.bf16.msra.mxu0 0
        %8039 = vmatprep.subr.bf16.mxu0 0
        %8040 = vmatpush2.bf16.msra.mxu0 0
        %8041 = vmatprep.subr.bf16.mxu0 0
        %8042 = vmatpush2.bf16.msra.mxu0 0
        %8043 = vmatprep.mubr.bf16.mxu0 0
        %8044 = vmatmul.mubr.bf16.gmra.mxu0 %v7678
        %v8045 = vpop.f32.mrf.mxu0
        %v8046 = vadd.f32 0.0, %v8045
        %v8047 = vpop.f32.mrf.mxu0
        %v8048 = vpop.f32.mrf.mxu0
        %v8049 = vadd.f32 0.0, %v8048
        %v8050 = vpop.f32.mrf.mxu0
        %8051 = vmatprep.mubr.bf16.mxu0 0
        %8052 = vmatmul.mubr.bf16.gmra.mxu0 %v7679
        %v8053 = vpop.f32.mrf.mxu0
        %v8054 = vadd.f32 0.0, %v8053
        %v8055 = vpop.f32.mrf.mxu0
        %v8056 = vpop.f32.mrf.mxu0
        %v8057 = vadd.f32 0.0, %v8056
        %v8058 = vpop.f32.mrf.mxu0
        %8059 = vmatprep.mubr.bf16.mxu0 0
        %8060 = vmatmul.mubr.bf16.gmra.mxu0 %v7680
        %v8061 = vpop.f32.mrf.mxu0
        %v8062 = vadd.f32 0.0, %v8061
        %v8063 = vpop.f32.mrf.mxu0
        %v8064 = vpop.f32.mrf.mxu0
        %v8065 = vadd.f32 0.0, %v8064
        %v8066 = vpop.f32.mrf.mxu0
        %8067 = vmatprep.mubr.bf16.mxu0 0
        %8068 = vmatmul.mubr.bf16.gmra.mxu0 %v7681
        %v8069 = vpop.f32.mrf.mxu0
        %v8070 = vadd.f32 0.0, %v8069
        %v8071 = vpop.f32.mrf.mxu0
        %v8072 = vpop.f32.mrf.mxu0
        %v8073 = vadd.f32 0.0, %v8072
        %v8074 = vpop.f32.mrf.mxu0
        %8075 = vmatprep.mubr.bf16.mxu0 0
        %8076 = vmatmul.mubr.bf16.gmra.mxu0 %v7682
        %v8077 = vpop.f32.mrf.mxu0
        %v8078 = vadd.f32 0.0, %v8077
        %v8079 = vpop.f32.mrf.mxu0
        %v8080 = vpop.f32.mrf.mxu0
        %v8081 = vadd.f32 0.0, %v8080
        %v8082 = vpop.f32.mrf.mxu0
        %8083 = vmatprep.mubr.bf16.mxu0 0
        %8084 = vmatmul.mubr.bf16.gmra.mxu0 %v7683
        %v8085 = vpop.f32.mrf.mxu0
        %v8086 = vadd.f32 0.0, %v8085
        %v8087 = vpop.f32.mrf.mxu0
        %v8088 = vpop.f32.mrf.mxu0
        %v8089 = vadd.f32 0.0, %v8088
        %v8090 = vpop.f32.mrf.mxu0
        %8091 = vmatprep.mubr.bf16.mxu0 0
        %8092 = vmatmul.mubr.bf16.gmra.mxu0 %v7684
        %v8093 = vpop.f32.mrf.mxu0
        %v8094 = vadd.f32 0.0, %v8093
        %v8095 = vpop.f32.mrf.mxu0
        %v8096 = vpop.f32.mrf.mxu0
        %v8097 = vadd.f32 0.0, %v8096
        %v8098 = vpop.f32.mrf.mxu0
        %8099 = vmatprep.mubr.bf16.mxu0 0
        %8100 = vmatmul.mubr.bf16.gmra.mxu0 %v7685
        %v8101 = vpop.f32.mrf.mxu0
        %v8102 = vadd.f32 0.0, %v8101
        %v8103 = vpop.f32.mrf.mxu0
        %v8104 = vpop.f32.mrf.mxu0
        %v8105 = vadd.f32 0.0, %v8104
        %v8106 = vpop.f32.mrf.mxu0
        %8107 = vmatprep.mubr.bf16.mxu0 0
        %8108 = vmatmul.mubr.bf16.gmra.mxu0 %v7686
        %v8109 = vpop.f32.mrf.mxu0
        %v8110 = vadd.f32 0.0, %v8109
        %v8111 = vpop.f32.mrf.mxu0
        %v8112 = vpop.f32.mrf.mxu0
        %v8113 = vadd.f32 0.0, %v8112
        %v8114 = vpop.f32.mrf.mxu0
        %8115 = vmatprep.mubr.bf16.mxu0 0
        %8116 = vmatmul.mubr.bf16.gmra.mxu0 %v7687
        %v8117 = vpop.f32.mrf.mxu0
        %v8118 = vadd.f32 0.0, %v8117
        %v8119 = vpop.f32.mrf.mxu0
        %v8120 = vpop.f32.mrf.mxu0
        %v8121 = vadd.f32 0.0, %v8120
        %v8122 = vpop.f32.mrf.mxu0
        %8123 = vmatprep.mubr.bf16.mxu0 0
        %8124 = vmatmul.mubr.bf16.gmra.mxu0 %v7688
        %v8125 = vpop.f32.mrf.mxu0
        %v8126 = vadd.f32 0.0, %v8125
        %v8127 = vpop.f32.mrf.mxu0
        %v8128 = vpop.f32.mrf.mxu0
        %v8129 = vadd.f32 0.0, %v8128
        %v8130 = vpop.f32.mrf.mxu0
        %8131 = vmatprep.mubr.bf16.mxu0 0
        %8132 = vmatmul.mubr.bf16.gmra.mxu0 %v7689
        %v8133 = vpop.f32.mrf.mxu0
        %v8134 = vadd.f32 0.0, %v8133
        %v8135 = vpop.f32.mrf.mxu0
        %v8136 = vpop.f32.mrf.mxu0
        %v8137 = vadd.f32 0.0, %v8136
        %v8138 = vpop.f32.mrf.mxu0
        %8139 = vmatprep.mubr.bf16.mxu0 0
        %8140 = vmatmul.mubr.bf16.gmra.mxu0 %v7690
        %v8141 = vpop.f32.mrf.mxu0
        %v8142 = vadd.f32 0.0, %v8141
        %v8143 = vpop.f32.mrf.mxu0
        %v8144 = vpop.f32.mrf.mxu0
        %v8145 = vadd.f32 0.0, %v8144
        %v8146 = vpop.f32.mrf.mxu0
        %8147 = vmatprep.mubr.bf16.mxu0 0
        %8148 = vmatmul.mubr.bf16.gmra.mxu0 %v7691
        %v8149 = vpop.f32.mrf.mxu0
        %v8150 = vadd.f32 0.0, %v8149
        %v8151 = vpop.f32.mrf.mxu0
        %v8152 = vpop.f32.mrf.mxu0
        %v8153 = vadd.f32 0.0, %v8152
        %v8154 = vpop.f32.mrf.mxu0
        %8155 = vmatprep.mubr.bf16.mxu0 0
        %8156 = vmatmul.mubr.bf16.gmra.mxu0 %v7692
        %v8157 = vpop.f32.mrf.mxu0
        %v8158 = vadd.f32 0.0, %v8157
        %v8159 = vpop.f32.mrf.mxu0
        %v8160 = vpop.f32.mrf.mxu0
        %v8161 = vadd.f32 0.0, %v8160
        %v8162 = vpop.f32.mrf.mxu0
        %8163 = vmatprep.mubr.bf16.mxu0 0
        %8164 = vmatmul.mubr.bf16.gmra.mxu0 %v7693
        %v8165 = vpop.f32.mrf.mxu0
        %v8166 = vadd.f32 0.0, %v8165
        %v8167 = vpop.f32.mrf.mxu0
        %v8168 = vpop.f32.mrf.mxu0
        %v8169 = vadd.f32 0.0, %v8168
        %v8170 = vpop.f32.mrf.mxu0
        %8171 = vmatprep.mubr.bf16.mxu0 0
        %8172 = vmatmul.mubr.bf16.gmra.mxu0 %v7694
        %v8173 = vpop.f32.mrf.mxu0
        %v8174 = vadd.f32 0.0, %v8173
        %v8175 = vpop.f32.mrf.mxu0
        %v8176 = vpop.f32.mrf.mxu0
        %v8177 = vadd.f32 0.0, %v8176
        %v8178 = vpop.f32.mrf.mxu0
        %8179 = vmatprep.mubr.bf16.mxu0 0
        %8180 = vmatmul.mubr.bf16.gmra.mxu0 %v7695
        %v8181 = vpop.f32.mrf.mxu0
        %v8182 = vadd.f32 0.0, %v8181
        %v8183 = vpop.f32.mrf.mxu0
        %v8184 = vpop.f32.mrf.mxu0
        %v8185 = vadd.f32 0.0, %v8184
        %v8186 = vpop.f32.mrf.mxu0
        %8187 = vmatprep.mubr.bf16.mxu0 0
        %8188 = vmatmul.mubr.bf16.gmra.mxu0 %v7696
        %v8189 = vpop.f32.mrf.mxu0
        %v8190 = vadd.f32 0.0, %v8189
        %v8191 = vpop.f32.mrf.mxu0
        %v8192 = vpop.f32.mrf.mxu0
        %v8193 = vadd.f32 0.0, %v8192
        %v8194 = vpop.f32.mrf.mxu0
        %8195 = vdwg.mxu0
        %s8196 = scalar_lea.vmem %s5, 128
        %v8197 = vld [vmem:[%s8196] sm:$0xf]
        %v8198 = vld [vmem:[%s8196 + $0x4] sm:$0xf]
        %v8199 = vld [vmem:[%s8196 + $0x8] sm:$0xf]
        %v8200 = vld [vmem:[%s8196 + $0xc] sm:$0xf]
        %v8201 = vld [vmem:[%s8196 + $0x10] sm:$0xf]
        %v8202 = vld [vmem:[%s8196 + $0x14] sm:$0xf]
        %v8203 = vld [vmem:[%s8196 + $0x18] sm:$0xf]
        %v8204 = vld [vmem:[%s8196 + $0x1c] sm:$0xf]
        %v8205 = vld [vmem:[%s8196 + $0x20] sm:$0xf]
        %v8206 = vld [vmem:[%s8196 + $0x24] sm:$0xf]
        %v8207 = vld [vmem:[%s8196 + $0x28] sm:$0xf]
        %v8208 = vld [vmem:[%s8196 + $0x2c] sm:$0xf]
        %v8209 = vld [vmem:[%s8196 + $0x30] sm:$0xf]
        %v8210 = vld [vmem:[%s8196 + $0x34] sm:$0xf]
        %v8211 = vld [vmem:[%s8196 + $0x38] sm:$0xf]
        %v8212 = vld [vmem:[%s8196 + $0x3c] sm:$0xf]
        %v8232 = vrot.slane %v7678, 1
        %v8233 = vrot.slane %v7679, 1
        %v8234 = vsel %vm6853, %v8232, %v8233
        %v8235 = vrot.slane %v7680, 1
        %v8236 = vsel %vm6853, %v8233, %v8235
        %v8237 = vrot.slane %v7681, 1
        %v8238 = vsel %vm6853, %v8235, %v8237
        %v8239 = vrot.slane %v7682, 1
        %v8240 = vsel %vm6853, %v8237, %v8239
        %v8241 = vrot.slane %v7683, 1
        %v8242 = vsel %vm6853, %v8239, %v8241
        %v8243 = vrot.slane %v7684, 1
        %v8244 = vsel %vm6853, %v8241, %v8243
        %v8245 = vrot.slane %v7685, 1
        %v8246 = vsel %vm6853, %v8243, %v8245
        %v8247 = vrot.slane %v7686, 1
        %v8248 = vsel %vm6853, %v8245, %v8247
        %v8249 = vrot.slane %v7687, 1
        %v8250 = vsel %vm6853, %v8247, %v8249
        %v8251 = vrot.slane %v7688, 1
        %v8252 = vsel %vm6853, %v8249, %v8251
        %v8253 = vrot.slane %v7689, 1
        %v8254 = vsel %vm6853, %v8251, %v8253
        %v8255 = vrot.slane %v7690, 1
        %v8256 = vsel %vm6853, %v8253, %v8255
        %v8257 = vrot.slane %v7691, 1
        %v8258 = vsel %vm6853, %v8255, %v8257
        %v8259 = vrot.slane %v7692, 1
        %v8260 = vsel %vm6853, %v8257, %v8259
        %v8261 = vrot.slane %v7693, 1
        %v8262 = vsel %vm6853, %v8259, %v8261
        %v8263 = vrot.slane %v7694, 1
        %v8264 = vsel %vm6853, %v8261, %v8263
        %v8265 = vrot.slane %v7695, 1
        %v8266 = vsel %vm6853, %v8263, %v8265
        %v8267 = vrot.slane %v7696, 1
        %v8268 = vsel %vm6853, %v8265, %v8267
        %v8304 = vunpack.c.l.b16 %v8197
        %v8305 = vunpack.c.l.b16 %v8198
        %v8306 = vunpack.c.l.b16 %v8199
        %v8307 = vunpack.c.l.b16 %v8200
        %v8308 = vunpack.c.l.b16 %v8201
        %v8309 = vunpack.c.l.b16 %v8202
        %v8310 = vunpack.c.l.b16 %v8203
        %v8311 = vunpack.c.l.b16 %v8204
        %v8312 = vunpack.c.l.b16 %v8205
        %v8313 = vunpack.c.l.b16 %v8206
        %v8314 = vunpack.c.l.b16 %v8207
        %v8315 = vunpack.c.l.b16 %v8208
        %v8316 = vunpack.c.l.b16 %v8209
        %v8317 = vunpack.c.l.b16 %v8210
        %v8318 = vunpack.c.l.b16 %v8211
        %v8319 = vunpack.c.l.b16 %v8212
        %v8320 = vpack.c.b16 %v8305, %v8304
        %v8321 = vpack.c.b16 %v8307, %v8306
        %v8322 = vpack.c.b16 %v8309, %v8308
        %v8323 = vpack.c.b16 %v8311, %v8310
        %v8324 = vpack.c.b16 %v8313, %v8312
        %v8325 = vpack.c.b16 %v8315, %v8314
        %v8326 = vpack.c.b16 %v8317, %v8316
        %v8327 = vpack.c.b16 %v8319, %v8318
        %8336 = vmatprep.subr.bf16.mxu0 0
        %8337 = vmatpush1.bf16.msra.mxu0 %v8327
        %8338 = vmatprep.subr.bf16.mxu0 0
        %8339 = vmatpush1.bf16.msra.mxu0 %v8326
        %8340 = vmatprep.subr.bf16.mxu0 0
        %8341 = vmatpush1.bf16.msra.mxu0 %v8325
        %8342 = vmatprep.subr.bf16.mxu0 0
        %8343 = vmatpush1.bf16.msra.mxu0 %v8324
        %8344 = vmatprep.subr.bf16.mxu0 0
        %8345 = vmatpush1.bf16.msra.mxu0 %v8323
        %8346 = vmatprep.subr.bf16.mxu0 0
        %8347 = vmatpush1.bf16.msra.mxu0 %v8322
        %8348 = vmatprep.subr.bf16.mxu0 0
        %8349 = vmatpush1.bf16.msra.mxu0 %v8321
        %8350 = vmatprep.subr.bf16.mxu0 0
        %8351 = vmatpush1.bf16.msra.mxu0 %v8320
        %8352 = vmatprep.subr.bf16.mxu0 0
        %8353 = vmatpush2.bf16.msra.mxu0 0
        %8354 = vmatprep.subr.bf16.mxu0 0
        %8355 = vmatpush2.bf16.msra.mxu0 0
        %8356 = vmatprep.subr.bf16.mxu0 0
        %8357 = vmatpush2.bf16.msra.mxu0 0
        %8358 = vmatprep.subr.bf16.mxu0 0
        %8359 = vmatpush2.bf16.msra.mxu0 0
        %8360 = vmatprep.subr.bf16.mxu0 0
        %8361 = vmatpush2.bf16.msra.mxu0 0
        %8362 = vmatprep.subr.bf16.mxu0 0
        %8363 = vmatpush2.bf16.msra.mxu0 0
        %8364 = vmatprep.subr.bf16.mxu0 0
        %8365 = vmatpush2.bf16.msra.mxu0 0
        %8366 = vmatprep.subr.bf16.mxu0 0
        %8367 = vmatpush2.bf16.msra.mxu0 0
        %8368 = vmatprep.mubr.bf16.mxu0 0
        %8369 = vmatmul.mubr.bf16.gmra.mxu0 %v8234
        %v8370 = vpop.f32.mrf.mxu0
        %v8371 = vadd.f32 0.0, %v8370
        %v8372 = vpop.f32.mrf.mxu0
        %v8373 = vpop.f32.mrf.mxu0
        %v8374 = vadd.f32 0.0, %v8373
        %v8375 = vpop.f32.mrf.mxu0
        %8376 = vmatprep.mubr.bf16.mxu0 0
        %8377 = vmatmul.mubr.bf16.gmra.mxu0 %v8236
        %v8378 = vpop.f32.mrf.mxu0
        %v8379 = vadd.f32 0.0, %v8378
        %v8380 = vpop.f32.mrf.mxu0
        %v8381 = vpop.f32.mrf.mxu0
        %v8382 = vadd.f32 0.0, %v8381
        %v8383 = vpop.f32.mrf.mxu0
        %8384 = vmatprep.mubr.bf16.mxu0 0
        %8385 = vmatmul.mubr.bf16.gmra.mxu0 %v8238
        %v8386 = vpop.f32.mrf.mxu0
        %v8387 = vadd.f32 0.0, %v8386
        %v8388 = vpop.f32.mrf.mxu0
        %v8389 = vpop.f32.mrf.mxu0
        %v8390 = vadd.f32 0.0, %v8389
        %v8391 = vpop.f32.mrf.mxu0
        %8392 = vmatprep.mubr.bf16.mxu0 0
        %8393 = vmatmul.mubr.bf16.gmra.mxu0 %v8240
        %v8394 = vpop.f32.mrf.mxu0
        %v8395 = vadd.f32 0.0, %v8394
        %v8396 = vpop.f32.mrf.mxu0
        %v8397 = vpop.f32.mrf.mxu0
        %v8398 = vadd.f32 0.0, %v8397
        %v8399 = vpop.f32.mrf.mxu0
        %8400 = vmatprep.mubr.bf16.mxu0 0
        %8401 = vmatmul.mubr.bf16.gmra.mxu0 %v8242
        %v8402 = vpop.f32.mrf.mxu0
        %v8403 = vadd.f32 0.0, %v8402
        %v8404 = vpop.f32.mrf.mxu0
        %v8405 = vpop.f32.mrf.mxu0
        %v8406 = vadd.f32 0.0, %v8405
        %v8407 = vpop.f32.mrf.mxu0
        %8408 = vmatprep.mubr.bf16.mxu0 0
        %8409 = vmatmul.mubr.bf16.gmra.mxu0 %v8244
        %v8410 = vpop.f32.mrf.mxu0
        %v8411 = vadd.f32 0.0, %v8410
        %v8412 = vpop.f32.mrf.mxu0
        %v8413 = vpop.f32.mrf.mxu0
        %v8414 = vadd.f32 0.0, %v8413
        %v8415 = vpop.f32.mrf.mxu0
        %8416 = vmatprep.mubr.bf16.mxu0 0
        %8417 = vmatmul.mubr.bf16.gmra.mxu0 %v8246
        %v8418 = vpop.f32.mrf.mxu0
        %v8419 = vadd.f32 0.0, %v8418
        %v8420 = vpop.f32.mrf.mxu0
        %v8421 = vpop.f32.mrf.mxu0
        %v8422 = vadd.f32 0.0, %v8421
        %v8423 = vpop.f32.mrf.mxu0
        %8424 = vmatprep.mubr.bf16.mxu0 0
        %8425 = vmatmul.mubr.bf16.gmra.mxu0 %v8248
        %v8426 = vpop.f32.mrf.mxu0
        %v8427 = vadd.f32 0.0, %v8426
        %v8428 = vpop.f32.mrf.mxu0
        %v8429 = vpop.f32.mrf.mxu0
        %v8430 = vadd.f32 0.0, %v8429
        %v8431 = vpop.f32.mrf.mxu0
        %8432 = vmatprep.mubr.bf16.mxu0 0
        %8433 = vmatmul.mubr.bf16.gmra.mxu0 %v8250
        %v8434 = vpop.f32.mrf.mxu0
        %v8435 = vadd.f32 0.0, %v8434
        %v8436 = vpop.f32.mrf.mxu0
        %v8437 = vpop.f32.mrf.mxu0
        %v8438 = vadd.f32 0.0, %v8437
        %v8439 = vpop.f32.mrf.mxu0
        %8440 = vmatprep.mubr.bf16.mxu0 0
        %8441 = vmatmul.mubr.bf16.gmra.mxu0 %v8252
        %v8442 = vpop.f32.mrf.mxu0
        %v8443 = vadd.f32 0.0, %v8442
        %v8444 = vpop.f32.mrf.mxu0
        %v8445 = vpop.f32.mrf.mxu0
        %v8446 = vadd.f32 0.0, %v8445
        %v8447 = vpop.f32.mrf.mxu0
        %8448 = vmatprep.mubr.bf16.mxu0 0
        %8449 = vmatmul.mubr.bf16.gmra.mxu0 %v8254
        %v8450 = vpop.f32.mrf.mxu0
        %v8451 = vadd.f32 0.0, %v8450
        %v8452 = vpop.f32.mrf.mxu0
        %v8453 = vpop.f32.mrf.mxu0
        %v8454 = vadd.f32 0.0, %v8453
        %v8455 = vpop.f32.mrf.mxu0
        %8456 = vmatprep.mubr.bf16.mxu0 0
        %8457 = vmatmul.mubr.bf16.gmra.mxu0 %v8256
        %v8458 = vpop.f32.mrf.mxu0
        %v8459 = vadd.f32 0.0, %v8458
        %v8460 = vpop.f32.mrf.mxu0
        %v8461 = vpop.f32.mrf.mxu0
        %v8462 = vadd.f32 0.0, %v8461
        %v8463 = vpop.f32.mrf.mxu0
        %8464 = vmatprep.mubr.bf16.mxu0 0
        %8465 = vmatmul.mubr.bf16.gmra.mxu0 %v8258
        %v8466 = vpop.f32.mrf.mxu0
        %v8467 = vadd.f32 0.0, %v8466
        %v8468 = vpop.f32.mrf.mxu0
        %v8469 = vpop.f32.mrf.mxu0
        %v8470 = vadd.f32 0.0, %v8469
        %v8471 = vpop.f32.mrf.mxu0
        %8472 = vmatprep.mubr.bf16.mxu0 0
        %8473 = vmatmul.mubr.bf16.gmra.mxu0 %v8260
        %v8474 = vpop.f32.mrf.mxu0
        %v8475 = vadd.f32 0.0, %v8474
        %v8476 = vpop.f32.mrf.mxu0
        %v8477 = vpop.f32.mrf.mxu0
        %v8478 = vadd.f32 0.0, %v8477
        %v8479 = vpop.f32.mrf.mxu0
        %8480 = vmatprep.mubr.bf16.mxu0 0
        %8481 = vmatmul.mubr.bf16.gmra.mxu0 %v8262
        %v8482 = vpop.f32.mrf.mxu0
        %v8483 = vadd.f32 0.0, %v8482
        %v8484 = vpop.f32.mrf.mxu0
        %v8485 = vpop.f32.mrf.mxu0
        %v8486 = vadd.f32 0.0, %v8485
        %v8487 = vpop.f32.mrf.mxu0
        %8488 = vmatprep.mubr.bf16.mxu0 0
        %8489 = vmatmul.mubr.bf16.gmra.mxu0 %v8264
        %v8490 = vpop.f32.mrf.mxu0
        %v8491 = vadd.f32 0.0, %v8490
        %v8492 = vpop.f32.mrf.mxu0
        %v8493 = vpop.f32.mrf.mxu0
        %v8494 = vadd.f32 0.0, %v8493
        %v8495 = vpop.f32.mrf.mxu0
        %8496 = vmatprep.mubr.bf16.mxu0 0
        %8497 = vmatmul.mubr.bf16.gmra.mxu0 %v8266
        %v8498 = vpop.f32.mrf.mxu0
        %v8499 = vadd.f32 0.0, %v8498
        %v8500 = vpop.f32.mrf.mxu0
        %v8501 = vpop.f32.mrf.mxu0
        %v8502 = vadd.f32 0.0, %v8501
        %v8503 = vpop.f32.mrf.mxu0
        %8504 = vmatprep.mubr.bf16.mxu0 0
        %8505 = vmatmul.mubr.bf16.gmra.mxu0 %v8268
        %v8506 = vpop.f32.mrf.mxu0
        %v8507 = vadd.f32 0.0, %v8506
        %v8508 = vpop.f32.mrf.mxu0
        %v8509 = vpop.f32.mrf.mxu0
        %v8510 = vadd.f32 0.0, %v8509
        %v8511 = vpop.f32.mrf.mxu0
        %8512 = vmatprep.mubr.bf16.mxu0 0
        %8513 = vmatmul.mubr.bf16.gmra.mxu0 %v8267
        %v8514 = vpop.f32.mrf.mxu0
        %v8515 = vadd.f32 0.0, %v8514
        %v8516 = vpop.f32.mrf.mxu0
        %v8517 = vpop.f32.mrf.mxu0
        %v8518 = vadd.f32 0.0, %v8517
        %v8519 = vpop.f32.mrf.mxu0
        %8520 = vdwg.mxu0
        %v8521 = vadd.f32 %v7797, %v8371
        %8522 = vst [vmem:[#allocation4] sm:$0x3] %v8521
        %v8560 = vrot.slane %v8046, 6
        %v8561 = vrot.slane %v8049, 6
        %v8562 = vsel %vm7286, %v8560, %v8561
        %v8563 = vrot.slane %v8054, 6
        %v8564 = vsel %vm7286, %v8561, %v8563
        %v8565 = vrot.slane %v8057, 6
        %v8566 = vsel %vm7286, %v8563, %v8565
        %v8567 = vrot.slane %v8062, 6
        %v8568 = vsel %vm7286, %v8565, %v8567
        %v8569 = vrot.slane %v8065, 6
        %v8570 = vsel %vm7286, %v8567, %v8569
        %v8571 = vrot.slane %v8070, 6
        %v8572 = vsel %vm7286, %v8569, %v8571
        %v8573 = vrot.slane %v8073, 6
        %v8574 = vsel %vm7286, %v8571, %v8573
        %v8575 = vrot.slane %v8078, 6
        %v8576 = vsel %vm7286, %v8573, %v8575
        %v8577 = vrot.slane %v8081, 6
        %v8578 = vsel %vm7286, %v8575, %v8577
        %v8579 = vrot.slane %v8086, 6
        %v8580 = vsel %vm7286, %v8577, %v8579
        %v8581 = vrot.slane %v8089, 6
        %v8582 = vsel %vm7286, %v8579, %v8581
        %v8583 = vrot.slane %v8094, 6
        %v8584 = vsel %vm7286, %v8581, %v8583
        %v8585 = vrot.slane %v8097, 6
        %v8586 = vsel %vm7286, %v8583, %v8585
        %v8587 = vrot.slane %v8102, 6
        %v8588 = vsel %vm7286, %v8585, %v8587
        %v8589 = vrot.slane %v8105, 6
        %v8590 = vsel %vm7286, %v8587, %v8589
        %v8591 = vrot.slane %v8110, 6
        %v8592 = vsel %vm7286, %v8589, %v8591
        %v8593 = vrot.slane %v8113, 6
        %v8594 = vsel %vm7286, %v8591, %v8593
        %v8595 = vrot.slane %v8118, 6
        %v8596 = vsel %vm7286, %v8593, %v8595
        %v8597 = vrot.slane %v8121, 6
        %v8598 = vsel %vm7286, %v8595, %v8597
        %v8599 = vrot.slane %v8126, 6
        %v8600 = vsel %vm7286, %v8597, %v8599
        %v8601 = vrot.slane %v8129, 6
        %v8602 = vsel %vm7286, %v8599, %v8601
        %v8603 = vrot.slane %v8134, 6
        %v8604 = vsel %vm7286, %v8601, %v8603
        %v8605 = vrot.slane %v8137, 6
        %v8606 = vsel %vm7286, %v8603, %v8605
        %v8607 = vrot.slane %v8142, 6
        %v8608 = vsel %vm7286, %v8605, %v8607
        %v8609 = vrot.slane %v8145, 6
        %v8610 = vsel %vm7286, %v8607, %v8609
        %v8611 = vrot.slane %v8150, 6
        %v8612 = vsel %vm7286, %v8609, %v8611
        %v8613 = vrot.slane %v8153, 6
        %v8614 = vsel %vm7286, %v8611, %v8613
        %v8615 = vrot.slane %v8158, 6
        %v8616 = vsel %vm7286, %v8613, %v8615
        %v8617 = vrot.slane %v8161, 6
        %v8618 = vsel %vm7286, %v8615, %v8617
        %v8619 = vrot.slane %v8166, 6
        %v8620 = vsel %vm7286, %v8617, %v8619
        %v8621 = vrot.slane %v8169, 6
        %v8622 = vsel %vm7286, %v8619, %v8621
        %v8623 = vrot.slane %v8174, 6
        %v8624 = vsel %vm7286, %v8621, %v8623
        %v8625 = vrot.slane %v8177, 6
        %v8626 = vsel %vm7286, %v8623, %v8625
        %v8627 = vrot.slane %v8182, 6
        %v8628 = vsel %vm7286, %v8625, %v8627
        %v8629 = vrot.slane %v8185, 6
        %v8630 = vsel %vm7286, %v8627, %v8629
        %v8631 = vrot.slane %v8190, 6
        %v8632 = vsel %vm7286, %v8629, %v8631
        %v8671 = vadd.f32 %v7797, %v8560
        %v8672 = vadd.f32 %v7800, %v8562
        %v8673 = vadd.f32 %v7805, %v8564
        %v8674 = vadd.f32 %v7808, %v8566
        %v8675 = vadd.f32 %v7813, %v8568
        %v8676 = vadd.f32 %v7816, %v8570
        %v8677 = vadd.f32 %v7821, %v8572
        %v8678 = vadd.f32 %v7824, %v8574
        %v8679 = vadd.f32 %v7829, %v8576
        %v8680 = vadd.f32 %v7832, %v8578
        %v8681 = vadd.f32 %v7837, %v8580
        %v8682 = vadd.f32 %v7840, %v8582
        %v8683 = vadd.f32 %v7845, %v8584
        %v8684 = vadd.f32 %v7848, %v8586
        %v8685 = vadd.f32 %v7853, %v8588
        %v8686 = vadd.f32 %v7856, %v8590
        %v8687 = vadd.f32 %v7861, %v8592
        %v8688 = vadd.f32 %v7864, %v8594
        %v8689 = vadd.f32 %v7869, %v8596
        %v8690 = vadd.f32 %v7872, %v8598
        %v8691 = vadd.f32 %v7877, %v8600
        %v8692 = vadd.f32 %v7880, %v8602
        %v8693 = vadd.f32 %v7885, %v8604
        %v8694 = vadd.f32 %v7888, %v8606
        %v8695 = vadd.f32 %v7893, %v8608
        %v8696 = vadd.f32 %v7896, %v8610
        %v8697 = vadd.f32 %v7901, %v8612
        %v8698 = vadd.f32 %v7904, %v8614
        %v8699 = vadd.f32 %v7909, %v8616
        %v8700 = vadd.f32 %v7912, %v8618
        %v8701 = vadd.f32 %v7917, %v8620
        %v8702 = vadd.f32 %v7920, %v8622
        %v8703 = vadd.f32 %v7925, %v8624
        %v8704 = vadd.f32 %v7928, %v8626
        %v8705 = vadd.f32 %v7933, %v8628
        %v8706 = vadd.f32 %v7936, %v8630
        %v8707 = vadd.f32 %v7941, %v8632
        %v8708 = vadd.f32 %v7944, %v8631
        %v8709 = vadd.f32 %v8671, %v8371
        %v8710 = vadd.f32 %v8672, %v8374
        %v8711 = vadd.f32 %v8673, %v8379
        %v8712 = vadd.f32 %v8674, %v8382
        %v8713 = vadd.f32 %v8675, %v8387
        %v8714 = vadd.f32 %v8676, %v8390
        %v8715 = vadd.f32 %v8677, %v8395
        %v8716 = vadd.f32 %v8678, %v8398
        %v8717 = vadd.f32 %v8679, %v8403
        %v8718 = vadd.f32 %v8680, %v8406
        %v8719 = vadd.f32 %v8681, %v8411
        %v8720 = vadd.f32 %v8682, %v8414
        %v8721 = vadd.f32 %v8683, %v8419
        %v8722 = vadd.f32 %v8684, %v8422
        %v8723 = vadd.f32 %v8685, %v8427
        %v8724 = vadd.f32 %v8686, %v8430
        %v8725 = vadd.f32 %v8687, %v8435
        %v8726 = vadd.f32 %v8688, %v8438
        %v8727 = vadd.f32 %v8689, %v8443
        %v8728 = vadd.f32 %v8690, %v8446
        %v8729 = vadd.f32 %v8691, %v8451
        %v8730 = vadd.f32 %v8692, %v8454
        %v8731 = vadd.f32 %v8693, %v8459
        %v8732 = vadd.f32 %v8694, %v8462
        %v8733 = vadd.f32 %v8695, %v8467
        %v8734 = vadd.f32 %v8696, %v8470
        %v8735 = vadd.f32 %v8697, %v8475
        %v8736 = vadd.f32 %v8698, %v8478
        %v8737 = vadd.f32 %v8699, %v8483
        %v8738 = vadd.f32 %v8700, %v8486
        %v8739 = vadd.f32 %v8701, %v8491
        %v8740 = vadd.f32 %v8702, %v8494
        %v8741 = vadd.f32 %v8703, %v8499
        %v8742 = vadd.f32 %v8704, %v8502
        %v8743 = vadd.f32 %v8705, %v8507
        %v8744 = vadd.f32 %v8706, %v8510
        %v8745 = vadd.f32 %v8707, %v8515
        %v8746 = vadd.f32 %v8708, %v8518
        %8747 = vst [vmem:[#allocation4] sm:$0xfc] %v8709
        %8748 = vst [vmem:[#allocation4 + $0x8] sm:$0xff] %v8710
        %8749 = vst [vmem:[#allocation4 + $0x10] sm:$0xff] %v8711
        %8750 = vst [vmem:[#allocation4 + $0x18] sm:$0xff] %v8712
        %8751 = vst [vmem:[#allocation4 + $0x20] sm:$0xff] %v8713
        %8752 = vst [vmem:[#allocation4 + $0x28] sm:$0xff] %v8714
        %8753 = vst [vmem:[#allocation4 + $0x30] sm:$0xff] %v8715
        %8754 = vst [vmem:[#allocation4 + $0x38] sm:$0xff] %v8716
        %8755 = vst [vmem:[#allocation4 + $0x40] sm:$0xff] %v8717
        %8756 = vst [vmem:[#allocation4 + $0x48] sm:$0xff] %v8718
        %8757 = vst [vmem:[#allocation4 + $0x50] sm:$0xff] %v8719
        %8758 = vst [vmem:[#allocation4 + $0x58] sm:$0xff] %v8720
        %8759 = vst [vmem:[#allocation4 + $0x60] sm:$0xff] %v8721
        %8760 = vst [vmem:[#allocation4 + $0x68] sm:$0xff] %v8722
        %8761 = vst [vmem:[#allocation4 + $0x70] sm:$0xff] %v8723
        %8762 = vst [vmem:[#allocation4 + $0x78] sm:$0xff] %v8724
        %8763 = vst [vmem:[#allocation4 + $0x80] sm:$0xff] %v8725
        %8764 = vst [vmem:[#allocation4 + $0x88] sm:$0xff] %v8726
        %8765 = vst [vmem:[#allocation4 + $0x90] sm:$0xff] %v8727
        %8766 = vst [vmem:[#allocation4 + $0x98] sm:$0xff] %v8728
        %8767 = vst [vmem:[#allocation4 + $0xa0] sm:$0xff] %v8729
        %8768 = vst [vmem:[#allocation4 + $0xa8] sm:$0xff] %v8730
        %8769 = vst [vmem:[#allocation4 + $0xb0] sm:$0xff] %v8731
        %8770 = vst [vmem:[#allocation4 + $0xb8] sm:$0xff] %v8732
        %8771 = vst [vmem:[#allocation4 + $0xc0] sm:$0xff] %v8733
        %8772 = vst [vmem:[#allocation4 + $0xc8] sm:$0xff] %v8734
        %8773 = vst [vmem:[#allocation4 + $0xd0] sm:$0xff] %v8735
        %8774 = vst [vmem:[#allocation4 + $0xd8] sm:$0xff] %v8736
        %8775 = vst [vmem:[#allocation4 + $0xe0] sm:$0xff] %v8737
        %8776 = vst [vmem:[#allocation4 + $0xe8] sm:$0xff] %v8738
        %8777 = vst [vmem:[#allocation4 + $0xf0] sm:$0xff] %v8739
        %8778 = vst [vmem:[#allocation4 + $0xf8] sm:$0xff] %v8740
        %8779 = vst [vmem:[#allocation4 + $0x100] sm:$0xff] %v8741
        %8780 = vst [vmem:[#allocation4 + $0x108] sm:$0xff] %v8742
        %8781 = vst [vmem:[#allocation4 + $0x110] sm:$0xff] %v8743
        %8782 = vst [vmem:[#allocation4 + $0x118] sm:$0xff] %v8744
        %8783 = vst [vmem:[#allocation4 + $0x120] sm:$0xff] %v8745
        %8784 = vst [vmem:[#allocation4 + $0x128] sm:$0x3] %v8746
        %v8786 = vrot.slane %v8193, 6
        %v8788 = vadd.f32 %v7944, %v8786
        %8789 = vst [vmem:[#allocation4 + $0x128] sm:$0xc] %v8788
        %v8790 = vld [vmem:[%s6] sm:$0x3]
        %v8791 = vld [vmem:[#allocation4] ss:$2 sm:$0xff]
        %s8792 = scalar_lea.vmem [#allocation4], 16
        %v8793 = vld [vmem:[%s8792] ss:$2 sm:$0xff]
        %s8794 = scalar_lea.vmem [#allocation4], 32
        %v8795 = vld [vmem:[%s8794] ss:$2 sm:$0xff]
        %s8796 = scalar_lea.vmem [#allocation4], 48
        %v8797 = vld [vmem:[%s8796] ss:$2 sm:$0xff]
        %s8798 = scalar_lea.vmem [#allocation4], 64
        %v8799 = vld [vmem:[%s8798] ss:$2 sm:$0xff]
        %s8800 = scalar_lea.vmem [#allocation4], 80
        %v8801 = vld [vmem:[%s8800] ss:$2 sm:$0xff]
        %s8802 = scalar_lea.vmem [#allocation4], 96
        %v8803 = vld [vmem:[%s8802] ss:$2 sm:$0xff]
        %s8804 = scalar_lea.vmem [#allocation4], 112
        %v8805 = vld [vmem:[%s8804] ss:$2 sm:$0xff]
        %s8806 = scalar_lea.vmem [#allocation4], 128
        %v8807 = vld [vmem:[%s8806] ss:$2 sm:$0xff]
        %s8808 = scalar_lea.vmem [#allocation4], 144
        %v8809 = vld [vmem:[%s8808] ss:$2 sm:$0xff]
        %s8810 = scalar_lea.vmem [#allocation4], 160
        %v8811 = vld [vmem:[%s8810] ss:$2 sm:$0xff]
        %s8812 = scalar_lea.vmem [#allocation4], 176
        %v8813 = vld [vmem:[%s8812] ss:$2 sm:$0xff]
        %s8814 = scalar_lea.vmem [#allocation4], 192
        %v8815 = vld [vmem:[%s8814] ss:$2 sm:$0xff]
        %s8816 = scalar_lea.vmem [#allocation4], 208
        %v8817 = vld [vmem:[%s8816] ss:$2 sm:$0xff]
        %s8818 = scalar_lea.vmem [#allocation4], 224
        %v8819 = vld [vmem:[%s8818] ss:$2 sm:$0xff]
        %s8820 = scalar_lea.vmem [#allocation4], 240
        %v8821 = vld [vmem:[%s8820] ss:$2 sm:$0xff]
        %s8822 = scalar_lea.vmem [#allocation4], 256
        %v8823 = vld [vmem:[%s8822] ss:$2 sm:$0xff]
        %s8824 = scalar_lea.vmem [#allocation4], 272
        %v8825 = vld [vmem:[%s8824] ss:$2 sm:$0xff]
        %s8826 = scalar_lea.vmem [#allocation4], 288
        %v8827 = vld [vmem:[%s8826] ss:$2 sm:$0x3f]
        %s8828 = scalar_lea.vmem [#allocation4], 1
        %v8829 = vld [vmem:[%s8828] ss:$2 sm:$0xff]
        %s8830 = scalar_lea.vmem [#allocation4], 17
        %v8831 = vld [vmem:[%s8830] ss:$2 sm:$0xff]
        %s8832 = scalar_lea.vmem [#allocation4], 33
        %v8833 = vld [vmem:[%s8832] ss:$2 sm:$0xff]
        %s8834 = scalar_lea.vmem [#allocation4], 49
        %v8835 = vld [vmem:[%s8834] ss:$2 sm:$0xff]
        %s8836 = scalar_lea.vmem [#allocation4], 65
        %v8837 = vld [vmem:[%s8836] ss:$2 sm:$0xff]
        %s8838 = scalar_lea.vmem [#allocation4], 81
        %v8839 = vld [vmem:[%s8838] ss:$2 sm:$0xff]
        %s8840 = scalar_lea.vmem [#allocation4], 97
        %v8841 = vld [vmem:[%s8840] ss:$2 sm:$0xff]
        %s8842 = scalar_lea.vmem [#allocation4], 113
        %v8843 = vld [vmem:[%s8842] ss:$2 sm:$0xff]
        %s8844 = scalar_lea.vmem [#allocation4], 129
        %v8845 = vld [vmem:[%s8844] ss:$2 sm:$0xff]
        %s8846 = scalar_lea.vmem [#allocation4], 145
        %v8847 = vld [vmem:[%s8846] ss:$2 sm:$0xff]
        %s8848 = scalar_lea.vmem [#allocation4], 161
        %v8849 = vld [vmem:[%s8848] ss:$2 sm:$0xff]
        %s8850 = scalar_lea.vmem [#allocation4], 177
        %v8851 = vld [vmem:[%s8850] ss:$2 sm:$0xff]
        %s8852 = scalar_lea.vmem [#allocation4], 193
        %v8853 = vld [vmem:[%s8852] ss:$2 sm:$0xff]
        %s8854 = scalar_lea.vmem [#allocation4], 209
        %v8855 = vld [vmem:[%s8854] ss:$2 sm:$0xff]
        %s8856 = scalar_lea.vmem [#allocation4], 225
        %v8857 = vld [vmem:[%s8856] ss:$2 sm:$0xff]
        %s8858 = scalar_lea.vmem [#allocation4], 241
        %v8859 = vld [vmem:[%s8858] ss:$2 sm:$0xff]
        %s8860 = scalar_lea.vmem [#allocation4], 257
        %v8861 = vld [vmem:[%s8860] ss:$2 sm:$0xff]
        %s8862 = scalar_lea.vmem [#allocation4], 273
        %v8863 = vld [vmem:[%s8862] ss:$2 sm:$0xff]
        %s8864 = scalar_lea.vmem [#allocation4], 289
        %v8865 = vld [vmem:[%s8864] ss:$2 sm:$0x3f]
        %v8866 = vlaneseq
        %v8867 = vshrl.u32 %v8866, 7
        %v8868 = vsub.s32 0, %v8867
        %v8869 = vrot.slane %v8790, %v8868
        %v8870 = vmul.f32 %v8791, %v8869
        %v8871 = vmul.f32 %v8793, %v8869
        %v8872 = vmul.f32 %v8795, %v8869
        %v8873 = vmul.f32 %v8797, %v8869
        %v8874 = vmul.f32 %v8799, %v8869
        %v8875 = vmul.f32 %v8801, %v8869
        %v8876 = vmul.f32 %v8803, %v8869
        %v8877 = vmul.f32 %v8805, %v8869
        %v8878 = vmul.f32 %v8807, %v8869
        %v8879 = vmul.f32 %v8809, %v8869
        %v8880 = vmul.f32 %v8811, %v8869
        %v8881 = vmul.f32 %v8813, %v8869
        %v8882 = vmul.f32 %v8815, %v8869
        %v8883 = vmul.f32 %v8817, %v8869
        %v8884 = vmul.f32 %v8819, %v8869
        %v8885 = vmul.f32 %v8821, %v8869
        %v8886 = vmul.f32 %v8823, %v8869
        %v8887 = vmul.f32 %v8825, %v8869
        %v8888 = vmul.f32 %v8827, %v8869
        %v8889 = vlaneseq
        %v8890 = vshrl.u32 %v8889, 7
        %v8891 = vsub.s32 1, %v8890
        %v8892 = vrot.slane %v8790, %v8891
        %v8893 = vadd.f32 %v8870, %v8892
        %v8894 = vadd.f32 %v8871, %v8892
        %v8895 = vadd.f32 %v8872, %v8892
        %v8896 = vadd.f32 %v8873, %v8892
        %v8897 = vadd.f32 %v8874, %v8892
        %v8898 = vadd.f32 %v8875, %v8892
        %v8899 = vadd.f32 %v8876, %v8892
        %v8900 = vadd.f32 %v8877, %v8892
        %v8901 = vadd.f32 %v8878, %v8892
        %v8902 = vadd.f32 %v8879, %v8892
        %v8903 = vadd.f32 %v8880, %v8892
        %v8904 = vadd.f32 %v8881, %v8892
        %v8905 = vadd.f32 %v8882, %v8892
        %v8906 = vadd.f32 %v8883, %v8892
        %v8907 = vadd.f32 %v8884, %v8892
        %v8908 = vadd.f32 %v8885, %v8892
        %v8909 = vadd.f32 %v8886, %v8892
        %v8910 = vadd.f32 %v8887, %v8892
        %v8911 = vadd.f32 %v8888, %v8892
        %v8912 = vmax.f32 %v8893, 0.0
        %v8913 = vmax.f32 %v8894, 0.0
        %v8914 = vmax.f32 %v8895, 0.0
        %v8915 = vmax.f32 %v8896, 0.0
        %v8916 = vmax.f32 %v8897, 0.0
        %v8917 = vmax.f32 %v8898, 0.0
        %v8918 = vmax.f32 %v8899, 0.0
        %v8919 = vmax.f32 %v8900, 0.0
        %v8920 = vmax.f32 %v8901, 0.0
        %v8921 = vmax.f32 %v8902, 0.0
        %v8922 = vmax.f32 %v8903, 0.0
        %v8923 = vmax.f32 %v8904, 0.0
        %v8924 = vmax.f32 %v8905, 0.0
        %v8925 = vmax.f32 %v8906, 0.0
        %v8926 = vmax.f32 %v8907, 0.0
        %v8927 = vmax.f32 %v8908, 0.0
        %v8928 = vmax.f32 %v8909, 0.0
        %v8929 = vmax.f32 %v8910, 0.0
        %v8930 = vmax.f32 %v8911, 0.0
        %v8931 = vmul.f32 %v8829, %v8869
        %v8932 = vmul.f32 %v8831, %v8869
        %v8933 = vmul.f32 %v8833, %v8869
        %v8934 = vmul.f32 %v8835, %v8869
        %v8935 = vmul.f32 %v8837, %v8869
        %v8936 = vmul.f32 %v8839, %v8869
        %v8937 = vmul.f32 %v8841, %v8869
        %v8938 = vmul.f32 %v8843, %v8869
        %v8939 = vmul.f32 %v8845, %v8869
        %v8940 = vmul.f32 %v8847, %v8869
        %v8941 = vmul.f32 %v8849, %v8869
        %v8942 = vmul.f32 %v8851, %v8869
        %v8943 = vmul.f32 %v8853, %v8869
        %v8944 = vmul.f32 %v8855, %v8869
        %v8945 = vmul.f32 %v8857, %v8869
        %v8946 = vmul.f32 %v8859, %v8869
        %v8947 = vmul.f32 %v8861, %v8869
        %v8948 = vmul.f32 %v8863, %v8869
        %v8949 = vmul.f32 %v8865, %v8869
        %v8950 = vadd.f32 %v8931, %v8892
        %v8951 = vadd.f32 %v8932, %v8892
        %v8952 = vadd.f32 %v8933, %v8892
        %v8953 = vadd.f32 %v8934, %v8892
        %v8954 = vadd.f32 %v8935, %v8892
        %v8955 = vadd.f32 %v8936, %v8892
        %v8956 = vadd.f32 %v8937, %v8892
        %v8957 = vadd.f32 %v8938, %v8892
        %v8958 = vadd.f32 %v8939, %v8892
        %v8959 = vadd.f32 %v8940, %v8892
        %v8960 = vadd.f32 %v8941, %v8892
        %v8961 = vadd.f32 %v8942, %v8892
        %v8962 = vadd.f32 %v8943, %v8892
        %v8963 = vadd.f32 %v8944, %v8892
        %v8964 = vadd.f32 %v8945, %v8892
        %v8965 = vadd.f32 %v8946, %v8892
        %v8966 = vadd.f32 %v8947, %v8892
        %v8967 = vadd.f32 %v8948, %v8892
        %v8968 = vadd.f32 %v8949, %v8892
        %v8969 = vmax.f32 %v8950, 0.0
        %v8970 = vmax.f32 %v8951, 0.0
        %v8971 = vmax.f32 %v8952, 0.0
        %v8972 = vmax.f32 %v8953, 0.0
        %v8973 = vmax.f32 %v8954, 0.0
        %v8974 = vmax.f32 %v8955, 0.0
        %v8975 = vmax.f32 %v8956, 0.0
        %v8976 = vmax.f32 %v8957, 0.0
        %v8977 = vmax.f32 %v8958, 0.0
        %v8978 = vmax.f32 %v8959, 0.0
        %v8979 = vmax.f32 %v8960, 0.0
        %v8980 = vmax.f32 %v8961, 0.0
        %v8981 = vmax.f32 %v8962, 0.0
        %v8982 = vmax.f32 %v8963, 0.0
        %v8983 = vmax.f32 %v8964, 0.0
        %v8984 = vmax.f32 %v8965, 0.0
        %v8985 = vmax.f32 %v8966, 0.0
        %v8986 = vmax.f32 %v8967, 0.0
        %v8987 = vmax.f32 %v8968, 0.0
        %v8988 = vmax.f32 %v8912, %v8969
        %v8989 = vmax.f32 %v8913, %v8970
        %v8990 = vmax.f32 %v8914, %v8971
        %v8991 = vmax.f32 %v8915, %v8972
        %v8992 = vmax.f32 %v8916, %v8973
        %v8993 = vmax.f32 %v8917, %v8974
        %v8994 = vmax.f32 %v8918, %v8975
        %v8995 = vmax.f32 %v8919, %v8976
        %v8996 = vmax.f32 %v8920, %v8977
        %v8997 = vmax.f32 %v8921, %v8978
        %v8998 = vmax.f32 %v8922, %v8979
        %v8999 = vmax.f32 %v8923, %v8980
        %v9000 = vmax.f32 %v8924, %v8981
        %v9001 = vmax.f32 %v8925, %v8982
        %v9002 = vmax.f32 %v8926, %v8983
        %v9003 = vmax.f32 %v8927, %v8984
        %v9004 = vmax.f32 %v8928, %v8985
        %v9005 = vmax.f32 %v8929, %v8986
        %v9006 = vmax.f32 %v8930, %v8987
        %v9007 = vpack.c.bf16 %v8989, %v8988
        %v9008 = vpack.c.bf16 %v8991, %v8990
        %v9009 = vpack.c.bf16 %v8993, %v8992
        %v9010 = vpack.c.bf16 %v8995, %v8994
        %v9011 = vpack.c.bf16 %v8997, %v8996
        %v9012 = vpack.c.bf16 %v8999, %v8998
        %v9013 = vpack.c.bf16 %v9001, %v9000
        %v9014 = vpack.c.bf16 %v9003, %v9002
        %v9015 = vpack.c.bf16 %v9005, %v9004
        %v9016 = vpack.c.bf16 %v9006, %v9006
        %s9017 = scalar_lea.vmem %s7, 64
        %v9018 = vld [vmem:[%s9017] sm:$0xf]
        %v9019 = vld [vmem:[%s9017 + $0x4] sm:$0xf]
        %v9020 = vld [vmem:[%s9017 + $0x8] sm:$0xf]
        %v9021 = vld [vmem:[%s9017 + $0xc] sm:$0xf]
        %v9022 = vld [vmem:[%s9017 + $0x10] sm:$0xf]
        %v9023 = vld [vmem:[%s9017 + $0x14] sm:$0xf]
        %v9024 = vld [vmem:[%s9017 + $0x18] sm:$0xf]
        %v9025 = vld [vmem:[%s9017 + $0x1c] sm:$0xf]
        %v9026 = vld [vmem:[%s9017 + $0x20] sm:$0xf]
        %v9027 = vld [vmem:[%s9017 + $0x24] sm:$0xf]
        %v9028 = vld [vmem:[%s9017 + $0x28] sm:$0xf]
        %v9029 = vld [vmem:[%s9017 + $0x2c] sm:$0xf]
        %v9030 = vld [vmem:[%s9017 + $0x30] sm:$0xf]
        %v9031 = vld [vmem:[%s9017 + $0x34] sm:$0xf]
        %v9032 = vld [vmem:[%s9017 + $0x38] sm:$0xf]
        %v9033 = vld [vmem:[%s9017 + $0x3c] sm:$0xf]
        %v9050 = vunpack.c.l.b16 %v9018
        %v9051 = vunpack.c.l.b16 %v9019
        %v9052 = vunpack.c.l.b16 %v9020
        %v9053 = vunpack.c.l.b16 %v9021
        %v9054 = vunpack.c.l.b16 %v9022
        %v9055 = vunpack.c.l.b16 %v9023
        %v9056 = vunpack.c.l.b16 %v9024
        %v9057 = vunpack.c.l.b16 %v9025
        %v9058 = vunpack.c.l.b16 %v9026
        %v9059 = vunpack.c.l.b16 %v9027
        %v9060 = vunpack.c.l.b16 %v9028
        %v9061 = vunpack.c.l.b16 %v9029
        %v9062 = vunpack.c.l.b16 %v9030
        %v9063 = vunpack.c.l.b16 %v9031
        %v9064 = vunpack.c.l.b16 %v9032
        %v9065 = vunpack.c.l.b16 %v9033
        %v9066 = vpack.c.b16 %v9051, %v9050
        %v9067 = vpack.c.b16 %v9053, %v9052
        %v9068 = vpack.c.b16 %v9055, %v9054
        %v9069 = vpack.c.b16 %v9057, %v9056
        %v9070 = vpack.c.b16 %v9059, %v9058
        %v9071 = vpack.c.b16 %v9061, %v9060
        %v9072 = vpack.c.b16 %v9063, %v9062
        %v9073 = vpack.c.b16 %v9065, %v9064
        %9082 = vmatprep.subr.bf16.mxu0 0
        %9083 = vmatpush1.bf16.msra.mxu0 %v9073
        %9084 = vmatprep.subr.bf16.mxu0 0
        %9085 = vmatpush1.bf16.msra.mxu0 %v9072
        %9086 = vmatprep.subr.bf16.mxu0 0
        %9087 = vmatpush1.bf16.msra.mxu0 %v9071
        %9088 = vmatprep.subr.bf16.mxu0 0
        %9089 = vmatpush1.bf16.msra.mxu0 %v9070
        %9090 = vmatprep.subr.bf16.mxu0 0
        %9091 = vmatpush1.bf16.msra.mxu0 %v9069
        %9092 = vmatprep.subr.bf16.mxu0 0
        %9093 = vmatpush1.bf16.msra.mxu0 %v9068
        %9094 = vmatprep.subr.bf16.mxu0 0
        %9095 = vmatpush1.bf16.msra.mxu0 %v9067
        %9096 = vmatprep.subr.bf16.mxu0 0
        %9097 = vmatpush1.bf16.msra.mxu0 %v9066
        %9098 = vmatprep.subr.bf16.mxu0 0
        %9099 = vmatpush2.bf16.msra.mxu0 0
        %9100 = vmatprep.subr.bf16.mxu0 0
        %9101 = vmatpush2.bf16.msra.mxu0 0
        %9102 = vmatprep.subr.bf16.mxu0 0
        %9103 = vmatpush2.bf16.msra.mxu0 0
        %9104 = vmatprep.subr.bf16.mxu0 0
        %9105 = vmatpush2.bf16.msra.mxu0 0
        %9106 = vmatprep.subr.bf16.mxu0 0
        %9107 = vmatpush2.bf16.msra.mxu0 0
        %9108 = vmatprep.subr.bf16.mxu0 0
        %9109 = vmatpush2.bf16.msra.mxu0 0
        %9110 = vmatprep.subr.bf16.mxu0 0
        %9111 = vmatpush2.bf16.msra.mxu0 0
        %9112 = vmatprep.subr.bf16.mxu0 0
        %9113 = vmatpush2.bf16.msra.mxu0 0
        %9114 = vmatprep.mubr.bf16.mxu0 0
        %9115 = vmatmul.mubr.bf16.gmra.mxu0 %v9007
        %v9116 = vpop.f32.mrf.mxu0
        %v9117 = vadd.f32 0.0, %v9116
        %v9118 = vpop.f32.mrf.mxu0
        %v9119 = vpop.f32.mrf.mxu0
        %v9120 = vadd.f32 0.0, %v9119
        %v9121 = vpop.f32.mrf.mxu0
        %9122 = vmatprep.mubr.bf16.mxu0 0
        %9123 = vmatmul.mubr.bf16.gmra.mxu0 %v9008
        %v9124 = vpop.f32.mrf.mxu0
        %v9125 = vadd.f32 0.0, %v9124
        %v9126 = vpop.f32.mrf.mxu0
        %v9127 = vpop.f32.mrf.mxu0
        %v9128 = vadd.f32 0.0, %v9127
        %v9129 = vpop.f32.mrf.mxu0
        %9130 = vmatprep.mubr.bf16.mxu0 0
        %9131 = vmatmul.mubr.bf16.gmra.mxu0 %v9009
        %v9132 = vpop.f32.mrf.mxu0
        %v9133 = vadd.f32 0.0, %v9132
        %v9134 = vpop.f32.mrf.mxu0
        %v9135 = vpop.f32.mrf.mxu0
        %v9136 = vadd.f32 0.0, %v9135
        %v9137 = vpop.f32.mrf.mxu0
        %9138 = vmatprep.mubr.bf16.mxu0 0
        %9139 = vmatmul.mubr.bf16.gmra.mxu0 %v9010
        %v9140 = vpop.f32.mrf.mxu0
        %v9141 = vadd.f32 0.0, %v9140
        %v9142 = vpop.f32.mrf.mxu0
        %v9143 = vpop.f32.mrf.mxu0
        %v9144 = vadd.f32 0.0, %v9143
        %v9145 = vpop.f32.mrf.mxu0
        %9146 = vmatprep.mubr.bf16.mxu0 0
        %9147 = vmatmul.mubr.bf16.gmra.mxu0 %v9011
        %v9148 = vpop.f32.mrf.mxu0
        %v9149 = vadd.f32 0.0, %v9148
        %v9150 = vpop.f32.mrf.mxu0
        %v9151 = vpop.f32.mrf.mxu0
        %v9152 = vadd.f32 0.0, %v9151
        %v9153 = vpop.f32.mrf.mxu0
        %9154 = vmatprep.mubr.bf16.mxu0 0
        %9155 = vmatmul.mubr.bf16.gmra.mxu0 %v9012
        %v9156 = vpop.f32.mrf.mxu0
        %v9157 = vadd.f32 0.0, %v9156
        %v9158 = vpop.f32.mrf.mxu0
        %v9159 = vpop.f32.mrf.mxu0
        %v9160 = vadd.f32 0.0, %v9159
        %v9161 = vpop.f32.mrf.mxu0
        %9162 = vmatprep.mubr.bf16.mxu0 0
        %9163 = vmatmul.mubr.bf16.gmra.mxu0 %v9013
        %v9164 = vpop.f32.mrf.mxu0
        %v9165 = vadd.f32 0.0, %v9164
        %v9166 = vpop.f32.mrf.mxu0
        %v9167 = vpop.f32.mrf.mxu0
        %v9168 = vadd.f32 0.0, %v9167
        %v9169 = vpop.f32.mrf.mxu0
        %9170 = vmatprep.mubr.bf16.mxu0 0
        %9171 = vmatmul.mubr.bf16.gmra.mxu0 %v9014
        %v9172 = vpop.f32.mrf.mxu0
        %v9173 = vadd.f32 0.0, %v9172
        %v9174 = vpop.f32.mrf.mxu0
        %v9175 = vpop.f32.mrf.mxu0
        %v9176 = vadd.f32 0.0, %v9175
        %v9177 = vpop.f32.mrf.mxu0
        %9178 = vmatprep.mubr.bf16.mxu0 0
        %9179 = vmatmul.mubr.bf16.gmra.mxu0 %v9015
        %v9180 = vpop.f32.mrf.mxu0
        %v9181 = vadd.f32 0.0, %v9180
        %v9182 = vpop.f32.mrf.mxu0
        %v9183 = vpop.f32.mrf.mxu0
        %v9184 = vadd.f32 0.0, %v9183
        %v9185 = vpop.f32.mrf.mxu0
        %9186 = vmatprep.mubr.bf16.mxu0 0
        %9187 = vmatmul.mubr.bf16.gmra.mxu0 %v9016
        %v9188 = vpop.f32.mrf.mxu0
        %v9189 = vadd.f32 0.0, %v9188
        %v9190 = vpop.f32.mrf.mxu0
        %v9191 = vpop.f32.mrf.mxu0
        %v9192 = vpop.f32.mrf.mxu0
        %9193 = vdwg.mxu0
        %v9194 = vld [vmem:[%s7] sm:$0xf]
        %v9195 = vld [vmem:[%s7 + $0x4] sm:$0xf]
        %v9196 = vld [vmem:[%s7 + $0x8] sm:$0xf]
        %v9197 = vld [vmem:[%s7 + $0xc] sm:$0xf]
        %v9198 = vld [vmem:[%s7 + $0x10] sm:$0xf]
        %v9199 = vld [vmem:[%s7 + $0x14] sm:$0xf]
        %v9200 = vld [vmem:[%s7 + $0x18] sm:$0xf]
        %v9201 = vld [vmem:[%s7 + $0x1c] sm:$0xf]
        %v9202 = vld [vmem:[%s7 + $0x20] sm:$0xf]
        %v9203 = vld [vmem:[%s7 + $0x24] sm:$0xf]
        %v9204 = vld [vmem:[%s7 + $0x28] sm:$0xf]
        %v9205 = vld [vmem:[%s7 + $0x2c] sm:$0xf]
        %v9206 = vld [vmem:[%s7 + $0x30] sm:$0xf]
        %v9207 = vld [vmem:[%s7 + $0x34] sm:$0xf]
        %v9208 = vld [vmem:[%s7 + $0x38] sm:$0xf]
        %v9209 = vld [vmem:[%s7 + $0x3c] sm:$0xf]
        %v9226 = vunpack.c.l.b16 %v9194
        %v9227 = vunpack.c.l.b16 %v9195
        %v9228 = vunpack.c.l.b16 %v9196
        %v9229 = vunpack.c.l.b16 %v9197
        %v9230 = vunpack.c.l.b16 %v9198
        %v9231 = vunpack.c.l.b16 %v9199
        %v9232 = vunpack.c.l.b16 %v9200
        %v9233 = vunpack.c.l.b16 %v9201
        %v9234 = vunpack.c.l.b16 %v9202
        %v9235 = vunpack.c.l.b16 %v9203
        %v9236 = vunpack.c.l.b16 %v9204
        %v9237 = vunpack.c.l.b16 %v9205
        %v9238 = vunpack.c.l.b16 %v9206
        %v9239 = vunpack.c.l.b16 %v9207
        %v9240 = vunpack.c.l.b16 %v9208
        %v9241 = vunpack.c.l.b16 %v9209
        %v9242 = vpack.c.b16 %v9227, %v9226
        %v9243 = vpack.c.b16 %v9229, %v9228
        %v9244 = vpack.c.b16 %v9231, %v9230
        %v9245 = vpack.c.b16 %v9233, %v9232
        %v9246 = vpack.c.b16 %v9235, %v9234
        %v9247 = vpack.c.b16 %v9237, %v9236
        %v9248 = vpack.c.b16 %v9239, %v9238
        %v9249 = vpack.c.b16 %v9241, %v9240
        %9258 = vmatprep.subr.bf16.mxu0 0
        %9259 = vmatpush1.bf16.msra.mxu0 %v9249
        %9260 = vmatprep.subr.bf16.mxu0 0
        %9261 = vmatpush1.bf16.msra.mxu0 %v9248
        %9262 = vmatprep.subr.bf16.mxu0 0
        %9263 = vmatpush1.bf16.msra.mxu0 %v9247
        %9264 = vmatprep.subr.bf16.mxu0 0
        %9265 = vmatpush1.bf16.msra.mxu0 %v9246
        %9266 = vmatprep.subr.bf16.mxu0 0
        %9267 = vmatpush1.bf16.msra.mxu0 %v9245
        %9268 = vmatprep.subr.bf16.mxu0 0
        %9269 = vmatpush1.bf16.msra.mxu0 %v9244
        %9270 = vmatprep.subr.bf16.mxu0 0
        %9271 = vmatpush1.bf16.msra.mxu0 %v9243
        %9272 = vmatprep.subr.bf16.mxu0 0
        %9273 = vmatpush1.bf16.msra.mxu0 %v9242
        %9274 = vmatprep.subr.bf16.mxu0 0
        %9275 = vmatpush2.bf16.msra.mxu0 0
        %9276 = vmatprep.subr.bf16.mxu0 0
        %9277 = vmatpush2.bf16.msra.mxu0 0
        %9278 = vmatprep.subr.bf16.mxu0 0
        %9279 = vmatpush2.bf16.msra.mxu0 0
        %9280 = vmatprep.subr.bf16.mxu0 0
        %9281 = vmatpush2.bf16.msra.mxu0 0
        %9282 = vmatprep.subr.bf16.mxu0 0
        %9283 = vmatpush2.bf16.msra.mxu0 0
        %9284 = vmatprep.subr.bf16.mxu0 0
        %9285 = vmatpush2.bf16.msra.mxu0 0
        %9286 = vmatprep.subr.bf16.mxu0 0
        %9287 = vmatpush2.bf16.msra.mxu0 0
        %9288 = vmatprep.subr.bf16.mxu0 0
        %9289 = vmatpush2.bf16.msra.mxu0 0
        %9290 = vmatprep.mubr.bf16.mxu0 0
        %9291 = vmatmul.mubr.bf16.gmra.mxu0 %v9007
        %v9292 = vpop.f32.mrf.mxu0
        %v9293 = vadd.f32 0.0, %v9292
        %v9294 = vpop.f32.mrf.mxu0
        %v9295 = vpop.f32.mrf.mxu0
        %v9296 = vadd.f32 0.0, %v9295
        %v9297 = vpop.f32.mrf.mxu0
        %9298 = vmatprep.mubr.bf16.mxu0 0
        %9299 = vmatmul.mubr.bf16.gmra.mxu0 %v9008
        %v9300 = vpop.f32.mrf.mxu0
        %v9301 = vadd.f32 0.0, %v9300
        %v9302 = vpop.f32.mrf.mxu0
        %v9303 = vpop.f32.mrf.mxu0
        %v9304 = vadd.f32 0.0, %v9303
        %v9305 = vpop.f32.mrf.mxu0
        %9306 = vmatprep.mubr.bf16.mxu0 0
        %9307 = vmatmul.mubr.bf16.gmra.mxu0 %v9009
        %v9308 = vpop.f32.mrf.mxu0
        %v9309 = vadd.f32 0.0, %v9308
        %v9310 = vpop.f32.mrf.mxu0
        %v9311 = vpop.f32.mrf.mxu0
        %v9312 = vadd.f32 0.0, %v9311
        %v9313 = vpop.f32.mrf.mxu0
        %9314 = vmatprep.mubr.bf16.mxu0 0
        %9315 = vmatmul.mubr.bf16.gmra.mxu0 %v9010
        %v9316 = vpop.f32.mrf.mxu0
        %v9317 = vadd.f32 0.0, %v9316
        %v9318 = vpop.f32.mrf.mxu0
        %v9319 = vpop.f32.mrf.mxu0
        %v9320 = vadd.f32 0.0, %v9319
        %v9321 = vpop.f32.mrf.mxu0
        %9322 = vmatprep.mubr.bf16.mxu0 0
        %9323 = vmatmul.mubr.bf16.gmra.mxu0 %v9011
        %v9324 = vpop.f32.mrf.mxu0
        %v9325 = vadd.f32 0.0, %v9324
        %v9326 = vpop.f32.mrf.mxu0
        %v9327 = vpop.f32.mrf.mxu0
        %v9328 = vadd.f32 0.0, %v9327
        %v9329 = vpop.f32.mrf.mxu0
        %9330 = vmatprep.mubr.bf16.mxu0 0
        %9331 = vmatmul.mubr.bf16.gmra.mxu0 %v9012
        %v9332 = vpop.f32.mrf.mxu0
        %v9333 = vadd.f32 0.0, %v9332
        %v9334 = vpop.f32.mrf.mxu0
        %v9335 = vpop.f32.mrf.mxu0
        %v9336 = vadd.f32 0.0, %v9335
        %v9337 = vpop.f32.mrf.mxu0
        %9338 = vmatprep.mubr.bf16.mxu0 0
        %9339 = vmatmul.mubr.bf16.gmra.mxu0 %v9013
        %v9340 = vpop.f32.mrf.mxu0
        %v9341 = vadd.f32 0.0, %v9340
        %v9342 = vpop.f32.mrf.mxu0
        %v9343 = vpop.f32.mrf.mxu0
        %v9344 = vadd.f32 0.0, %v9343
        %v9345 = vpop.f32.mrf.mxu0
        %9346 = vmatprep.mubr.bf16.mxu0 0
        %9347 = vmatmul.mubr.bf16.gmra.mxu0 %v9014
        %v9348 = vpop.f32.mrf.mxu0
        %v9349 = vadd.f32 0.0, %v9348
        %v9350 = vpop.f32.mrf.mxu0
        %v9351 = vpop.f32.mrf.mxu0
        %v9352 = vadd.f32 0.0, %v9351
        %v9353 = vpop.f32.mrf.mxu0
        %9354 = vmatprep.mubr.bf16.mxu0 0
        %9355 = vmatmul.mubr.bf16.gmra.mxu0 %v9015
        %v9356 = vpop.f32.mrf.mxu0
        %v9357 = vadd.f32 0.0, %v9356
        %v9358 = vpop.f32.mrf.mxu0
        %v9359 = vpop.f32.mrf.mxu0
        %v9360 = vadd.f32 0.0, %v9359
        %v9361 = vpop.f32.mrf.mxu0
        %9362 = vmatprep.mubr.bf16.mxu0 0
        %9363 = vmatmul.mubr.bf16.gmra.mxu0 %v9016
        %v9364 = vpop.f32.mrf.mxu0
        %v9365 = vadd.f32 0.0, %v9364
        %v9366 = vpop.f32.mrf.mxu0
        %v9367 = vpop.f32.mrf.mxu0
        %v9368 = vpop.f32.mrf.mxu0
        %9369 = vdwg.mxu0
        %s9370 = scalar_lea.vmem %s7, 128
        %v9371 = vld [vmem:[%s9370] sm:$0xf]
        %v9372 = vld [vmem:[%s9370 + $0x4] sm:$0xf]
        %v9373 = vld [vmem:[%s9370 + $0x8] sm:$0xf]
        %v9374 = vld [vmem:[%s9370 + $0xc] sm:$0xf]
        %v9375 = vld [vmem:[%s9370 + $0x10] sm:$0xf]
        %v9376 = vld [vmem:[%s9370 + $0x14] sm:$0xf]
        %v9377 = vld [vmem:[%s9370 + $0x18] sm:$0xf]
        %v9378 = vld [vmem:[%s9370 + $0x1c] sm:$0xf]
        %v9379 = vld [vmem:[%s9370 + $0x20] sm:$0xf]
        %v9380 = vld [vmem:[%s9370 + $0x24] sm:$0xf]
        %v9381 = vld [vmem:[%s9370 + $0x28] sm:$0xf]
        %v9382 = vld [vmem:[%s9370 + $0x2c] sm:$0xf]
        %v9383 = vld [vmem:[%s9370 + $0x30] sm:$0xf]
        %v9384 = vld [vmem:[%s9370 + $0x34] sm:$0xf]
        %v9385 = vld [vmem:[%s9370 + $0x38] sm:$0xf]
        %v9386 = vld [vmem:[%s9370 + $0x3c] sm:$0xf]
        %v9397 = vrot.slane %v9007, 1
        %v9398 = vrot.slane %v9008, 1
        %v9399 = vsel %vm6853, %v9397, %v9398
        %v9400 = vrot.slane %v9009, 1
        %v9401 = vsel %vm6853, %v9398, %v9400
        %v9402 = vrot.slane %v9010, 1
        %v9403 = vsel %vm6853, %v9400, %v9402
        %v9404 = vrot.slane %v9011, 1
        %v9405 = vsel %vm6853, %v9402, %v9404
        %v9406 = vrot.slane %v9012, 1
        %v9407 = vsel %vm6853, %v9404, %v9406
        %v9408 = vrot.slane %v9013, 1
        %v9409 = vsel %vm6853, %v9406, %v9408
        %v9410 = vrot.slane %v9014, 1
        %v9411 = vsel %vm6853, %v9408, %v9410
        %v9412 = vrot.slane %v9015, 1
        %v9413 = vsel %vm6853, %v9410, %v9412
        %v9414 = vrot.slane %v9016, 1
        %v9415 = vsel %vm6853, %v9412, %v9414
        %v9442 = vunpack.c.l.b16 %v9371
        %v9443 = vunpack.c.l.b16 %v9372
        %v9444 = vunpack.c.l.b16 %v9373
        %v9445 = vunpack.c.l.b16 %v9374
        %v9446 = vunpack.c.l.b16 %v9375
        %v9447 = vunpack.c.l.b16 %v9376
        %v9448 = vunpack.c.l.b16 %v9377
        %v9449 = vunpack.c.l.b16 %v9378
        %v9450 = vunpack.c.l.b16 %v9379
        %v9451 = vunpack.c.l.b16 %v9380
        %v9452 = vunpack.c.l.b16 %v9381
        %v9453 = vunpack.c.l.b16 %v9382
        %v9454 = vunpack.c.l.b16 %v9383
        %v9455 = vunpack.c.l.b16 %v9384
        %v9456 = vunpack.c.l.b16 %v9385
        %v9457 = vunpack.c.l.b16 %v9386
        %v9458 = vpack.c.b16 %v9443, %v9442
        %v9459 = vpack.c.b16 %v9445, %v9444
        %v9460 = vpack.c.b16 %v9447, %v9446
        %v9461 = vpack.c.b16 %v9449, %v9448
        %v9462 = vpack.c.b16 %v9451, %v9450
        %v9463 = vpack.c.b16 %v9453, %v9452
        %v9464 = vpack.c.b16 %v9455, %v9454
        %v9465 = vpack.c.b16 %v9457, %v9456
        %9474 = vmatprep.subr.bf16.mxu0 0
        %9475 = vmatpush1.bf16.msra.mxu0 %v9465
        %9476 = vmatprep.subr.bf16.mxu0 0
        %9477 = vmatpush1.bf16.msra.mxu0 %v9464
        %9478 = vmatprep.subr.bf16.mxu0 0
        %9479 = vmatpush1.bf16.msra.mxu0 %v9463
        %9480 = vmatprep.subr.bf16.mxu0 0
        %9481 = vmatpush1.bf16.msra.mxu0 %v9462
        %9482 = vmatprep.subr.bf16.mxu0 0
        %9483 = vmatpush1.bf16.msra.mxu0 %v9461
        %9484 = vmatprep.subr.bf16.mxu0 0
        %9485 = vmatpush1.bf16.msra.mxu0 %v9460
        %9486 = vmatprep.subr.bf16.mxu0 0
        %9487 = vmatpush1.bf16.msra.mxu0 %v9459
        %9488 = vmatprep.subr.bf16.mxu0 0
        %9489 = vmatpush1.bf16.msra.mxu0 %v9458
        %9490 = vmatprep.subr.bf16.mxu0 0
        %9491 = vmatpush2.bf16.msra.mxu0 0
        %9492 = vmatprep.subr.bf16.mxu0 0
        %9493 = vmatpush2.bf16.msra.mxu0 0
        %9494 = vmatprep.subr.bf16.mxu0 0
        %9495 = vmatpush2.bf16.msra.mxu0 0
        %9496 = vmatprep.subr.bf16.mxu0 0
        %9497 = vmatpush2.bf16.msra.mxu0 0
        %9498 = vmatprep.subr.bf16.mxu0 0
        %9499 = vmatpush2.bf16.msra.mxu0 0
        %9500 = vmatprep.subr.bf16.mxu0 0
        %9501 = vmatpush2.bf16.msra.mxu0 0
        %9502 = vmatprep.subr.bf16.mxu0 0
        %9503 = vmatpush2.bf16.msra.mxu0 0
        %9504 = vmatprep.subr.bf16.mxu0 0
        %9505 = vmatpush2.bf16.msra.mxu0 0
        %9506 = vmatprep.mubr.bf16.mxu0 0
        %9507 = vmatmul.mubr.bf16.gmra.mxu0 %v9399
        %v9508 = vpop.f32.mrf.mxu0
        %v9509 = vadd.f32 0.0, %v9508
        %v9510 = vpop.f32.mrf.mxu0
        %v9511 = vpop.f32.mrf.mxu0
        %v9512 = vadd.f32 0.0, %v9511
        %v9513 = vpop.f32.mrf.mxu0
        %9514 = vmatprep.mubr.bf16.mxu0 0
        %9515 = vmatmul.mubr.bf16.gmra.mxu0 %v9401
        %v9516 = vpop.f32.mrf.mxu0
        %v9517 = vadd.f32 0.0, %v9516
        %v9518 = vpop.f32.mrf.mxu0
        %v9519 = vpop.f32.mrf.mxu0
        %v9520 = vadd.f32 0.0, %v9519
        %v9521 = vpop.f32.mrf.mxu0
        %9522 = vmatprep.mubr.bf16.mxu0 0
        %9523 = vmatmul.mubr.bf16.gmra.mxu0 %v9403
        %v9524 = vpop.f32.mrf.mxu0
        %v9525 = vadd.f32 0.0, %v9524
        %v9526 = vpop.f32.mrf.mxu0
        %v9527 = vpop.f32.mrf.mxu0
        %v9528 = vadd.f32 0.0, %v9527
        %v9529 = vpop.f32.mrf.mxu0
        %9530 = vmatprep.mubr.bf16.mxu0 0
        %9531 = vmatmul.mubr.bf16.gmra.mxu0 %v9405
        %v9532 = vpop.f32.mrf.mxu0
        %v9533 = vadd.f32 0.0, %v9532
        %v9534 = vpop.f32.mrf.mxu0
        %v9535 = vpop.f32.mrf.mxu0
        %v9536 = vadd.f32 0.0, %v9535
        %v9537 = vpop.f32.mrf.mxu0
        %9538 = vmatprep.mubr.bf16.mxu0 0
        %9539 = vmatmul.mubr.bf16.gmra.mxu0 %v9407
        %v9540 = vpop.f32.mrf.mxu0
        %v9541 = vadd.f32 0.0, %v9540
        %v9542 = vpop.f32.mrf.mxu0
        %v9543 = vpop.f32.mrf.mxu0
        %v9544 = vadd.f32 0.0, %v9543
        %v9545 = vpop.f32.mrf.mxu0
        %9546 = vmatprep.mubr.bf16.mxu0 0
        %9547 = vmatmul.mubr.bf16.gmra.mxu0 %v9409
        %v9548 = vpop.f32.mrf.mxu0
        %v9549 = vadd.f32 0.0, %v9548
        %v9550 = vpop.f32.mrf.mxu0
        %v9551 = vpop.f32.mrf.mxu0
        %v9552 = vadd.f32 0.0, %v9551
        %v9553 = vpop.f32.mrf.mxu0
        %9554 = vmatprep.mubr.bf16.mxu0 0
        %9555 = vmatmul.mubr.bf16.gmra.mxu0 %v9411
        %v9556 = vpop.f32.mrf.mxu0
        %v9557 = vadd.f32 0.0, %v9556
        %v9558 = vpop.f32.mrf.mxu0
        %v9559 = vpop.f32.mrf.mxu0
        %v9560 = vadd.f32 0.0, %v9559
        %v9561 = vpop.f32.mrf.mxu0
        %9562 = vmatprep.mubr.bf16.mxu0 0
        %9563 = vmatmul.mubr.bf16.gmra.mxu0 %v9413
        %v9564 = vpop.f32.mrf.mxu0
        %v9565 = vadd.f32 0.0, %v9564
        %v9566 = vpop.f32.mrf.mxu0
        %v9567 = vpop.f32.mrf.mxu0
        %v9568 = vadd.f32 0.0, %v9567
        %v9569 = vpop.f32.mrf.mxu0
        %9570 = vmatprep.mubr.bf16.mxu0 0
        %9571 = vmatmul.mubr.bf16.gmra.mxu0 %v9415
        %v9572 = vpop.f32.mrf.mxu0
        %v9573 = vadd.f32 0.0, %v9572
        %v9574 = vpop.f32.mrf.mxu0
        %v9575 = vpop.f32.mrf.mxu0
        %v9576 = vadd.f32 0.0, %v9575
        %v9577 = vpop.f32.mrf.mxu0
        %9578 = vmatprep.mubr.bf16.mxu0 0
        %9579 = vmatmul.mubr.bf16.gmra.mxu0 %v9414
        %v9580 = vpop.f32.mrf.mxu0
        %v9581 = vadd.f32 0.0, %v9580
        %v9582 = vpop.f32.mrf.mxu0
        %v9583 = vpop.f32.mrf.mxu0
        %v9584 = vpop.f32.mrf.mxu0
        %9585 = vdwg.mxu0
        %v9586 = vadd.f32 %v9117, %v9509
        %vm9587 = vcmask 517120
        %9588 = vst.msk [vmem:[#allocation5] sm:$0x3] %vm9587, %v9586
        %v9608 = vrot.slane %v9293, 6
        %v9609 = vrot.slane %v9296, 6
        %v9610 = vsel %vm7286, %v9608, %v9609
        %v9611 = vrot.slane %v9301, 6
        %v9612 = vsel %vm7286, %v9609, %v9611
        %v9613 = vrot.slane %v9304, 6
        %v9614 = vsel %vm7286, %v9611, %v9613
        %v9615 = vrot.slane %v9309, 6
        %v9616 = vsel %vm7286, %v9613, %v9615
        %v9617 = vrot.slane %v9312, 6
        %v9618 = vsel %vm7286, %v9615, %v9617
        %v9619 = vrot.slane %v9317, 6
        %v9620 = vsel %vm7286, %v9617, %v9619
        %v9621 = vrot.slane %v9320, 6
        %v9622 = vsel %vm7286, %v9619, %v9621
        %v9623 = vrot.slane %v9325, 6
        %v9624 = vsel %vm7286, %v9621, %v9623
        %v9625 = vrot.slane %v9328, 6
        %v9626 = vsel %vm7286, %v9623, %v9625
        %v9627 = vrot.slane %v9333, 6
        %v9628 = vsel %vm7286, %v9625, %v9627
        %v9629 = vrot.slane %v9336, 6
        %v9630 = vsel %vm7286, %v9627, %v9629
        %v9631 = vrot.slane %v9341, 6
        %v9632 = vsel %vm7286, %v9629, %v9631
        %v9633 = vrot.slane %v9344, 6
        %v9634 = vsel %vm7286, %v9631, %v9633
        %v9635 = vrot.slane %v9349, 6
        %v9636 = vsel %vm7286, %v9633, %v9635
        %v9637 = vrot.slane %v9352, 6
        %v9638 = vsel %vm7286, %v9635, %v9637
        %v9639 = vrot.slane %v9357, 6
        %v9640 = vsel %vm7286, %v9637, %v9639
        %v9641 = vrot.slane %v9360, 6
        %v9642 = vsel %vm7286, %v9639, %v9641
        %v9643 = vrot.slane %v9365, 6
        %v9644 = vsel %vm7286, %v9641, %v9643
        %v9664 = vadd.f32 %v9117, %v9608
        %v9665 = vadd.f32 %v9120, %v9610
        %v9666 = vadd.f32 %v9125, %v9612
        %v9667 = vadd.f32 %v9128, %v9614
        %v9668 = vadd.f32 %v9133, %v9616
        %v9669 = vadd.f32 %v9136, %v9618
        %v9670 = vadd.f32 %v9141, %v9620
        %v9671 = vadd.f32 %v9144, %v9622
        %v9672 = vadd.f32 %v9149, %v9624
        %v9673 = vadd.f32 %v9152, %v9626
        %v9674 = vadd.f32 %v9157, %v9628
        %v9675 = vadd.f32 %v9160, %v9630
        %v9676 = vadd.f32 %v9165, %v9632
        %v9677 = vadd.f32 %v9168, %v9634
        %v9678 = vadd.f32 %v9173, %v9636
        %v9679 = vadd.f32 %v9176, %v9638
        %v9680 = vadd.f32 %v9181, %v9640
        %v9681 = vadd.f32 %v9184, %v9642
        %v9682 = vadd.f32 %v9189, %v9644
        %v9683 = vadd.f32 %v9664, %v9509
        %v9684 = vadd.f32 %v9665, %v9512
        %v9685 = vadd.f32 %v9666, %v9517
        %v9686 = vadd.f32 %v9667, %v9520
        %v9687 = vadd.f32 %v9668, %v9525
        %v9688 = vadd.f32 %v9669, %v9528
        %v9689 = vadd.f32 %v9670, %v9533
        %v9690 = vadd.f32 %v9671, %v9536
        %v9691 = vadd.f32 %v9672, %v9541
        %v9692 = vadd.f32 %v9673, %v9544
        %v9693 = vadd.f32 %v9674, %v9549
        %v9694 = vadd.f32 %v9675, %v9552
        %v9695 = vadd.f32 %v9676, %v9557
        %v9696 = vadd.f32 %v9677, %v9560
        %v9697 = vadd.f32 %v9678, %v9565
        %v9698 = vadd.f32 %v9679, %v9568
        %v9699 = vadd.f32 %v9680, %v9573
        %v9700 = vadd.f32 %v9681, %v9576
        %v9701 = vadd.f32 %v9682, %v9581
        %vm9702 = vcmask 523266
        %9703 = vst.msk [vmem:[#allocation5] sm:$0xfc] %vm9702, %v9683
        %vm9704 = vcmask 523264
        %9705 = vst.msk [vmem:[#allocation5 + $0x8] sm:$0xff] %vm9704, %v9684
        %9706 = vst.msk [vmem:[#allocation5 + $0x10] sm:$0xff] %vm9704, %v9685
        %9707 = vst.msk [vmem:[#allocation5 + $0x18] sm:$0xff] %vm9704, %v9686
        %9708 = vst.msk [vmem:[#allocation5 + $0x20] sm:$0xff] %vm9704, %v9687
        %9709 = vst.msk [vmem:[#allocation5 + $0x28] sm:$0xff] %vm9704, %v9688
        %9710 = vst.msk [vmem:[#allocation5 + $0x30] sm:$0xff] %vm9704, %v9689
        %9711 = vst.msk [vmem:[#allocation5 + $0x38] sm:$0xff] %vm9704, %v9690
        %9712 = vst.msk [vmem:[#allocation5 + $0x40] sm:$0xff] %vm9704, %v9691
        %9713 = vst.msk [vmem:[#allocation5 + $0x48] sm:$0xff] %vm9704, %v9692
        %9714 = vst.msk [vmem:[#allocation5 + $0x50] sm:$0xff] %vm9704, %v9693
        %9715 = vst.msk [vmem:[#allocation5 + $0x58] sm:$0xff] %vm9704, %v9694
        %9716 = vst.msk [vmem:[#allocation5 + $0x60] sm:$0xff] %vm9704, %v9695
        %9717 = vst.msk [vmem:[#allocation5 + $0x68] sm:$0xff] %vm9704, %v9696
        %9718 = vst.msk [vmem:[#allocation5 + $0x70] sm:$0xff] %vm9704, %v9697
        %9719 = vst.msk [vmem:[#allocation5 + $0x78] sm:$0xff] %vm9704, %v9698
        %9720 = vst.msk [vmem:[#allocation5 + $0x80] sm:$0xff] %vm9704, %v9699
        %9721 = vst.msk [vmem:[#allocation5 + $0x88] sm:$0xff] %vm9704, %v9700
        %vm9722 = vcmask 519168
        %9723 = vst.msk [vmem:[#allocation5 + $0x90] sm:$0xf] %vm9722, %v9701
        %v9725 = vadd.f32 %v9189, %v9643
        %vm9726 = vcmask 521220
        %9727 = vst.msk [vmem:[#allocation5 + $0x90] sm:$0x30] %vm9726, %v9725
        %v9728 = vld [vmem:[%s8] sm:$0x3]
        %v9729 = vld [vmem:[#allocation5] ss:$2 sm:$0xff]
        %s9730 = scalar_lea.vmem [#allocation5], 16
        %v9731 = vld [vmem:[%s9730] ss:$2 sm:$0xff]
        %s9732 = scalar_lea.vmem [#allocation5], 32
        %v9733 = vld [vmem:[%s9732] ss:$2 sm:$0xff]
        %s9734 = scalar_lea.vmem [#allocation5], 48
        %v9735 = vld [vmem:[%s9734] ss:$2 sm:$0xff]
        %s9736 = scalar_lea.vmem [#allocation5], 64
        %v9737 = vld [vmem:[%s9736] ss:$2 sm:$0xff]
        %s9738 = scalar_lea.vmem [#allocation5], 80
        %v9739 = vld [vmem:[%s9738] ss:$2 sm:$0xff]
        %s9740 = scalar_lea.vmem [#allocation5], 96
        %v9741 = vld [vmem:[%s9740] ss:$2 sm:$0xff]
        %s9742 = scalar_lea.vmem [#allocation5], 112
        %v9743 = vld [vmem:[%s9742] ss:$2 sm:$0xff]
        %s9744 = scalar_lea.vmem [#allocation5], 128
        %v9745 = vld [vmem:[%s9744] ss:$2 sm:$0xff]
        %s9746 = scalar_lea.vmem [#allocation5], 144
        %v9747 = vld [vmem:[%s9746] ss:$2 sm:$0x7]
        %s9748 = scalar_lea.vmem [#allocation5], 1
        %v9749 = vld [vmem:[%s9748] ss:$2 sm:$0xff]
        %s9750 = scalar_lea.vmem [#allocation5], 17
        %v9751 = vld [vmem:[%s9750] ss:$2 sm:$0xff]
        %s9752 = scalar_lea.vmem [#allocation5], 33
        %v9753 = vld [vmem:[%s9752] ss:$2 sm:$0xff]
        %s9754 = scalar_lea.vmem [#allocation5], 49
        %v9755 = vld [vmem:[%s9754] ss:$2 sm:$0xff]
        %s9756 = scalar_lea.vmem [#allocation5], 65
        %v9757 = vld [vmem:[%s9756] ss:$2 sm:$0xff]
        %s9758 = scalar_lea.vmem [#allocation5], 81
        %v9759 = vld [vmem:[%s9758] ss:$2 sm:$0xff]
        %s9760 = scalar_lea.vmem [#allocation5], 97
        %v9761 = vld [vmem:[%s9760] ss:$2 sm:$0xff]
        %s9762 = scalar_lea.vmem [#allocation5], 113
        %v9763 = vld [vmem:[%s9762] ss:$2 sm:$0xff]
        %s9764 = scalar_lea.vmem [#allocation5], 129
        %v9765 = vld [vmem:[%s9764] ss:$2 sm:$0xff]
        %s9766 = scalar_lea.vmem [#allocation5], 145
        %v9767 = vld [vmem:[%s9766] ss:$2 sm:$0x7]
        %v9768 = vlaneseq
        %v9769 = vshrl.u32 %v9768, 7
        %v9770 = vsub.s32 0, %v9769
        %v9771 = vrot.slane %v9728, %v9770
        %v9772 = vmul.f32 %v9729, %v9771
        %v9773 = vmul.f32 %v9731, %v9771
        %v9774 = vmul.f32 %v9733, %v9771
        %v9775 = vmul.f32 %v9735, %v9771
        %v9776 = vmul.f32 %v9737, %v9771
        %v9777 = vmul.f32 %v9739, %v9771
        %v9778 = vmul.f32 %v9741, %v9771
        %v9779 = vmul.f32 %v9743, %v9771
        %v9780 = vmul.f32 %v9745, %v9771
        %v9781 = vmul.f32 %v9747, %v9771
        %v9782 = vlaneseq
        %v9783 = vshrl.u32 %v9782, 7
        %v9784 = vsub.s32 1, %v9783
        %v9785 = vrot.slane %v9728, %v9784
        %v9786 = vadd.f32 %v9772, %v9785
        %v9787 = vadd.f32 %v9773, %v9785
        %v9788 = vadd.f32 %v9774, %v9785
        %v9789 = vadd.f32 %v9775, %v9785
        %v9790 = vadd.f32 %v9776, %v9785
        %v9791 = vadd.f32 %v9777, %v9785
        %v9792 = vadd.f32 %v9778, %v9785
        %v9793 = vadd.f32 %v9779, %v9785
        %v9794 = vadd.f32 %v9780, %v9785
        %v9795 = vadd.f32 %v9781, %v9785
        %v9796 = vmax.f32 %v9786, 0.0
        %v9797 = vmax.f32 %v9787, 0.0
        %v9798 = vmax.f32 %v9788, 0.0
        %v9799 = vmax.f32 %v9789, 0.0
        %v9800 = vmax.f32 %v9790, 0.0
        %v9801 = vmax.f32 %v9791, 0.0
        %v9802 = vmax.f32 %v9792, 0.0
        %v9803 = vmax.f32 %v9793, 0.0
        %v9804 = vmax.f32 %v9794, 0.0
        %v9805 = vmax.f32 %v9795, 0.0
        %v9806 = vmul.f32 %v9749, %v9771
        %v9807 = vmul.f32 %v9751, %v9771
        %v9808 = vmul.f32 %v9753, %v9771
        %v9809 = vmul.f32 %v9755, %v9771
        %v9810 = vmul.f32 %v9757, %v9771
        %v9811 = vmul.f32 %v9759, %v9771
        %v9812 = vmul.f32 %v9761, %v9771
        %v9813 = vmul.f32 %v9763, %v9771
        %v9814 = vmul.f32 %v9765, %v9771
        %v9815 = vmul.f32 %v9767, %v9771
        %v9816 = vadd.f32 %v9806, %v9785
        %v9817 = vadd.f32 %v9807, %v9785
        %v9818 = vadd.f32 %v9808, %v9785
        %v9819 = vadd.f32 %v9809, %v9785
        %v9820 = vadd.f32 %v9810, %v9785
        %v9821 = vadd.f32 %v9811, %v9785
        %v9822 = vadd.f32 %v9812, %v9785
        %v9823 = vadd.f32 %v9813, %v9785
        %v9824 = vadd.f32 %v9814, %v9785
        %v9825 = vadd.f32 %v9815, %v9785
        %v9826 = vmax.f32 %v9816, 0.0
        %v9827 = vmax.f32 %v9817, 0.0
        %v9828 = vmax.f32 %v9818, 0.0
        %v9829 = vmax.f32 %v9819, 0.0
        %v9830 = vmax.f32 %v9820, 0.0
        %v9831 = vmax.f32 %v9821, 0.0
        %v9832 = vmax.f32 %v9822, 0.0
        %v9833 = vmax.f32 %v9823, 0.0
        %v9834 = vmax.f32 %v9824, 0.0
        %v9835 = vmax.f32 %v9825, 0.0
        %v9836 = vmax.f32 %v9796, %v9826
        %v9837 = vmax.f32 %v9797, %v9827
        %v9838 = vmax.f32 %v9798, %v9828
        %v9839 = vmax.f32 %v9799, %v9829
        %v9840 = vmax.f32 %v9800, %v9830
        %v9841 = vmax.f32 %v9801, %v9831
        %v9842 = vmax.f32 %v9802, %v9832
        %v9843 = vmax.f32 %v9803, %v9833
        %v9844 = vmax.f32 %v9804, %v9834
        %v9845 = vmax.f32 %v9805, %v9835
        %v9846 = vpack.c.bf16 %v9837, %v9836
        %v9847 = vpack.c.bf16 %v9839, %v9838
        %v9848 = vpack.c.bf16 %v9841, %v9840
        %v9849 = vpack.c.bf16 %v9843, %v9842
        %v9850 = vpack.c.bf16 %v9845, %v9844
        %v9851 = vld [vmem:[%s12] sm:$0x1]
        %v9852 = vld [vmem:[%s9] sm:$0xff]
        %v9853 = vld [vmem:[%s9 + $0x8] sm:$0xff]
        %v9854 = vld [vmem:[%s9 + $0x10] sm:$0xff]
        %v9855 = vld [vmem:[%s9 + $0x18] sm:$0xff]
        %v9856 = vld [vmem:[%s9 + $0x20] sm:$0xff]
        %v9857 = vld [vmem:[%s9 + $0x28] sm:$0xff]
        %v9858 = vld [vmem:[%s9 + $0x30] sm:$0xff]
        %v9859 = vld [vmem:[%s9 + $0x38] sm:$0xff]
        %v9860 = vld [vmem:[%s9 + $0x40] sm:$0xff]
        %v9861 = vld [vmem:[%s9 + $0x48] sm:$0x7]
        %v9862 = vunpack.c.l.bf16 %v9846
        %v9863 = vunpack.c.h.bf16 %v9846
        %v9864 = vunpack.c.l.bf16 %v9847
        %v9865 = vunpack.c.h.bf16 %v9847
        %v9866 = vunpack.c.l.bf16 %v9848
        %v9867 = vunpack.c.h.bf16 %v9848
        %v9868 = vunpack.c.l.bf16 %v9849
        %v9869 = vunpack.c.h.bf16 %v9849
        %v9870 = vunpack.c.l.bf16 %v9850
        %v9871 = vunpack.c.h.bf16 %v9850
        %v9872 = vmul.f32 %v9862, %v9852
        %v9873 = vmul.f32 %v9863, %v9853
        %v9874 = vmul.f32 %v9864, %v9854
        %v9875 = vmul.f32 %v9865, %v9855
        %v9876 = vmul.f32 %v9866, %v9856
        %v9877 = vmul.f32 %v9867, %v9857
        %v9878 = vmul.f32 %v9868, %v9858
        %v9879 = vmul.f32 %v9869, %v9859
        %v9880 = vmul.f32 %v9870, %v9860
        %v9881 = vmul.f32 %v9871, %v9861
        %v9882 = vsel %vm9704, %v9872, 0.0
        %9883 = vadd.xlane.f32.xlu0 %v9882
        %v9884 = vpop.xlane.xlu0 %9883
        %v9885 = vsel %vm9704, %v9873, 0.0
        %9886 = vadd.xlane.f32.xlu0 %v9885
        %v9887 = vpop.xlane.xlu0 %9886
        %v9888 = vsel %vm9704, %v9874, 0.0
        %9889 = vadd.xlane.f32.xlu0 %v9888
        %v9890 = vpop.xlane.xlu0 %9889
        %v9891 = vsel %vm9704, %v9875, 0.0
        %9892 = vadd.xlane.f32.xlu0 %v9891
        %v9893 = vpop.xlane.xlu0 %9892
        %v9894 = vsel %vm9704, %v9876, 0.0
        %9895 = vadd.xlane.f32.xlu0 %v9894
        %v9896 = vpop.xlane.xlu0 %9895
        %v9897 = vsel %vm9704, %v9877, 0.0
        %9898 = vadd.xlane.f32.xlu0 %v9897
        %v9899 = vpop.xlane.xlu0 %9898
        %v9900 = vsel %vm9704, %v9878, 0.0
        %9901 = vadd.xlane.f32.xlu0 %v9900
        %v9902 = vpop.xlane.xlu0 %9901
        %v9903 = vsel %vm9704, %v9879, 0.0
        %9904 = vadd.xlane.f32.xlu0 %v9903
        %v9905 = vpop.xlane.xlu0 %9904
        %v9906 = vsel %vm9704, %v9880, 0.0
        %9907 = vadd.xlane.f32.xlu0 %v9906
        %v9908 = vpop.xlane.xlu0 %9907
        %vm9909 = vcmask 518144
        %v9910 = vsel %vm9909, %v9881, 0.0
        %9911 = vadd.xlane.f32.xlu0 %v9910
        %v9912 = vpop.xlane.xlu0 %9911
        %v9913 = vadd.f32 %v9884, %v9887
        %v9914 = vadd.f32 %v9913, %v9890
        %v9915 = vadd.f32 %v9914, %v9893
        %v9916 = vadd.f32 %v9915, %v9896
        %v9917 = vadd.f32 %v9916, %v9899
        %v9918 = vadd.f32 %v9917, %v9902
        %v9919 = vadd.f32 %v9918, %v9905
        %v9920 = vadd.f32 %v9919, %v9908
        %vm9921 = vcmask 1042432
        %v9922 = vsel %vm9921, %v9912, 0.0
        %v9923 = vadd.f32 %v9920, %v9922
        %v9924 = vrot.slane %v9923, 4
        %v9925 = vadd.f32 %v9923, %v9924
        %v9926 = vrot.slane %v9925, 2
        %v9927 = vadd.f32 %v9925, %v9926
        %v9928 = vrot.slane %v9927, 1
        %v9929 = vadd.f32 %v9927, %v9928
        %v9930 = vadd.f32 %v9929, %v9851
        %v9931 = vld [vmem:[%s10] sm:$0x1]
        %9933 = vset.pattern.permute.xlu0 0
        %9934 = vperm.xlu0 %9933, %v9930
        %v9935 = vpop.permute.xlu0 %9934
        %v9937 = vlaneseq
        %v9938 = vshrl.u32 %v9937, 7
        %v9939 = vsub.s32 0, %v9938
        %v9940 = vrot.slane %v9935, %v9939
        %v9942 = vsel %vm9704, %v9931, 0
        %v9945 = vsel %vm9704, %v9846, 0
        %v9948 = vsel %vm9704, %v9847, 0
        %v9951 = vsel %vm9704, %v9848, 0
        %v9954 = vsel %vm9704, %v9849, 0
        %v9957 = vsel %vm9704, %v9850, 0
        %9959 = vmatprep.subr.bf16.mxu0 0
        %9960 = vmatpush1.bf16.xpose.msra.mxu0 0
        %9961 = vmatprep.subr.bf16.mxu0 0
        %9962 = vmatpush1.bf16.xpose.msra.mxu0 0
        %9963 = vmatprep.subr.bf16.mxu0 0
        %9964 = vmatpush1.bf16.xpose.msra.mxu0 0
        %9965 = vmatprep.subr.bf16.mxu0 0
        %9966 = vmatpush1.bf16.xpose.msra.mxu0 %v9957
        %9967 = vmatprep.subr.bf16.mxu0 0
        %9968 = vmatpush1.bf16.xpose.msra.mxu0 %v9954
        %9969 = vmatprep.subr.bf16.mxu0 0
        %9970 = vmatpush1.bf16.xpose.msra.mxu0 %v9951
        %9971 = vmatprep.subr.bf16.mxu0 0
        %9972 = vmatpush1.bf16.xpose.msra.mxu0 %v9948
        %9973 = vmatprep.subr.bf16.mxu0 0
        %9974 = vmatpush1.bf16.xpose.msra.mxu0 %v9945
        %9975 = vmatprep.subr.bf16.mxu0 0
        %9976 = vmatpush2.bf16.xpose.msra.mxu0 0
        %9977 = vmatprep.subr.bf16.mxu0 0
        %9978 = vmatpush2.bf16.xpose.msra.mxu0 0
        %9979 = vmatprep.subr.bf16.mxu0 0
        %9980 = vmatpush2.bf16.xpose.msra.mxu0 0
        %9981 = vmatprep.subr.bf16.mxu0 0
        %9982 = vmatpush2.bf16.xpose.msra.mxu0 0
        %9983 = vmatprep.subr.bf16.mxu0 0
        %9984 = vmatpush2.bf16.xpose.msra.mxu0 0
        %9985 = vmatprep.subr.bf16.mxu0 0
        %9986 = vmatpush2.bf16.xpose.msra.mxu0 0
        %9987 = vmatprep.subr.bf16.mxu0 0
        %9988 = vmatpush2.bf16.xpose.msra.mxu0 0
        %9989 = vmatprep.subr.bf16.mxu0 0
        %9990 = vmatpush2.bf16.xpose.msra.mxu0 0
        %9991 = vmatprep.mubr.bf16.mxu0 0
        %9992 = vmatmul.mubr.bf16.gmra.mxu0 %v9942
        %v9993 = vpop.f32.mrf.mxu0
        %v9994 = vadd.f32 %v9940, %v9993
        %v9995 = vpop.f32.mrf.mxu0
        %v9996 = vpop.f32.mrf.mxu0
        %v9997 = vpop.f32.mrf.mxu0
        %9998 = vdwg.mxu0
        %vm9999 = vcmask 606208
        %v10000 = vsel %vm9999, %v9994, -inf
        %10001 = vmax.xlane.f32.xlu0 %v10000
        %v10002 = vpop.xlane.xlu0 %10001
        %v10003 = vsub.f32 %v9994, %v10002
        %v10004 = vmul.f32 %v10003, 1.442695
        %v10005 = vpow.pop %v10004
        %v10006 = vsel %vm9999, %v10005, 0.0
        %10007 = vadd.xlane.f32.xlu0 %v10006
        %v10008 = vpop.xlane.xlu0 %10007
        %v10009 = vrcp.pop %v10008
        %v10010 = vmul.f32 %v10005, %v10009
        %vm10011 = vcmask 613376
        %v10013 = vsel %vm10011, %v10010, 0
        %vm10015 = vcmask 1044480
        %vm10016 = vcmask 1045504
        %v10017 = vsel %vm10015, 4294967295, 65535
        %v10018 = vsel %vm10016, %v10017, 0
        %v10019 = vand.u32 %v9850, %v10018
        %10021 = vmatprep.subr.bf16.mxu0 0
        %10022 = vmatpush1.bf16.msra.mxu0 0
        %10023 = vmatprep.subr.bf16.mxu0 0
        %10024 = vmatpush1.bf16.msra.mxu0 0
        %10025 = vmatprep.subr.bf16.mxu0 0
        %10026 = vmatpush1.bf16.msra.mxu0 0
        %10027 = vmatprep.subr.bf16.mxu0 0
        %10028 = vmatpush1.bf16.msra.mxu0 %v10019
        %10029 = vmatprep.subr.bf16.mxu0 0
        %10030 = vmatpush1.bf16.msra.mxu0 %v9849
        %10031 = vmatprep.subr.bf16.mxu0 0
        %10032 = vmatpush1.bf16.msra.mxu0 %v9848
        %10033 = vmatprep.subr.bf16.mxu0 0
        %10034 = vmatpush1.bf16.msra.mxu0 %v9847
        %10035 = vmatprep.subr.bf16.mxu0 0
        %10036 = vmatpush1.bf16.msra.mxu0 %v9846
        %10037 = vmatprep.subr.bf16.mxu0 0
        %10038 = vmatpush2.bf16.msra.mxu0 0
        %10039 = vmatprep.subr.bf16.mxu0 0
        %10040 = vmatpush2.bf16.msra.mxu0 0
        %10041 = vmatprep.subr.bf16.mxu0 0
        %10042 = vmatpush2.bf16.msra.mxu0 0
        %10043 = vmatprep.subr.bf16.mxu0 0
        %10044 = vmatpush2.bf16.msra.mxu0 0
        %10045 = vmatprep.subr.bf16.mxu0 0
        %10046 = vmatpush2.bf16.msra.mxu0 0
        %10047 = vmatprep.subr.bf16.mxu0 0
        %10048 = vmatpush2.bf16.msra.mxu0 0
        %10049 = vmatprep.subr.bf16.mxu0 0
        %10050 = vmatpush2.bf16.msra.mxu0 0
        %10051 = vmatprep.subr.bf16.mxu0 0
        %10052 = vmatpush2.bf16.msra.mxu0 0
        %10053 = vmatprep.mubr.f32.mxu0 0.0
        %10054 = vmatmul.mubr.f32.gmra.mxu0 %v10013
        %v10055 = vpop.f32.mrf.mxu0
        %v10056 = vadd.f32 0.0, %v10055
        %v10057 = vpop.f32.mrf.mxu0
        %10058 = vdwg.mxu0
        %v10059 = vld [vmem:[%s11] sm:$0x1]
        %v10060 = vmul.f32 %v10056, %v10059
        %vm10061 = vcmask 516096
        %v10062 = vsel %vm10061, %v10060, 0.0
        %10063 = vadd.xlane.f32.xlu0 %v10062
        %v10064 = vpop.xlane.xlu0 %10063
        %v10066 = vlaneseq
        %v10067 = vshrl.u32 %v10066, 7
        %v10068 = vsub.s32 0, %v10067
        %v10069 = vrot.slane %v9851, %v10068
        %10070 = vrot.lane.b32.xlu0 %v10069, 127
        %v10071 = vpop.permute.xlu0 %10070
        %v10073 = vadd.f32 %v10064, %v10071
        %v10074 = vxor.u32 %v10073, 2147483648
        %v10075 = vmul.f32 %v10074, 1.442695
        %v10076 = vpow.pop %v10075
        %v10077 = vadd.f32 %v10076, 1.0
        %v10078 = vrcp.pop %v10077
        %v10079 = vmul.f32 1.0, %v10078
        %vm10080 = vcmask 0
        %10081 = vst.msk [vmem:[%s473] sm:$0x1] %vm10080, %v10079
        %10082 = vst.msk [vmem:[%s465] sm:$0x1] %vm9999, %v9994
        %p10083 = scmp.lt.s32.totalorder %s29, 1
        %s10084 = scalar_select %p10083, %s29, 1
        %s10085 = scalar_lea.vmem %s13, %s10084
        %s10086 = sand.u32 %s341, 1
        %s10087 = scalar_lea.sflag [#allocation7], %s10086
        %s10088 = sand.u32 %s341, 1
        %s10089 = scalar_lea.vmem [#allocation6], %s10088
        // Predicated region
        $region73: #{attn_pooling_forward.1} parent=71 // pred_check
          %p10090 = pneg %p325
        $region74: #{attn_pooling_forward.1} parent=71 // pred_check_branch
          %10092 = sbr.rel (%p10090) target = $region76
        $region75: #{attn_pooling_forward.1} parent=71 // pred_region
          _
        $region76: #{attn_pooling_forward.1} parent=71 // pred_fallthru
          _
        // Predicated region
        $region77: #{attn_pooling_forward.1} parent=71 // pred_check
          %p10093 = pneg %p351
        $region78: #{attn_pooling_forward.1} parent=71 // pred_check_branch
          %10095 = sbr.rel (%p10093) target = $region80
        $region79: #{attn_pooling_forward.1} parent=71 // pred_region
          %s10097 = ssub.s32 16, 16
          %10098 = vsyncadd %s10087, %s10097
          %s10099 = smul.addr %s29, 16
          %s10100 = scalar_lea.hbm %s14, %s10099
          %s10102 = sshll.u32 %s10089, 4
          %s10103 = int_to_ptr.vmem [resolvable:$true] %s10102
          %10105 = dma.vmem_to_hbm [thread:$0]  %s10103, 16, %s10100, %s10087
        $region80: #{attn_pooling_forward.1} parent=71 // pred_fallthru
          _
      $region72: #{attn_pooling_forward.1} parent=5 // pred_fallthru
        _
      %p10106 = scmp.le.s32.totalorder 2, %s24
      // Predicated region
      $region81: #{attn_pooling_forward.1} parent=5 // pred_check
        %p10107 = pneg %p10106
      $region82: #{attn_pooling_forward.1} parent=5 // pred_check_branch
        %10109 = sbr.rel (%p10107) target = $region84
      $region83: #{attn_pooling_forward.1} parent=5 // pred_region
        %s10110 = ssub.s32 %s24, 2
        // Predicated region
        $region85: #{attn_pooling_forward.1} parent=83 // pred_check
          %p10111 = pneg %p331
        $region86: #{attn_pooling_forward.1} parent=83 // pred_check_branch
          %10113 = sbr.rel (%p10111) target = $region88
        $region87: #{attn_pooling_forward.1} parent=83 // pred_region
          %p10114 = scmp.lt.s32.totalorder %s30, 1
          %s10115 = scalar_select %p10114, %s30, 1
          %s10116 = scalar_lea.vmem %s13, %s10115
        $region88: #{attn_pooling_forward.1} parent=83 // pred_fallthru
          _
        // Predicated region
        $region89: #{attn_pooling_forward.1} parent=83 // pred_check
          %p10117 = pneg %p357
        $region90: #{attn_pooling_forward.1} parent=83 // pred_check_branch
          %10119 = sbr.rel (%p10117) target = $region92
        $region91: #{attn_pooling_forward.1} parent=83 // pred_region
          %s10120 = sand.u32 %s342, 1
          %s10121 = scalar_lea.sflag [#allocation7], %s10120
          %s10122 = sand.u32 %s342, 1
          %s10123 = scalar_lea.vmem [#allocation6], %s10122
          %10124 = dma.done %s10121, 16
        $region92: #{attn_pooling_forward.1} parent=83 // pred_fallthru
          _
      $region84: #{attn_pooling_forward.1} parent=5 // pred_fallthru
        _
    $region6: #{attn_pooling_forward.1} parent=1 // loop_footer
      %s28 = sadd.s32 1, %s24
    $region7: #{attn_pooling_forward.1} parent=1 // loop_footer_branch
      %23 = sbr.rel target = $region3
    $region8: #{attn_pooling_forward.1} parent=1 // loop_exit
      _
    %10125 = vsyncpa [#allocation7], 1
    %s10126 = scalar_lea.sflag [#allocation7], 1
    %10127 = vsyncpa %s10126, 1

</llo_original>
